<compile_context>
chip_gen: v5e
topology: v5e:2x2
jax: 0.10.0
libtpu: 0.0.40
codegen_flags: <defaults>
</compile_context>

<pallas_src>
import functools

import jax
import jax.numpy as jnp
from jax.experimental import pallas as pl
from jax.experimental.pallas import tpu as pltpu

LANE = 128


def _round_up(x, m):
    return (x + m - 1) // m * m


# ----------------------------------------------------------------------------
# Pallas kernels
# ----------------------------------------------------------------------------

def _stem_kernel(p_ref, w_ref, b_ref, o_ref):
    """out = (patches @ w_folded) + bias   (BN scale pre-folded into w; bf16 MXU, f32 epilogue)."""
    x = p_ref[...].astype(jnp.bfloat16)
    acc = jnp.dot(x, w_ref[...], preferred_element_type=jnp.float32)
    o_ref[...] = (acc + b_ref[...]).astype(o_ref.dtype)


def stem_conv(patches, w_bf16, bias):
    """patches: (M, K) f32, w: (K, C) bf16, bias: (C,) f32 -> (M, C) f32.  Single big block."""
    M, K = patches.shape
    C = w_bf16.shape[1]
    return pl.pallas_call(
        _stem_kernel,
        out_shape=jax.ShapeDtypeStruct((M, C), jnp.float32),
    )(patches, w_bf16, bias.reshape(1, C))


def _cell_dw_kernel(y_ref, w3_ref, w5_ref, o_ref, *, Ho, Wo):
    """Fused depthwise 3x3 (relu-in), depthwise 5x5 (relu-in) and 3x3 avg-pool on one image.

    y_ref:  (1, Ho+4, Wo+4, C) f32, spatially halo-padded by 2 (covers both 3x3 p1 and 5x5 p2).
    w3_ref: (9, C), w5_ref: (25, C) depthwise weights.
    o_ref:  (1, Ho, Wo, 3C) bf16 lane-dense slab: [dw3 | dw5 | avgpool].
    """
    C = y_ref.shape[-1]
    w3 = w3_ref[...]
    w5 = w5_ref[...]

    # --- 3x3 window: shared slice stream feeds both the separable-3x3 branch and the avg-pool.
    dw3 = jnp.zeros((Ho, Wo, C), jnp.float32)
    avg = jnp.zeros((Ho, Wo, C), jnp.float32)
    for di in range(3):
        for dj in range(3):
            k = di * 3 + dj
            raw = y_ref[0, di + 1:di + 1 + Ho, dj + 1:dj + 1 + Wo, :]
            rel = jnp.maximum(raw, 0.0)
            dw3 = dw3 + rel * w3[k][None, None, :]
            # TODO(synk): PyTorch NASNet uses count_include_pad=False; uniform 1/9 used here.
            avg = avg + raw * jnp.float32(1.0 / 9.0)
    o_ref[0, :, :, 0 * C:1 * C] = dw3.astype(o_ref.dtype)
    o_ref[0, :, :, 2 * C:3 * C] = avg.astype(o_ref.dtype)

    # --- 5x5 window (written immediately to keep accumulator live-range small).
    dw5 = jnp.zeros((Ho, Wo, C), jnp.float32)
    for di in range(5):
        for dj in range(5):
            k = di * 5 + dj
            rel = jnp.maximum(y_ref[0, di:di + Ho, dj:dj + Wo, :], 0.0)
            dw5 = dw5 + rel * w5[k][None, None, :]
    o_ref[0, :, :, 1 * C:2 * C] = dw5.astype(o_ref.dtype)


def cell_depthwise(yp, w3, w5, Ho, Wo):
    """yp: (N, Ho+4, Wo+4, C) f32 -> (N, Ho, Wo, 3C) bf16 depthwise/avg-pool slab."""
    N, Hp, Wp, C = yp.shape
    F = 3 * C
    return pl.pallas_call(
        functools.partial(_cell_dw_kernel, Ho=Ho, Wo=Wo),
        out_shape=jax.ShapeDtypeStruct((N, Ho, Wo, F), jnp.bfloat16),
        grid_spec=pltpu.PrefetchScalarGridSpec(
            num_scalar_prefetch=0,
            grid=(N,),
            in_specs=[
                pl.BlockSpec((1, Hp, Wp, C), lambda n: (n, 0, 0, 0)),
                pl.BlockSpec((9, C), lambda n: (0, 0)),
                pl.BlockSpec((25, C), lambda n: (0, 0)),
            ],
            out_specs=pl.BlockSpec((1, Ho, Wo, F), lambda n: (n, 0, 0, 0)),
        ),
        compiler_params=pltpu.CompilerParams(dimension_semantics=("parallel",)),
    )(yp, w3, w5)


def _pw_head_kernel(d_ref, wblk_ref, bblk_ref, wfc_ref, bfc_ref, o_ref):
    """Pointwise convs + BN (block-diagonal matmul) + concat + head, per image.

    d_ref:    (1, P, F) bf16 slab [dw3 | dw5 | avg],  F = 3C.
    wblk_ref: (F, F) bf16 block-diag [pw3*bn3_scale, pw5*bn5_scale, I].
    bblk_ref: (1, F) f32 [bn3_bias, bn5_bias, 0].
    wfc_ref:  (F, NCP) bf16 classifier (lane-padded), bfc_ref: (1, NCP) f32.
    o_ref:    (1, 1, NCP) f32 logits.
    """
    z = jnp.dot(d_ref[0], wblk_ref[...], preferred_element_type=jnp.float32)
    z = z + bblk_ref[...]                           # fused BN bias ([..|..|0] for the pool branch)
    z = jnp.maximum(z, 0.0)                         # head relu
    pooled = jnp.mean(z, axis=0, keepdims=True)     # global average pool over spatial, (1, F)
    # dropout is identity at inference
    y = jnp.dot(pooled.astype(jnp.bfloat16), wfc_ref[...],
                preferred_element_type=jnp.float32) + bfc_ref[...]
    o_ref[0] = y


def pw_head(d, wblk, bblk, wfc, bfc):
    """d: (N, P, F) bf16 -> logits (N, NCP) f32 (lane-padded; caller slices to num_classes)."""
    N, P, F = d.shape
    NCP = wfc.shape[1]
    out = pl.pallas_call(
        _pw_head_kernel,
        out_shape=jax.ShapeDtypeStruct((N, 1, NCP), jnp.float32),
        grid_spec=pltpu.PrefetchScalarGridSpec(
            num_scalar_prefetch=0,
            grid=(N,),
            in_specs=[
                pl.BlockSpec((1, P, F), lambda n: (n, 0, 0)),
                pl.BlockSpec((F, F), lambda n: (0, 0)),
                pl.BlockSpec((1, F), lambda n: (0, 0)),
                pl.BlockSpec((F, NCP), lambda n: (0, 0)),
                pl.BlockSpec((1, NCP), lambda n: (0, 0)),
            ],
            out_specs=pl.BlockSpec((1, 1, NCP), lambda n: (n, 0, 0)),
        ),
        compiler_params=pltpu.CompilerParams(dimension_semantics=("parallel",)),
    )(d, wblk, bblk.reshape(1, F), wfc, bfc.reshape(1, NCP))
    return out[:, 0, :]


# ----------------------------------------------------------------------------
# Plain-JAX glue: stem im2col (tiny, 3 input channels), BN folding, params
# ----------------------------------------------------------------------------

def extract_patches(x_nhwc, k, stride, pad):
    """x: (N, H, W, C) -> (N, Ho, Wo, k*k, C) via pure slicing (stem only; Cin=3)."""
    x = jnp.pad(x_nhwc, ((0, 0), (pad, pad), (pad, pad), (0, 0)))
    _, H, W, _ = x.shape
    Ho = (H - k) // stride + 1
    Wo = (W - k) // stride + 1
    slabs = []
    for i in range(k):
        for j in range(k):
            slabs.append(x[:, i:i + stride * Ho:stride, j:j + stride * Wo:stride, :])
    return jnp.stack(slabs, axis=3)


def bn_fold(gamma, beta, mean, var, eps=1e-3):
    """Fold inference BatchNorm into (scale, bias)."""
    scale = gamma / jnp.sqrt(var + eps)
    return scale, beta - mean * scale


def build_block_weights(pw3, pw5, s3, s5, b3, b5, C):
    """Fold both pointwise convs + BN + identity (avg-pool passthrough) into one block-diag matmul."""
    F = 3 * C
    w = jnp.zeros((F, F), jnp.float32)
    w = w.at[0 * C:1 * C, 0 * C:1 * C].set(pw3 * s3[None, :])
    w = w.at[1 * C:2 * C, 1 * C:2 * C].set(pw5 * s5[None, :])
    w = w.at[2 * C:3 * C, 2 * C:3 * C].set(jnp.eye(C, dtype=jnp.float32))
    b = jnp.concatenate([b3, b5, jnp.zeros((C,), jnp.float32)])
    return w.astype(jnp.bfloat16), b


def init_params(key, in_ch=3, stem=128, num_classes=10):
    ks = jax.random.split(key, 10)
    p = {}
    # conv0: 3x3 s2, matmul form (9*in_ch, stem)
    p["conv0_w"] = 0.1 * jax.random.normal(ks[0], (3 * 3 * in_ch, stem), jnp.float32)
    p["bn0"] = (jnp.ones((stem,)), 0.01 * jax.random.normal(ks[1], (stem,)),
                jnp.zeros((stem,)), jnp.ones((stem,)))
    # separable 3x3 branch: depthwise (9, stem), pointwise (stem, stem), BN(stem)
    p["dw3_w"] = 0.1 * jax.random.normal(ks[2], (9, stem), jnp.float32)
    p["pw3_w"] = 0.1 * jax.random.normal(ks[3], (stem, stem), jnp.float32)
    p["bn3"] = (jnp.ones((stem,)), 0.01 * jax.random.normal(ks[4], (stem,)),
                jnp.zeros((stem,)), jnp.ones((stem,)))
    # separable 5x5 branch
    p["dw5_w"] = 0.1 * jax.random.normal(ks[5], (25, stem), jnp.float32)
    p["pw5_w"] = 0.1 * jax.random.normal(ks[6], (stem, stem), jnp.float32)
    p["bn5"] = (jnp.ones((stem,)), 0.01 * jax.random.normal(ks[7], (stem,)),
                jnp.zeros((stem,)), jnp.ones((stem,)))
    # replaced classifier (the NasNet wrapper's new last_linear)
    feat = 3 * stem
    p["fc_w"] = 0.1 * jax.random.normal(ks[8], (feat, num_classes), jnp.float32)
    p["fc_b"] = 0.01 * jax.random.normal(ks[9], (num_classes,), jnp.float32)
    return p


# ----------------------------------------------------------------------------
# Forward pass
# ----------------------------------------------------------------------------

def nasnet_forward(params, x_nchw):
    x = jnp.transpose(x_nchw, (0, 2, 3, 1)).astype(jnp.float32)   # NCHW -> NHWC
    N = x.shape[0]

    # --- stem: conv0 3x3 stride 2, pad 0, no bias + BN (scale folded into weights)
    pat = extract_patches(x, k=3, stride=2, pad=0)                # (N, Ho, Wo, 9, Cin)
    _, Ho, Wo, K2, Cin = pat.shape
    s0, b0 = bn_fold(*params["bn0"])
    w0 = (params["conv0_w"] * s0[None, :]).astype(jnp.bfloat16)
    C = w0.shape[1]
    y0 = stem_conv(pat.reshape(N * Ho * Wo, K2 * Cin), w0, b0)
    y0 = y0.reshape(N, Ho, Wo, C)

    # --- normal-cell-like block: fused dw3 / dw5 / avg-pool (halo tiles, no im2col)
    yp = jnp.pad(y0, ((0, 0), (2, 2), (2, 2), (0, 0)))            # single halo pad (5x5 needs 2)
    dw_slab = cell_depthwise(yp, params["dw3_w"], params["dw5_w"], Ho, Wo)   # (N,Ho,Wo,3C) bf16

    # --- pointwise convs + BN + concat + head (relu -> GAP -> dropout(id) -> last_linear)
    s3, b3 = bn_fold(*params["bn3"])
    s5, b5 = bn_fold(*params["bn5"])
    wblk, bblk = build_block_weights(params["pw3_w"], params["pw5_w"], s3, s5, b3, b5, C)
    num_classes = params["fc_w"].shape[1]
    ncp = _round_up(num_classes, LANE)                            # lane-dense classifier output
    wfc = jnp.pad(params["fc_w"], ((0, 0), (0, ncp - num_classes))).astype(jnp.bfloat16)
    bfc = jnp.pad(params["fc_b"], (0, ncp - num_classes))

    d = dw_slab.reshape(N, Ho * Wo, 3 * C)                        # contiguous reshape (free)
    logits_p = pw_head(d, wblk, bblk, wfc, bfc)                   # (N, ncp)
    # NOTE: forward() of the wrapper returns raw last_linear output (no sigmoid applied).
    return logits_p[:, :num_classes]


# ----------------------------------------------------------------------------
# Main
# ----------------------------------------------------------------------------

if __name__ == "__main__":
    key = jax.random.PRNGKey(0)
    k_param, k_x = jax.random.split(key)

    num_classes = 10
    params = init_params(k_param, in_ch=3, stem=128, num_classes=num_classes)

    x = jax.random.normal(k_x, (2, 3, 32, 32), jnp.float32)       # NCHW, like PyTorch

    fwd = jax.jit(functools.partial(nasnet_forward, params))
    out = fwd(x)
    jax.block_until_ready(out)

    assert out.shape == (2, num_classes), out.shape
    assert out.dtype == jnp.float32
    assert bool(jnp.all(jnp.isfinite(out)))
    print("KERNEL_OK")
</pallas_src>

<mosaic_0001>
module attributes {stable_mosaic.version = 11 : i64} {
  func.func @_stem_kernel(%arg0: memref<450x27xf32, #tpu.memory_space<vmem>>, %arg1: memref<27x128xbf16, #tpu.memory_space<vmem>>, %arg2: memref<1x128xf32, #tpu.memory_space<vmem>>, %arg3: memref<450x128xf32, #tpu.memory_space<vmem>>) attributes {dimension_semantics = [], scalar_prefetch = 0 : i64, scratch_operands = 0 : i64, tpu.core_type = #tpu.core_type<tc>} {
    %c0 = arith.constant 0 : index
    %c0_0 = arith.constant 0 : index
    %0 = vector.load %arg0[%c0, %c0_0] : memref<450x27xf32, #tpu.memory_space<vmem>>, vector<450x27xf32>
    %1 = arith.truncf %0 : vector<450x27xf32> to vector<450x27xbf16>
    %c0_1 = arith.constant 0 : index
    %c0_2 = arith.constant 0 : index
    %2 = vector.load %arg1[%c0_1, %c0_2] : memref<27x128xbf16, #tpu.memory_space<vmem>>, vector<27x128xbf16>
    %cst = arith.constant dense<0.000000e+00> : vector<450x128xf32>
    %3 = tpu.matmul %1, %2, %cst {dimension_numbers = #tpu.dot_dimension_numbers<[1], [0], [0], [1], [0, 0, 1, 1], [], []>} : vector<450x27xbf16>, vector<27x128xbf16>, vector<450x128xf32> -> vector<450x128xf32>
    %c0_3 = arith.constant 0 : index
    %c0_4 = arith.constant 0 : index
    %4 = vector.load %arg2[%c0_3, %c0_4] : memref<1x128xf32, #tpu.memory_space<vmem>>, vector<1x128xf32>
    %5 = vector.broadcast %4 : vector<1x128xf32> to vector<450x128xf32>
    %6 = arith.addf %3, %5 : vector<450x128xf32>
    %c0_5 = arith.constant 0 : index
    %c0_6 = arith.constant 0 : index
    %7 = vector.load %arg3[%c0_5, %c0_6] : memref<450x128xf32, #tpu.memory_space<vmem>>, vector<450x128xf32>
    tpu.vector_store %arg3[%c0_5, %c0_6], %6 {strides = array<i32>} : memref<450x128xf32, #tpu.memory_space<vmem>>, vector<450x128xf32>,
    return
  }
}

module attributes {stable_mosaic.version = 11 : i64} {
  func.func @_cell_dw_kernel(%arg0: i32, %arg1: memref<1x19x19x128xf32, #tpu.memory_space<vmem>>, %arg2: memref<9x128xf32, #tpu.memory_space<vmem>>, %arg3: memref<25x128xf32, #tpu.memory_space<vmem>>, %arg4: memref<1x15x15x384xbf16, #tpu.memory_space<vmem>>) attributes {dimension_semantics = [#tpu.dimension_semantics<parallel>], iteration_bounds = array<i64: 2>, scalar_prefetch = 0 : i64, scratch_operands = 0 : i64, tpu.core_type = #tpu.core_type<tc>, window_params = [{transform_indices = @transform_0, window_bounds = array<i64: 1, 19, 19, 128>}, {pipeline_mode = #tpu.pipeline_mode<synchronous>, transform_indices = @transform_1, window_bounds = array<i64: 9, 128>}, {pipeline_mode = #tpu.pipeline_mode<synchronous>, transform_indices = @transform_2, window_bounds = array<i64: 25, 128>}, {transform_indices = @transform_3, window_bounds = array<i64: 1, 15, 15, 384>}]} {
    %c0 = arith.constant 0 : index
    %c0_0 = arith.constant 0 : index
    %0 = vector.load %arg2[%c0, %c0_0] : memref<9x128xf32, #tpu.memory_space<vmem>>, vector<9x128xf32>
    %c0_1 = arith.constant 0 : index
    %c0_2 = arith.constant 0 : index
    %1 = vector.load %arg3[%c0_1, %c0_2] : memref<25x128xf32, #tpu.memory_space<vmem>>, vector<25x128xf32>
    %cst = arith.constant 0.000000e+00 : f32
    %2 = vector.broadcast %cst : f32 to vector<15x15x128xf32>
    %cst_3 = arith.constant 0.000000e+00 : f32
    %3 = vector.broadcast %cst_3 : f32 to vector<15x15x128xf32>
    %c0_4 = arith.constant 0 : index
    %c1 = arith.constant 1 : index
    %c1_5 = arith.constant 1 : index
    %c0_6 = arith.constant 0 : index
    %4 = vector.load %arg1[%c0_4, %c1, %c1_5, %c0_6] : memref<1x19x19x128xf32, #tpu.memory_space<vmem>>, vector<1x15x15x128xf32>
    %5 = vector.shape_cast %4 : vector<1x15x15x128xf32> to vector<15x15x128xf32>
    %cst_7 = arith.constant 0.000000e+00 : f32
    %6 = vector.broadcast %cst_7 : f32 to vector<15x15x128xf32>
    %7 = arith.maximumf %5, %6 : vector<15x15x128xf32>
    %8 = vector.extract_strided_slice %0 {offsets = [0, 0], sizes = [1, 128], strides = [1, 1]} : vector<9x128xf32> to vector<1x128xf32>
    %9 = vector.shape_cast %8 : vector<1x128xf32> to vector<128xf32>
    %10 = vector.shape_cast %9 : vector<128xf32> to vector<1x1x128xf32>
    %11 = vector.broadcast %10 : vector<1x1x128xf32> to vector<15x15x128xf32>
    %12 = arith.mulf %7, %11 : vector<15x15x128xf32>
    %13 = arith.addf %2, %12 : vector<15x15x128xf32>
    %cst_8 = arith.constant 0.111111112 : f32
    %14 = vector.broadcast %cst_8 : f32 to vector<15x15x128xf32>
    %15 = arith.mulf %5, %14 : vector<15x15x128xf32>
    %16 = arith.addf %3, %15 : vector<15x15x128xf32>
    %c0_9 = arith.constant 0 : index
    %c1_10 = arith.constant 1 : index
    %c2 = arith.constant 2 : index
    %c0_11 = arith.constant 0 : index
    %17 = vector.load %arg1[%c0_9, %c1_10, %c2, %c0_11] : memref<1x19x19x128xf32, #tpu.memory_space<vmem>>, vector<1x15x15x128xf32>
    %18 = vector.shape_cast %17 : vector<1x15x15x128xf32> to vector<15x15x128xf32>
    %cst_12 = arith.constant 0.000000e+00 : f32
    %19 = vector.broadcast %cst_12 : f32 to vector<15x15x128xf32>
    %20 = arith.maximumf %18, %19 : vector<15x15x128xf32>
    %21 = vector.extract_strided_slice %0 {offsets = [1, 0], sizes = [1, 128], strides = [1, 1]} : vector<9x128xf32> to vector<1x128xf32>
    %22 = vector.shape_cast %21 : vector<1x128xf32> to vector<128xf32>
    %23 = vector.shape_cast %22 : vector<128xf32> to vector<1x1x128xf32>
    %24 = vector.broadcast %23 : vector<1x1x128xf32> to vector<15x15x128xf32>
    %25 = arith.mulf %20, %24 : vector<15x15x128xf32>
    %26 = arith.addf %13, %25 : vector<15x15x128xf32>
    %cst_13 = arith.constant 0.111111112 : f32
    %27 = vector.broadcast %cst_13 : f32 to vector<15x15x128xf32>
    %28 = arith.mulf %18, %27 : vector<15x15x128xf32>
    %29 = arith.addf %16, %28 : vector<15x15x128xf32>
    %c0_14 = arith.constant 0 : index
    %c1_15 = arith.constant 1 : index
    %c3 = arith.constant 3 : index
    %c0_16 = arith.constant 0 : index
    %30 = vector.load %arg1[%c0_14, %c1_15, %c3, %c0_16] : memref<1x19x19x128xf32, #tpu.memory_space<vmem>>, vector<1x15x15x128xf32>
    %31 = vector.shape_cast %30 : vector<1x15x15x128xf32> to vector<15x15x128xf32>
    %cst_17 = arith.constant 0.000000e+00 : f32
    %32 = vector.broadcast %cst_17 : f32 to vector<15x15x128xf32>
    %33 = arith.maximumf %31, %32 : vector<15x15x128xf32>
    %34 = vector.extract_strided_slice %0 {offsets = [2, 0], sizes = [1, 128], strides = [1, 1]} : vector<9x128xf32> to vector<1x128xf32>
    %35 = vector.shape_cast %34 : vector<1x128xf32> to vector<128xf32>
    %36 = vector.shape_cast %35 : vector<128xf32> to vector<1x1x128xf32>
    %37 = vector.broadcast %36 : vector<1x1x128xf32> to vector<15x15x128xf32>
    %38 = arith.mulf %33, %37 : vector<15x15x128xf32>
    %39 = arith.addf %26, %38 : vector<15x15x128xf32>
    %cst_18 = arith.constant 0.111111112 : f32
    %40 = vector.broadcast %cst_18 : f32 to vector<15x15x128xf32>
    %41 = arith.mulf %31, %40 : vector<15x15x128xf32>
    %42 = arith.addf %29, %41 : vector<15x15x128xf32>
    %c0_19 = arith.constant 0 : index
    %c2_20 = arith.constant 2 : index
    %c1_21 = arith.constant 1 : index
    %c0_22 = arith.constant 0 : index
    %43 = vector.load %arg1[%c0_19, %c2_20, %c1_21, %c0_22] : memref<1x19x19x128xf32, #tpu.memory_space<vmem>>, vector<1x15x15x128xf32>
    %44 = vector.shape_cast %43 : vector<1x15x15x128xf32> to vector<15x15x128xf32>
    %cst_23 = arith.constant 0.000000e+00 : f32
    %45 = vector.broadcast %cst_23 : f32 to vector<15x15x128xf32>
    %46 = arith.maximumf %44, %45 : vector<15x15x128xf32>
    %47 = vector.extract_strided_slice %0 {offsets = [3, 0], sizes = [1, 128], strides = [1, 1]} : vector<9x128xf32> to vector<1x128xf32>
    %48 = vector.shape_cast %47 : vector<1x128xf32> to vector<128xf32>
    %49 = vector.shape_cast %48 : vector<128xf32> to vector<1x1x128xf32>
    %50 = vector.broadcast %49 : vector<1x1x128xf32> to vector<15x15x128xf32>
    %51 = arith.mulf %46, %50 : vector<15x15x128xf32>
    %52 = arith.addf %39, %51 : vector<15x15x128xf32>
    %cst_24 = arith.constant 0.111111112 : f32
    %53 = vector.broadcast %cst_24 : f32 to vector<15x15x128xf32>
    %54 = arith.mulf %44, %53 : vector<15x15x128xf32>
    %55 = arith.addf %42, %54 : vector<15x15x128xf32>
    %c0_25 = arith.constant 0 : index
    %c2_26 = arith.constant 2 : index
    %c2_27 = arith.constant 2 : index
    %c0_28 = arith.constant 0 : index
    %56 = vector.load %arg1[%c0_25, %c2_26, %c2_27, %c0_28] : memref<1x19x19x128xf32, #tpu.memory_space<vmem>>, vector<1x15x15x128xf32>
    %57 = vector.shape_cast %56 : vector<1x15x15x128xf32> to vector<15x15x128xf32>
    %cst_29 = arith.constant 0.000000e+00 : f32
    %58 = vector.broadcast %cst_29 : f32 to vector<15x15x128xf32>
    %59 = arith.maximumf %57, %58 : vector<15x15x128xf32>
    %60 = vector.extract_strided_slice %0 {offsets = [4, 0], sizes = [1, 128], strides = [1, 1]} : vector<9x128xf32> to vector<1x128xf32>
    %61 = vector.shape_cast %60 : vector<1x128xf32> to vector<128xf32>
    %62 = vector.shape_cast %61 : vector<128xf32> to vector<1x1x128xf32>
    %63 = vector.broadcast %62 : vector<1x1x128xf32> to vector<15x15x128xf32>
    %64 = arith.mulf %59, %63 : vector<15x15x128xf32>
    %65 = arith.addf %52, %64 : vector<15x15x128xf32>
    %cst_30 = arith.constant 0.111111112 : f32
    %66 = vector.broadcast %cst_30 : f32 to vector<15x15x128xf32>
    %67 = arith.mulf %57, %66 : vector<15x15x128xf32>
    %68 = arith.addf %55, %67 : vector<15x15x128xf32>
    %c0_31 = arith.constant 0 : index
    %c2_32 = arith.constant 2 : index
    %c3_33 = arith.constant 3 : index
    %c0_34 = arith.constant 0 : index
    %69 = vector.load %arg1[%c0_31, %c2_32, %c3_33, %c0_34] : memref<1x19x19x128xf32, #tpu.memory_space<vmem>>, vector<1x15x15x128xf32>
    %70 = vector.shape_cast %69 : vector<1x15x15x128xf32> to vector<15x15x128xf32>
    %cst_35 = arith.constant 0.000000e+00 : f32
    %71 = vector.broadcast %cst_35 : f32 to vector<15x15x128xf32>
    %72 = arith.maximumf %70, %71 : vector<15x15x128xf32>
    %73 = vector.extract_strided_slice %0 {offsets = [5, 0], sizes = [1, 128], strides = [1, 1]} : vector<9x128xf32> to vector<1x128xf32>
    %74 = vector.shape_cast %73 : vector<1x128xf32> to vector<128xf32>
    %75 = vector.shape_cast %74 : vector<128xf32> to vector<1x1x128xf32>
    %76 = vector.broadcast %75 : vector<1x1x128xf32> to vector<15x15x128xf32>
    %77 = arith.mulf %72, %76 : vector<15x15x128xf32>
    %78 = arith.addf %65, %77 : vector<15x15x128xf32>
    %cst_36 = arith.constant 0.111111112 : f32
    %79 = vector.broadcast %cst_36 : f32 to vector<15x15x128xf32>
    %80 = arith.mulf %70, %79 : vector<15x15x128xf32>
    %81 = arith.addf %68, %80 : vector<15x15x128xf32>
    %c0_37 = arith.constant 0 : index
    %c3_38 = arith.constant 3 : index
    %c1_39 = arith.constant 1 : index
    %c0_40 = arith.constant 0 : index
    %82 = vector.load %arg1[%c0_37, %c3_38, %c1_39, %c0_40] : memref<1x19x19x128xf32, #tpu.memory_space<vmem>>, vector<1x15x15x128xf32>
    %83 = vector.shape_cast %82 : vector<1x15x15x128xf32> to vector<15x15x128xf32>
    %cst_41 = arith.constant 0.000000e+00 : f32
    %84 = vector.broadcast %cst_41 : f32 to vector<15x15x128xf32>
    %85 = arith.maximumf %83, %84 : vector<15x15x128xf32>
    %86 = vector.extract_strided_slice %0 {offsets = [6, 0], sizes = [1, 128], strides = [1, 1]} : vector<9x128xf32> to vector<1x128xf32>
    %87 = vector.shape_cast %86 : vector<1x128xf32> to vector<128xf32>
    %88 = vector.shape_cast %87 : vector<128xf32> to vector<1x1x128xf32>
    %89 = vector.broadcast %88 : vector<1x1x128xf32> to vector<15x15x128xf32>
    %90 = arith.mulf %85, %89 : vector<15x15x128xf32>
    %91 = arith.addf %78, %90 : vector<15x15x128xf32>
    %cst_42 = arith.constant 0.111111112 : f32
    %92 = vector.broadcast %cst_42 : f32 to vector<15x15x128xf32>
    %93 = arith.mulf %83, %92 : vector<15x15x128xf32>
    %94 = arith.addf %81, %93 : vector<15x15x128xf32>
    %c0_43 = arith.constant 0 : index
    %c3_44 = arith.constant 3 : index
    %c2_45 = arith.constant 2 : index
    %c0_46 = arith.constant 0 : index
    %95 = vector.load %arg1[%c0_43, %c3_44, %c2_45, %c0_46] : memref<1x19x19x128xf32, #tpu.memory_space<vmem>>, vector<1x15x15x128xf32>
    %96 = vector.shape_cast %95 : vector<1x15x15x128xf32> to vector<15x15x128xf32>
    %cst_47 = arith.constant 0.000000e+00 : f32
    %97 = vector.broadcast %cst_47 : f32 to vector<15x15x128xf32>
    %98 = arith.maximumf %96, %97 : vector<15x15x128xf32>
    %99 = vector.extract_strided_slice %0 {offsets = [7, 0], sizes = [1, 128], strides = [1, 1]} : vector<9x128xf32> to vector<1x128xf32>
    %100 = vector.shape_cast %99 : vector<1x128xf32> to vector<128xf32>
    %101 = vector.shape_cast %100 : vector<128xf32> to vector<1x1x128xf32>
    %102 = vector.broadcast %101 : vector<1x1x128xf32> to vector<15x15x128xf32>
    %103 = arith.mulf %98, %102 : vector<15x15x128xf32>
    %104 = arith.addf %91, %103 : vector<15x15x128xf32>
    %cst_48 = arith.constant 0.111111112 : f32
    %105 = vector.broadcast %cst_48 : f32 to vector<15x15x128xf32>
    %106 = arith.mulf %96, %105 : vector<15x15x128xf32>
    %107 = arith.addf %94, %106 : vector<15x15x128xf32>
    %c0_49 = arith.constant 0 : index
    %c3_50 = arith.constant 3 : index
    %c3_51 = arith.constant 3 : index
    %c0_52 = arith.constant 0 : index
    %108 = vector.load %arg1[%c0_49, %c3_50, %c3_51, %c0_52] : memref<1x19x19x128xf32, #tpu.memory_space<vmem>>, vector<1x15x15x128xf32>
    %109 = vector.shape_cast %108 : vector<1x15x15x128xf32> to vector<15x15x128xf32>
    %cst_53 = arith.constant 0.000000e+00 : f32
    %110 = vector.broadcast %cst_53 : f32 to vector<15x15x128xf32>
    %111 = arith.maximumf %109, %110 : vector<15x15x128xf32>
    %112 = vector.extract_strided_slice %0 {offsets = [8, 0], sizes = [1, 128], strides = [1, 1]} : vector<9x128xf32> to vector<1x128xf32>
    %113 = vector.shape_cast %112 : vector<1x128xf32> to vector<128xf32>
    %114 = vector.shape_cast %113 : vector<128xf32> to vector<1x1x128xf32>
    %115 = vector.broadcast %114 : vector<1x1x128xf32> to vector<15x15x128xf32>
    %116 = arith.mulf %111, %115 : vector<15x15x128xf32>
    %117 = arith.addf %104, %116 : vector<15x15x128xf32>
    %cst_54 = arith.constant 0.111111112 : f32
    %118 = vector.broadcast %cst_54 : f32 to vector<15x15x128xf32>
    %119 = arith.mulf %109, %118 : vector<15x15x128xf32>
    %120 = arith.addf %107, %119 : vector<15x15x128xf32>
    %121 = arith.truncf %117 : vector<15x15x128xf32> to vector<15x15x128xbf16>
    %c0_55 = arith.constant 0 : index
    %c0_56 = arith.constant 0 : index
    %c0_57 = arith.constant 0 : index
    %c0_58 = arith.constant 0 : index
    %122 = vector.load %arg4[%c0_55, %c0_56, %c0_57, %c0_58] : memref<1x15x15x384xbf16, #tpu.memory_space<vmem>>, vector<1x15x15x128xbf16>
    %123 = vector.shape_cast %122 : vector<1x15x15x128xbf16> to vector<15x15x128xbf16>
    %124 = vector.shape_cast %121 : vector<15x15x128xbf16> to vector<1x15x15x128xbf16>
    tpu.vector_store %arg4[%c0_55, %c0_56, %c0_57, %c0_58], %124 {strides = array<i32>} : memref<1x15x15x384xbf16, #tpu.memory_space<vmem>>, vector<1x15x15x128xbf16>,
    %125 = arith.truncf %120 : vector<15x15x128xf32> to vector<15x15x128xbf16>
    %c0_59 = arith.constant 0 : index
    %c0_60 = arith.constant 0 : index
    %c0_61 = arith.constant 0 : index
    %c256 = arith.constant 256 : index
    %126 = vector.load %arg4[%c0_59, %c0_60, %c0_61, %c256] : memref<1x15x15x384xbf16, #tpu.memory_space<vmem>>, vector<1x15x15x128xbf16>
    %127 = vector.shape_cast %126 : vector<1x15x15x128xbf16> to vector<15x15x128xbf16>
    %128 = vector.shape_cast %125 : vector<15x15x128xbf16> to vector<1x15x15x128xbf16>
    tpu.vector_store %arg4[%c0_59, %c0_60, %c0_61, %c256], %128 {strides = array<i32>} : memref<1x15x15x384xbf16, #tpu.memory_space<vmem>>, vector<1x15x15x128xbf16>,
    %cst_62 = arith.constant 0.000000e+00 : f32
    %129 = vector.broadcast %cst_62 : f32 to vector<15x15x128xf32>
    %c0_63 = arith.constant 0 : index
    %c0_64 = arith.constant 0 : index
    %c0_65 = arith.constant 0 : index
    %c0_66 = arith.constant 0 : index
    %130 = vector.load %arg1[%c0_63, %c0_64, %c0_65, %c0_66] : memref<1x19x19x128xf32, #tpu.memory_space<vmem>>, vector<1x15x15x128xf32>
    %131 = vector.shape_cast %130 : vector<1x15x15x128xf32> to vector<15x15x128xf32>
    %cst_67 = arith.constant 0.000000e+00 : f32
    %132 = vector.broadcast %cst_67 : f32 to vector<15x15x128xf32>
    %133 = arith.maximumf %131, %132 : vector<15x15x128xf32>
    %134 = vector.extract_strided_slice %1 {offsets = [0, 0], sizes = [1, 128], strides = [1, 1]} : vector<25x128xf32> to vector<1x128xf32>
    %135 = vector.shape_cast %134 : vector<1x128xf32> to vector<128xf32>
    %136 = vector.shape_cast %135 : vector<128xf32> to vector<1x1x128xf32>
    %137 = vector.broadcast %136 : vector<1x1x128xf32> to vector<15x15x128xf32>
    %138 = arith.mulf %133, %137 : vector<15x15x128xf32>
    %139 = arith.addf %129, %138 : vector<15x15x128xf32>
    %c0_68 = arith.constant 0 : index
    %c0_69 = arith.constant 0 : index
    %c1_70 = arith.constant 1 : index
    %c0_71 = arith.constant 0 : index
    %140 = vector.load %arg1[%c0_68, %c0_69, %c1_70, %c0_71] : memref<1x19x19x128xf32, #tpu.memory_space<vmem>>, vector<1x15x15x128xf32>
    %141 = vector.shape_cast %140 : vector<1x15x15x128xf32> to vector<15x15x128xf32>
    %cst_72 = arith.constant 0.000000e+00 : f32
    %142 = vector.broadcast %cst_72 : f32 to vector<15x15x128xf32>
    %143 = arith.maximumf %141, %142 : vector<15x15x128xf32>
    %144 = vector.extract_strided_slice %1 {offsets = [1, 0], sizes = [1, 128], strides = [1, 1]} : vector<25x128xf32> to vector<1x128xf32>
    %145 = vector.shape_cast %144 : vector<1x128xf32> to vector<128xf32>
    %146 = vector.shape_cast %145 : vector<128xf32> to vector<1x1x128xf32>
    %147 = vector.broadcast %146 : vector<1x1x128xf32> to vector<15x15x128xf32>
    %148 = arith.mulf %143, %147 : vector<15x15x128xf32>
    %149 = arith.addf %139, %148 : vector<15x15x128xf32>
    %c0_73 = arith.constant 0 : index
    %c0_74 = arith.constant 0 : index
    %c2_75 = arith.constant 2 : index
    %c0_76 = arith.constant 0 : index
    %150 = vector.load %arg1[%c0_73, %c0_74, %c2_75, %c0_76] : memref<1x19x19x128xf32, #tpu.memory_space<vmem>>, vector<1x15x15x128xf32>
    %151 = vector.shape_cast %150 : vector<1x15x15x128xf32> to vector<15x15x128xf32>
    %cst_77 = arith.constant 0.000000e+00 : f32
    %152 = vector.broadcast %cst_77 : f32 to vector<15x15x128xf32>
    %153 = arith.maximumf %151, %152 : vector<15x15x128xf32>
    %154 = vector.extract_strided_slice %1 {offsets = [2, 0], sizes = [1, 128], strides = [1, 1]} : vector<25x128xf32> to vector<1x128xf32>
    %155 = vector.shape_cast %154 : vector<1x128xf32> to vector<128xf32>
    %156 = vector.shape_cast %155 : vector<128xf32> to vector<1x1x128xf32>
    %157 = vector.broadcast %156 : vector<1x1x128xf32> to vector<15x15x128xf32>
    %158 = arith.mulf %153, %157 : vector<15x15x128xf32>
    %159 = arith.addf %149, %158 : vector<15x15x128xf32>
    %c0_78 = arith.constant 0 : index
    %c0_79 = arith.constant 0 : index
    %c3_80 = arith.constant 3 : index
    %c0_81 = arith.constant 0 : index
    %160 = vector.load %arg1[%c0_78, %c0_79, %c3_80, %c0_81] : memref<1x19x19x128xf32, #tpu.memory_space<vmem>>, vector<1x15x15x128xf32>
    %161 = vector.shape_cast %160 : vector<1x15x15x128xf32> to vector<15x15x128xf32>
    %cst_82 = arith.constant 0.000000e+00 : f32
    %162 = vector.broadcast %cst_82 : f32 to vector<15x15x128xf32>
    %163 = arith.maximumf %161, %162 : vector<15x15x128xf32>
    %164 = vector.extract_strided_slice %1 {offsets = [3, 0], sizes = [1, 128], strides = [1, 1]} : vector<25x128xf32> to vector<1x128xf32>
    %165 = vector.shape_cast %164 : vector<1x128xf32> to vector<128xf32>
    %166 = vector.shape_cast %165 : vector<128xf32> to vector<1x1x128xf32>
    %167 = vector.broadcast %166 : vector<1x1x128xf32> to vector<15x15x128xf32>
    %168 = arith.mulf %163, %167 : vector<15x15x128xf32>
    %169 = arith.addf %159, %168 : vector<15x15x128xf32>
    %c0_83 = arith.constant 0 : index
    %c0_84 = arith.constant 0 : index
    %c4 = arith.constant 4 : index
    %c0_85 = arith.constant 0 : index
    %170 = vector.load %arg1[%c0_83, %c0_84, %c4, %c0_85] : memref<1x19x19x128xf32, #tpu.memory_space<vmem>>, vector<1x15x15x128xf32>
    %171 = vector.shape_cast %170 : vector<1x15x15x128xf32> to vector<15x15x128xf32>
    %cst_86 = arith.constant 0.000000e+00 : f32
    %172 = vector.broadcast %cst_86 : f32 to vector<15x15x128xf32>
    %173 = arith.maximumf %171, %172 : vector<15x15x128xf32>
    %174 = vector.extract_strided_slice %1 {offsets = [4, 0], sizes = [1, 128], strides = [1, 1]} : vector<25x128xf32> to vector<1x128xf32>
    %175 = vector.shape_cast %174 : vector<1x128xf32> to vector<128xf32>
    %176 = vector.shape_cast %175 : vector<128xf32> to vector<1x1x128xf32>
    %177 = vector.broadcast %176 : vector<1x1x128xf32> to vector<15x15x128xf32>
    %178 = arith.mulf %173, %177 : vector<15x15x128xf32>
    %179 = arith.addf %169, %178 : vector<15x15x128xf32>
    %c0_87 = arith.constant 0 : index
    %c1_88 = arith.constant 1 : index
    %c0_89 = arith.constant 0 : index
    %c0_90 = arith.constant 0 : index
    %180 = vector.load %arg1[%c0_87, %c1_88, %c0_89, %c0_90] : memref<1x19x19x128xf32, #tpu.memory_space<vmem>>, vector<1x15x15x128xf32>
    %181 = vector.shape_cast %180 : vector<1x15x15x128xf32> to vector<15x15x128xf32>
    %cst_91 = arith.constant 0.000000e+00 : f32
    %182 = vector.broadcast %cst_91 : f32 to vector<15x15x128xf32>
    %183 = arith.maximumf %181, %182 : vector<15x15x128xf32>
    %184 = vector.extract_strided_slice %1 {offsets = [5, 0], sizes = [1, 128], strides = [1, 1]} : vector<25x128xf32> to vector<1x128xf32>
    %185 = vector.shape_cast %184 : vector<1x128xf32> to vector<128xf32>
    %186 = vector.shape_cast %185 : vector<128xf32> to vector<1x1x128xf32>
    %187 = vector.broadcast %186 : vector<1x1x128xf32> to vector<15x15x128xf32>
    %188 = arith.mulf %183, %187 : vector<15x15x128xf32>
    %189 = arith.addf %179, %188 : vector<15x15x128xf32>
    %c0_92 = arith.constant 0 : index
    %c1_93 = arith.constant 1 : index
    %c1_94 = arith.constant 1 : index
    %c0_95 = arith.constant 0 : index
    %190 = vector.load %arg1[%c0_92, %c1_93, %c1_94, %c0_95] : memref<1x19x19x128xf32, #tpu.memory_space<vmem>>, vector<1x15x15x128xf32>
    %191 = vector.shape_cast %190 : vector<1x15x15x128xf32> to vector<15x15x128xf32>
    %cst_96 = arith.constant 0.000000e+00 : f32
    %192 = vector.broadcast %cst_96 : f32 to vector<15x15x128xf32>
    %193 = arith.maximumf %191, %192 : vector<15x15x128xf32>
    %194 = vector.extract_strided_slice %1 {offsets = [6, 0], sizes = [1, 128], strides = [1, 1]} : vector<25x128xf32> to vector<1x128xf32>
    %195 = vector.shape_cast %194 : vector<1x128xf32> to vector<128xf32>
    %196 = vector.shape_cast %195 : vector<128xf32> to vector<1x1x128xf32>
    %197 = vector.broadcast %196 : vector<1x1x128xf32> to vector<15x15x128xf32>
    %198 = arith.mulf %193, %197 : vector<15x15x128xf32>
    %199 = arith.addf %189, %198 : vector<15x15x128xf32>
    %c0_97 = arith.constant 0 : index
    %c1_98 = arith.constant 1 : index
    %c2_99 = arith.constant 2 : index
    %c0_100 = arith.constant 0 : index
    %200 = vector.load %arg1[%c0_97, %c1_98, %c2_99, %c0_100] : memref<1x19x19x128xf32, #tpu.memory_space<vmem>>, vector<1x15x15x128xf32>
    %201 = vector.shape_cast %200 : vector<1x15x15x128xf32> to vector<15x15x128xf32>
    %cst_101 = arith.constant 0.000000e+00 : f32
    %202 = vector.broadcast %cst_101 : f32 to vector<15x15x128xf32>
    %203 = arith.maximumf %201, %202 : vector<15x15x128xf32>
    %204 = vector.extract_strided_slice %1 {offsets = [7, 0], sizes = [1, 128], strides = [1, 1]} : vector<25x128xf32> to vector<1x128xf32>
    %205 = vector.shape_cast %204 : vector<1x128xf32> to vector<128xf32>
    %206 = vector.shape_cast %205 : vector<128xf32> to vector<1x1x128xf32>
    %207 = vector.broadcast %206 : vector<1x1x128xf32> to vector<15x15x128xf32>
    %208 = arith.mulf %203, %207 : vector<15x15x128xf32>
    %209 = arith.addf %199, %208 : vector<15x15x128xf32>
    %c0_102 = arith.constant 0 : index
    %c1_103 = arith.constant 1 : index
    %c3_104 = arith.constant 3 : index
    %c0_105 = arith.constant 0 : index
    %210 = vector.load %arg1[%c0_102, %c1_103, %c3_104, %c0_105] : memref<1x19x19x128xf32, #tpu.memory_space<vmem>>, vector<1x15x15x128xf32>
    %211 = vector.shape_cast %210 : vector<1x15x15x128xf32> to vector<15x15x128xf32>
    %cst_106 = arith.constant 0.000000e+00 : f32
    %212 = vector.broadcast %cst_106 : f32 to vector<15x15x128xf32>
    %213 = arith.maximumf %211, %212 : vector<15x15x128xf32>
    %214 = vector.extract_strided_slice %1 {offsets = [8, 0], sizes = [1, 128], strides = [1, 1]} : vector<25x128xf32> to vector<1x128xf32>
    %215 = vector.shape_cast %214 : vector<1x128xf32> to vector<128xf32>
    %216 = vector.shape_cast %215 : vector<128xf32> to vector<1x1x128xf32>
    %217 = vector.broadcast %216 : vector<1x1x128xf32> to vector<15x15x128xf32>
    %218 = arith.mulf %213, %217 : vector<15x15x128xf32>
    %219 = arith.addf %209, %218 : vector<15x15x128xf32>
    %c0_107 = arith.constant 0 : index
    %c1_108 = arith.constant 1 : index
    %c4_109 = arith.constant 4 : index
    %c0_110 = arith.constant 0 : index
    %220 = vector.load %arg1[%c0_107, %c1_108, %c4_109, %c0_110] : memref<1x19x19x128xf32, #tpu.memory_space<vmem>>, vector<1x15x15x128xf32>
    %221 = vector.shape_cast %220 : vector<1x15x15x128xf32> to vector<15x15x128xf32>
    %cst_111 = arith.constant 0.000000e+00 : f32
    %222 = vector.broadcast %cst_111 : f32 to vector<15x15x128xf32>
    %223 = arith.maximumf %221, %222 : vector<15x15x128xf32>
    %224 = vector.extract_strided_slice %1 {offsets = [9, 0], sizes = [1, 128], strides = [1, 1]} : vector<25x128xf32> to vector<1x128xf32>
    %225 = vector.shape_cast %224 : vector<1x128xf32> to vector<128xf32>
    %226 = vector.shape_cast %225 : vector<128xf32> to vector<1x1x128xf32>
    %227 = vector.broadcast %226 : vector<1x1x128xf32> to vector<15x15x128xf32>
    %228 = arith.mulf %223, %227 : vector<15x15x128xf32>
    %229 = arith.addf %219, %228 : vector<15x15x128xf32>
    %c0_112 = arith.constant 0 : index
    %c2_113 = arith.constant 2 : index
    %c0_114 = arith.constant 0 : index
    %c0_115 = arith.constant 0 : index
    %230 = vector.load %arg1[%c0_112, %c2_113, %c0_114, %c0_115] : memref<1x19x19x128xf32, #tpu.memory_space<vmem>>, vector<1x15x15x128xf32>
    %231 = vector.shape_cast %230 : vector<1x15x15x128xf32> to vector<15x15x128xf32>
    %cst_116 = arith.constant 0.000000e+00 : f32
    %232 = vector.broadcast %cst_116 : f32 to vector<15x15x128xf32>
    %233 = arith.maximumf %231, %232 : vector<15x15x128xf32>
    %234 = vector.extract_strided_slice %1 {offsets = [10, 0], sizes = [1, 128], strides = [1, 1]} : vector<25x128xf32> to vector<1x128xf32>
    %235 = vector.shape_cast %234 : vector<1x128xf32> to vector<128xf32>
    %236 = vector.shape_cast %235 : vector<128xf32> to vector<1x1x128xf32>
    %237 = vector.broadcast %236 : vector<1x1x128xf32> to vector<15x15x128xf32>
    %238 = arith.mulf %233, %237 : vector<15x15x128xf32>
    %239 = arith.addf %229, %238 : vector<15x15x128xf32>
    %c0_117 = arith.constant 0 : index
    %c2_118 = arith.constant 2 : index
    %c1_119 = arith.constant 1 : index
    %c0_120 = arith.constant 0 : index
    %240 = vector.load %arg1[%c0_117, %c2_118, %c1_119, %c0_120] : memref<1x19x19x128xf32, #tpu.memory_space<vmem>>, vector<1x15x15x128xf32>
    %241 = vector.shape_cast %240 : vector<1x15x15x128xf32> to vector<15x15x128xf32>
    %cst_121 = arith.constant 0.000000e+00 : f32
    %242 = vector.broadcast %cst_121 : f32 to vector<15x15x128xf32>
    %243 = arith.maximumf %241, %242 : vector<15x15x128xf32>
    %244 = vector.extract_strided_slice %1 {offsets = [11, 0], sizes = [1, 128], strides = [1, 1]} : vector<25x128xf32> to vector<1x128xf32>
    %245 = vector.shape_cast %244 : vector<1x128xf32> to vector<128xf32>
    %246 = vector.shape_cast %245 : vector<128xf32> to vector<1x1x128xf32>
    %247 = vector.broadcast %246 : vector<1x1x128xf32> to vector<15x15x128xf32>
    %248 = arith.mulf %243, %247 : vector<15x15x128xf32>
    %249 = arith.addf %239, %248 : vector<15x15x128xf32>
    %c0_122 = arith.constant 0 : index
    %c2_123 = arith.constant 2 : index
    %c2_124 = arith.constant 2 : index
    %c0_125 = arith.constant 0 : index
    %250 = vector.load %arg1[%c0_122, %c2_123, %c2_124, %c0_125] : memref<1x19x19x128xf32, #tpu.memory_space<vmem>>, vector<1x15x15x128xf32>
    %251 = vector.shape_cast %250 : vector<1x15x15x128xf32> to vector<15x15x128xf32>
    %cst_126 = arith.constant 0.000000e+00 : f32
    %252 = vector.broadcast %cst_126 : f32 to vector<15x15x128xf32>
    %253 = arith.maximumf %251, %252 : vector<15x15x128xf32>
    %254 = vector.extract_strided_slice %1 {offsets = [12, 0], sizes = [1, 128], strides = [1, 1]} : vector<25x128xf32> to vector<1x128xf32>
    %255 = vector.shape_cast %254 : vector<1x128xf32> to vector<128xf32>
    %256 = vector.shape_cast %255 : vector<128xf32> to vector<1x1x128xf32>
    %257 = vector.broadcast %256 : vector<1x1x128xf32> to vector<15x15x128xf32>
    %258 = arith.mulf %253, %257 : vector<15x15x128xf32>
    %259 = arith.addf %249, %258 : vector<15x15x128xf32>
    %c0_127 = arith.constant 0 : index
    %c2_128 = arith.constant 2 : index
    %c3_129 = arith.constant 3 : index
    %c0_130 = arith.constant 0 : index
    %260 = vector.load %arg1[%c0_127, %c2_128, %c3_129, %c0_130] : memref<1x19x19x128xf32, #tpu.memory_space<vmem>>, vector<1x15x15x128xf32>
    %261 = vector.shape_cast %260 : vector<1x15x15x128xf32> to vector<15x15x128xf32>
    %cst_131 = arith.constant 0.000000e+00 : f32
    %262 = vector.broadcast %cst_131 : f32 to vector<15x15x128xf32>
    %263 = arith.maximumf %261, %262 : vector<15x15x128xf32>
    %264 = vector.extract_strided_slice %1 {offsets = [13, 0], sizes = [1, 128], strides = [1, 1]} : vector<25x128xf32> to vector<1x128xf32>
    %265 = vector.shape_cast %264 : vector<1x128xf32> to vector<128xf32>
    %266 = vector.shape_cast %265 : vector<128xf32> to vector<1x1x128xf32>
    %267 = vector.broadcast %266 : vector<1x1x128xf32> to vector<15x15x128xf32>
    %268 = arith.mulf %263, %267 : vector<15x15x128xf32>
    %269 = arith.addf %259, %268 : vector<15x15x128xf32>
    %c0_132 = arith.constant 0 : index
    %c2_133 = arith.constant 2 : index
    %c4_134 = arith.constant 4 : index
    %c0_135 = arith.constant 0 : index
    %270 = vector.load %arg1[%c0_132, %c2_133, %c4_134, %c0_135] : memref<1x19x19x128xf32, #tpu.memory_space<vmem>>, vector<1x15x15x128xf32>
    %271 = vector.shape_cast %270 : vector<1x15x15x128xf32> to vector<15x15x128xf32>
    %cst_136 = arith.constant 0.000000e+00 : f32
    %272 = vector.broadcast %cst_136 : f32 to vector<15x15x128xf32>
    %273 = arith.maximumf %271, %272 : vector<15x15x128xf32>
    %274 = vector.extract_strided_slice %1 {offsets = [14, 0], sizes = [1, 128], strides = [1, 1]} : vector<25x128xf32> to vector<1x128xf32>
    %275 = vector.shape_cast %274 : vector<1x128xf32> to vector<128xf32>
    %276 = vector.shape_cast %275 : vector<128xf32> to vector<1x1x128xf32>
    %277 = vector.broadcast %276 : vector<1x1x128xf32> to vector<15x15x128xf32>
    %278 = arith.mulf %273, %277 : vector<15x15x128xf32>
    %279 = arith.addf %269, %278 : vector<15x15x128xf32>
    %c0_137 = arith.constant 0 : index
    %c3_138 = arith.constant 3 : index
    %c0_139 = arith.constant 0 : index
    %c0_140 = arith.constant 0 : index
    %280 = vector.load %arg1[%c0_137, %c3_138, %c0_139, %c0_140] : memref<1x19x19x128xf32, #tpu.memory_space<vmem>>, vector<1x15x15x128xf32>
    %281 = vector.shape_cast %280 : vector<1x15x15x128xf32> to vector<15x15x128xf32>
    %cst_141 = arith.constant 0.000000e+00 : f32
    %282 = vector.broadcast %cst_141 : f32 to vector<15x15x128xf32>
    %283 = arith.maximumf %281, %282 : vector<15x15x128xf32>
    %284 = vector.extract_strided_slice %1 {offsets = [15, 0], sizes = [1, 128], strides = [1, 1]} : vector<25x128xf32> to vector<1x128xf32>
    %285 = vector.shape_cast %284 : vector<1x128xf32> to vector<128xf32>
    %286 = vector.shape_cast %285 : vector<128xf32> to vector<1x1x128xf32>
    %287 = vector.broadcast %286 : vector<1x1x128xf32> to vector<15x15x128xf32>
    %288 = arith.mulf %283, %287 : vector<15x15x128xf32>
    %289 = arith.addf %279, %288 : vector<15x15x128xf32>
    %c0_142 = arith.constant 0 : index
    %c3_143 = arith.constant 3 : index
    %c1_144 = arith.constant 1 : index
    %c0_145 = arith.constant 0 : index
    %290 = vector.load %arg1[%c0_142, %c3_143, %c1_144, %c0_145] : memref<1x19x19x128xf32, #tpu.memory_space<vmem>>, vector<1x15x15x128xf32>
    %291 = vector.shape_cast %290 : vector<1x15x15x128xf32> to vector<15x15x128xf32>
    %cst_146 = arith.constant 0.000000e+00 : f32
    %292 = vector.broadcast %cst_146 : f32 to vector<15x15x128xf32>
    %293 = arith.maximumf %291, %292 : vector<15x15x128xf32>
    %294 = vector.extract_strided_slice %1 {offsets = [16, 0], sizes = [1, 128], strides = [1, 1]} : vector<25x128xf32> to vector<1x128xf32>
    %295 = vector.shape_cast %294 : vector<1x128xf32> to vector<128xf32>
    %296 = vector.shape_cast %295 : vector<128xf32> to vector<1x1x128xf32>
    %297 = vector.broadcast %296 : vector<1x1x128xf32> to vector<15x15x128xf32>
    %298 = arith.mulf %293, %297 : vector<15x15x128xf32>
    %299 = arith.addf %289, %298 : vector<15x15x128xf32>
    %c0_147 = arith.constant 0 : index
    %c3_148 = arith.constant 3 : index
    %c2_149 = arith.constant 2 : index
    %c0_150 = arith.constant 0 : index
    %300 = vector.load %arg1[%c0_147, %c3_148, %c2_149, %c0_150] : memref<1x19x19x128xf32, #tpu.memory_space<vmem>>, vector<1x15x15x128xf32>
    %301 = vector.shape_cast %300 : vector<1x15x15x128xf32> to vector<15x15x128xf32>
    %cst_151 = arith.constant 0.000000e+00 : f32
    %302 = vector.broadcast %cst_151 : f32 to vector<15x15x128xf32>
    %303 = arith.maximumf %301, %302 : vector<15x15x128xf32>
    %304 = vector.extract_strided_slice %1 {offsets = [17, 0], sizes = [1, 128], strides = [1, 1]} : vector<25x128xf32> to vector<1x128xf32>
    %305 = vector.shape_cast %304 : vector<1x128xf32> to vector<128xf32>
    %306 = vector.shape_cast %305 : vector<128xf32> to vector<1x1x128xf32>
    %307 = vector.broadcast %306 : vector<1x1x128xf32> to vector<15x15x128xf32>
    %308 = arith.mulf %303, %307 : vector<15x15x128xf32>
    %309 = arith.addf %299, %308 : vector<15x15x128xf32>
    %c0_152 = arith.constant 0 : index
    %c3_153 = arith.constant 3 : index
    %c3_154 = arith.constant 3 : index
    %c0_155 = arith.constant 0 : index
    %310 = vector.load %arg1[%c0_152, %c3_153, %c3_154, %c0_155] : memref<1x19x19x128xf32, #tpu.memory_space<vmem>>, vector<1x15x15x128xf32>
    %311 = vector.shape_cast %310 : vector<1x15x15x128xf32> to vector<15x15x128xf32>
    %cst_156 = arith.constant 0.000000e+00 : f32
    %312 = vector.broadcast %cst_156 : f32 to vector<15x15x128xf32>
    %313 = arith.maximumf %311, %312 : vector<15x15x128xf32>
    %314 = vector.extract_strided_slice %1 {offsets = [18, 0], sizes = [1, 128], strides = [1, 1]} : vector<25x128xf32> to vector<1x128xf32>
    %315 = vector.shape_cast %314 : vector<1x128xf32> to vector<128xf32>
    %316 = vector.shape_cast %315 : vector<128xf32> to vector<1x1x128xf32>
    %317 = vector.broadcast %316 : vector<1x1x128xf32> to vector<15x15x128xf32>
    %318 = arith.mulf %313, %317 : vector<15x15x128xf32>
    %319 = arith.addf %309, %318 : vector<15x15x128xf32>
    %c0_157 = arith.constant 0 : index
    %c3_158 = arith.constant 3 : index
    %c4_159 = arith.constant 4 : index
    %c0_160 = arith.constant 0 : index
    %320 = vector.load %arg1[%c0_157, %c3_158, %c4_159, %c0_160] : memref<1x19x19x128xf32, #tpu.memory_space<vmem>>, vector<1x15x15x128xf32>
    %321 = vector.shape_cast %320 : vector<1x15x15x128xf32> to vector<15x15x128xf32>
    %cst_161 = arith.constant 0.000000e+00 : f32
    %322 = vector.broadcast %cst_161 : f32 to vector<15x15x128xf32>
    %323 = arith.maximumf %321, %322 : vector<15x15x128xf32>
    %324 = vector.extract_strided_slice %1 {offsets = [19, 0], sizes = [1, 128], strides = [1, 1]} : vector<25x128xf32> to vector<1x128xf32>
    %325 = vector.shape_cast %324 : vector<1x128xf32> to vector<128xf32>
    %326 = vector.shape_cast %325 : vector<128xf32> to vector<1x1x128xf32>
    %327 = vector.broadcast %326 : vector<1x1x128xf32> to vector<15x15x128xf32>
    %328 = arith.mulf %323, %327 : vector<15x15x128xf32>
    %329 = arith.addf %319, %328 : vector<15x15x128xf32>
    %c0_162 = arith.constant 0 : index
    %c4_163 = arith.constant 4 : index
    %c0_164 = arith.constant 0 : index
    %c0_165 = arith.constant 0 : index
    %330 = vector.load %arg1[%c0_162, %c4_163, %c0_164, %c0_165] : memref<1x19x19x128xf32, #tpu.memory_space<vmem>>, vector<1x15x15x128xf32>
    %331 = vector.shape_cast %330 : vector<1x15x15x128xf32> to vector<15x15x128xf32>
    %cst_166 = arith.constant 0.000000e+00 : f32
    %332 = vector.broadcast %cst_166 : f32 to vector<15x15x128xf32>
    %333 = arith.maximumf %331, %332 : vector<15x15x128xf32>
    %334 = vector.extract_strided_slice %1 {offsets = [20, 0], sizes = [1, 128], strides = [1, 1]} : vector<25x128xf32> to vector<1x128xf32>
    %335 = vector.shape_cast %334 : vector<1x128xf32> to vector<128xf32>
    %336 = vector.shape_cast %335 : vector<128xf32> to vector<1x1x128xf32>
    %337 = vector.broadcast %336 : vector<1x1x128xf32> to vector<15x15x128xf32>
    %338 = arith.mulf %333, %337 : vector<15x15x128xf32>
    %339 = arith.addf %329, %338 : vector<15x15x128xf32>
    %c0_167 = arith.constant 0 : index
    %c4_168 = arith.constant 4 : index
    %c1_169 = arith.constant 1 : index
    %c0_170 = arith.constant 0 : index
    %340 = vector.load %arg1[%c0_167, %c4_168, %c1_169, %c0_170] : memref<1x19x19x128xf32, #tpu.memory_space<vmem>>, vector<1x15x15x128xf32>
    %341 = vector.shape_cast %340 : vector<1x15x15x128xf32> to vector<15x15x128xf32>
    %cst_171 = arith.constant 0.000000e+00 : f32
    %342 = vector.broadcast %cst_171 : f32 to vector<15x15x128xf32>
    %343 = arith.maximumf %341, %342 : vector<15x15x128xf32>
    %344 = vector.extract_strided_slice %1 {offsets = [21, 0], sizes = [1, 128], strides = [1, 1]} : vector<25x128xf32> to vector<1x128xf32>
    %345 = vector.shape_cast %344 : vector<1x128xf32> to vector<128xf32>
    %346 = vector.shape_cast %345 : vector<128xf32> to vector<1x1x128xf32>
    %347 = vector.broadcast %346 : vector<1x1x128xf32> to vector<15x15x128xf32>
    %348 = arith.mulf %343, %347 : vector<15x15x128xf32>
    %349 = arith.addf %339, %348 : vector<15x15x128xf32>
    %c0_172 = arith.constant 0 : index
    %c4_173 = arith.constant 4 : index
    %c2_174 = arith.constant 2 : index
    %c0_175 = arith.constant 0 : index
    %350 = vector.load %arg1[%c0_172, %c4_173, %c2_174, %c0_175] : memref<1x19x19x128xf32, #tpu.memory_space<vmem>>, vector<1x15x15x128xf32>
    %351 = vector.shape_cast %350 : vector<1x15x15x128xf32> to vector<15x15x128xf32>
    %cst_176 = arith.constant 0.000000e+00 : f32
    %352 = vector.broadcast %cst_176 : f32 to vector<15x15x128xf32>
    %353 = arith.maximumf %351, %352 : vector<15x15x128xf32>
    %354 = vector.extract_strided_slice %1 {offsets = [22, 0], sizes = [1, 128], strides = [1, 1]} : vector<25x128xf32> to vector<1x128xf32>
    %355 = vector.shape_cast %354 : vector<1x128xf32> to vector<128xf32>
    %356 = vector.shape_cast %355 : vector<128xf32> to vector<1x1x128xf32>
    %357 = vector.broadcast %356 : vector<1x1x128xf32> to vector<15x15x128xf32>
    %358 = arith.mulf %353, %357 : vector<15x15x128xf32>
    %359 = arith.addf %349, %358 : vector<15x15x128xf32>
    %c0_177 = arith.constant 0 : index
    %c4_178 = arith.constant 4 : index
    %c3_179 = arith.constant 3 : index
    %c0_180 = arith.constant 0 : index
    %360 = vector.load %arg1[%c0_177, %c4_178, %c3_179, %c0_180] : memref<1x19x19x128xf32, #tpu.memory_space<vmem>>, vector<1x15x15x128xf32>
    %361 = vector.shape_cast %360 : vector<1x15x15x128xf32> to vector<15x15x128xf32>
    %cst_181 = arith.constant 0.000000e+00 : f32
    %362 = vector.broadcast %cst_181 : f32 to vector<15x15x128xf32>
    %363 = arith.maximumf %361, %362 : vector<15x15x128xf32>
    %364 = vector.extract_strided_slice %1 {offsets = [23, 0], sizes = [1, 128], strides = [1, 1]} : vector<25x128xf32> to vector<1x128xf32>
    %365 = vector.shape_cast %364 : vector<1x128xf32> to vector<128xf32>
    %366 = vector.shape_cast %365 : vector<128xf32> to vector<1x1x128xf32>
    %367 = vector.broadcast %366 : vector<1x1x128xf32> to vector<15x15x128xf32>
    %368 = arith.mulf %363, %367 : vector<15x15x128xf32>
    %369 = arith.addf %359, %368 : vector<15x15x128xf32>
    %c0_182 = arith.constant 0 : index
    %c4_183 = arith.constant 4 : index
    %c4_184 = arith.constant 4 : index
    %c0_185 = arith.constant 0 : index
    %370 = vector.load %arg1[%c0_182, %c4_183, %c4_184, %c0_185] : memref<1x19x19x128xf32, #tpu.memory_space<vmem>>, vector<1x15x15x128xf32>
    %371 = vector.shape_cast %370 : vector<1x15x15x128xf32> to vector<15x15x128xf32>
    %cst_186 = arith.constant 0.000000e+00 : f32
    %372 = vector.broadcast %cst_186 : f32 to vector<15x15x128xf32>
    %373 = arith.maximumf %371, %372 : vector<15x15x128xf32>
    %374 = vector.extract_strided_slice %1 {offsets = [24, 0], sizes = [1, 128], strides = [1, 1]} : vector<25x128xf32> to vector<1x128xf32>
    %375 = vector.shape_cast %374 : vector<1x128xf32> to vector<128xf32>
    %376 = vector.shape_cast %375 : vector<128xf32> to vector<1x1x128xf32>
    %377 = vector.broadcast %376 : vector<1x1x128xf32> to vector<15x15x128xf32>
    %378 = arith.mulf %373, %377 : vector<15x15x128xf32>
    %379 = arith.addf %369, %378 : vector<15x15x128xf32>
    %380 = arith.truncf %379 : vector<15x15x128xf32> to vector<15x15x128xbf16>
    %c0_187 = arith.constant 0 : index
    %c0_188 = arith.constant 0 : index
    %c0_189 = arith.constant 0 : index
    %c128 = arith.constant 128 : index
    %381 = vector.load %arg4[%c0_187, %c0_188, %c0_189, %c128] : memref<1x15x15x384xbf16, #tpu.memory_space<vmem>>, vector<1x15x15x128xbf16>
    %382 = vector.shape_cast %381 : vector<1x15x15x128xbf16> to vector<15x15x128xbf16>
    %383 = vector.shape_cast %380 : vector<15x15x128xbf16> to vector<1x15x15x128xbf16>
    tpu.vector_store %arg4[%c0_187, %c0_188, %c0_189, %c128], %383 {strides = array<i32>} : memref<1x15x15x384xbf16, #tpu.memory_space<vmem>>, vector<1x15x15x128xbf16>,
    return
  }
  func.func @transform_0(%arg0: i32) -> (i32, i32, i32, i32) {
    %c0_i32 = arith.constant 0 : i32
    %c0_i32_0 = arith.constant 0 : i32
    %c0_i32_1 = arith.constant 0 : i32
    %c0_i32_2 = arith.constant 0 : i32
    return %arg0, %c0_i32, %c0_i32_0, %c0_i32_1 : i32, i32, i32, i32
  }
  func.func @transform_1(%arg0: i32) -> (i32, i32) {
    %c0_i32 = arith.constant 0 : i32
    %c0_i32_0 = arith.constant 0 : i32
    %c0_i32_1 = arith.constant 0 : i32
    return %c0_i32, %c0_i32_0 : i32, i32
  }
  func.func @transform_2(%arg0: i32) -> (i32, i32) {
    %c0_i32 = arith.constant 0 : i32
    %c0_i32_0 = arith.constant 0 : i32
    %c0_i32_1 = arith.constant 0 : i32
    return %c0_i32, %c0_i32_0 : i32, i32
  }
  func.func @transform_3(%arg0: i32) -> (i32, i32, i32, i32) {
    %c0_i32 = arith.constant 0 : i32
    %c0_i32_0 = arith.constant 0 : i32
    %c0_i32_1 = arith.constant 0 : i32
    %c0_i32_2 = arith.constant 0 : i32
    return %arg0, %c0_i32, %c0_i32_0, %c0_i32_1 : i32, i32, i32, i32
  }
}

module attributes {stable_mosaic.version = 11 : i64} {
  func.func @_pw_head_kernel(%arg0: i32, %arg1: memref<1x225x384xbf16, #tpu.memory_space<vmem>>, %arg2: memref<384x384xbf16, #tpu.memory_space<vmem>>, %arg3: memref<1x384xf32, #tpu.memory_space<vmem>>, %arg4: memref<384x128xbf16, #tpu.memory_space<vmem>>, %arg5: memref<1x128xf32, #tpu.memory_space<vmem>>, %arg6: memref<1x1x128xf32, #tpu.memory_space<vmem>>) attributes {dimension_semantics = [#tpu.dimension_semantics<parallel>], iteration_bounds = array<i64: 2>, scalar_prefetch = 0 : i64, scratch_operands = 0 : i64, tpu.core_type = #tpu.core_type<tc>, window_params = [{transform_indices = @transform_0, window_bounds = array<i64: 1, 225, 384>}, {pipeline_mode = #tpu.pipeline_mode<synchronous>, transform_indices = @transform_1, window_bounds = array<i64: 384, 384>}, {pipeline_mode = #tpu.pipeline_mode<synchronous>, transform_indices = @transform_2, window_bounds = array<i64: 1, 384>}, {pipeline_mode = #tpu.pipeline_mode<synchronous>, transform_indices = @transform_3, window_bounds = array<i64: 384, 128>}, {pipeline_mode = #tpu.pipeline_mode<synchronous>, transform_indices = @transform_4, window_bounds = array<i64: 1, 128>}, {transform_indices = @transform_5, window_bounds = array<i64: 1, 1, 128>}]} {
    %c0 = arith.constant 0 : index
    %c0_0 = arith.constant 0 : index
    %c0_1 = arith.constant 0 : index
    %0 = vector.load %arg1[%c0, %c0_0, %c0_1] : memref<1x225x384xbf16, #tpu.memory_space<vmem>>, vector<1x225x384xbf16>
    %1 = vector.shape_cast %0 : vector<1x225x384xbf16> to vector<225x384xbf16>
    %c0_2 = arith.constant 0 : index
    %c0_3 = arith.constant 0 : index
    %2 = vector.load %arg2[%c0_2, %c0_3] : memref<384x384xbf16, #tpu.memory_space<vmem>>, vector<384x384xbf16>
    %cst = arith.constant dense<0.000000e+00> : vector<225x384xf32>
    %3 = tpu.matmul %1, %2, %cst {dimension_numbers = #tpu.dot_dimension_numbers<[1], [0], [0], [1], [0, 0, 1, 1], [], []>} : vector<225x384xbf16>, vector<384x384xbf16>, vector<225x384xf32> -> vector<225x384xf32>
    %c0_4 = arith.constant 0 : index
    %c0_5 = arith.constant 0 : index
    %4 = vector.load %arg3[%c0_4, %c0_5] : memref<1x384xf32, #tpu.memory_space<vmem>>, vector<1x384xf32>
    %5 = vector.broadcast %4 : vector<1x384xf32> to vector<225x384xf32>
    %6 = arith.addf %3, %5 : vector<225x384xf32>
    %cst_6 = arith.constant 0.000000e+00 : f32
    %7 = vector.broadcast %cst_6 : f32 to vector<225x384xf32>
    %8 = arith.maximumf %6, %7 : vector<225x384xf32>
    %cst_7 = arith.constant dense<0.000000e+00> : vector<384xf32>
    %9 = vector.multi_reduction <add>, %8, %cst_7 [0] : vector<225x384xf32> to vector<384xf32>
    %10 = vector.shape_cast %9 : vector<384xf32> to vector<1x384xf32>
    %cst_8 = arith.constant 2.250000e+02 : f32
    %11 = vector.broadcast %cst_8 : f32 to vector<1x384xf32>
    %12 = arith.divf %10, %11 : vector<1x384xf32>
    %13 = arith.truncf %12 : vector<1x384xf32> to vector<1x384xbf16>
    %c0_9 = arith.constant 0 : index
    %c0_10 = arith.constant 0 : index
    %14 = vector.load %arg4[%c0_9, %c0_10] : memref<384x128xbf16, #tpu.memory_space<vmem>>, vector<384x128xbf16>
    %cst_11 = arith.constant dense<0.000000e+00> : vector<1x128xf32>
    %15 = tpu.matmul %13, %14, %cst_11 {dimension_numbers = #tpu.dot_dimension_numbers<[1], [0], [0], [1], [0, 0, 1, 1], [], []>} : vector<1x384xbf16>, vector<384x128xbf16>, vector<1x128xf32> -> vector<1x128xf32>
    %c0_12 = arith.constant 0 : index
    %c0_13 = arith.constant 0 : index
    %16 = vector.load %arg5[%c0_12, %c0_13] : memref<1x128xf32, #tpu.memory_space<vmem>>, vector<1x128xf32>
    %17 = arith.addf %15, %16 : vector<1x128xf32>
    %c0_14 = arith.constant 0 : index
    %c0_15 = arith.constant 0 : index
    %c0_16 = arith.constant 0 : index
    %18 = vector.load %arg6[%c0_14, %c0_15, %c0_16] : memref<1x1x128xf32, #tpu.memory_space<vmem>>, vector<1x1x128xf32>
    %19 = vector.shape_cast %18 : vector<1x1x128xf32> to vector<1x128xf32>
    %20 = vector.shape_cast %17 : vector<1x128xf32> to vector<1x1x128xf32>
    tpu.vector_store %arg6[%c0_14, %c0_15, %c0_16], %20 {strides = array<i32>} : memref<1x1x128xf32, #tpu.memory_space<vmem>>, vector<1x1x128xf32>,
    return
  }
  func.func @transform_0(%arg0: i32) -> (i32, i32, i32) {
    %c0_i32 = arith.constant 0 : i32
    %c0_i32_0 = arith.constant 0 : i32
    %c0_i32_1 = arith.constant 0 : i32
    return %arg0, %c0_i32, %c0_i32_0 : i32, i32, i32
  }
  func.func @transform_1(%arg0: i32) -> (i32, i32) {
    %c0_i32 = arith.constant 0 : i32
    %c0_i32_0 = arith.constant 0 : i32
    %c0_i32_1 = arith.constant 0 : i32
    return %c0_i32, %c0_i32_0 : i32, i32
  }
  func.func @transform_2(%arg0: i32) -> (i32, i32) {
    %c0_i32 = arith.constant 0 : i32
    %c0_i32_0 = arith.constant 0 : i32
    %c0_i32_1 = arith.constant 0 : i32
    return %c0_i32, %c0_i32_0 : i32, i32
  }
  func.func @transform_3(%arg0: i32) -> (i32, i32) {
    %c0_i32 = arith.constant 0 : i32
    %c0_i32_0 = arith.constant 0 : i32
    %c0_i32_1 = arith.constant 0 : i32
    return %c0_i32, %c0_i32_0 : i32, i32
  }
  func.func @transform_4(%arg0: i32) -> (i32, i32) {
    %c0_i32 = arith.constant 0 : i32
    %c0_i32_0 = arith.constant 0 : i32
    %c0_i32_1 = arith.constant 0 : i32
    return %c0_i32, %c0_i32_0 : i32, i32
  }
  func.func @transform_5(%arg0: i32) -> (i32, i32, i32) {
    %c0_i32 = arith.constant 0 : i32
    %c0_i32_0 = arith.constant 0 : i32
    %c0_i32_1 = arith.constant 0 : i32
    return %arg0, %c0_i32, %c0_i32_0 : i32, i32, i32
  }
}

</mosaic_0001>

<llo_original>
// kernel: nasnet_forward.3
$region0: #{nasnet_forward.3}
  #allocation0 [shape = 'u32[]', space=smem, size = 0x4, offset = 0x4, fixed_abs, tag = 'smem constant byte address 0x4 - core index']
  #allocation1 [shape = 'u32[72,128]{1,0:T(1,128)}', space=vmem, size = 0x9000, scoped, tag = 'internal scratch']
  %s0 = inlined_call_operand.vmem [shape: f32[450,27], index: 0, kind: input, shape index: {}]
  %s1 = inlined_call_operand.vmem [shape: bf16[27,128], index: 1, kind: input, shape index: {}]
  %s2 = inlined_call_operand.vmem [shape: f32[1,128], index: 2, kind: input, shape index: {}]
  %s3 = inlined_call_operand.vmem [shape: f32[450,128], index: 3, kind: output, shape index: {}]
  %s4 = sld [smem:[#allocation0]]
  $region22: #{nasnet_forward.3} parent=0
    _
  %s6 = ssub.s32 1, %s4
  %s7 = scalar_select 0, %s6, %s4
  // Predicated region
  $region2: #{nasnet_forward.3} parent=0 // pred_check
    _
  $region3: #{nasnet_forward.3} parent=0 // pred_check_branch
    %9 = sbr.rel (0) target = $region5
  $region4: #{nasnet_forward.3} parent=0 // pred_region
    _
  $region5: #{nasnet_forward.3} parent=0 // pred_fallthru
    _
  // Predicated region
  $region6: #{nasnet_forward.3} parent=0 // pred_check
    _
  $region7: #{nasnet_forward.3} parent=0 // pred_check_branch
    %11 = sbr.rel (0) target = $region9
  $region8: #{nasnet_forward.3} parent=0 // pred_region
    _
  $region9: #{nasnet_forward.3} parent=0 // pred_fallthru
    _
  // Predicated region
  $region10: #{nasnet_forward.3} parent=0 // pred_check
    _
  $region11: #{nasnet_forward.3} parent=0 // pred_check_branch
    %13 = sbr.rel (0) target = $region13
  $region12: #{nasnet_forward.3} parent=0 // pred_region
    _
  $region13: #{nasnet_forward.3} parent=0 // pred_fallthru
    _
  %v15 = vld [vmem:[%s0] sm:$0xff]
  %v16 = vld [vmem:[%s0 + $0x8] sm:$0xff]
  %v17 = vld [vmem:[%s0 + $0x10] sm:$0xff]
  %v18 = vld [vmem:[%s0 + $0x18] sm:$0xff]
  %v19 = vld [vmem:[%s0 + $0x20] sm:$0xff]
  %v20 = vld [vmem:[%s0 + $0x28] sm:$0xff]
  %v21 = vld [vmem:[%s0 + $0x30] sm:$0xff]
  %v22 = vld [vmem:[%s0 + $0x38] sm:$0xff]
  %v23 = vld [vmem:[%s0 + $0x40] sm:$0xff]
  %v24 = vld [vmem:[%s0 + $0x48] sm:$0xff]
  %v25 = vld [vmem:[%s0 + $0x50] sm:$0xff]
  %v26 = vld [vmem:[%s0 + $0x58] sm:$0xff]
  %v27 = vld [vmem:[%s0 + $0x60] sm:$0xff]
  %v28 = vld [vmem:[%s0 + $0x68] sm:$0xff]
  %v29 = vld [vmem:[%s0 + $0x70] sm:$0xff]
  %v30 = vld [vmem:[%s0 + $0x78] sm:$0xff]
  %v31 = vld [vmem:[%s0 + $0x80] sm:$0xff]
  %v32 = vld [vmem:[%s0 + $0x88] sm:$0xff]
  %v33 = vld [vmem:[%s0 + $0x90] sm:$0xff]
  %v34 = vld [vmem:[%s0 + $0x98] sm:$0xff]
  %v35 = vld [vmem:[%s0 + $0xa0] sm:$0xff]
  %v36 = vld [vmem:[%s0 + $0xa8] sm:$0xff]
  %v37 = vld [vmem:[%s0 + $0xb0] sm:$0xff]
  %v38 = vld [vmem:[%s0 + $0xb8] sm:$0xff]
  %v39 = vld [vmem:[%s0 + $0xc0] sm:$0xff]
  %v40 = vld [vmem:[%s0 + $0xc8] sm:$0xff]
  %v41 = vld [vmem:[%s0 + $0xd0] sm:$0xff]
  %v42 = vld [vmem:[%s0 + $0xd8] sm:$0xff]
  %v43 = vld [vmem:[%s0 + $0xe0] sm:$0xff]
  %v44 = vld [vmem:[%s0 + $0xe8] sm:$0xff]
  %v45 = vld [vmem:[%s0 + $0xf0] sm:$0xff]
  %v46 = vld [vmem:[%s0 + $0xf8] sm:$0xff]
  %v47 = vld [vmem:[%s0 + $0x100] sm:$0xff]
  %v48 = vld [vmem:[%s0 + $0x108] sm:$0xff]
  %v49 = vld [vmem:[%s0 + $0x110] sm:$0xff]
  %v50 = vld [vmem:[%s0 + $0x118] sm:$0xff]
  %v51 = vld [vmem:[%s0 + $0x120] sm:$0xff]
  %v52 = vld [vmem:[%s0 + $0x128] sm:$0xff]
  %v53 = vld [vmem:[%s0 + $0x130] sm:$0xff]
  %v54 = vld [vmem:[%s0 + $0x138] sm:$0xff]
  %v55 = vld [vmem:[%s0 + $0x140] sm:$0xff]
  %v56 = vld [vmem:[%s0 + $0x148] sm:$0xff]
  %v57 = vld [vmem:[%s0 + $0x150] sm:$0xff]
  %v58 = vld [vmem:[%s0 + $0x158] sm:$0xff]
  %v59 = vld [vmem:[%s0 + $0x160] sm:$0xff]
  %v60 = vld [vmem:[%s0 + $0x168] sm:$0xff]
  %v61 = vld [vmem:[%s0 + $0x170] sm:$0xff]
  %v62 = vld [vmem:[%s0 + $0x178] sm:$0xff]
  %v63 = vld [vmem:[%s0 + $0x180] sm:$0xff]
  %v64 = vld [vmem:[%s0 + $0x188] sm:$0xff]
  %v65 = vld [vmem:[%s0 + $0x190] sm:$0xff]
  %v66 = vld [vmem:[%s0 + $0x198] sm:$0xff]
  %v67 = vld [vmem:[%s0 + $0x1a0] sm:$0xff]
  %v68 = vld [vmem:[%s0 + $0x1a8] sm:$0xff]
  %v69 = vld [vmem:[%s0 + $0x1b0] sm:$0xff]
  %v70 = vld [vmem:[%s0 + $0x1b8] sm:$0xff]
  %v71 = vld [vmem:[%s0 + $0x1c0] sm:$0x3]
  %v72 = vpack.c.bf16 %v16, %v15
  %v73 = vpack.c.bf16 %v18, %v17
  %v74 = vpack.c.bf16 %v20, %v19
  %v75 = vpack.c.bf16 %v22, %v21
  %v76 = vpack.c.bf16 %v24, %v23
  %v77 = vpack.c.bf16 %v26, %v25
  %v78 = vpack.c.bf16 %v28, %v27
  %v79 = vpack.c.bf16 %v30, %v29
  %v80 = vpack.c.bf16 %v32, %v31
  %v81 = vpack.c.bf16 %v34, %v33
  %v82 = vpack.c.bf16 %v36, %v35
  %v83 = vpack.c.bf16 %v38, %v37
  %v84 = vpack.c.bf16 %v40, %v39
  %v85 = vpack.c.bf16 %v42, %v41
  %v86 = vpack.c.bf16 %v44, %v43
  %v87 = vpack.c.bf16 %v46, %v45
  %v88 = vpack.c.bf16 %v48, %v47
  %v89 = vpack.c.bf16 %v50, %v49
  %v90 = vpack.c.bf16 %v52, %v51
  %v91 = vpack.c.bf16 %v54, %v53
  %v92 = vpack.c.bf16 %v56, %v55
  %v93 = vpack.c.bf16 %v58, %v57
  %v94 = vpack.c.bf16 %v60, %v59
  %v95 = vpack.c.bf16 %v62, %v61
  %v96 = vpack.c.bf16 %v64, %v63
  %v97 = vpack.c.bf16 %v66, %v65
  %v98 = vpack.c.bf16 %v68, %v67
  %v99 = vpack.c.bf16 %v70, %v69
  %v100 = vpack.c.bf16 %v71, %v71
  %v101 = vld [vmem:[%s1] sm:$0xf]
  %v102 = vld [vmem:[%s1 + $0x4] sm:$0xf]
  %v103 = vld [vmem:[%s1 + $0x8] sm:$0xf]
  %v104 = vld [vmem:[%s1 + $0xc] sm:$0x3]
  %v105 = vld [vmem:[%s2] sm:$0x1]
  %v107 = vperm.slane %v105, 0
  %v113 = vunpack.c.l.b16 %v101
  %v114 = vunpack.c.l.b16 %v102
  %v115 = vunpack.c.l.b16 %v103
  %v116 = vunpack.c.l.b16 %v104
  %v117 = vpack.c.b16 %v114, %v113
  %v118 = vpack.c.b16 %v116, %v115
  %vm120 = vcmask 220160
  %v122 = vsel %vm120, %v72, 0
  %v125 = vsel %vm120, %v73, 0
  %v128 = vsel %vm120, %v74, 0
  %v131 = vsel %vm120, %v75, 0
  %v134 = vsel %vm120, %v76, 0
  %v137 = vsel %vm120, %v77, 0
  %v140 = vsel %vm120, %v78, 0
  %v143 = vsel %vm120, %v79, 0
  %v146 = vsel %vm120, %v80, 0
  %v149 = vsel %vm120, %v81, 0
  %v152 = vsel %vm120, %v82, 0
  %v155 = vsel %vm120, %v83, 0
  %v158 = vsel %vm120, %v84, 0
  %v161 = vsel %vm120, %v85, 0
  %v164 = vsel %vm120, %v86, 0
  %v167 = vsel %vm120, %v87, 0
  %v170 = vsel %vm120, %v88, 0
  %v173 = vsel %vm120, %v89, 0
  %v176 = vsel %vm120, %v90, 0
  %v179 = vsel %vm120, %v91, 0
  %v182 = vsel %vm120, %v92, 0
  %v185 = vsel %vm120, %v93, 0
  %v188 = vsel %vm120, %v94, 0
  %v191 = vsel %vm120, %v95, 0
  %v194 = vsel %vm120, %v96, 0
  %v197 = vsel %vm120, %v97, 0
  %v200 = vsel %vm120, %v98, 0
  %v203 = vsel %vm120, %v99, 0
  %v206 = vsel %vm120, %v100, 0
  %vm208 = vcmask 1044480
  %vm209 = vcmask 1045504
  %v210 = vsel %vm208, 4294967295, 65535
  %v211 = vsel %vm209, %v210, 0
  %v213 = vand.u32 %v118, %v211
  %215 = vmatpush.bf16.msra.mxu0 0
  %216 = vmatpush.bf16.msra.mxu0 0
  %217 = vmatpush.bf16.msra.mxu0 0
  %218 = vmatpush.bf16.msra.mxu0 0
  %219 = vmatpush.bf16.msra.mxu0 0
  %220 = vmatpush.bf16.msra.mxu0 0
  %221 = vmatpush.bf16.msra.mxu0 %v213
  %222 = vmatpush.bf16.msra.mxu0 %v117
  %223 = vmatmul.bf16.gmra.mxu0 %v122
  %v224 = vpop.f32.mrf.mxu0
  %v225 = vadd.f32 %v107, %v224
  %v226 = vpop.f32.mrf.mxu0
  %v227 = vadd.f32 %v107, %v226
  %228 = vmatmul.bf16.gmra.mxu0 %v125
  %v229 = vpop.f32.mrf.mxu0
  %v230 = vadd.f32 %v107, %v229
  %v231 = vpop.f32.mrf.mxu0
  %v232 = vadd.f32 %v107, %v231
  %233 = vmatmul.bf16.gmra.mxu0 %v128
  %v234 = vpop.f32.mrf.mxu0
  %v235 = vadd.f32 %v107, %v234
  %v236 = vpop.f32.mrf.mxu0
  %v237 = vadd.f32 %v107, %v236
  %238 = vmatmul.bf16.gmra.mxu0 %v131
  %v239 = vpop.f32.mrf.mxu0
  %v240 = vadd.f32 %v107, %v239
  %v241 = vpop.f32.mrf.mxu0
  %v242 = vadd.f32 %v107, %v241
  %243 = vmatmul.bf16.gmra.mxu0 %v134
  %v244 = vpop.f32.mrf.mxu0
  %v245 = vadd.f32 %v107, %v244
  %v246 = vpop.f32.mrf.mxu0
  %v247 = vadd.f32 %v107, %v246
  %248 = vmatmul.bf16.gmra.mxu0 %v137
  %v249 = vpop.f32.mrf.mxu0
  %v250 = vadd.f32 %v107, %v249
  %v251 = vpop.f32.mrf.mxu0
  %v252 = vadd.f32 %v107, %v251
  %253 = vmatmul.bf16.gmra.mxu0 %v140
  %v254 = vpop.f32.mrf.mxu0
  %v255 = vadd.f32 %v107, %v254
  %v256 = vpop.f32.mrf.mxu0
  %v257 = vadd.f32 %v107, %v256
  %258 = vmatmul.bf16.gmra.mxu0 %v143
  %v259 = vpop.f32.mrf.mxu0
  %v260 = vadd.f32 %v107, %v259
  %v261 = vpop.f32.mrf.mxu0
  %v262 = vadd.f32 %v107, %v261
  %263 = vmatmul.bf16.gmra.mxu0 %v146
  %v264 = vpop.f32.mrf.mxu0
  %v265 = vadd.f32 %v107, %v264
  %v266 = vpop.f32.mrf.mxu0
  %v267 = vadd.f32 %v107, %v266
  %268 = vmatmul.bf16.gmra.mxu0 %v149
  %v269 = vpop.f32.mrf.mxu0
  %v270 = vadd.f32 %v107, %v269
  %v271 = vpop.f32.mrf.mxu0
  %v272 = vadd.f32 %v107, %v271
  %273 = vmatmul.bf16.gmra.mxu0 %v152
  %v274 = vpop.f32.mrf.mxu0
  %v275 = vadd.f32 %v107, %v274
  %v276 = vpop.f32.mrf.mxu0
  %v277 = vadd.f32 %v107, %v276
  %278 = vmatmul.bf16.gmra.mxu0 %v155
  %v279 = vpop.f32.mrf.mxu0
  %v280 = vadd.f32 %v107, %v279
  %v281 = vpop.f32.mrf.mxu0
  %v282 = vadd.f32 %v107, %v281
  %283 = vmatmul.bf16.gmra.mxu0 %v158
  %v284 = vpop.f32.mrf.mxu0
  %v285 = vadd.f32 %v107, %v284
  %v286 = vpop.f32.mrf.mxu0
  %v287 = vadd.f32 %v107, %v286
  %288 = vmatmul.bf16.gmra.mxu0 %v161
  %v289 = vpop.f32.mrf.mxu0
  %v290 = vadd.f32 %v107, %v289
  %v291 = vpop.f32.mrf.mxu0
  %v292 = vadd.f32 %v107, %v291
  %293 = vmatmul.bf16.gmra.mxu0 %v164
  %v294 = vpop.f32.mrf.mxu0
  %v295 = vadd.f32 %v107, %v294
  %v296 = vpop.f32.mrf.mxu0
  %v297 = vadd.f32 %v107, %v296
  %298 = vmatmul.bf16.gmra.mxu0 %v167
  %v299 = vpop.f32.mrf.mxu0
  %v300 = vadd.f32 %v107, %v299
  %v301 = vpop.f32.mrf.mxu0
  %v302 = vadd.f32 %v107, %v301
  %303 = vmatmul.bf16.gmra.mxu0 %v170
  %v304 = vpop.f32.mrf.mxu0
  %v305 = vadd.f32 %v107, %v304
  %v306 = vpop.f32.mrf.mxu0
  %v307 = vadd.f32 %v107, %v306
  %308 = vmatmul.bf16.gmra.mxu0 %v173
  %v309 = vpop.f32.mrf.mxu0
  %v310 = vadd.f32 %v107, %v309
  %v311 = vpop.f32.mrf.mxu0
  %v312 = vadd.f32 %v107, %v311
  %313 = vmatmul.bf16.gmra.mxu0 %v176
  %v314 = vpop.f32.mrf.mxu0
  %v315 = vadd.f32 %v107, %v314
  %v316 = vpop.f32.mrf.mxu0
  %v317 = vadd.f32 %v107, %v316
  %318 = vmatmul.bf16.gmra.mxu0 %v179
  %v319 = vpop.f32.mrf.mxu0
  %v320 = vadd.f32 %v107, %v319
  %v321 = vpop.f32.mrf.mxu0
  %v322 = vadd.f32 %v107, %v321
  %323 = vmatmul.bf16.gmra.mxu0 %v182
  %v324 = vpop.f32.mrf.mxu0
  %v325 = vadd.f32 %v107, %v324
  %v326 = vpop.f32.mrf.mxu0
  %v327 = vadd.f32 %v107, %v326
  %328 = vmatmul.bf16.gmra.mxu0 %v185
  %v329 = vpop.f32.mrf.mxu0
  %v330 = vadd.f32 %v107, %v329
  %v331 = vpop.f32.mrf.mxu0
  %v332 = vadd.f32 %v107, %v331
  %333 = vmatmul.bf16.gmra.mxu0 %v188
  %v334 = vpop.f32.mrf.mxu0
  %v335 = vadd.f32 %v107, %v334
  %v336 = vpop.f32.mrf.mxu0
  %v337 = vadd.f32 %v107, %v336
  %338 = vmatmul.bf16.gmra.mxu0 %v191
  %v339 = vpop.f32.mrf.mxu0
  %v340 = vadd.f32 %v107, %v339
  %v341 = vpop.f32.mrf.mxu0
  %v342 = vadd.f32 %v107, %v341
  %343 = vmatmul.bf16.gmra.mxu0 %v194
  %v344 = vpop.f32.mrf.mxu0
  %v345 = vadd.f32 %v107, %v344
  %v346 = vpop.f32.mrf.mxu0
  %v347 = vadd.f32 %v107, %v346
  %348 = vmatmul.bf16.gmra.mxu0 %v197
  %v349 = vpop.f32.mrf.mxu0
  %v350 = vadd.f32 %v107, %v349
  %v351 = vpop.f32.mrf.mxu0
  %v352 = vadd.f32 %v107, %v351
  %353 = vmatmul.bf16.gmra.mxu0 %v200
  %v354 = vpop.f32.mrf.mxu0
  %v355 = vadd.f32 %v107, %v354
  %v356 = vpop.f32.mrf.mxu0
  %v357 = vadd.f32 %v107, %v356
  %358 = vmatmul.bf16.gmra.mxu0 %v203
  %v359 = vpop.f32.mrf.mxu0
  %v360 = vadd.f32 %v107, %v359
  %v361 = vpop.f32.mrf.mxu0
  %v362 = vadd.f32 %v107, %v361
  %363 = vmatmul.bf16.gmra.mxu0 %v206
  %v364 = vpop.f32.mrf.mxu0
  %v365 = vadd.f32 %v107, %v364
  %v366 = vpop.f32.mrf.mxu0
  %367 = vdwg.mxu0
  %368 = vst [vmem:[%s3] sm:$0xff] %v225
  %369 = vst [vmem:[%s3 + $0x8] sm:$0xff] %v227
  %370 = vst [vmem:[%s3 + $0x10] sm:$0xff] %v230
  %371 = vst [vmem:[%s3 + $0x18] sm:$0xff] %v232
  %372 = vst [vmem:[%s3 + $0x20] sm:$0xff] %v235
  %373 = vst [vmem:[%s3 + $0x28] sm:$0xff] %v237
  %374 = vst [vmem:[%s3 + $0x30] sm:$0xff] %v240
  %375 = vst [vmem:[%s3 + $0x38] sm:$0xff] %v242
  %376 = vst [vmem:[%s3 + $0x40] sm:$0xff] %v245
  %377 = vst [vmem:[%s3 + $0x48] sm:$0xff] %v247
  %378 = vst [vmem:[%s3 + $0x50] sm:$0xff] %v250
  %379 = vst [vmem:[%s3 + $0x58] sm:$0xff] %v252
  %380 = vst [vmem:[%s3 + $0x60] sm:$0xff] %v255
  %381 = vst [vmem:[%s3 + $0x68] sm:$0xff] %v257
  %382 = vst [vmem:[%s3 + $0x70] sm:$0xff] %v260
  %383 = vst [vmem:[%s3 + $0x78] sm:$0xff] %v262
  %384 = vst [vmem:[%s3 + $0x80] sm:$0xff] %v265
  %385 = vst [vmem:[%s3 + $0x88] sm:$0xff] %v267
  %386 = vst [vmem:[%s3 + $0x90] sm:$0xff] %v270
  %387 = vst [vmem:[%s3 + $0x98] sm:$0xff] %v272
  %388 = vst [vmem:[%s3 + $0xa0] sm:$0xff] %v275
  %389 = vst [vmem:[%s3 + $0xa8] sm:$0xff] %v277
  %390 = vst [vmem:[%s3 + $0xb0] sm:$0xff] %v280
  %391 = vst [vmem:[%s3 + $0xb8] sm:$0xff] %v282
  %392 = vst [vmem:[%s3 + $0xc0] sm:$0xff] %v285
  %393 = vst [vmem:[%s3 + $0xc8] sm:$0xff] %v287
  %394 = vst [vmem:[%s3 + $0xd0] sm:$0xff] %v290
  %395 = vst [vmem:[%s3 + $0xd8] sm:$0xff] %v292
  %396 = vst [vmem:[%s3 + $0xe0] sm:$0xff] %v295
  %397 = vst [vmem:[%s3 + $0xe8] sm:$0xff] %v297
  %398 = vst [vmem:[%s3 + $0xf0] sm:$0xff] %v300
  %399 = vst [vmem:[%s3 + $0xf8] sm:$0xff] %v302
  %400 = vst [vmem:[%s3 + $0x100] sm:$0xff] %v305
  %401 = vst [vmem:[%s3 + $0x108] sm:$0xff] %v307
  %402 = vst [vmem:[%s3 + $0x110] sm:$0xff] %v310
  %403 = vst [vmem:[%s3 + $0x118] sm:$0xff] %v312
  %404 = vst [vmem:[%s3 + $0x120] sm:$0xff] %v315
  %405 = vst [vmem:[%s3 + $0x128] sm:$0xff] %v317
  %406 = vst [vmem:[%s3 + $0x130] sm:$0xff] %v320
  %407 = vst [vmem:[%s3 + $0x138] sm:$0xff] %v322
  %408 = vst [vmem:[%s3 + $0x140] sm:$0xff] %v325
  %409 = vst [vmem:[%s3 + $0x148] sm:$0xff] %v327
  %410 = vst [vmem:[%s3 + $0x150] sm:$0xff] %v330
  %411 = vst [vmem:[%s3 + $0x158] sm:$0xff] %v332
  %412 = vst [vmem:[%s3 + $0x160] sm:$0xff] %v335
  %413 = vst [vmem:[%s3 + $0x168] sm:$0xff] %v337
  %414 = vst [vmem:[%s3 + $0x170] sm:$0xff] %v340
  %415 = vst [vmem:[%s3 + $0x178] sm:$0xff] %v342
  %416 = vst [vmem:[%s3 + $0x180] sm:$0xff] %v345
  %417 = vst [vmem:[%s3 + $0x188] sm:$0xff] %v347
  %418 = vst [vmem:[%s3 + $0x190] sm:$0xff] %v350
  %419 = vst [vmem:[%s3 + $0x198] sm:$0xff] %v352
  %420 = vst [vmem:[%s3 + $0x1a0] sm:$0xff] %v355
  %421 = vst [vmem:[%s3 + $0x1a8] sm:$0xff] %v357
  %422 = vst [vmem:[%s3 + $0x1b0] sm:$0xff] %v360
  %423 = vst [vmem:[%s3 + $0x1b8] sm:$0xff] %v362
  %424 = vst [vmem:[%s3 + $0x1c0] sm:$0x3] %v365
  // Predicated region
  $region14: #{nasnet_forward.3} parent=0 // pred_check
    _
  $region15: #{nasnet_forward.3} parent=0 // pred_check_branch
    %426 = sbr.rel (0) target = $region17
  $region16: #{nasnet_forward.3} parent=0 // pred_region
    _
  $region17: #{nasnet_forward.3} parent=0 // pred_fallthru
    _
  // Predicated region
  $region18: #{nasnet_forward.3} parent=0 // pred_check
    _
  $region19: #{nasnet_forward.3} parent=0 // pred_check_branch
    %428 = sbr.rel (0) target = $region21
  $region20: #{nasnet_forward.3} parent=0 // pred_region
    _
  $region21: #{nasnet_forward.3} parent=0 // pred_fallthru
    _

// kernel: nasnet_forward.5
$region0: #{nasnet_forward.5}
  #allocation0 [shape = 'u32[]', space=smem, size = 0x4, offset = 0x4, fixed_abs, tag = 'smem constant byte address 0x4 - core index']
  #allocation1 [shape = 'u32[72,128]{1,0:T(1,128)}', space=vmem, size = 0x9000, scoped, tag = 'internal scratch']
  %s0 = inlined_call_operand.vmem [shape: bf16[2,225,384], index: 0, kind: input, shape index: {}]
  %s1 = inlined_call_operand.vmem [shape: bf16[384,384], index: 1, kind: input, shape index: {}]
  %s2 = inlined_call_operand.vmem [shape: f32[1,384], index: 2, kind: input, shape index: {}]
  %s3 = inlined_call_operand.vmem [shape: bf16[384,128], index: 3, kind: input, shape index: {}]
  %s4 = inlined_call_operand.vmem [shape: f32[1,128], index: 4, kind: input, shape index: {}]
  %s5 = inlined_call_operand.hbm [shape: f32[2,1,128], index: 5, kind: output, shape index: {}]
  %s6 = sld [smem:[#allocation0]]
  $region53: #{nasnet_forward.5} parent=0
    _
  %s8 = ssub.s32 1, %s6
  %s9 = scalar_select 0, %s8, %s6
  $region1: #{nasnet_forward.5} parent=0
    #allocation2 [shape = 'u8[1024]{0}', space=vmem, size = 0x400, scoped, tag = 'output window, operand 0']
    #allocation3 [shape = 's32[2]{0}', space=sflag, size = 0x8, scoped, tag = 'scoped memory for nasnet_forward.5']
    %10 = vsyncpa [#allocation3], 0
    %s11 = scalar_lea.sflag [#allocation3], 1
    %12 = vsyncpa %s11, 0
    loop: start=0, step=1, limit=4
    $region2: #{nasnet_forward.5} parent=1 // loop_pre_header
      _
    $region3: #{nasnet_forward.5} parent=1 // loop_header
      %s14 = sphi 0, %s18
      %p15 = scmp.ge.s32.totalorder %s14, 4
      %s24 = sphi 0, %s26
      %s27 = sphi 0, %s24
      %s28 = sphi 0, %s27
      %s44 = sphi 0, %s28
      %s48 = sphi 0, %s48
      %s50 = sphi 0, %s48
      %s51 = sphi 0, %s50
      %s65 = sphi 0, %s51
      %s69 = sphi 0, %s69
      %s71 = sphi 0, %s69
      %s72 = sphi 0, %s71
      %s86 = sphi 0, %s72
      %s90 = sphi 0, %s90
      %s92 = sphi 0, %s90
      %s93 = sphi 0, %s92
      %s107 = sphi 0, %s93
      %s111 = sphi 0, %s111
      %s113 = sphi 0, %s111
      %s114 = sphi 0, %s113
      %s128 = sphi 0, %s114
      %s134 = sphi 0, %s136
      %s137 = sphi 0, %s134
      %s138 = sphi 0, %s137
      %s154 = sphi 0, %s138
    $region4: #{nasnet_forward.5} parent=1 // loop_header_branch
      %17 = sbr.rel (%p15) target = $region8
    $region5: #{nasnet_forward.5} parent=1 // loop_body
      %s19 = ssub.s32 %s14, 1
      %s20 = ssub.s32 %s14, 2
      %s21 = sadd.s32 %s14, 1
      %s22 = ssub.s32 %s14, %s21
      %p23 = scmp.eq.s32.totalorder %s22, 0
      %s25 = sadd.s32 %s24, 1
      %s26 = scalar_select %p23, %s24, %s25
      %p29 = pneg %p23
      %p30 = scmp.eq.s32.totalorder %s14, 1
      %p31 = por %p29, %p30
      %p32 = scmp.ne.s32.totalorder %s24, %s27
      %p33 = scmp.eq.s32.totalorder %s14, 0
      %p34 = por %p32, %p33
      %p35 = scmp.ne.s32.totalorder %s24, %s27
      %p36 = scmp.eq.s32.totalorder %s19, 1
      %p37 = por %p35, %p36
      %p38 = scmp.ne.s32.totalorder %s27, %s28
      %p39 = scmp.eq.s32.totalorder %s19, 0
      %p40 = por %p38, %p39
      %p41 = scmp.ne.s32.totalorder %s27, %s28
      %p42 = scmp.eq.s32.totalorder %s20, 1
      %p43 = por %p41, %p42
      %p45 = scmp.ne.s32.totalorder %s28, %s44
      %p46 = scmp.eq.s32.totalorder %s20, 0
      %p47 = por %p45, %p46
      %s49 = sadd.s32 %s48, 1
      %p52 = scmp.eq.s32.totalorder %s14, 1
      %p53 = scmp.ne.s32.totalorder %s48, %s50
      %p54 = scmp.eq.s32.totalorder %s14, 0
      %p55 = por %p53, %p54
      %p56 = scmp.ne.s32.totalorder %s48, %s50
      %p57 = scmp.eq.s32.totalorder %s19, 1
      %p58 = por %p56, %p57
      %p59 = scmp.ne.s32.totalorder %s50, %s51
      %p60 = scmp.eq.s32.totalorder %s19, 0
      %p61 = por %p59, %p60
      %p62 = scmp.ne.s32.totalorder %s50, %s51
      %p63 = scmp.eq.s32.totalorder %s20, 1
      %p64 = por %p62, %p63
      %p66 = scmp.ne.s32.totalorder %s51, %s65
      %p67 = scmp.eq.s32.totalorder %s20, 0
      %p68 = por %p66, %p67
      %s70 = sadd.s32 %s69, 1
      %p73 = scmp.eq.s32.totalorder %s14, 1
      %p74 = scmp.ne.s32.totalorder %s69, %s71
      %p75 = scmp.eq.s32.totalorder %s14, 0
      %p76 = por %p74, %p75
      %p77 = scmp.ne.s32.totalorder %s69, %s71
      %p78 = scmp.eq.s32.totalorder %s19, 1
      %p79 = por %p77, %p78
      %p80 = scmp.ne.s32.totalorder %s71, %s72
      %p81 = scmp.eq.s32.totalorder %s19, 0
      %p82 = por %p80, %p81
      %p83 = scmp.ne.s32.totalorder %s71, %s72
      %p84 = scmp.eq.s32.totalorder %s20, 1
      %p85 = por %p83, %p84
      %p87 = scmp.ne.s32.totalorder %s72, %s86
      %p88 = scmp.eq.s32.totalorder %s20, 0
      %p89 = por %p87, %p88
      %s91 = sadd.s32 %s90, 1
      %p94 = scmp.eq.s32.totalorder %s14, 1
      %p95 = scmp.ne.s32.totalorder %s90, %s92
      %p96 = scmp.eq.s32.totalorder %s14, 0
      %p97 = por %p95, %p96
      %p98 = scmp.ne.s32.totalorder %s90, %s92
      %p99 = scmp.eq.s32.totalorder %s19, 1
      %p100 = por %p98, %p99
      %p101 = scmp.ne.s32.totalorder %s92, %s93
      %p102 = scmp.eq.s32.totalorder %s19, 0
      %p103 = por %p101, %p102
      %p104 = scmp.ne.s32.totalorder %s92, %s93
      %p105 = scmp.eq.s32.totalorder %s20, 1
      %p106 = por %p104, %p105
      %p108 = scmp.ne.s32.totalorder %s93, %s107
      %p109 = scmp.eq.s32.totalorder %s20, 0
      %p110 = por %p108, %p109
      %s112 = sadd.s32 %s111, 1
      %p115 = scmp.eq.s32.totalorder %s14, 1
      %p116 = scmp.ne.s32.totalorder %s111, %s113
      %p117 = scmp.eq.s32.totalorder %s14, 0
      %p118 = por %p116, %p117
      %p119 = scmp.ne.s32.totalorder %s111, %s113
      %p120 = scmp.eq.s32.totalorder %s19, 1
      %p121 = por %p119, %p120
      %p122 = scmp.ne.s32.totalorder %s113, %s114
      %p123 = scmp.eq.s32.totalorder %s19, 0
      %p124 = por %p122, %p123
      %p125 = scmp.ne.s32.totalorder %s113, %s114
      %p126 = scmp.eq.s32.totalorder %s20, 1
      %p127 = por %p125, %p126
      %p129 = scmp.ne.s32.totalorder %s114, %s128
      %p130 = scmp.eq.s32.totalorder %s20, 0
      %p131 = por %p129, %p130
      %s132 = ssub.s32 %s14, %s21
      %p133 = scmp.eq.s32.totalorder %s132, 0
      %s135 = sadd.s32 %s134, 1
      %s136 = scalar_select %p133, %s134, %s135
      %p139 = pneg %p133
      %p140 = scmp.eq.s32.totalorder %s14, 1
      %p141 = por %p139, %p140
      %p142 = scmp.ne.s32.totalorder %s134, %s137
      %p143 = scmp.eq.s32.totalorder %s14, 0
      %p144 = por %p142, %p143
      %p145 = scmp.ne.s32.totalorder %s134, %s137
      %p146 = scmp.eq.s32.totalorder %s19, 1
      %p147 = por %p145, %p146
      %p148 = scmp.ne.s32.totalorder %s137, %s138
      %p149 = scmp.eq.s32.totalorder %s19, 0
      %p150 = por %p148, %p149
      %p151 = scmp.ne.s32.totalorder %s137, %s138
      %p152 = scmp.eq.s32.totalorder %s20, 1
      %p153 = por %p151, %p152
      %p155 = scmp.ne.s32.totalorder %s138, %s154
      %p156 = scmp.eq.s32.totalorder %s20, 0
      %p157 = por %p155, %p156
      %p158 = scmp.le.s32.totalorder 1, %s14
      %p159 = scmp.lt.s32.totalorder %s14, 3
      %p160 = pnand %p158, %p159
      %p161 = pneg %p160
      // Predicated region
      $region9: #{nasnet_forward.5} parent=5 // pred_check
        _
      $region10: #{nasnet_forward.5} parent=5 // pred_check_branch
        %163 = sbr.rel (%p160) target = $region12
      $region11: #{nasnet_forward.5} parent=5 // pred_region
        %s164 = ssub.s32 %s14, 1
        // Predicated region
        $region13: #{nasnet_forward.5} parent=11 // pred_check
          %p165 = pneg %p61
        $region14: #{nasnet_forward.5} parent=11 // pred_check_branch
          %167 = sbr.rel (%p165) target = $region16
        $region15: #{nasnet_forward.5} parent=11 // pred_region
          _
        $region16: #{nasnet_forward.5} parent=11 // pred_fallthru
          _
        // Predicated region
        $region17: #{nasnet_forward.5} parent=11 // pred_check
          %p168 = pneg %p82
        $region18: #{nasnet_forward.5} parent=11 // pred_check_branch
          %170 = sbr.rel (%p168) target = $region20
        $region19: #{nasnet_forward.5} parent=11 // pred_region
          _
        $region20: #{nasnet_forward.5} parent=11 // pred_fallthru
          _
        // Predicated region
        $region21: #{nasnet_forward.5} parent=11 // pred_check
          %p171 = pneg %p103
        $region22: #{nasnet_forward.5} parent=11 // pred_check_branch
          %173 = sbr.rel (%p171) target = $region24
        $region23: #{nasnet_forward.5} parent=11 // pred_region
          _
        $region24: #{nasnet_forward.5} parent=11 // pred_fallthru
          _
        // Predicated region
        $region25: #{nasnet_forward.5} parent=11 // pred_check
          %p174 = pneg %p124
        $region26: #{nasnet_forward.5} parent=11 // pred_check_branch
          %176 = sbr.rel (%p174) target = $region28
        $region27: #{nasnet_forward.5} parent=11 // pred_region
          _
        $region28: #{nasnet_forward.5} parent=11 // pred_fallthru
          _
      $region12: #{nasnet_forward.5} parent=5 // pred_fallthru
        _
      %p177 = scmp.lt.s32.totalorder %s14, 2
      // Predicated region
      $region29: #{nasnet_forward.5} parent=5 // pred_check
        %p178 = pneg %p177
      $region30: #{nasnet_forward.5} parent=5 // pred_check_branch
        %180 = sbr.rel (%p178) target = $region32
      $region31: #{nasnet_forward.5} parent=5 // pred_region
        // Predicated region
        $region33: #{nasnet_forward.5} parent=31 // pred_check
          %p181 = pneg %p34
        $region34: #{nasnet_forward.5} parent=31 // pred_check_branch
          %183 = sbr.rel (%p181) target = $region36
        $region35: #{nasnet_forward.5} parent=31 // pred_region
          %p184 = scmp.lt.s32.totalorder %s14, 1
          %s185 = scalar_select %p184, %s14, 1
          %s186 = smul.addr %s185, 87
          %s187 = smul.addr %s186, 4
          %s188 = scalar_lea.vmem %s0, %s187
        $region36: #{nasnet_forward.5} parent=31 // pred_fallthru
          _
      $region32: #{nasnet_forward.5} parent=5 // pred_fallthru
        _
      %p189 = scmp.le.s32.totalorder 1, %s14
      %p190 = scmp.lt.s32.totalorder %s14, 3
      %p191 = pnand %p189, %p190
      %p192 = pneg %p191
      // Predicated region
      $region37: #{nasnet_forward.5} parent=5 // pred_check
        _
      $region38: #{nasnet_forward.5} parent=5 // pred_check_branch
        %194 = sbr.rel (%p191) target = $region40
      $region39: #{nasnet_forward.5} parent=5 // pred_region
        %s195 = ssub.s32 %s14, 1
        %p196 = scmp.lt.s32.totalorder %s19, 1
        %s197 = scalar_select %p196, %s19, 1
        %s198 = smul.addr %s197, 87
        %s199 = smul.addr %s198, 4
        %s200 = scalar_lea.vmem %s0, %s199
        %p201 = pneg %p40
        %p202 = pneg %p37
        %p203 = pneg %p61
        %p204 = pneg %p58
        %p205 = pneg %p82
        %p206 = pneg %p79
        %p207 = pneg %p103
        %p208 = pneg %p100
        %p209 = pneg %p124
        %p210 = pneg %p121
        %p211 = pneg %p150
        %p212 = pneg %p147
        %s213 = sand.u32 %s137, 1
        %s214 = scalar_lea.sflag [#allocation3], %s213
        %s215 = sand.u32 %s137, 1
        %s216 = scalar_lea.vmem [#allocation2], %s215
        %p217 = scmp.lt.s32.totalorder %s19, 1
        %s218 = scalar_select %p217, %s19, 1
        %s219 = smul.addr %s218, 87
        %s220 = smul.addr %s219, 4
        %s221 = scalar_lea.vmem %s0, %s220
        %v222 = vld [vmem:[%s221] sm:$0xff]
        %v223 = vld [vmem:[%s221 + $0x8] sm:$0xf]
        %v224 = vld [vmem:[%s221 + $0xc] sm:$0xff]
        %v225 = vld [vmem:[%s221 + $0x14] sm:$0xf]
        %v226 = vld [vmem:[%s221 + $0x18] sm:$0xff]
        %v227 = vld [vmem:[%s221 + $0x20] sm:$0xf]
        %v228 = vld [vmem:[%s221 + $0x24] sm:$0xff]
        %v229 = vld [vmem:[%s221 + $0x2c] sm:$0xf]
        %v230 = vld [vmem:[%s221 + $0x30] sm:$0xff]
        %v231 = vld [vmem:[%s221 + $0x38] sm:$0xf]
        %v232 = vld [vmem:[%s221 + $0x3c] sm:$0xff]
        %v233 = vld [vmem:[%s221 + $0x44] sm:$0xf]
        %v234 = vld [vmem:[%s221 + $0x48] sm:$0xff]
        %v235 = vld [vmem:[%s221 + $0x50] sm:$0xf]
        %v236 = vld [vmem:[%s221 + $0x54] sm:$0xff]
        %v237 = vld [vmem:[%s221 + $0x5c] sm:$0xf]
        %v238 = vld [vmem:[%s221 + $0x60] sm:$0xff]
        %v239 = vld [vmem:[%s221 + $0x68] sm:$0xf]
        %v240 = vld [vmem:[%s221 + $0x6c] sm:$0xff]
        %v241 = vld [vmem:[%s221 + $0x74] sm:$0xf]
        %v242 = vld [vmem:[%s221 + $0x78] sm:$0xff]
        %v243 = vld [vmem:[%s221 + $0x80] sm:$0xf]
        %v244 = vld [vmem:[%s221 + $0x84] sm:$0xff]
        %v245 = vld [vmem:[%s221 + $0x8c] sm:$0xf]
        %v246 = vld [vmem:[%s221 + $0x90] sm:$0xff]
        %v247 = vld [vmem:[%s221 + $0x98] sm:$0xf]
        %v248 = vld [vmem:[%s221 + $0x9c] sm:$0xff]
        %v249 = vld [vmem:[%s221 + $0xa4] sm:$0xf]
        %v250 = vld [vmem:[%s221 + $0xa8] sm:$0xff]
        %v251 = vld [vmem:[%s221 + $0xb0] sm:$0xf]
        %v252 = vld [vmem:[%s221 + $0xb4] sm:$0xff]
        %v253 = vld [vmem:[%s221 + $0xbc] sm:$0xf]
        %v254 = vld [vmem:[%s221 + $0xc0] sm:$0xff]
        %v255 = vld [vmem:[%s221 + $0xc8] sm:$0xf]
        %v256 = vld [vmem:[%s221 + $0xcc] sm:$0xff]
        %v257 = vld [vmem:[%s221 + $0xd4] sm:$0xf]
        %v258 = vld [vmem:[%s221 + $0xd8] sm:$0xff]
        %v259 = vld [vmem:[%s221 + $0xe0] sm:$0xf]
        %v260 = vld [vmem:[%s221 + $0xe4] sm:$0xff]
        %v261 = vld [vmem:[%s221 + $0xec] sm:$0xf]
        %v262 = vld [vmem:[%s221 + $0xf0] sm:$0xff]
        %v263 = vld [vmem:[%s221 + $0xf8] sm:$0xf]
        %v264 = vld [vmem:[%s221 + $0xfc] sm:$0xff]
        %v265 = vld [vmem:[%s221 + $0x104] sm:$0xf]
        %v266 = vld [vmem:[%s221 + $0x108] sm:$0xff]
        %v267 = vld [vmem:[%s221 + $0x110] sm:$0xf]
        %v268 = vld [vmem:[%s221 + $0x114] sm:$0xff]
        %v269 = vld [vmem:[%s221 + $0x11c] sm:$0xf]
        %v270 = vld [vmem:[%s221 + $0x120] sm:$0xff]
        %v271 = vld [vmem:[%s221 + $0x128] sm:$0xf]
        %v272 = vld [vmem:[%s221 + $0x12c] sm:$0xff]
        %v273 = vld [vmem:[%s221 + $0x134] sm:$0xf]
        %v274 = vld [vmem:[%s221 + $0x138] sm:$0xff]
        %v275 = vld [vmem:[%s221 + $0x140] sm:$0xf]
        %v276 = vld [vmem:[%s221 + $0x144] sm:$0xff]
        %v277 = vld [vmem:[%s221 + $0x14c] sm:$0xf]
        %v278 = vld [vmem:[%s221 + $0x150] sm:$0x11]
        %v279 = vld [vmem:[%s221 + $0x158] sm:$0x1]
        %v280 = vld [vmem:[%s1] sm:$0xff]
        %v281 = vld [vmem:[%s1 + $0x8] sm:$0xf]
        %v282 = vld [vmem:[%s1 + $0xc] sm:$0xff]
        %v283 = vld [vmem:[%s1 + $0x14] sm:$0xf]
        %v284 = vld [vmem:[%s1 + $0x18] sm:$0xff]
        %v285 = vld [vmem:[%s1 + $0x20] sm:$0xf]
        %v286 = vld [vmem:[%s1 + $0x24] sm:$0xff]
        %v287 = vld [vmem:[%s1 + $0x2c] sm:$0xf]
        %v288 = vld [vmem:[%s1 + $0x30] sm:$0xff]
        %v289 = vld [vmem:[%s1 + $0x38] sm:$0xf]
        %v290 = vld [vmem:[%s1 + $0x3c] sm:$0xff]
        %v291 = vld [vmem:[%s1 + $0x44] sm:$0xf]
        %v292 = vld [vmem:[%s1 + $0x48] sm:$0xff]
        %v293 = vld [vmem:[%s1 + $0x50] sm:$0xf]
        %v294 = vld [vmem:[%s1 + $0x54] sm:$0xff]
        %v295 = vld [vmem:[%s1 + $0x5c] sm:$0xf]
        %v296 = vld [vmem:[%s1 + $0x60] sm:$0xff]
        %v297 = vld [vmem:[%s1 + $0x68] sm:$0xf]
        %v298 = vld [vmem:[%s1 + $0x6c] sm:$0xff]
        %v299 = vld [vmem:[%s1 + $0x74] sm:$0xf]
        %v300 = vld [vmem:[%s1 + $0x78] sm:$0xff]
        %v301 = vld [vmem:[%s1 + $0x80] sm:$0xf]
        %v302 = vld [vmem:[%s1 + $0x84] sm:$0xff]
        %v303 = vld [vmem:[%s1 + $0x8c] sm:$0xf]
        %v304 = vld [vmem:[%s1 + $0x90] sm:$0xff]
        %v305 = vld [vmem:[%s1 + $0x98] sm:$0xf]
        %v306 = vld [vmem:[%s1 + $0x9c] sm:$0xff]
        %v307 = vld [vmem:[%s1 + $0xa4] sm:$0xf]
        %v308 = vld [vmem:[%s1 + $0xa8] sm:$0xff]
        %v309 = vld [vmem:[%s1 + $0xb0] sm:$0xf]
        %v310 = vld [vmem:[%s1 + $0xb4] sm:$0xff]
        %v311 = vld [vmem:[%s1 + $0xbc] sm:$0xf]
        %v312 = vld [vmem:[%s1 + $0xc0] sm:$0xff]
        %v313 = vld [vmem:[%s1 + $0xc8] sm:$0xf]
        %v314 = vld [vmem:[%s1 + $0xcc] sm:$0xff]
        %v315 = vld [vmem:[%s1 + $0xd4] sm:$0xf]
        %v316 = vld [vmem:[%s1 + $0xd8] sm:$0xff]
        %v317 = vld [vmem:[%s1 + $0xe0] sm:$0xf]
        %v318 = vld [vmem:[%s1 + $0xe4] sm:$0xff]
        %v319 = vld [vmem:[%s1 + $0xec] sm:$0xf]
        %v320 = vld [vmem:[%s1 + $0xf0] sm:$0xff]
        %v321 = vld [vmem:[%s1 + $0xf8] sm:$0xf]
        %v322 = vld [vmem:[%s1 + $0xfc] sm:$0xff]
        %v323 = vld [vmem:[%s1 + $0x104] sm:$0xf]
        %v324 = vld [vmem:[%s1 + $0x108] sm:$0xff]
        %v325 = vld [vmem:[%s1 + $0x110] sm:$0xf]
        %v326 = vld [vmem:[%s1 + $0x114] sm:$0xff]
        %v327 = vld [vmem:[%s1 + $0x11c] sm:$0xf]
        %v328 = vld [vmem:[%s1 + $0x120] sm:$0xff]
        %v329 = vld [vmem:[%s1 + $0x128] sm:$0xf]
        %v330 = vld [vmem:[%s1 + $0x12c] sm:$0xff]
        %v331 = vld [vmem:[%s1 + $0x134] sm:$0xf]
        %v332 = vld [vmem:[%s1 + $0x138] sm:$0xff]
        %v333 = vld [vmem:[%s1 + $0x140] sm:$0xf]
        %v334 = vld [vmem:[%s1 + $0x144] sm:$0xff]
        %v335 = vld [vmem:[%s1 + $0x14c] sm:$0xf]
        %v336 = vld [vmem:[%s1 + $0x150] sm:$0xff]
        %v337 = vld [vmem:[%s1 + $0x158] sm:$0xf]
        %v338 = vld [vmem:[%s1 + $0x15c] sm:$0xff]
        %v339 = vld [vmem:[%s1 + $0x164] sm:$0xf]
        %v340 = vld [vmem:[%s1 + $0x168] sm:$0xff]
        %v341 = vld [vmem:[%s1 + $0x170] sm:$0xf]
        %v342 = vld [vmem:[%s1 + $0x174] sm:$0xff]
        %v343 = vld [vmem:[%s1 + $0x17c] sm:$0xf]
        %v344 = vld [vmem:[%s1 + $0x180] sm:$0xff]
        %v345 = vld [vmem:[%s1 + $0x188] sm:$0xf]
        %v346 = vld [vmem:[%s1 + $0x18c] sm:$0xff]
        %v347 = vld [vmem:[%s1 + $0x194] sm:$0xf]
        %v348 = vld [vmem:[%s1 + $0x198] sm:$0xff]
        %v349 = vld [vmem:[%s1 + $0x1a0] sm:$0xf]
        %v350 = vld [vmem:[%s1 + $0x1a4] sm:$0xff]
        %v351 = vld [vmem:[%s1 + $0x1ac] sm:$0xf]
        %v352 = vld [vmem:[%s1 + $0x1b0] sm:$0xff]
        %v353 = vld [vmem:[%s1 + $0x1b8] sm:$0xf]
        %v354 = vld [vmem:[%s1 + $0x1bc] sm:$0xff]
        %v355 = vld [vmem:[%s1 + $0x1c4] sm:$0xf]
        %v356 = vld [vmem:[%s1 + $0x1c8] sm:$0xff]
        %v357 = vld [vmem:[%s1 + $0x1d0] sm:$0xf]
        %v358 = vld [vmem:[%s1 + $0x1d4] sm:$0xff]
        %v359 = vld [vmem:[%s1 + $0x1dc] sm:$0xf]
        %v360 = vld [vmem:[%s1 + $0x1e0] sm:$0xff]
        %v361 = vld [vmem:[%s1 + $0x1e8] sm:$0xf]
        %v362 = vld [vmem:[%s1 + $0x1ec] sm:$0xff]
        %v363 = vld [vmem:[%s1 + $0x1f4] sm:$0xf]
        %v364 = vld [vmem:[%s1 + $0x1f8] sm:$0xff]
        %v365 = vld [vmem:[%s1 + $0x200] sm:$0xf]
        %v366 = vld [vmem:[%s1 + $0x204] sm:$0xff]
        %v367 = vld [vmem:[%s1 + $0x20c] sm:$0xf]
        %v368 = vld [vmem:[%s1 + $0x210] sm:$0xff]
        %v369 = vld [vmem:[%s1 + $0x218] sm:$0xf]
        %v370 = vld [vmem:[%s1 + $0x21c] sm:$0xff]
        %v371 = vld [vmem:[%s1 + $0x224] sm:$0xf]
        %v372 = vld [vmem:[%s1 + $0x228] sm:$0xff]
        %v373 = vld [vmem:[%s1 + $0x230] sm:$0xf]
        %v374 = vld [vmem:[%s1 + $0x234] sm:$0xff]
        %v375 = vld [vmem:[%s1 + $0x23c] sm:$0xf]
        %v376 = vld [vmem:[%s2] sm:$0x7]
        %v378 = vperm.slane %v376, 0
        %v379 = vperm.slane %v376, 1
        %v380 = vperm.slane %v376, 2
        %v442 = vunpack.c.l.b16 %v222
        %v443 = vunpack.c.h.b16 %v222
        %v444 = vunpack.c.l.b16 %v223
        %v445 = vunpack.c.l.b16 %v224
        %v446 = vunpack.c.h.b16 %v224
        %v447 = vunpack.c.l.b16 %v225
        %v448 = vunpack.c.l.b16 %v226
        %v449 = vunpack.c.h.b16 %v226
        %v450 = vunpack.c.l.b16 %v227
        %v451 = vunpack.c.l.b16 %v228
        %v452 = vunpack.c.h.b16 %v228
        %v453 = vunpack.c.l.b16 %v229
        %v454 = vunpack.c.l.b16 %v230
        %v455 = vunpack.c.h.b16 %v230
        %v456 = vunpack.c.l.b16 %v231
        %v457 = vunpack.c.l.b16 %v232
        %v458 = vunpack.c.h.b16 %v232
        %v459 = vunpack.c.l.b16 %v233
        %v460 = vunpack.c.l.b16 %v234
        %v461 = vunpack.c.h.b16 %v234
        %v462 = vunpack.c.l.b16 %v235
        %v463 = vunpack.c.l.b16 %v236
        %v464 = vunpack.c.h.b16 %v236
        %v465 = vunpack.c.l.b16 %v237
        %v466 = vunpack.c.l.b16 %v238
        %v467 = vunpack.c.h.b16 %v238
        %v468 = vunpack.c.l.b16 %v239
        %v469 = vunpack.c.l.b16 %v240
        %v470 = vunpack.c.h.b16 %v240
        %v471 = vunpack.c.l.b16 %v241
        %v472 = vunpack.c.l.b16 %v242
        %v473 = vunpack.c.h.b16 %v242
        %v474 = vunpack.c.l.b16 %v243
        %v475 = vunpack.c.l.b16 %v244
        %v476 = vunpack.c.h.b16 %v244
        %v477 = vunpack.c.l.b16 %v245
        %v478 = vunpack.c.l.b16 %v246
        %v479 = vunpack.c.h.b16 %v246
        %v480 = vunpack.c.l.b16 %v247
        %v481 = vunpack.c.l.b16 %v248
        %v482 = vunpack.c.h.b16 %v248
        %v483 = vunpack.c.l.b16 %v249
        %v484 = vunpack.c.l.b16 %v250
        %v485 = vunpack.c.h.b16 %v250
        %v486 = vunpack.c.l.b16 %v251
        %v487 = vunpack.c.l.b16 %v252
        %v488 = vunpack.c.h.b16 %v252
        %v489 = vunpack.c.l.b16 %v253
        %v490 = vunpack.c.l.b16 %v254
        %v491 = vunpack.c.h.b16 %v254
        %v492 = vunpack.c.l.b16 %v255
        %v493 = vunpack.c.l.b16 %v256
        %v494 = vunpack.c.h.b16 %v256
        %v495 = vunpack.c.l.b16 %v257
        %v496 = vunpack.c.l.b16 %v258
        %v497 = vunpack.c.h.b16 %v258
        %v498 = vunpack.c.l.b16 %v259
        %v499 = vunpack.c.l.b16 %v260
        %v500 = vunpack.c.h.b16 %v260
        %v501 = vunpack.c.l.b16 %v261
        %v502 = vunpack.c.l.b16 %v262
        %v503 = vunpack.c.h.b16 %v262
        %v504 = vunpack.c.l.b16 %v263
        %v505 = vunpack.c.l.b16 %v264
        %v506 = vunpack.c.h.b16 %v264
        %v507 = vunpack.c.l.b16 %v265
        %v508 = vunpack.c.l.b16 %v266
        %v509 = vunpack.c.h.b16 %v266
        %v510 = vunpack.c.l.b16 %v267
        %v511 = vunpack.c.l.b16 %v268
        %v512 = vunpack.c.h.b16 %v268
        %v513 = vunpack.c.l.b16 %v269
        %v514 = vunpack.c.l.b16 %v270
        %v515 = vunpack.c.h.b16 %v270
        %v516 = vunpack.c.l.b16 %v271
        %v517 = vunpack.c.l.b16 %v272
        %v518 = vunpack.c.h.b16 %v272
        %v519 = vunpack.c.l.b16 %v273
        %v520 = vunpack.c.l.b16 %v274
        %v521 = vunpack.c.h.b16 %v274
        %v522 = vunpack.c.l.b16 %v275
        %v523 = vunpack.c.l.b16 %v276
        %v524 = vunpack.c.h.b16 %v276
        %v525 = vunpack.c.l.b16 %v277
        %v526 = vunpack.c.l.b16 %v278
        %v527 = vunpack.c.h.b16 %v278
        %v528 = vunpack.c.l.b16 %v279
        %v529 = vpack.c.b16 %v445, %v442
        %v530 = vpack.c.b16 %v446, %v443
        %v531 = vpack.c.b16 %v447, %v444
        %v532 = vpack.c.b16 %v451, %v448
        %v533 = vpack.c.b16 %v452, %v449
        %v534 = vpack.c.b16 %v453, %v450
        %v535 = vpack.c.b16 %v457, %v454
        %v536 = vpack.c.b16 %v458, %v455
        %v537 = vpack.c.b16 %v459, %v456
        %v538 = vpack.c.b16 %v463, %v460
        %v539 = vpack.c.b16 %v464, %v461
        %v540 = vpack.c.b16 %v465, %v462
        %v541 = vpack.c.b16 %v469, %v466
        %v542 = vpack.c.b16 %v470, %v467
        %v543 = vpack.c.b16 %v471, %v468
        %v544 = vpack.c.b16 %v475, %v472
        %v545 = vpack.c.b16 %v476, %v473
        %v546 = vpack.c.b16 %v477, %v474
        %v547 = vpack.c.b16 %v481, %v478
        %v548 = vpack.c.b16 %v482, %v479
        %v549 = vpack.c.b16 %v483, %v480
        %v550 = vpack.c.b16 %v487, %v484
        %v551 = vpack.c.b16 %v488, %v485
        %v552 = vpack.c.b16 %v489, %v486
        %v553 = vpack.c.b16 %v493, %v490
        %v554 = vpack.c.b16 %v494, %v491
        %v555 = vpack.c.b16 %v495, %v492
        %v556 = vpack.c.b16 %v499, %v496
        %v557 = vpack.c.b16 %v500, %v497
        %v558 = vpack.c.b16 %v501, %v498
        %v559 = vpack.c.b16 %v505, %v502
        %v560 = vpack.c.b16 %v506, %v503
        %v561 = vpack.c.b16 %v507, %v504
        %v562 = vpack.c.b16 %v511, %v508
        %v563 = vpack.c.b16 %v512, %v509
        %v564 = vpack.c.b16 %v513, %v510
        %v565 = vpack.c.b16 %v517, %v514
        %v566 = vpack.c.b16 %v518, %v515
        %v567 = vpack.c.b16 %v519, %v516
        %v568 = vpack.c.b16 %v523, %v520
        %v569 = vpack.c.b16 %v524, %v521
        %v570 = vpack.c.b16 %v525, %v522
        %v571 = vpack.c.b16 %v526, %v526
        %v572 = vpack.c.b16 %v527, %v527
        %v573 = vpack.c.b16 %v528, %v528
        %v715 = vunpack.c.l.b16 %v280
        %v716 = vunpack.c.h.b16 %v280
        %v717 = vunpack.c.l.b16 %v281
        %v718 = vunpack.c.l.b16 %v282
        %v719 = vunpack.c.h.b16 %v282
        %v720 = vunpack.c.l.b16 %v283
        %v721 = vunpack.c.l.b16 %v284
        %v722 = vunpack.c.h.b16 %v284
        %v723 = vunpack.c.l.b16 %v285
        %v724 = vunpack.c.l.b16 %v286
        %v725 = vunpack.c.h.b16 %v286
        %v726 = vunpack.c.l.b16 %v287
        %v727 = vunpack.c.l.b16 %v288
        %v728 = vunpack.c.h.b16 %v288
        %v729 = vunpack.c.l.b16 %v289
        %v730 = vunpack.c.l.b16 %v290
        %v731 = vunpack.c.h.b16 %v290
        %v732 = vunpack.c.l.b16 %v291
        %v733 = vunpack.c.l.b16 %v292
        %v734 = vunpack.c.h.b16 %v292
        %v735 = vunpack.c.l.b16 %v293
        %v736 = vunpack.c.l.b16 %v294
        %v737 = vunpack.c.h.b16 %v294
        %v738 = vunpack.c.l.b16 %v295
        %v739 = vunpack.c.l.b16 %v296
        %v740 = vunpack.c.h.b16 %v296
        %v741 = vunpack.c.l.b16 %v297
        %v742 = vunpack.c.l.b16 %v298
        %v743 = vunpack.c.h.b16 %v298
        %v744 = vunpack.c.l.b16 %v299
        %v745 = vunpack.c.l.b16 %v300
        %v746 = vunpack.c.h.b16 %v300
        %v747 = vunpack.c.l.b16 %v301
        %v748 = vunpack.c.l.b16 %v302
        %v749 = vunpack.c.h.b16 %v302
        %v750 = vunpack.c.l.b16 %v303
        %v751 = vunpack.c.l.b16 %v304
        %v752 = vunpack.c.h.b16 %v304
        %v753 = vunpack.c.l.b16 %v305
        %v754 = vunpack.c.l.b16 %v306
        %v755 = vunpack.c.h.b16 %v306
        %v756 = vunpack.c.l.b16 %v307
        %v757 = vunpack.c.l.b16 %v308
        %v758 = vunpack.c.h.b16 %v308
        %v759 = vunpack.c.l.b16 %v309
        %v760 = vunpack.c.l.b16 %v310
        %v761 = vunpack.c.h.b16 %v310
        %v762 = vunpack.c.l.b16 %v311
        %v763 = vunpack.c.l.b16 %v312
        %v764 = vunpack.c.h.b16 %v312
        %v765 = vunpack.c.l.b16 %v313
        %v766 = vunpack.c.l.b16 %v314
        %v767 = vunpack.c.h.b16 %v314
        %v768 = vunpack.c.l.b16 %v315
        %v769 = vunpack.c.l.b16 %v316
        %v770 = vunpack.c.h.b16 %v316
        %v771 = vunpack.c.l.b16 %v317
        %v772 = vunpack.c.l.b16 %v318
        %v773 = vunpack.c.h.b16 %v318
        %v774 = vunpack.c.l.b16 %v319
        %v775 = vunpack.c.l.b16 %v320
        %v776 = vunpack.c.h.b16 %v320
        %v777 = vunpack.c.l.b16 %v321
        %v778 = vunpack.c.l.b16 %v322
        %v779 = vunpack.c.h.b16 %v322
        %v780 = vunpack.c.l.b16 %v323
        %v781 = vunpack.c.l.b16 %v324
        %v782 = vunpack.c.h.b16 %v324
        %v783 = vunpack.c.l.b16 %v325
        %v784 = vunpack.c.l.b16 %v326
        %v785 = vunpack.c.h.b16 %v326
        %v786 = vunpack.c.l.b16 %v327
        %v787 = vunpack.c.l.b16 %v328
        %v788 = vunpack.c.h.b16 %v328
        %v789 = vunpack.c.l.b16 %v329
        %v790 = vunpack.c.l.b16 %v330
        %v791 = vunpack.c.h.b16 %v330
        %v792 = vunpack.c.l.b16 %v331
        %v793 = vunpack.c.l.b16 %v332
        %v794 = vunpack.c.h.b16 %v332
        %v795 = vunpack.c.l.b16 %v333
        %v796 = vunpack.c.l.b16 %v334
        %v797 = vunpack.c.h.b16 %v334
        %v798 = vunpack.c.l.b16 %v335
        %v799 = vunpack.c.l.b16 %v336
        %v800 = vunpack.c.h.b16 %v336
        %v801 = vunpack.c.l.b16 %v337
        %v802 = vunpack.c.l.b16 %v338
        %v803 = vunpack.c.h.b16 %v338
        %v804 = vunpack.c.l.b16 %v339
        %v805 = vunpack.c.l.b16 %v340
        %v806 = vunpack.c.h.b16 %v340
        %v807 = vunpack.c.l.b16 %v341
        %v808 = vunpack.c.l.b16 %v342
        %v809 = vunpack.c.h.b16 %v342
        %v810 = vunpack.c.l.b16 %v343
        %v811 = vunpack.c.l.b16 %v344
        %v812 = vunpack.c.h.b16 %v344
        %v813 = vunpack.c.l.b16 %v345
        %v814 = vunpack.c.l.b16 %v346
        %v815 = vunpack.c.h.b16 %v346
        %v816 = vunpack.c.l.b16 %v347
        %v817 = vunpack.c.l.b16 %v348
        %v818 = vunpack.c.h.b16 %v348
        %v819 = vunpack.c.l.b16 %v349
        %v820 = vunpack.c.l.b16 %v350
        %v821 = vunpack.c.h.b16 %v350
        %v822 = vunpack.c.l.b16 %v351
        %v823 = vunpack.c.l.b16 %v352
        %v824 = vunpack.c.h.b16 %v352
        %v825 = vunpack.c.l.b16 %v353
        %v826 = vunpack.c.l.b16 %v354
        %v827 = vunpack.c.h.b16 %v354
        %v828 = vunpack.c.l.b16 %v355
        %v829 = vunpack.c.l.b16 %v356
        %v830 = vunpack.c.h.b16 %v356
        %v831 = vunpack.c.l.b16 %v357
        %v832 = vunpack.c.l.b16 %v358
        %v833 = vunpack.c.h.b16 %v358
        %v834 = vunpack.c.l.b16 %v359
        %v835 = vunpack.c.l.b16 %v360
        %v836 = vunpack.c.h.b16 %v360
        %v837 = vunpack.c.l.b16 %v361
        %v838 = vunpack.c.l.b16 %v362
        %v839 = vunpack.c.h.b16 %v362
        %v840 = vunpack.c.l.b16 %v363
        %v841 = vunpack.c.l.b16 %v364
        %v842 = vunpack.c.h.b16 %v364
        %v843 = vunpack.c.l.b16 %v365
        %v844 = vunpack.c.l.b16 %v366
        %v845 = vunpack.c.h.b16 %v366
        %v846 = vunpack.c.l.b16 %v367
        %v847 = vunpack.c.l.b16 %v368
        %v848 = vunpack.c.h.b16 %v368
        %v849 = vunpack.c.l.b16 %v369
        %v850 = vunpack.c.l.b16 %v370
        %v851 = vunpack.c.h.b16 %v370
        %v852 = vunpack.c.l.b16 %v371
        %v853 = vunpack.c.l.b16 %v372
        %v854 = vunpack.c.h.b16 %v372
        %v855 = vunpack.c.l.b16 %v373
        %v856 = vunpack.c.l.b16 %v374
        %v857 = vunpack.c.h.b16 %v374
        %v858 = vunpack.c.l.b16 %v375
        %v859 = vpack.c.b16 %v718, %v715
        %v860 = vpack.c.b16 %v719, %v716
        %v861 = vpack.c.b16 %v720, %v717
        %v862 = vpack.c.b16 %v724, %v721
        %v863 = vpack.c.b16 %v725, %v722
        %v864 = vpack.c.b16 %v726, %v723
        %v865 = vpack.c.b16 %v730, %v727
        %v866 = vpack.c.b16 %v731, %v728
        %v867 = vpack.c.b16 %v732, %v729
        %v868 = vpack.c.b16 %v736, %v733
        %v869 = vpack.c.b16 %v737, %v734
        %v870 = vpack.c.b16 %v738, %v735
        %v871 = vpack.c.b16 %v742, %v739
        %v872 = vpack.c.b16 %v743, %v740
        %v873 = vpack.c.b16 %v744, %v741
        %v874 = vpack.c.b16 %v748, %v745
        %v875 = vpack.c.b16 %v749, %v746
        %v876 = vpack.c.b16 %v750, %v747
        %v877 = vpack.c.b16 %v754, %v751
        %v878 = vpack.c.b16 %v755, %v752
        %v879 = vpack.c.b16 %v756, %v753
        %v880 = vpack.c.b16 %v760, %v757
        %v881 = vpack.c.b16 %v761, %v758
        %v882 = vpack.c.b16 %v762, %v759
        %v883 = vpack.c.b16 %v766, %v763
        %v884 = vpack.c.b16 %v767, %v764
        %v885 = vpack.c.b16 %v768, %v765
        %v886 = vpack.c.b16 %v772, %v769
        %v887 = vpack.c.b16 %v773, %v770
        %v888 = vpack.c.b16 %v774, %v771
        %v889 = vpack.c.b16 %v778, %v775
        %v890 = vpack.c.b16 %v779, %v776
        %v891 = vpack.c.b16 %v780, %v777
        %v892 = vpack.c.b16 %v784, %v781
        %v893 = vpack.c.b16 %v785, %v782
        %v894 = vpack.c.b16 %v786, %v783
        %v895 = vpack.c.b16 %v790, %v787
        %v896 = vpack.c.b16 %v791, %v788
        %v897 = vpack.c.b16 %v792, %v789
        %v898 = vpack.c.b16 %v796, %v793
        %v899 = vpack.c.b16 %v797, %v794
        %v900 = vpack.c.b16 %v798, %v795
        %v901 = vpack.c.b16 %v802, %v799
        %v902 = vpack.c.b16 %v803, %v800
        %v903 = vpack.c.b16 %v804, %v801
        %v904 = vpack.c.b16 %v808, %v805
        %v905 = vpack.c.b16 %v809, %v806
        %v906 = vpack.c.b16 %v810, %v807
        %v907 = vpack.c.b16 %v814, %v811
        %v908 = vpack.c.b16 %v815, %v812
        %v909 = vpack.c.b16 %v816, %v813
        %v910 = vpack.c.b16 %v820, %v817
        %v911 = vpack.c.b16 %v821, %v818
        %v912 = vpack.c.b16 %v822, %v819
        %v913 = vpack.c.b16 %v826, %v823
        %v914 = vpack.c.b16 %v827, %v824
        %v915 = vpack.c.b16 %v828, %v825
        %v916 = vpack.c.b16 %v832, %v829
        %v917 = vpack.c.b16 %v833, %v830
        %v918 = vpack.c.b16 %v834, %v831
        %v919 = vpack.c.b16 %v838, %v835
        %v920 = vpack.c.b16 %v839, %v836
        %v921 = vpack.c.b16 %v840, %v837
        %v922 = vpack.c.b16 %v844, %v841
        %v923 = vpack.c.b16 %v845, %v842
        %v924 = vpack.c.b16 %v846, %v843
        %v925 = vpack.c.b16 %v850, %v847
        %v926 = vpack.c.b16 %v851, %v848
        %v927 = vpack.c.b16 %v852, %v849
        %v928 = vpack.c.b16 %v856, %v853
        %v929 = vpack.c.b16 %v857, %v854
        %v930 = vpack.c.b16 %v858, %v855
        %1003 = vmatpush.bf16.msra.mxu0 %v880
        %1004 = vmatpush.bf16.msra.mxu0 %v877
        %1005 = vmatpush.bf16.msra.mxu0 %v874
        %1006 = vmatpush.bf16.msra.mxu0 %v871
        %1007 = vmatpush.bf16.msra.mxu0 %v868
        %1008 = vmatpush.bf16.msra.mxu0 %v865
        %1009 = vmatpush.bf16.msra.mxu0 %v862
        %1010 = vmatpush.bf16.msra.mxu0 %v859
        %1011 = vmatmul.bf16.gmra.mxu0 %v529
        %v1012 = vpop.f32.mrf.mxu0
        %v1013 = vadd.f32 %v378, %v1012
        %v1014 = vpop.f32.mrf.mxu0
        %v1015 = vadd.f32 %v378, %v1014
        %1016 = vmatmul.bf16.gmra.mxu0 %v532
        %v1017 = vpop.f32.mrf.mxu0
        %v1018 = vadd.f32 %v378, %v1017
        %v1019 = vpop.f32.mrf.mxu0
        %v1020 = vadd.f32 %v378, %v1019
        %1021 = vmatmul.bf16.gmra.mxu0 %v535
        %v1022 = vpop.f32.mrf.mxu0
        %v1023 = vadd.f32 %v378, %v1022
        %v1024 = vpop.f32.mrf.mxu0
        %v1025 = vadd.f32 %v378, %v1024
        %1026 = vmatmul.bf16.gmra.mxu0 %v538
        %v1027 = vpop.f32.mrf.mxu0
        %v1028 = vadd.f32 %v378, %v1027
        %v1029 = vpop.f32.mrf.mxu0
        %v1030 = vadd.f32 %v378, %v1029
        %1031 = vmatmul.bf16.gmra.mxu0 %v541
        %v1032 = vpop.f32.mrf.mxu0
        %v1033 = vadd.f32 %v378, %v1032
        %v1034 = vpop.f32.mrf.mxu0
        %v1035 = vadd.f32 %v378, %v1034
        %1036 = vmatmul.bf16.gmra.mxu0 %v544
        %v1037 = vpop.f32.mrf.mxu0
        %v1038 = vadd.f32 %v378, %v1037
        %v1039 = vpop.f32.mrf.mxu0
        %v1040 = vadd.f32 %v378, %v1039
        %1041 = vmatmul.bf16.gmra.mxu0 %v547
        %v1042 = vpop.f32.mrf.mxu0
        %v1043 = vadd.f32 %v378, %v1042
        %v1044 = vpop.f32.mrf.mxu0
        %v1045 = vadd.f32 %v378, %v1044
        %1046 = vmatmul.bf16.gmra.mxu0 %v550
        %v1047 = vpop.f32.mrf.mxu0
        %v1048 = vadd.f32 %v378, %v1047
        %v1049 = vpop.f32.mrf.mxu0
        %v1050 = vadd.f32 %v378, %v1049
        %1051 = vmatmul.bf16.gmra.mxu0 %v553
        %v1052 = vpop.f32.mrf.mxu0
        %v1053 = vadd.f32 %v378, %v1052
        %v1054 = vpop.f32.mrf.mxu0
        %v1055 = vadd.f32 %v378, %v1054
        %1056 = vmatmul.bf16.gmra.mxu0 %v556
        %v1057 = vpop.f32.mrf.mxu0
        %v1058 = vadd.f32 %v378, %v1057
        %v1059 = vpop.f32.mrf.mxu0
        %v1060 = vadd.f32 %v378, %v1059
        %1061 = vmatmul.bf16.gmra.mxu0 %v559
        %v1062 = vpop.f32.mrf.mxu0
        %v1063 = vadd.f32 %v378, %v1062
        %v1064 = vpop.f32.mrf.mxu0
        %v1065 = vadd.f32 %v378, %v1064
        %1066 = vmatmul.bf16.gmra.mxu0 %v562
        %v1067 = vpop.f32.mrf.mxu0
        %v1068 = vadd.f32 %v378, %v1067
        %v1069 = vpop.f32.mrf.mxu0
        %v1070 = vadd.f32 %v378, %v1069
        %1071 = vmatmul.bf16.gmra.mxu0 %v565
        %v1072 = vpop.f32.mrf.mxu0
        %v1073 = vadd.f32 %v378, %v1072
        %v1074 = vpop.f32.mrf.mxu0
        %v1075 = vadd.f32 %v378, %v1074
        %1076 = vmatmul.bf16.gmra.mxu0 %v568
        %v1077 = vpop.f32.mrf.mxu0
        %v1078 = vadd.f32 %v378, %v1077
        %v1079 = vpop.f32.mrf.mxu0
        %v1080 = vadd.f32 %v378, %v1079
        %1081 = vmatmul.bf16.gmra.mxu0 %v571
        %v1082 = vpop.f32.mrf.mxu0
        %v1083 = vadd.f32 %v378, %v1082
        %v1084 = vpop.f32.mrf.mxu0
        %1085 = vdwg.mxu0
        %1086 = vmatpush.bf16.msra.mxu0 %v904
        %1087 = vmatpush.bf16.msra.mxu0 %v901
        %1088 = vmatpush.bf16.msra.mxu0 %v898
        %1089 = vmatpush.bf16.msra.mxu0 %v895
        %1090 = vmatpush.bf16.msra.mxu0 %v892
        %1091 = vmatpush.bf16.msra.mxu0 %v889
        %1092 = vmatpush.bf16.msra.mxu0 %v886
        %1093 = vmatpush.bf16.msra.mxu0 %v883
        %1094 = vmatmul.bf16.gmra.mxu0 %v530
        %v1095 = vpop.f32.mrf.mxu0
        %v1096 = vadd.f32 %v1013, %v1095
        %v1097 = vpop.f32.mrf.mxu0
        %v1098 = vadd.f32 %v1015, %v1097
        %1099 = vmatmul.bf16.gmra.mxu0 %v533
        %v1100 = vpop.f32.mrf.mxu0
        %v1101 = vadd.f32 %v1018, %v1100
        %v1102 = vpop.f32.mrf.mxu0
        %v1103 = vadd.f32 %v1020, %v1102
        %1104 = vmatmul.bf16.gmra.mxu0 %v536
        %v1105 = vpop.f32.mrf.mxu0
        %v1106 = vadd.f32 %v1023, %v1105
        %v1107 = vpop.f32.mrf.mxu0
        %v1108 = vadd.f32 %v1025, %v1107
        %1109 = vmatmul.bf16.gmra.mxu0 %v539
        %v1110 = vpop.f32.mrf.mxu0
        %v1111 = vadd.f32 %v1028, %v1110
        %v1112 = vpop.f32.mrf.mxu0
        %v1113 = vadd.f32 %v1030, %v1112
        %1114 = vmatmul.bf16.gmra.mxu0 %v542
        %v1115 = vpop.f32.mrf.mxu0
        %v1116 = vadd.f32 %v1033, %v1115
        %v1117 = vpop.f32.mrf.mxu0
        %v1118 = vadd.f32 %v1035, %v1117
        %1119 = vmatmul.bf16.gmra.mxu0 %v545
        %v1120 = vpop.f32.mrf.mxu0
        %v1121 = vadd.f32 %v1038, %v1120
        %v1122 = vpop.f32.mrf.mxu0
        %v1123 = vadd.f32 %v1040, %v1122
        %1124 = vmatmul.bf16.gmra.mxu0 %v548
        %v1125 = vpop.f32.mrf.mxu0
        %v1126 = vadd.f32 %v1043, %v1125
        %v1127 = vpop.f32.mrf.mxu0
        %v1128 = vadd.f32 %v1045, %v1127
        %1129 = vmatmul.bf16.gmra.mxu0 %v551
        %v1130 = vpop.f32.mrf.mxu0
        %v1131 = vadd.f32 %v1048, %v1130
        %v1132 = vpop.f32.mrf.mxu0
        %v1133 = vadd.f32 %v1050, %v1132
        %1134 = vmatmul.bf16.gmra.mxu0 %v554
        %v1135 = vpop.f32.mrf.mxu0
        %v1136 = vadd.f32 %v1053, %v1135
        %v1137 = vpop.f32.mrf.mxu0
        %v1138 = vadd.f32 %v1055, %v1137
        %1139 = vmatmul.bf16.gmra.mxu0 %v557
        %v1140 = vpop.f32.mrf.mxu0
        %v1141 = vadd.f32 %v1058, %v1140
        %v1142 = vpop.f32.mrf.mxu0
        %v1143 = vadd.f32 %v1060, %v1142
        %1144 = vmatmul.bf16.gmra.mxu0 %v560
        %v1145 = vpop.f32.mrf.mxu0
        %v1146 = vadd.f32 %v1063, %v1145
        %v1147 = vpop.f32.mrf.mxu0
        %v1148 = vadd.f32 %v1065, %v1147
        %1149 = vmatmul.bf16.gmra.mxu0 %v563
        %v1150 = vpop.f32.mrf.mxu0
        %v1151 = vadd.f32 %v1068, %v1150
        %v1152 = vpop.f32.mrf.mxu0
        %v1153 = vadd.f32 %v1070, %v1152
        %1154 = vmatmul.bf16.gmra.mxu0 %v566
        %v1155 = vpop.f32.mrf.mxu0
        %v1156 = vadd.f32 %v1073, %v1155
        %v1157 = vpop.f32.mrf.mxu0
        %v1158 = vadd.f32 %v1075, %v1157
        %1159 = vmatmul.bf16.gmra.mxu0 %v569
        %v1160 = vpop.f32.mrf.mxu0
        %v1161 = vadd.f32 %v1078, %v1160
        %v1162 = vpop.f32.mrf.mxu0
        %v1163 = vadd.f32 %v1080, %v1162
        %1164 = vmatmul.bf16.gmra.mxu0 %v572
        %v1165 = vpop.f32.mrf.mxu0
        %v1166 = vadd.f32 %v1083, %v1165
        %v1167 = vpop.f32.mrf.mxu0
        %1168 = vdwg.mxu0
        %1169 = vmatpush.bf16.msra.mxu0 %v928
        %1170 = vmatpush.bf16.msra.mxu0 %v925
        %1171 = vmatpush.bf16.msra.mxu0 %v922
        %1172 = vmatpush.bf16.msra.mxu0 %v919
        %1173 = vmatpush.bf16.msra.mxu0 %v916
        %1174 = vmatpush.bf16.msra.mxu0 %v913
        %1175 = vmatpush.bf16.msra.mxu0 %v910
        %1176 = vmatpush.bf16.msra.mxu0 %v907
        %1177 = vmatmul.bf16.gmra.mxu0 %v531
        %v1178 = vpop.f32.mrf.mxu0
        %v1179 = vadd.f32 %v1096, %v1178
        %v1180 = vpop.f32.mrf.mxu0
        %v1181 = vadd.f32 %v1098, %v1180
        %1182 = vmatmul.bf16.gmra.mxu0 %v534
        %v1183 = vpop.f32.mrf.mxu0
        %v1184 = vadd.f32 %v1101, %v1183
        %v1185 = vpop.f32.mrf.mxu0
        %v1186 = vadd.f32 %v1103, %v1185
        %1187 = vmatmul.bf16.gmra.mxu0 %v537
        %v1188 = vpop.f32.mrf.mxu0
        %v1189 = vadd.f32 %v1106, %v1188
        %v1190 = vpop.f32.mrf.mxu0
        %v1191 = vadd.f32 %v1108, %v1190
        %1192 = vmatmul.bf16.gmra.mxu0 %v540
        %v1193 = vpop.f32.mrf.mxu0
        %v1194 = vadd.f32 %v1111, %v1193
        %v1195 = vpop.f32.mrf.mxu0
        %v1196 = vadd.f32 %v1113, %v1195
        %1197 = vmatmul.bf16.gmra.mxu0 %v543
        %v1198 = vpop.f32.mrf.mxu0
        %v1199 = vadd.f32 %v1116, %v1198
        %v1200 = vpop.f32.mrf.mxu0
        %v1201 = vadd.f32 %v1118, %v1200
        %1202 = vmatmul.bf16.gmra.mxu0 %v546
        %v1203 = vpop.f32.mrf.mxu0
        %v1204 = vadd.f32 %v1121, %v1203
        %v1205 = vpop.f32.mrf.mxu0
        %v1206 = vadd.f32 %v1123, %v1205
        %1207 = vmatmul.bf16.gmra.mxu0 %v549
        %v1208 = vpop.f32.mrf.mxu0
        %v1209 = vadd.f32 %v1126, %v1208
        %v1210 = vpop.f32.mrf.mxu0
        %v1211 = vadd.f32 %v1128, %v1210
        %1212 = vmatmul.bf16.gmra.mxu0 %v552
        %v1213 = vpop.f32.mrf.mxu0
        %v1214 = vadd.f32 %v1131, %v1213
        %v1215 = vpop.f32.mrf.mxu0
        %v1216 = vadd.f32 %v1133, %v1215
        %1217 = vmatmul.bf16.gmra.mxu0 %v555
        %v1218 = vpop.f32.mrf.mxu0
        %v1219 = vadd.f32 %v1136, %v1218
        %v1220 = vpop.f32.mrf.mxu0
        %v1221 = vadd.f32 %v1138, %v1220
        %1222 = vmatmul.bf16.gmra.mxu0 %v558
        %v1223 = vpop.f32.mrf.mxu0
        %v1224 = vadd.f32 %v1141, %v1223
        %v1225 = vpop.f32.mrf.mxu0
        %v1226 = vadd.f32 %v1143, %v1225
        %1227 = vmatmul.bf16.gmra.mxu0 %v561
        %v1228 = vpop.f32.mrf.mxu0
        %v1229 = vadd.f32 %v1146, %v1228
        %v1230 = vpop.f32.mrf.mxu0
        %v1231 = vadd.f32 %v1148, %v1230
        %1232 = vmatmul.bf16.gmra.mxu0 %v564
        %v1233 = vpop.f32.mrf.mxu0
        %v1234 = vadd.f32 %v1151, %v1233
        %v1235 = vpop.f32.mrf.mxu0
        %v1236 = vadd.f32 %v1153, %v1235
        %1237 = vmatmul.bf16.gmra.mxu0 %v567
        %v1238 = vpop.f32.mrf.mxu0
        %v1239 = vadd.f32 %v1156, %v1238
        %v1240 = vpop.f32.mrf.mxu0
        %v1241 = vadd.f32 %v1158, %v1240
        %1242 = vmatmul.bf16.gmra.mxu0 %v570
        %v1243 = vpop.f32.mrf.mxu0
        %v1244 = vadd.f32 %v1161, %v1243
        %v1245 = vpop.f32.mrf.mxu0
        %v1246 = vadd.f32 %v1163, %v1245
        %1247 = vmatmul.bf16.gmra.mxu0 %v573
        %v1248 = vpop.f32.mrf.mxu0
        %v1249 = vadd.f32 %v1166, %v1248
        %v1250 = vpop.f32.mrf.mxu0
        %1251 = vdwg.mxu0
        %1252 = vmatpush.bf16.msra.mxu0 %v881
        %1253 = vmatpush.bf16.msra.mxu0 %v878
        %1254 = vmatpush.bf16.msra.mxu0 %v875
        %1255 = vmatpush.bf16.msra.mxu0 %v872
        %1256 = vmatpush.bf16.msra.mxu0 %v869
        %1257 = vmatpush.bf16.msra.mxu0 %v866
        %1258 = vmatpush.bf16.msra.mxu0 %v863
        %1259 = vmatpush.bf16.msra.mxu0 %v860
        %1260 = vmatmul.bf16.gmra.mxu0 %v529
        %v1261 = vpop.f32.mrf.mxu0
        %v1262 = vadd.f32 %v379, %v1261
        %v1263 = vpop.f32.mrf.mxu0
        %v1264 = vadd.f32 %v379, %v1263
        %1265 = vmatmul.bf16.gmra.mxu0 %v532
        %v1266 = vpop.f32.mrf.mxu0
        %v1267 = vadd.f32 %v379, %v1266
        %v1268 = vpop.f32.mrf.mxu0
        %v1269 = vadd.f32 %v379, %v1268
        %1270 = vmatmul.bf16.gmra.mxu0 %v535
        %v1271 = vpop.f32.mrf.mxu0
        %v1272 = vadd.f32 %v379, %v1271
        %v1273 = vpop.f32.mrf.mxu0
        %v1274 = vadd.f32 %v379, %v1273
        %1275 = vmatmul.bf16.gmra.mxu0 %v538
        %v1276 = vpop.f32.mrf.mxu0
        %v1277 = vadd.f32 %v379, %v1276
        %v1278 = vpop.f32.mrf.mxu0
        %v1279 = vadd.f32 %v379, %v1278
        %1280 = vmatmul.bf16.gmra.mxu0 %v541
        %v1281 = vpop.f32.mrf.mxu0
        %v1282 = vadd.f32 %v379, %v1281
        %v1283 = vpop.f32.mrf.mxu0
        %v1284 = vadd.f32 %v379, %v1283
        %1285 = vmatmul.bf16.gmra.mxu0 %v544
        %v1286 = vpop.f32.mrf.mxu0
        %v1287 = vadd.f32 %v379, %v1286
        %v1288 = vpop.f32.mrf.mxu0
        %v1289 = vadd.f32 %v379, %v1288
        %1290 = vmatmul.bf16.gmra.mxu0 %v547
        %v1291 = vpop.f32.mrf.mxu0
        %v1292 = vadd.f32 %v379, %v1291
        %v1293 = vpop.f32.mrf.mxu0
        %v1294 = vadd.f32 %v379, %v1293
        %1295 = vmatmul.bf16.gmra.mxu0 %v550
        %v1296 = vpop.f32.mrf.mxu0
        %v1297 = vadd.f32 %v379, %v1296
        %v1298 = vpop.f32.mrf.mxu0
        %v1299 = vadd.f32 %v379, %v1298
        %1300 = vmatmul.bf16.gmra.mxu0 %v553
        %v1301 = vpop.f32.mrf.mxu0
        %v1302 = vadd.f32 %v379, %v1301
        %v1303 = vpop.f32.mrf.mxu0
        %v1304 = vadd.f32 %v379, %v1303
        %1305 = vmatmul.bf16.gmra.mxu0 %v556
        %v1306 = vpop.f32.mrf.mxu0
        %v1307 = vadd.f32 %v379, %v1306
        %v1308 = vpop.f32.mrf.mxu0
        %v1309 = vadd.f32 %v379, %v1308
        %1310 = vmatmul.bf16.gmra.mxu0 %v559
        %v1311 = vpop.f32.mrf.mxu0
        %v1312 = vadd.f32 %v379, %v1311
        %v1313 = vpop.f32.mrf.mxu0
        %v1314 = vadd.f32 %v379, %v1313
        %1315 = vmatmul.bf16.gmra.mxu0 %v562
        %v1316 = vpop.f32.mrf.mxu0
        %v1317 = vadd.f32 %v379, %v1316
        %v1318 = vpop.f32.mrf.mxu0
        %v1319 = vadd.f32 %v379, %v1318
        %1320 = vmatmul.bf16.gmra.mxu0 %v565
        %v1321 = vpop.f32.mrf.mxu0
        %v1322 = vadd.f32 %v379, %v1321
        %v1323 = vpop.f32.mrf.mxu0
        %v1324 = vadd.f32 %v379, %v1323
        %1325 = vmatmul.bf16.gmra.mxu0 %v568
        %v1326 = vpop.f32.mrf.mxu0
        %v1327 = vadd.f32 %v379, %v1326
        %v1328 = vpop.f32.mrf.mxu0
        %v1329 = vadd.f32 %v379, %v1328
        %1330 = vmatmul.bf16.gmra.mxu0 %v571
        %v1331 = vpop.f32.mrf.mxu0
        %v1332 = vadd.f32 %v379, %v1331
        %v1333 = vpop.f32.mrf.mxu0
        %1334 = vdwg.mxu0
        %1335 = vmatpush.bf16.msra.mxu0 %v905
        %1336 = vmatpush.bf16.msra.mxu0 %v902
        %1337 = vmatpush.bf16.msra.mxu0 %v899
        %1338 = vmatpush.bf16.msra.mxu0 %v896
        %1339 = vmatpush.bf16.msra.mxu0 %v893
        %1340 = vmatpush.bf16.msra.mxu0 %v890
        %1341 = vmatpush.bf16.msra.mxu0 %v887
        %1342 = vmatpush.bf16.msra.mxu0 %v884
        %1343 = vmatmul.bf16.gmra.mxu0 %v530
        %v1344 = vpop.f32.mrf.mxu0
        %v1345 = vadd.f32 %v1262, %v1344
        %v1346 = vpop.f32.mrf.mxu0
        %v1347 = vadd.f32 %v1264, %v1346
        %1348 = vmatmul.bf16.gmra.mxu0 %v533
        %v1349 = vpop.f32.mrf.mxu0
        %v1350 = vadd.f32 %v1267, %v1349
        %v1351 = vpop.f32.mrf.mxu0
        %v1352 = vadd.f32 %v1269, %v1351
        %1353 = vmatmul.bf16.gmra.mxu0 %v536
        %v1354 = vpop.f32.mrf.mxu0
        %v1355 = vadd.f32 %v1272, %v1354
        %v1356 = vpop.f32.mrf.mxu0
        %v1357 = vadd.f32 %v1274, %v1356
        %1358 = vmatmul.bf16.gmra.mxu0 %v539
        %v1359 = vpop.f32.mrf.mxu0
        %v1360 = vadd.f32 %v1277, %v1359
        %v1361 = vpop.f32.mrf.mxu0
        %v1362 = vadd.f32 %v1279, %v1361
        %1363 = vmatmul.bf16.gmra.mxu0 %v542
        %v1364 = vpop.f32.mrf.mxu0
        %v1365 = vadd.f32 %v1282, %v1364
        %v1366 = vpop.f32.mrf.mxu0
        %v1367 = vadd.f32 %v1284, %v1366
        %1368 = vmatmul.bf16.gmra.mxu0 %v545
        %v1369 = vpop.f32.mrf.mxu0
        %v1370 = vadd.f32 %v1287, %v1369
        %v1371 = vpop.f32.mrf.mxu0
        %v1372 = vadd.f32 %v1289, %v1371
        %1373 = vmatmul.bf16.gmra.mxu0 %v548
        %v1374 = vpop.f32.mrf.mxu0
        %v1375 = vadd.f32 %v1292, %v1374
        %v1376 = vpop.f32.mrf.mxu0
        %v1377 = vadd.f32 %v1294, %v1376
        %1378 = vmatmul.bf16.gmra.mxu0 %v551
        %v1379 = vpop.f32.mrf.mxu0
        %v1380 = vadd.f32 %v1297, %v1379
        %v1381 = vpop.f32.mrf.mxu0
        %v1382 = vadd.f32 %v1299, %v1381
        %1383 = vmatmul.bf16.gmra.mxu0 %v554
        %v1384 = vpop.f32.mrf.mxu0
        %v1385 = vadd.f32 %v1302, %v1384
        %v1386 = vpop.f32.mrf.mxu0
        %v1387 = vadd.f32 %v1304, %v1386
        %1388 = vmatmul.bf16.gmra.mxu0 %v557
        %v1389 = vpop.f32.mrf.mxu0
        %v1390 = vadd.f32 %v1307, %v1389
        %v1391 = vpop.f32.mrf.mxu0
        %v1392 = vadd.f32 %v1309, %v1391
        %1393 = vmatmul.bf16.gmra.mxu0 %v560
        %v1394 = vpop.f32.mrf.mxu0
        %v1395 = vadd.f32 %v1312, %v1394
        %v1396 = vpop.f32.mrf.mxu0
        %v1397 = vadd.f32 %v1314, %v1396
        %1398 = vmatmul.bf16.gmra.mxu0 %v563
        %v1399 = vpop.f32.mrf.mxu0
        %v1400 = vadd.f32 %v1317, %v1399
        %v1401 = vpop.f32.mrf.mxu0
        %v1402 = vadd.f32 %v1319, %v1401
        %1403 = vmatmul.bf16.gmra.mxu0 %v566
        %v1404 = vpop.f32.mrf.mxu0
        %v1405 = vadd.f32 %v1322, %v1404
        %v1406 = vpop.f32.mrf.mxu0
        %v1407 = vadd.f32 %v1324, %v1406
        %1408 = vmatmul.bf16.gmra.mxu0 %v569
        %v1409 = vpop.f32.mrf.mxu0
        %v1410 = vadd.f32 %v1327, %v1409
        %v1411 = vpop.f32.mrf.mxu0
        %v1412 = vadd.f32 %v1329, %v1411
        %1413 = vmatmul.bf16.gmra.mxu0 %v572
        %v1414 = vpop.f32.mrf.mxu0
        %v1415 = vadd.f32 %v1332, %v1414
        %v1416 = vpop.f32.mrf.mxu0
        %1417 = vdwg.mxu0
        %1418 = vmatpush.bf16.msra.mxu0 %v929
        %1419 = vmatpush.bf16.msra.mxu0 %v926
        %1420 = vmatpush.bf16.msra.mxu0 %v923
        %1421 = vmatpush.bf16.msra.mxu0 %v920
        %1422 = vmatpush.bf16.msra.mxu0 %v917
        %1423 = vmatpush.bf16.msra.mxu0 %v914
        %1424 = vmatpush.bf16.msra.mxu0 %v911
        %1425 = vmatpush.bf16.msra.mxu0 %v908
        %1426 = vmatmul.bf16.gmra.mxu0 %v531
        %v1427 = vpop.f32.mrf.mxu0
        %v1428 = vadd.f32 %v1345, %v1427
        %v1429 = vpop.f32.mrf.mxu0
        %v1430 = vadd.f32 %v1347, %v1429
        %1431 = vmatmul.bf16.gmra.mxu0 %v534
        %v1432 = vpop.f32.mrf.mxu0
        %v1433 = vadd.f32 %v1350, %v1432
        %v1434 = vpop.f32.mrf.mxu0
        %v1435 = vadd.f32 %v1352, %v1434
        %1436 = vmatmul.bf16.gmra.mxu0 %v537
        %v1437 = vpop.f32.mrf.mxu0
        %v1438 = vadd.f32 %v1355, %v1437
        %v1439 = vpop.f32.mrf.mxu0
        %v1440 = vadd.f32 %v1357, %v1439
        %1441 = vmatmul.bf16.gmra.mxu0 %v540
        %v1442 = vpop.f32.mrf.mxu0
        %v1443 = vadd.f32 %v1360, %v1442
        %v1444 = vpop.f32.mrf.mxu0
        %v1445 = vadd.f32 %v1362, %v1444
        %1446 = vmatmul.bf16.gmra.mxu0 %v543
        %v1447 = vpop.f32.mrf.mxu0
        %v1448 = vadd.f32 %v1365, %v1447
        %v1449 = vpop.f32.mrf.mxu0
        %v1450 = vadd.f32 %v1367, %v1449
        %1451 = vmatmul.bf16.gmra.mxu0 %v546
        %v1452 = vpop.f32.mrf.mxu0
        %v1453 = vadd.f32 %v1370, %v1452
        %v1454 = vpop.f32.mrf.mxu0
        %v1455 = vadd.f32 %v1372, %v1454
        %1456 = vmatmul.bf16.gmra.mxu0 %v549
        %v1457 = vpop.f32.mrf.mxu0
        %v1458 = vadd.f32 %v1375, %v1457
        %v1459 = vpop.f32.mrf.mxu0
        %v1460 = vadd.f32 %v1377, %v1459
        %1461 = vmatmul.bf16.gmra.mxu0 %v552
        %v1462 = vpop.f32.mrf.mxu0
        %v1463 = vadd.f32 %v1380, %v1462
        %v1464 = vpop.f32.mrf.mxu0
        %v1465 = vadd.f32 %v1382, %v1464
        %1466 = vmatmul.bf16.gmra.mxu0 %v555
        %v1467 = vpop.f32.mrf.mxu0
        %v1468 = vadd.f32 %v1385, %v1467
        %v1469 = vpop.f32.mrf.mxu0
        %v1470 = vadd.f32 %v1387, %v1469
        %1471 = vmatmul.bf16.gmra.mxu0 %v558
        %v1472 = vpop.f32.mrf.mxu0
        %v1473 = vadd.f32 %v1390, %v1472
        %v1474 = vpop.f32.mrf.mxu0
        %v1475 = vadd.f32 %v1392, %v1474
        %1476 = vmatmul.bf16.gmra.mxu0 %v561
        %v1477 = vpop.f32.mrf.mxu0
        %v1478 = vadd.f32 %v1395, %v1477
        %v1479 = vpop.f32.mrf.mxu0
        %v1480 = vadd.f32 %v1397, %v1479
        %1481 = vmatmul.bf16.gmra.mxu0 %v564
        %v1482 = vpop.f32.mrf.mxu0
        %v1483 = vadd.f32 %v1400, %v1482
        %v1484 = vpop.f32.mrf.mxu0
        %v1485 = vadd.f32 %v1402, %v1484
        %1486 = vmatmul.bf16.gmra.mxu0 %v567
        %v1487 = vpop.f32.mrf.mxu0
        %v1488 = vadd.f32 %v1405, %v1487
        %v1489 = vpop.f32.mrf.mxu0
        %v1490 = vadd.f32 %v1407, %v1489
        %1491 = vmatmul.bf16.gmra.mxu0 %v570
        %v1492 = vpop.f32.mrf.mxu0
        %v1493 = vadd.f32 %v1410, %v1492
        %v1494 = vpop.f32.mrf.mxu0
        %v1495 = vadd.f32 %v1412, %v1494
        %1496 = vmatmul.bf16.gmra.mxu0 %v573
        %v1497 = vpop.f32.mrf.mxu0
        %v1498 = vadd.f32 %v1415, %v1497
        %v1499 = vpop.f32.mrf.mxu0
        %1500 = vdwg.mxu0
        %1501 = vmatpush.bf16.msra.mxu0 %v882
        %1502 = vmatpush.bf16.msra.mxu0 %v879
        %1503 = vmatpush.bf16.msra.mxu0 %v876
        %1504 = vmatpush.bf16.msra.mxu0 %v873
        %1505 = vmatpush.bf16.msra.mxu0 %v870
        %1506 = vmatpush.bf16.msra.mxu0 %v867
        %1507 = vmatpush.bf16.msra.mxu0 %v864
        %1508 = vmatpush.bf16.msra.mxu0 %v861
        %1509 = vmatmul.bf16.gmra.mxu0 %v529
        %v1510 = vpop.f32.mrf.mxu0
        %v1511 = vadd.f32 %v380, %v1510
        %v1512 = vpop.f32.mrf.mxu0
        %v1513 = vadd.f32 %v380, %v1512
        %1514 = vmatmul.bf16.gmra.mxu0 %v532
        %v1515 = vpop.f32.mrf.mxu0
        %v1516 = vadd.f32 %v380, %v1515
        %v1517 = vpop.f32.mrf.mxu0
        %v1518 = vadd.f32 %v380, %v1517
        %1519 = vmatmul.bf16.gmra.mxu0 %v535
        %v1520 = vpop.f32.mrf.mxu0
        %v1521 = vadd.f32 %v380, %v1520
        %v1522 = vpop.f32.mrf.mxu0
        %v1523 = vadd.f32 %v380, %v1522
        %1524 = vmatmul.bf16.gmra.mxu0 %v538
        %v1525 = vpop.f32.mrf.mxu0
        %v1526 = vadd.f32 %v380, %v1525
        %v1527 = vpop.f32.mrf.mxu0
        %v1528 = vadd.f32 %v380, %v1527
        %1529 = vmatmul.bf16.gmra.mxu0 %v541
        %v1530 = vpop.f32.mrf.mxu0
        %v1531 = vadd.f32 %v380, %v1530
        %v1532 = vpop.f32.mrf.mxu0
        %v1533 = vadd.f32 %v380, %v1532
        %1534 = vmatmul.bf16.gmra.mxu0 %v544
        %v1535 = vpop.f32.mrf.mxu0
        %v1536 = vadd.f32 %v380, %v1535
        %v1537 = vpop.f32.mrf.mxu0
        %v1538 = vadd.f32 %v380, %v1537
        %1539 = vmatmul.bf16.gmra.mxu0 %v547
        %v1540 = vpop.f32.mrf.mxu0
        %v1541 = vadd.f32 %v380, %v1540
        %v1542 = vpop.f32.mrf.mxu0
        %v1543 = vadd.f32 %v380, %v1542
        %1544 = vmatmul.bf16.gmra.mxu0 %v550
        %v1545 = vpop.f32.mrf.mxu0
        %v1546 = vadd.f32 %v380, %v1545
        %v1547 = vpop.f32.mrf.mxu0
        %v1548 = vadd.f32 %v380, %v1547
        %1549 = vmatmul.bf16.gmra.mxu0 %v553
        %v1550 = vpop.f32.mrf.mxu0
        %v1551 = vadd.f32 %v380, %v1550
        %v1552 = vpop.f32.mrf.mxu0
        %v1553 = vadd.f32 %v380, %v1552
        %1554 = vmatmul.bf16.gmra.mxu0 %v556
        %v1555 = vpop.f32.mrf.mxu0
        %v1556 = vadd.f32 %v380, %v1555
        %v1557 = vpop.f32.mrf.mxu0
        %v1558 = vadd.f32 %v380, %v1557
        %1559 = vmatmul.bf16.gmra.mxu0 %v559
        %v1560 = vpop.f32.mrf.mxu0
        %v1561 = vadd.f32 %v380, %v1560
        %v1562 = vpop.f32.mrf.mxu0
        %v1563 = vadd.f32 %v380, %v1562
        %1564 = vmatmul.bf16.gmra.mxu0 %v562
        %v1565 = vpop.f32.mrf.mxu0
        %v1566 = vadd.f32 %v380, %v1565
        %v1567 = vpop.f32.mrf.mxu0
        %v1568 = vadd.f32 %v380, %v1567
        %1569 = vmatmul.bf16.gmra.mxu0 %v565
        %v1570 = vpop.f32.mrf.mxu0
        %v1571 = vadd.f32 %v380, %v1570
        %v1572 = vpop.f32.mrf.mxu0
        %v1573 = vadd.f32 %v380, %v1572
        %1574 = vmatmul.bf16.gmra.mxu0 %v568
        %v1575 = vpop.f32.mrf.mxu0
        %v1576 = vadd.f32 %v380, %v1575
        %v1577 = vpop.f32.mrf.mxu0
        %v1578 = vadd.f32 %v380, %v1577
        %1579 = vmatmul.bf16.gmra.mxu0 %v571
        %v1580 = vpop.f32.mrf.mxu0
        %v1581 = vadd.f32 %v380, %v1580
        %v1582 = vpop.f32.mrf.mxu0
        %1583 = vdwg.mxu0
        %1584 = vmatpush.bf16.msra.mxu0 %v906
        %1585 = vmatpush.bf16.msra.mxu0 %v903
        %1586 = vmatpush.bf16.msra.mxu0 %v900
        %1587 = vmatpush.bf16.msra.mxu0 %v897
        %1588 = vmatpush.bf16.msra.mxu0 %v894
        %1589 = vmatpush.bf16.msra.mxu0 %v891
        %1590 = vmatpush.bf16.msra.mxu0 %v888
        %1591 = vmatpush.bf16.msra.mxu0 %v885
        %1592 = vmatmul.bf16.gmra.mxu0 %v530
        %v1593 = vpop.f32.mrf.mxu0
        %v1594 = vadd.f32 %v1511, %v1593
        %v1595 = vpop.f32.mrf.mxu0
        %v1596 = vadd.f32 %v1513, %v1595
        %1597 = vmatmul.bf16.gmra.mxu0 %v533
        %v1598 = vpop.f32.mrf.mxu0
        %v1599 = vadd.f32 %v1516, %v1598
        %v1600 = vpop.f32.mrf.mxu0
        %v1601 = vadd.f32 %v1518, %v1600
        %1602 = vmatmul.bf16.gmra.mxu0 %v536
        %v1603 = vpop.f32.mrf.mxu0
        %v1604 = vadd.f32 %v1521, %v1603
        %v1605 = vpop.f32.mrf.mxu0
        %v1606 = vadd.f32 %v1523, %v1605
        %1607 = vmatmul.bf16.gmra.mxu0 %v539
        %v1608 = vpop.f32.mrf.mxu0
        %v1609 = vadd.f32 %v1526, %v1608
        %v1610 = vpop.f32.mrf.mxu0
        %v1611 = vadd.f32 %v1528, %v1610
        %1612 = vmatmul.bf16.gmra.mxu0 %v542
        %v1613 = vpop.f32.mrf.mxu0
        %v1614 = vadd.f32 %v1531, %v1613
        %v1615 = vpop.f32.mrf.mxu0
        %v1616 = vadd.f32 %v1533, %v1615
        %1617 = vmatmul.bf16.gmra.mxu0 %v545
        %v1618 = vpop.f32.mrf.mxu0
        %v1619 = vadd.f32 %v1536, %v1618
        %v1620 = vpop.f32.mrf.mxu0
        %v1621 = vadd.f32 %v1538, %v1620
        %1622 = vmatmul.bf16.gmra.mxu0 %v548
        %v1623 = vpop.f32.mrf.mxu0
        %v1624 = vadd.f32 %v1541, %v1623
        %v1625 = vpop.f32.mrf.mxu0
        %v1626 = vadd.f32 %v1543, %v1625
        %1627 = vmatmul.bf16.gmra.mxu0 %v551
        %v1628 = vpop.f32.mrf.mxu0
        %v1629 = vadd.f32 %v1546, %v1628
        %v1630 = vpop.f32.mrf.mxu0
        %v1631 = vadd.f32 %v1548, %v1630
        %1632 = vmatmul.bf16.gmra.mxu0 %v554
        %v1633 = vpop.f32.mrf.mxu0
        %v1634 = vadd.f32 %v1551, %v1633
        %v1635 = vpop.f32.mrf.mxu0
        %v1636 = vadd.f32 %v1553, %v1635
        %1637 = vmatmul.bf16.gmra.mxu0 %v557
        %v1638 = vpop.f32.mrf.mxu0
        %v1639 = vadd.f32 %v1556, %v1638
        %v1640 = vpop.f32.mrf.mxu0
        %v1641 = vadd.f32 %v1558, %v1640
        %1642 = vmatmul.bf16.gmra.mxu0 %v560
        %v1643 = vpop.f32.mrf.mxu0
        %v1644 = vadd.f32 %v1561, %v1643
        %v1645 = vpop.f32.mrf.mxu0
        %v1646 = vadd.f32 %v1563, %v1645
        %1647 = vmatmul.bf16.gmra.mxu0 %v563
        %v1648 = vpop.f32.mrf.mxu0
        %v1649 = vadd.f32 %v1566, %v1648
        %v1650 = vpop.f32.mrf.mxu0
        %v1651 = vadd.f32 %v1568, %v1650
        %1652 = vmatmul.bf16.gmra.mxu0 %v566
        %v1653 = vpop.f32.mrf.mxu0
        %v1654 = vadd.f32 %v1571, %v1653
        %v1655 = vpop.f32.mrf.mxu0
        %v1656 = vadd.f32 %v1573, %v1655
        %1657 = vmatmul.bf16.gmra.mxu0 %v569
        %v1658 = vpop.f32.mrf.mxu0
        %v1659 = vadd.f32 %v1576, %v1658
        %v1660 = vpop.f32.mrf.mxu0
        %v1661 = vadd.f32 %v1578, %v1660
        %1662 = vmatmul.bf16.gmra.mxu0 %v572
        %v1663 = vpop.f32.mrf.mxu0
        %v1664 = vadd.f32 %v1581, %v1663
        %v1665 = vpop.f32.mrf.mxu0
        %1666 = vdwg.mxu0
        %1667 = vmatpush.bf16.msra.mxu0 %v930
        %1668 = vmatpush.bf16.msra.mxu0 %v927
        %1669 = vmatpush.bf16.msra.mxu0 %v924
        %1670 = vmatpush.bf16.msra.mxu0 %v921
        %1671 = vmatpush.bf16.msra.mxu0 %v918
        %1672 = vmatpush.bf16.msra.mxu0 %v915
        %1673 = vmatpush.bf16.msra.mxu0 %v912
        %1674 = vmatpush.bf16.msra.mxu0 %v909
        %1675 = vmatmul.bf16.gmra.mxu0 %v531
        %v1676 = vpop.f32.mrf.mxu0
        %v1677 = vadd.f32 %v1594, %v1676
        %v1678 = vpop.f32.mrf.mxu0
        %v1679 = vadd.f32 %v1596, %v1678
        %1680 = vmatmul.bf16.gmra.mxu0 %v534
        %v1681 = vpop.f32.mrf.mxu0
        %v1682 = vadd.f32 %v1599, %v1681
        %v1683 = vpop.f32.mrf.mxu0
        %v1684 = vadd.f32 %v1601, %v1683
        %1685 = vmatmul.bf16.gmra.mxu0 %v537
        %v1686 = vpop.f32.mrf.mxu0
        %v1687 = vadd.f32 %v1604, %v1686
        %v1688 = vpop.f32.mrf.mxu0
        %v1689 = vadd.f32 %v1606, %v1688
        %1690 = vmatmul.bf16.gmra.mxu0 %v540
        %v1691 = vpop.f32.mrf.mxu0
        %v1692 = vadd.f32 %v1609, %v1691
        %v1693 = vpop.f32.mrf.mxu0
        %v1694 = vadd.f32 %v1611, %v1693
        %1695 = vmatmul.bf16.gmra.mxu0 %v543
        %v1696 = vpop.f32.mrf.mxu0
        %v1697 = vadd.f32 %v1614, %v1696
        %v1698 = vpop.f32.mrf.mxu0
        %v1699 = vadd.f32 %v1616, %v1698
        %1700 = vmatmul.bf16.gmra.mxu0 %v546
        %v1701 = vpop.f32.mrf.mxu0
        %v1702 = vadd.f32 %v1619, %v1701
        %v1703 = vpop.f32.mrf.mxu0
        %v1704 = vadd.f32 %v1621, %v1703
        %1705 = vmatmul.bf16.gmra.mxu0 %v549
        %v1706 = vpop.f32.mrf.mxu0
        %v1707 = vadd.f32 %v1624, %v1706
        %v1708 = vpop.f32.mrf.mxu0
        %v1709 = vadd.f32 %v1626, %v1708
        %1710 = vmatmul.bf16.gmra.mxu0 %v552
        %v1711 = vpop.f32.mrf.mxu0
        %v1712 = vadd.f32 %v1629, %v1711
        %v1713 = vpop.f32.mrf.mxu0
        %v1714 = vadd.f32 %v1631, %v1713
        %1715 = vmatmul.bf16.gmra.mxu0 %v555
        %v1716 = vpop.f32.mrf.mxu0
        %v1717 = vadd.f32 %v1634, %v1716
        %v1718 = vpop.f32.mrf.mxu0
        %v1719 = vadd.f32 %v1636, %v1718
        %1720 = vmatmul.bf16.gmra.mxu0 %v558
        %v1721 = vpop.f32.mrf.mxu0
        %v1722 = vadd.f32 %v1639, %v1721
        %v1723 = vpop.f32.mrf.mxu0
        %v1724 = vadd.f32 %v1641, %v1723
        %1725 = vmatmul.bf16.gmra.mxu0 %v561
        %v1726 = vpop.f32.mrf.mxu0
        %v1727 = vadd.f32 %v1644, %v1726
        %v1728 = vpop.f32.mrf.mxu0
        %v1729 = vadd.f32 %v1646, %v1728
        %1730 = vmatmul.bf16.gmra.mxu0 %v564
        %v1731 = vpop.f32.mrf.mxu0
        %v1732 = vadd.f32 %v1649, %v1731
        %v1733 = vpop.f32.mrf.mxu0
        %v1734 = vadd.f32 %v1651, %v1733
        %1735 = vmatmul.bf16.gmra.mxu0 %v567
        %v1736 = vpop.f32.mrf.mxu0
        %v1737 = vadd.f32 %v1654, %v1736
        %v1738 = vpop.f32.mrf.mxu0
        %v1739 = vadd.f32 %v1656, %v1738
        %1740 = vmatmul.bf16.gmra.mxu0 %v570
        %v1741 = vpop.f32.mrf.mxu0
        %v1742 = vadd.f32 %v1659, %v1741
        %v1743 = vpop.f32.mrf.mxu0
        %v1744 = vadd.f32 %v1661, %v1743
        %1745 = vmatmul.bf16.gmra.mxu0 %v573
        %v1746 = vpop.f32.mrf.mxu0
        %v1747 = vadd.f32 %v1664, %v1746
        %v1748 = vpop.f32.mrf.mxu0
        %1749 = vdwg.mxu0
        %v1750 = vmax.f32 %v1179, 0.0
        %v1751 = vmax.f32 %v1428, 0.0
        %v1752 = vmax.f32 %v1677, 0.0
        %v1753 = vmax.f32 %v1181, 0.0
        %v1754 = vmax.f32 %v1430, 0.0
        %v1755 = vmax.f32 %v1679, 0.0
        %v1756 = vmax.f32 %v1184, 0.0
        %v1757 = vmax.f32 %v1433, 0.0
        %v1758 = vmax.f32 %v1682, 0.0
        %v1759 = vmax.f32 %v1186, 0.0
        %v1760 = vmax.f32 %v1435, 0.0
        %v1761 = vmax.f32 %v1684, 0.0
        %v1762 = vmax.f32 %v1189, 0.0
        %v1763 = vmax.f32 %v1438, 0.0
        %v1764 = vmax.f32 %v1687, 0.0
        %v1765 = vmax.f32 %v1191, 0.0
        %v1766 = vmax.f32 %v1440, 0.0
        %v1767 = vmax.f32 %v1689, 0.0
        %v1768 = vmax.f32 %v1194, 0.0
        %v1769 = vmax.f32 %v1443, 0.0
        %v1770 = vmax.f32 %v1692, 0.0
        %v1771 = vmax.f32 %v1196, 0.0
        %v1772 = vmax.f32 %v1445, 0.0
        %v1773 = vmax.f32 %v1694, 0.0
        %v1774 = vmax.f32 %v1199, 0.0
        %v1775 = vmax.f32 %v1448, 0.0
        %v1776 = vmax.f32 %v1697, 0.0
        %v1777 = vmax.f32 %v1201, 0.0
        %v1778 = vmax.f32 %v1450, 0.0
        %v1779 = vmax.f32 %v1699, 0.0
        %v1780 = vmax.f32 %v1204, 0.0
        %v1781 = vmax.f32 %v1453, 0.0
        %v1782 = vmax.f32 %v1702, 0.0
        %v1783 = vmax.f32 %v1206, 0.0
        %v1784 = vmax.f32 %v1455, 0.0
        %v1785 = vmax.f32 %v1704, 0.0
        %v1786 = vmax.f32 %v1209, 0.0
        %v1787 = vmax.f32 %v1458, 0.0
        %v1788 = vmax.f32 %v1707, 0.0
        %v1789 = vmax.f32 %v1211, 0.0
        %v1790 = vmax.f32 %v1460, 0.0
        %v1791 = vmax.f32 %v1709, 0.0
        %v1792 = vmax.f32 %v1214, 0.0
        %v1793 = vmax.f32 %v1463, 0.0
        %v1794 = vmax.f32 %v1712, 0.0
        %v1795 = vmax.f32 %v1216, 0.0
        %v1796 = vmax.f32 %v1465, 0.0
        %v1797 = vmax.f32 %v1714, 0.0
        %v1798 = vmax.f32 %v1219, 0.0
        %v1799 = vmax.f32 %v1468, 0.0
        %v1800 = vmax.f32 %v1717, 0.0
        %v1801 = vmax.f32 %v1221, 0.0
        %v1802 = vmax.f32 %v1470, 0.0
        %v1803 = vmax.f32 %v1719, 0.0
        %v1804 = vmax.f32 %v1224, 0.0
        %v1805 = vmax.f32 %v1473, 0.0
        %v1806 = vmax.f32 %v1722, 0.0
        %v1807 = vmax.f32 %v1226, 0.0
        %v1808 = vmax.f32 %v1475, 0.0
        %v1809 = vmax.f32 %v1724, 0.0
        %v1810 = vmax.f32 %v1229, 0.0
        %v1811 = vmax.f32 %v1478, 0.0
        %v1812 = vmax.f32 %v1727, 0.0
        %v1813 = vmax.f32 %v1231, 0.0
        %v1814 = vmax.f32 %v1480, 0.0
        %v1815 = vmax.f32 %v1729, 0.0
        %v1816 = vmax.f32 %v1234, 0.0
        %v1817 = vmax.f32 %v1483, 0.0
        %v1818 = vmax.f32 %v1732, 0.0
        %v1819 = vmax.f32 %v1236, 0.0
        %v1820 = vmax.f32 %v1485, 0.0
        %v1821 = vmax.f32 %v1734, 0.0
        %v1822 = vmax.f32 %v1239, 0.0
        %v1823 = vmax.f32 %v1488, 0.0
        %v1824 = vmax.f32 %v1737, 0.0
        %v1825 = vmax.f32 %v1241, 0.0
        %v1826 = vmax.f32 %v1490, 0.0
        %v1827 = vmax.f32 %v1739, 0.0
        %v1828 = vmax.f32 %v1244, 0.0
        %v1829 = vmax.f32 %v1493, 0.0
        %v1830 = vmax.f32 %v1742, 0.0
        %v1831 = vmax.f32 %v1246, 0.0
        %v1832 = vmax.f32 %v1495, 0.0
        %v1833 = vmax.f32 %v1744, 0.0
        %v1834 = vmax.f32 %v1249, 0.0
        %v1835 = vmax.f32 %v1498, 0.0
        %v1836 = vmax.f32 %v1747, 0.0
        %v1837 = vadd.f32 %v1750, %v1753
        %v1838 = vadd.f32 %v1837, %v1756
        %v1839 = vadd.f32 %v1838, %v1759
        %v1840 = vadd.f32 %v1839, %v1762
        %v1841 = vadd.f32 %v1840, %v1765
        %v1842 = vadd.f32 %v1841, %v1768
        %v1843 = vadd.f32 %v1842, %v1771
        %v1844 = vadd.f32 %v1843, %v1774
        %v1845 = vadd.f32 %v1844, %v1777
        %v1846 = vadd.f32 %v1845, %v1780
        %v1847 = vadd.f32 %v1846, %v1783
        %v1848 = vadd.f32 %v1847, %v1786
        %v1849 = vadd.f32 %v1848, %v1789
        %v1850 = vadd.f32 %v1849, %v1792
        %v1851 = vadd.f32 %v1850, %v1795
        %v1852 = vadd.f32 %v1851, %v1798
        %v1853 = vadd.f32 %v1852, %v1801
        %v1854 = vadd.f32 %v1853, %v1804
        %v1855 = vadd.f32 %v1854, %v1807
        %v1856 = vadd.f32 %v1855, %v1810
        %v1857 = vadd.f32 %v1856, %v1813
        %v1858 = vadd.f32 %v1857, %v1816
        %v1859 = vadd.f32 %v1858, %v1819
        %v1860 = vadd.f32 %v1859, %v1822
        %v1861 = vadd.f32 %v1860, %v1825
        %v1862 = vadd.f32 %v1861, %v1828
        %v1863 = vadd.f32 %v1862, %v1831
        %vm1864 = vcmask 1040384
        %v1865 = vsel %vm1864, %v1834, 0.0
        %v1866 = vadd.f32 %v1863, %v1865
        %v1867 = vrot.slane %v1866, 4
        %v1868 = vadd.f32 %v1866, %v1867
        %v1869 = vrot.slane %v1868, 2
        %v1870 = vadd.f32 %v1868, %v1869
        %v1871 = vrot.slane %v1870, 1
        %v1872 = vadd.f32 %v1870, %v1871
        %v1873 = vadd.f32 %v1751, %v1754
        %v1874 = vadd.f32 %v1873, %v1757
        %v1875 = vadd.f32 %v1874, %v1760
        %v1876 = vadd.f32 %v1875, %v1763
        %v1877 = vadd.f32 %v1876, %v1766
        %v1878 = vadd.f32 %v1877, %v1769
        %v1879 = vadd.f32 %v1878, %v1772
        %v1880 = vadd.f32 %v1879, %v1775
        %v1881 = vadd.f32 %v1880, %v1778
        %v1882 = vadd.f32 %v1881, %v1781
        %v1883 = vadd.f32 %v1882, %v1784
        %v1884 = vadd.f32 %v1883, %v1787
        %v1885 = vadd.f32 %v1884, %v1790
        %v1886 = vadd.f32 %v1885, %v1793
        %v1887 = vadd.f32 %v1886, %v1796
        %v1888 = vadd.f32 %v1887, %v1799
        %v1889 = vadd.f32 %v1888, %v1802
        %v1890 = vadd.f32 %v1889, %v1805
        %v1891 = vadd.f32 %v1890, %v1808
        %v1892 = vadd.f32 %v1891, %v1811
        %v1893 = vadd.f32 %v1892, %v1814
        %v1894 = vadd.f32 %v1893, %v1817
        %v1895 = vadd.f32 %v1894, %v1820
        %v1896 = vadd.f32 %v1895, %v1823
        %v1897 = vadd.f32 %v1896, %v1826
        %v1898 = vadd.f32 %v1897, %v1829
        %v1899 = vadd.f32 %v1898, %v1832
        %v1900 = vsel %vm1864, %v1835, 0.0
        %v1901 = vadd.f32 %v1899, %v1900
        %v1902 = vrot.slane %v1901, 4
        %v1903 = vadd.f32 %v1901, %v1902
        %v1904 = vrot.slane %v1903, 2
        %v1905 = vadd.f32 %v1903, %v1904
        %v1906 = vrot.slane %v1905, 1
        %v1907 = vadd.f32 %v1905, %v1906
        %v1908 = vadd.f32 %v1752, %v1755
        %v1909 = vadd.f32 %v1908, %v1758
        %v1910 = vadd.f32 %v1909, %v1761
        %v1911 = vadd.f32 %v1910, %v1764
        %v1912 = vadd.f32 %v1911, %v1767
        %v1913 = vadd.f32 %v1912, %v1770
        %v1914 = vadd.f32 %v1913, %v1773
        %v1915 = vadd.f32 %v1914, %v1776
        %v1916 = vadd.f32 %v1915, %v1779
        %v1917 = vadd.f32 %v1916, %v1782
        %v1918 = vadd.f32 %v1917, %v1785
        %v1919 = vadd.f32 %v1918, %v1788
        %v1920 = vadd.f32 %v1919, %v1791
        %v1921 = vadd.f32 %v1920, %v1794
        %v1922 = vadd.f32 %v1921, %v1797
        %v1923 = vadd.f32 %v1922, %v1800
        %v1924 = vadd.f32 %v1923, %v1803
        %v1925 = vadd.f32 %v1924, %v1806
        %v1926 = vadd.f32 %v1925, %v1809
        %v1927 = vadd.f32 %v1926, %v1812
        %v1928 = vadd.f32 %v1927, %v1815
        %v1929 = vadd.f32 %v1928, %v1818
        %v1930 = vadd.f32 %v1929, %v1821
        %v1931 = vadd.f32 %v1930, %v1824
        %v1932 = vadd.f32 %v1931, %v1827
        %v1933 = vadd.f32 %v1932, %v1830
        %v1934 = vadd.f32 %v1933, %v1833
        %v1935 = vsel %vm1864, %v1836, 0.0
        %v1936 = vadd.f32 %v1934, %v1935
        %v1937 = vrot.slane %v1936, 4
        %v1938 = vadd.f32 %v1936, %v1937
        %v1939 = vrot.slane %v1938, 2
        %v1940 = vadd.f32 %v1938, %v1939
        %v1941 = vrot.slane %v1940, 1
        %v1942 = vadd.f32 %v1940, %v1941
        %v1943 = vrcp.pop 225.0
        %v1944 = vmul.f32 225.0, %v1943
        %v1945 = vsub.f32 1.0, %v1944
        %v1946 = vmul.f32 %v1943, %v1945
        %v1947 = vadd.f32 %v1943, %v1946
        %vm1948 = vweird.f32 %v1943
        %v1949 = vsel %vm1948, %v1943, %v1947
        %v1950 = vmul.f32 %v1872, %v1949
        %v1951 = vmul.f32 %v1907, %v1949
        %v1952 = vmul.f32 %v1942, %v1949
        %v1953 = vpack.c.bf16 %v1950, %v1950
        %v1954 = vpack.c.bf16 %v1951, %v1951
        %v1955 = vpack.c.bf16 %v1952, %v1952
        %v1956 = vld [vmem:[%s3] sm:$0xf]
        %v1957 = vld [vmem:[%s3 + $0x4] sm:$0xf]
        %v1958 = vld [vmem:[%s3 + $0x8] sm:$0xf]
        %v1959 = vld [vmem:[%s3 + $0xc] sm:$0xf]
        %v1960 = vld [vmem:[%s3 + $0x10] sm:$0xf]
        %v1961 = vld [vmem:[%s3 + $0x14] sm:$0xf]
        %v1962 = vld [vmem:[%s3 + $0x18] sm:$0xf]
        %v1963 = vld [vmem:[%s3 + $0x1c] sm:$0xf]
        %v1964 = vld [vmem:[%s3 + $0x20] sm:$0xf]
        %v1965 = vld [vmem:[%s3 + $0x24] sm:$0xf]
        %v1966 = vld [vmem:[%s3 + $0x28] sm:$0xf]
        %v1967 = vld [vmem:[%s3 + $0x2c] sm:$0xf]
        %v1968 = vld [vmem:[%s3 + $0x30] sm:$0xf]
        %v1969 = vld [vmem:[%s3 + $0x34] sm:$0xf]
        %v1970 = vld [vmem:[%s3 + $0x38] sm:$0xf]
        %v1971 = vld [vmem:[%s3 + $0x3c] sm:$0xf]
        %v1972 = vld [vmem:[%s3 + $0x40] sm:$0xf]
        %v1973 = vld [vmem:[%s3 + $0x44] sm:$0xf]
        %v1974 = vld [vmem:[%s3 + $0x48] sm:$0xf]
        %v1975 = vld [vmem:[%s3 + $0x4c] sm:$0xf]
        %v1976 = vld [vmem:[%s3 + $0x50] sm:$0xf]
        %v1977 = vld [vmem:[%s3 + $0x54] sm:$0xf]
        %v1978 = vld [vmem:[%s3 + $0x58] sm:$0xf]
        %v1979 = vld [vmem:[%s3 + $0x5c] sm:$0xf]
        %v1980 = vld [vmem:[%s3 + $0x60] sm:$0xf]
        %v1981 = vld [vmem:[%s3 + $0x64] sm:$0xf]
        %v1982 = vld [vmem:[%s3 + $0x68] sm:$0xf]
        %v1983 = vld [vmem:[%s3 + $0x6c] sm:$0xf]
        %v1984 = vld [vmem:[%s3 + $0x70] sm:$0xf]
        %v1985 = vld [vmem:[%s3 + $0x74] sm:$0xf]
        %v1986 = vld [vmem:[%s3 + $0x78] sm:$0xf]
        %v1987 = vld [vmem:[%s3 + $0x7c] sm:$0xf]
        %v1988 = vld [vmem:[%s3 + $0x80] sm:$0xf]
        %v1989 = vld [vmem:[%s3 + $0x84] sm:$0xf]
        %v1990 = vld [vmem:[%s3 + $0x88] sm:$0xf]
        %v1991 = vld [vmem:[%s3 + $0x8c] sm:$0xf]
        %v1992 = vld [vmem:[%s3 + $0x90] sm:$0xf]
        %v1993 = vld [vmem:[%s3 + $0x94] sm:$0xf]
        %v1994 = vld [vmem:[%s3 + $0x98] sm:$0xf]
        %v1995 = vld [vmem:[%s3 + $0x9c] sm:$0xf]
        %v1996 = vld [vmem:[%s3 + $0xa0] sm:$0xf]
        %v1997 = vld [vmem:[%s3 + $0xa4] sm:$0xf]
        %v1998 = vld [vmem:[%s3 + $0xa8] sm:$0xf]
        %v1999 = vld [vmem:[%s3 + $0xac] sm:$0xf]
        %v2000 = vld [vmem:[%s3 + $0xb0] sm:$0xf]
        %v2001 = vld [vmem:[%s3 + $0xb4] sm:$0xf]
        %v2002 = vld [vmem:[%s3 + $0xb8] sm:$0xf]
        %v2003 = vld [vmem:[%s3 + $0xbc] sm:$0xf]
        %v2004 = vld [vmem:[%s4] sm:$0x1]
        %v2053 = vunpack.c.l.b16 %v1956
        %v2054 = vunpack.c.l.b16 %v1957
        %v2055 = vunpack.c.l.b16 %v1958
        %v2056 = vunpack.c.l.b16 %v1959
        %v2057 = vunpack.c.l.b16 %v1960
        %v2058 = vunpack.c.l.b16 %v1961
        %v2059 = vunpack.c.l.b16 %v1962
        %v2060 = vunpack.c.l.b16 %v1963
        %v2061 = vunpack.c.l.b16 %v1964
        %v2062 = vunpack.c.l.b16 %v1965
        %v2063 = vunpack.c.l.b16 %v1966
        %v2064 = vunpack.c.l.b16 %v1967
        %v2065 = vunpack.c.l.b16 %v1968
        %v2066 = vunpack.c.l.b16 %v1969
        %v2067 = vunpack.c.l.b16 %v1970
        %v2068 = vunpack.c.l.b16 %v1971
        %v2069 = vunpack.c.l.b16 %v1972
        %v2070 = vunpack.c.l.b16 %v1973
        %v2071 = vunpack.c.l.b16 %v1974
        %v2072 = vunpack.c.l.b16 %v1975
        %v2073 = vunpack.c.l.b16 %v1976
        %v2074 = vunpack.c.l.b16 %v1977
        %v2075 = vunpack.c.l.b16 %v1978
        %v2076 = vunpack.c.l.b16 %v1979
        %v2077 = vunpack.c.l.b16 %v1980
        %v2078 = vunpack.c.l.b16 %v1981
        %v2079 = vunpack.c.l.b16 %v1982
        %v2080 = vunpack.c.l.b16 %v1983
        %v2081 = vunpack.c.l.b16 %v1984
        %v2082 = vunpack.c.l.b16 %v1985
        %v2083 = vunpack.c.l.b16 %v1986
        %v2084 = vunpack.c.l.b16 %v1987
        %v2085 = vunpack.c.l.b16 %v1988
        %v2086 = vunpack.c.l.b16 %v1989
        %v2087 = vunpack.c.l.b16 %v1990
        %v2088 = vunpack.c.l.b16 %v1991
        %v2089 = vunpack.c.l.b16 %v1992
        %v2090 = vunpack.c.l.b16 %v1993
        %v2091 = vunpack.c.l.b16 %v1994
        %v2092 = vunpack.c.l.b16 %v1995
        %v2093 = vunpack.c.l.b16 %v1996
        %v2094 = vunpack.c.l.b16 %v1997
        %v2095 = vunpack.c.l.b16 %v1998
        %v2096 = vunpack.c.l.b16 %v1999
        %v2097 = vunpack.c.l.b16 %v2000
        %v2098 = vunpack.c.l.b16 %v2001
        %v2099 = vunpack.c.l.b16 %v2002
        %v2100 = vunpack.c.l.b16 %v2003
        %v2101 = vpack.c.b16 %v2054, %v2053
        %v2102 = vpack.c.b16 %v2056, %v2055
        %v2103 = vpack.c.b16 %v2058, %v2057
        %v2104 = vpack.c.b16 %v2060, %v2059
        %v2105 = vpack.c.b16 %v2062, %v2061
        %v2106 = vpack.c.b16 %v2064, %v2063
        %v2107 = vpack.c.b16 %v2066, %v2065
        %v2108 = vpack.c.b16 %v2068, %v2067
        %v2109 = vpack.c.b16 %v2070, %v2069
        %v2110 = vpack.c.b16 %v2072, %v2071
        %v2111 = vpack.c.b16 %v2074, %v2073
        %v2112 = vpack.c.b16 %v2076, %v2075
        %v2113 = vpack.c.b16 %v2078, %v2077
        %v2114 = vpack.c.b16 %v2080, %v2079
        %v2115 = vpack.c.b16 %v2082, %v2081
        %v2116 = vpack.c.b16 %v2084, %v2083
        %v2117 = vpack.c.b16 %v2086, %v2085
        %v2118 = vpack.c.b16 %v2088, %v2087
        %v2119 = vpack.c.b16 %v2090, %v2089
        %v2120 = vpack.c.b16 %v2092, %v2091
        %v2121 = vpack.c.b16 %v2094, %v2093
        %v2122 = vpack.c.b16 %v2096, %v2095
        %v2123 = vpack.c.b16 %v2098, %v2097
        %v2124 = vpack.c.b16 %v2100, %v2099
        %2149 = vmatpush.bf16.msra.mxu0 %v2108
        %2150 = vmatpush.bf16.msra.mxu0 %v2107
        %2151 = vmatpush.bf16.msra.mxu0 %v2106
        %2152 = vmatpush.bf16.msra.mxu0 %v2105
        %2153 = vmatpush.bf16.msra.mxu0 %v2104
        %2154 = vmatpush.bf16.msra.mxu0 %v2103
        %2155 = vmatpush.bf16.msra.mxu0 %v2102
        %2156 = vmatpush.bf16.msra.mxu0 %v2101
        %2157 = vmatmul.bf16.gmra.mxu0 %v1953
        %v2158 = vpop.f32.mrf.mxu0
        %v2159 = vadd.f32 %v2004, %v2158
        %v2160 = vpop.f32.mrf.mxu0
        %2161 = vdwg.mxu0
        %2162 = vmatpush.bf16.msra.mxu0 %v2116
        %2163 = vmatpush.bf16.msra.mxu0 %v2115
        %2164 = vmatpush.bf16.msra.mxu0 %v2114
        %2165 = vmatpush.bf16.msra.mxu0 %v2113
        %2166 = vmatpush.bf16.msra.mxu0 %v2112
        %2167 = vmatpush.bf16.msra.mxu0 %v2111
        %2168 = vmatpush.bf16.msra.mxu0 %v2110
        %2169 = vmatpush.bf16.msra.mxu0 %v2109
        %2170 = vmatmul.bf16.gmra.mxu0 %v1954
        %v2171 = vpop.f32.mrf.mxu0
        %v2172 = vadd.f32 %v2159, %v2171
        %v2173 = vpop.f32.mrf.mxu0
        %2174 = vdwg.mxu0
        %2175 = vmatpush.bf16.msra.mxu0 %v2124
        %2176 = vmatpush.bf16.msra.mxu0 %v2123
        %2177 = vmatpush.bf16.msra.mxu0 %v2122
        %2178 = vmatpush.bf16.msra.mxu0 %v2121
        %2179 = vmatpush.bf16.msra.mxu0 %v2120
        %2180 = vmatpush.bf16.msra.mxu0 %v2119
        %2181 = vmatpush.bf16.msra.mxu0 %v2118
        %2182 = vmatpush.bf16.msra.mxu0 %v2117
        %2183 = vmatmul.bf16.gmra.mxu0 %v1955
        %v2184 = vpop.f32.mrf.mxu0
        %v2185 = vadd.f32 %v2172, %v2184
        %v2186 = vpop.f32.mrf.mxu0
        %2187 = vdwg.mxu0
        %2188 = vst [vmem:[%s216] sm:$0x1] %v2185
        %s2189 = sand.u32 %s137, 1
        %s2190 = scalar_lea.sflag [#allocation3], %s2189
        %s2191 = sand.u32 %s137, 1
        %s2192 = scalar_lea.vmem [#allocation2], %s2191
        // Predicated region
        $region41: #{nasnet_forward.5} parent=39 // pred_check
          %p2193 = pneg %p147
        $region42: #{nasnet_forward.5} parent=39 // pred_check_branch
          %2195 = sbr.rel (%p2193) target = $region44
        $region43: #{nasnet_forward.5} parent=39 // pred_region
          %2197 = vsyncadd %s2190, 0
          %s2198 = scalar_lea.hbm %s5, %s19
          %s2200 = sshll.u32 %s2192, 4
          %s2201 = int_to_ptr.vmem [resolvable:$true] %s2200
          %s2202 = sshll.u32 %s2198, 4
          %s2203 = int_to_ptr.hbm [resolvable:$true] %s2202
          %2205 = dma.vmem_to_hbm [thread:$0]  %s2201, 16, %s2203, %s2190
        $region44: #{nasnet_forward.5} parent=39 // pred_fallthru
          _
      $region40: #{nasnet_forward.5} parent=5 // pred_fallthru
        _
      %p2206 = scmp.le.s32.totalorder 2, %s14
      // Predicated region
      $region45: #{nasnet_forward.5} parent=5 // pred_check
        %p2207 = pneg %p2206
      $region46: #{nasnet_forward.5} parent=5 // pred_check_branch
        %2209 = sbr.rel (%p2207) target = $region48
      $region47: #{nasnet_forward.5} parent=5 // pred_region
        %s2210 = ssub.s32 %s14, 2
        // Predicated region
        $region49: #{nasnet_forward.5} parent=47 // pred_check
          %p2211 = pneg %p153
        $region50: #{nasnet_forward.5} parent=47 // pred_check_branch
          %2213 = sbr.rel (%p2211) target = $region52
        $region51: #{nasnet_forward.5} parent=47 // pred_region
          %s2214 = sand.u32 %s138, 1
          %s2215 = scalar_lea.sflag [#allocation3], %s2214
          %s2216 = sand.u32 %s138, 1
          %s2217 = scalar_lea.vmem [#allocation2], %s2216
          %2219 = dma.done %s2215, 16
        $region52: #{nasnet_forward.5} parent=47 // pred_fallthru
          _
      $region48: #{nasnet_forward.5} parent=5 // pred_fallthru
        _
    $region6: #{nasnet_forward.5} parent=1 // loop_footer
      %s18 = sadd.s32 1, %s14
    $region7: #{nasnet_forward.5} parent=1 // loop_footer_branch
      %13 = sbr.rel target = $region3
    $region8: #{nasnet_forward.5} parent=1 // loop_exit
      _
    %2220 = vsyncpa [#allocation3], 1
    %s2221 = scalar_lea.sflag [#allocation3], 1
    %2222 = vsyncpa %s2221, 1

// kernel: nasnet_forward.4
$region0: #{nasnet_forward.4}
  #allocation0 [shape = 'u32[]', space=smem, size = 0x4, offset = 0x4, fixed_abs, tag = 'smem constant byte address 0x4 - core index']
  #allocation1 [shape = 'u32[72,128]{1,0:T(1,128)}', space=vmem, size = 0x9000, scoped, tag = 'internal scratch']
  %s0 = inlined_call_operand.vmem [shape: f32[2,19,19,128], index: 0, kind: input, shape index: {}]
  %s1 = inlined_call_operand.vmem [shape: f32[9,128], index: 1, kind: input, shape index: {}]
  %s2 = inlined_call_operand.vmem [shape: f32[25,128], index: 2, kind: input, shape index: {}]
  %s3 = inlined_call_operand.vmem [shape: bf16[2,15,15,384], index: 3, kind: output, shape index: {}]
  %s4 = sld [smem:[#allocation0]]
  $region45: #{nasnet_forward.4} parent=0
    _
  %s6 = ssub.s32 1, %s4
  %s7 = scalar_select 0, %s6, %s4
  loop: start=0, step=1, limit=4
  $region2: #{nasnet_forward.4} parent=0 // loop_pre_header
    _
  $region3: #{nasnet_forward.4} parent=0 // loop_header
    %s9 = sphi 0, %s13
    %p10 = scmp.ge.s32.totalorder %s9, 4
    %s19 = sphi 0, %s21
    %s22 = sphi 0, %s19
    %s23 = sphi 0, %s22
    %s39 = sphi 0, %s23
    %s43 = sphi 0, %s43
    %s45 = sphi 0, %s43
    %s46 = sphi 0, %s45
    %s60 = sphi 0, %s46
    %s64 = sphi 0, %s64
    %s66 = sphi 0, %s64
    %s67 = sphi 0, %s66
    %s81 = sphi 0, %s67
    %s87 = sphi 0, %s89
    %s90 = sphi 0, %s87
    %s91 = sphi 0, %s90
    %s107 = sphi 0, %s91
  $region4: #{nasnet_forward.4} parent=0 // loop_header_branch
    %12 = sbr.rel (%p10) target = $region8
  $region5: #{nasnet_forward.4} parent=0 // loop_body
    %s14 = ssub.s32 %s9, 1
    %s15 = ssub.s32 %s9, 2
    %s16 = sadd.s32 %s9, 1
    %s17 = ssub.s32 %s9, %s16
    %p18 = scmp.eq.s32.totalorder %s17, 0
    %s20 = sadd.s32 %s19, 1
    %s21 = scalar_select %p18, %s19, %s20
    %p24 = pneg %p18
    %p25 = scmp.eq.s32.totalorder %s9, 1
    %p26 = por %p24, %p25
    %p27 = scmp.ne.s32.totalorder %s19, %s22
    %p28 = scmp.eq.s32.totalorder %s9, 0
    %p29 = por %p27, %p28
    %p30 = scmp.ne.s32.totalorder %s19, %s22
    %p31 = scmp.eq.s32.totalorder %s14, 1
    %p32 = por %p30, %p31
    %p33 = scmp.ne.s32.totalorder %s22, %s23
    %p34 = scmp.eq.s32.totalorder %s14, 0
    %p35 = por %p33, %p34
    %p36 = scmp.ne.s32.totalorder %s22, %s23
    %p37 = scmp.eq.s32.totalorder %s15, 1
    %p38 = por %p36, %p37
    %p40 = scmp.ne.s32.totalorder %s23, %s39
    %p41 = scmp.eq.s32.totalorder %s15, 0
    %p42 = por %p40, %p41
    %s44 = sadd.s32 %s43, 1
    %p47 = scmp.eq.s32.totalorder %s9, 1
    %p48 = scmp.ne.s32.totalorder %s43, %s45
    %p49 = scmp.eq.s32.totalorder %s9, 0
    %p50 = por %p48, %p49
    %p51 = scmp.ne.s32.totalorder %s43, %s45
    %p52 = scmp.eq.s32.totalorder %s14, 1
    %p53 = por %p51, %p52
    %p54 = scmp.ne.s32.totalorder %s45, %s46
    %p55 = scmp.eq.s32.totalorder %s14, 0
    %p56 = por %p54, %p55
    %p57 = scmp.ne.s32.totalorder %s45, %s46
    %p58 = scmp.eq.s32.totalorder %s15, 1
    %p59 = por %p57, %p58
    %p61 = scmp.ne.s32.totalorder %s46, %s60
    %p62 = scmp.eq.s32.totalorder %s15, 0
    %p63 = por %p61, %p62
    %s65 = sadd.s32 %s64, 1
    %p68 = scmp.eq.s32.totalorder %s9, 1
    %p69 = scmp.ne.s32.totalorder %s64, %s66
    %p70 = scmp.eq.s32.totalorder %s9, 0
    %p71 = por %p69, %p70
    %p72 = scmp.ne.s32.totalorder %s64, %s66
    %p73 = scmp.eq.s32.totalorder %s14, 1
    %p74 = por %p72, %p73
    %p75 = scmp.ne.s32.totalorder %s66, %s67
    %p76 = scmp.eq.s32.totalorder %s14, 0
    %p77 = por %p75, %p76
    %p78 = scmp.ne.s32.totalorder %s66, %s67
    %p79 = scmp.eq.s32.totalorder %s15, 1
    %p80 = por %p78, %p79
    %p82 = scmp.ne.s32.totalorder %s67, %s81
    %p83 = scmp.eq.s32.totalorder %s15, 0
    %p84 = por %p82, %p83
    %s85 = ssub.s32 %s9, %s16
    %p86 = scmp.eq.s32.totalorder %s85, 0
    %s88 = sadd.s32 %s87, 1
    %s89 = scalar_select %p86, %s87, %s88
    %p92 = pneg %p86
    %p93 = scmp.eq.s32.totalorder %s9, 1
    %p94 = por %p92, %p93
    %p95 = scmp.ne.s32.totalorder %s87, %s90
    %p96 = scmp.eq.s32.totalorder %s9, 0
    %p97 = por %p95, %p96
    %p98 = scmp.ne.s32.totalorder %s87, %s90
    %p99 = scmp.eq.s32.totalorder %s14, 1
    %p100 = por %p98, %p99
    %p101 = scmp.ne.s32.totalorder %s90, %s91
    %p102 = scmp.eq.s32.totalorder %s14, 0
    %p103 = por %p101, %p102
    %p104 = scmp.ne.s32.totalorder %s90, %s91
    %p105 = scmp.eq.s32.totalorder %s15, 1
    %p106 = por %p104, %p105
    %p108 = scmp.ne.s32.totalorder %s91, %s107
    %p109 = scmp.eq.s32.totalorder %s15, 0
    %p110 = por %p108, %p109
    %p111 = scmp.le.s32.totalorder 1, %s9
    %p112 = scmp.lt.s32.totalorder %s9, 3
    %p113 = pnand %p111, %p112
    %p114 = pneg %p113
    // Predicated region
    $region9: #{nasnet_forward.4} parent=5 // pred_check
      _
    $region10: #{nasnet_forward.4} parent=5 // pred_check_branch
      %116 = sbr.rel (%p113) target = $region12
    $region11: #{nasnet_forward.4} parent=5 // pred_region
      %s117 = ssub.s32 %s9, 1
      // Predicated region
      $region13: #{nasnet_forward.4} parent=11 // pred_check
        %p118 = pneg %p56
      $region14: #{nasnet_forward.4} parent=11 // pred_check_branch
        %120 = sbr.rel (%p118) target = $region16
      $region15: #{nasnet_forward.4} parent=11 // pred_region
        _
      $region16: #{nasnet_forward.4} parent=11 // pred_fallthru
        _
      // Predicated region
      $region17: #{nasnet_forward.4} parent=11 // pred_check
        %p121 = pneg %p77
      $region18: #{nasnet_forward.4} parent=11 // pred_check_branch
        %123 = sbr.rel (%p121) target = $region20
      $region19: #{nasnet_forward.4} parent=11 // pred_region
        _
      $region20: #{nasnet_forward.4} parent=11 // pred_fallthru
        _
    $region12: #{nasnet_forward.4} parent=5 // pred_fallthru
      _
    %p124 = scmp.lt.s32.totalorder %s9, 2
    // Predicated region
    $region21: #{nasnet_forward.4} parent=5 // pred_check
      %p125 = pneg %p124
    $region22: #{nasnet_forward.4} parent=5 // pred_check_branch
      %127 = sbr.rel (%p125) target = $region24
    $region23: #{nasnet_forward.4} parent=5 // pred_region
      // Predicated region
      $region25: #{nasnet_forward.4} parent=23 // pred_check
        %p128 = pneg %p29
      $region26: #{nasnet_forward.4} parent=23 // pred_check_branch
        %130 = sbr.rel (%p128) target = $region28
      $region27: #{nasnet_forward.4} parent=23 // pred_region
        %p131 = scmp.lt.s32.totalorder %s9, 1
        %s132 = scalar_select %p131, %s9, 1
        %s133 = smul.addr %s132, 57
        %s134 = smul.addr %s133, 8
        %s135 = scalar_lea.vmem %s0, %s134
      $region28: #{nasnet_forward.4} parent=23 // pred_fallthru
        _
    $region24: #{nasnet_forward.4} parent=5 // pred_fallthru
      _
    %p136 = scmp.le.s32.totalorder 1, %s9
    %p137 = scmp.lt.s32.totalorder %s9, 3
    %p138 = pnand %p136, %p137
    %p139 = pneg %p138
    // Predicated region
    $region29: #{nasnet_forward.4} parent=5 // pred_check
      _
    $region30: #{nasnet_forward.4} parent=5 // pred_check_branch
      %141 = sbr.rel (%p138) target = $region32
    $region31: #{nasnet_forward.4} parent=5 // pred_region
      %s142 = ssub.s32 %s9, 1
      %p143 = scmp.lt.s32.totalorder %s14, 1
      %s144 = scalar_select %p143, %s14, 1
      %s145 = smul.addr %s144, 57
      %s146 = smul.addr %s145, 8
      %s147 = scalar_lea.vmem %s0, %s146
      %p148 = pneg %p35
      %p149 = pneg %p32
      %p150 = pneg %p56
      %p151 = pneg %p53
      %p152 = pneg %p77
      %p153 = pneg %p74
      %p154 = pneg %p103
      %p155 = pneg %p100
      %p156 = scmp.lt.s32.totalorder %s14, 1
      %s157 = scalar_select %p156, %s14, 1
      %s158 = smul.addr %s157, 90
      %s159 = smul.addr %s158, 4
      %s160 = scalar_lea.vmem %s3, %s159
      %p161 = scmp.lt.s32.totalorder %s14, 1
      %s162 = scalar_select %p161, %s14, 1
      %s163 = smul.addr %s162, 57
      %s164 = smul.addr %s163, 8
      %s165 = scalar_lea.vmem %s0, %s164
      %p166 = scmp.lt.s32.totalorder %s14, 1
      %s167 = scalar_select %p166, %s14, 1
      %s168 = smul.addr %s167, 90
      %s169 = smul.addr %s168, 4
      %s170 = scalar_lea.vmem %s3, %s169
      %v171 = vld [vmem:[%s1] sm:$0xff]
      %v172 = vld [vmem:[%s1 + $0x8] sm:$0x1]
      %v173 = vld [vmem:[%s2] sm:$0xff]
      %v174 = vld [vmem:[%s2 + $0x8] sm:$0xff]
      %v175 = vld [vmem:[%s2 + $0x10] sm:$0xff]
      %v176 = vld [vmem:[%s2 + $0x18] sm:$0x1]
      %s177 = scalar_lea.vmem %s165, 24
      %v178 = vld [vmem:[%s177 + $0x1] sm:$0xff]
      %v179 = vld [vmem:[%s177 + $0x9] sm:$0x7f]
      %v180 = vld [vmem:[%s177 + $0x19] sm:$0xff]
      %v181 = vld [vmem:[%s177 + $0x21] sm:$0x7f]
      %v182 = vld [vmem:[%s177 + $0x31] sm:$0xff]
      %v183 = vld [vmem:[%s177 + $0x39] sm:$0x7f]
      %v184 = vld [vmem:[%s177 + $0x49] sm:$0xff]
      %v185 = vld [vmem:[%s177 + $0x51] sm:$0x7f]
      %v186 = vld [vmem:[%s177 + $0x61] sm:$0xff]
      %v187 = vld [vmem:[%s177 + $0x69] sm:$0x7f]
      %v188 = vld [vmem:[%s177 + $0x79] sm:$0xff]
      %v189 = vld [vmem:[%s177 + $0x81] sm:$0x7f]
      %v190 = vld [vmem:[%s177 + $0x91] sm:$0xff]
      %v191 = vld [vmem:[%s177 + $0x99] sm:$0x7f]
      %v192 = vld [vmem:[%s177 + $0xa9] sm:$0xff]
      %v193 = vld [vmem:[%s177 + $0xb1] sm:$0x7f]
      %v194 = vld [vmem:[%s177 + $0xc1] sm:$0xff]
      %v195 = vld [vmem:[%s177 + $0xc9] sm:$0x7f]
      %v196 = vld [vmem:[%s177 + $0xd9] sm:$0xff]
      %v197 = vld [vmem:[%s177 + $0xe1] sm:$0x7f]
      %v198 = vld [vmem:[%s177 + $0xf1] sm:$0xff]
      %v199 = vld [vmem:[%s177 + $0xf9] sm:$0x7f]
      %v200 = vld [vmem:[%s177 + $0x109] sm:$0xff]
      %v201 = vld [vmem:[%s177 + $0x111] sm:$0x7f]
      %v202 = vld [vmem:[%s177 + $0x121] sm:$0xff]
      %v203 = vld [vmem:[%s177 + $0x129] sm:$0x7f]
      %v204 = vld [vmem:[%s177 + $0x139] sm:$0xff]
      %v205 = vld [vmem:[%s177 + $0x141] sm:$0x7f]
      %v206 = vld [vmem:[%s177 + $0x151] sm:$0xff]
      %v207 = vld [vmem:[%s177 + $0x159] sm:$0x7f]
      %v208 = vmax.f32 %v178, 0.0
      %v209 = vmax.f32 %v179, 0.0
      %v210 = vmax.f32 %v180, 0.0
      %v211 = vmax.f32 %v181, 0.0
      %v212 = vmax.f32 %v182, 0.0
      %v213 = vmax.f32 %v183, 0.0
      %v214 = vmax.f32 %v184, 0.0
      %v215 = vmax.f32 %v185, 0.0
      %v216 = vmax.f32 %v186, 0.0
      %v217 = vmax.f32 %v187, 0.0
      %v218 = vmax.f32 %v188, 0.0
      %v219 = vmax.f32 %v189, 0.0
      %v220 = vmax.f32 %v190, 0.0
      %v221 = vmax.f32 %v191, 0.0
      %v222 = vmax.f32 %v192, 0.0
      %v223 = vmax.f32 %v193, 0.0
      %v224 = vmax.f32 %v194, 0.0
      %v225 = vmax.f32 %v195, 0.0
      %v226 = vmax.f32 %v196, 0.0
      %v227 = vmax.f32 %v197, 0.0
      %v228 = vmax.f32 %v198, 0.0
      %v229 = vmax.f32 %v199, 0.0
      %v230 = vmax.f32 %v200, 0.0
      %v231 = vmax.f32 %v201, 0.0
      %v232 = vmax.f32 %v202, 0.0
      %v233 = vmax.f32 %v203, 0.0
      %v234 = vmax.f32 %v204, 0.0
      %v235 = vmax.f32 %v205, 0.0
      %v236 = vmax.f32 %v206, 0.0
      %v237 = vmax.f32 %v207, 0.0
      %v238 = vperm.slane %v171, 0
      %v239 = vmul.f32 %v208, %v238
      %v240 = vmul.f32 %v209, %v238
      %v241 = vmul.f32 %v210, %v238
      %v242 = vmul.f32 %v211, %v238
      %v243 = vmul.f32 %v212, %v238
      %v244 = vmul.f32 %v213, %v238
      %v245 = vmul.f32 %v214, %v238
      %v246 = vmul.f32 %v215, %v238
      %v247 = vmul.f32 %v216, %v238
      %v248 = vmul.f32 %v217, %v238
      %v249 = vmul.f32 %v218, %v238
      %v250 = vmul.f32 %v219, %v238
      %v251 = vmul.f32 %v220, %v238
      %v252 = vmul.f32 %v221, %v238
      %v253 = vmul.f32 %v222, %v238
      %v254 = vmul.f32 %v223, %v238
      %v255 = vmul.f32 %v224, %v238
      %v256 = vmul.f32 %v225, %v238
      %v257 = vmul.f32 %v226, %v238
      %v258 = vmul.f32 %v227, %v238
      %v259 = vmul.f32 %v228, %v238
      %v260 = vmul.f32 %v229, %v238
      %v261 = vmul.f32 %v230, %v238
      %v262 = vmul.f32 %v231, %v238
      %v263 = vmul.f32 %v232, %v238
      %v264 = vmul.f32 %v233, %v238
      %v265 = vmul.f32 %v234, %v238
      %v266 = vmul.f32 %v235, %v238
      %v267 = vmul.f32 %v236, %v238
      %v268 = vmul.f32 %v237, %v238
      %v269 = vadd.f32 %v239, 0.0
      %v270 = vadd.f32 %v240, 0.0
      %v271 = vadd.f32 %v241, 0.0
      %v272 = vadd.f32 %v242, 0.0
      %v273 = vadd.f32 %v243, 0.0
      %v274 = vadd.f32 %v244, 0.0
      %v275 = vadd.f32 %v245, 0.0
      %v276 = vadd.f32 %v246, 0.0
      %v277 = vadd.f32 %v247, 0.0
      %v278 = vadd.f32 %v248, 0.0
      %v279 = vadd.f32 %v249, 0.0
      %v280 = vadd.f32 %v250, 0.0
      %v281 = vadd.f32 %v251, 0.0
      %v282 = vadd.f32 %v252, 0.0
      %v283 = vadd.f32 %v253, 0.0
      %v284 = vadd.f32 %v254, 0.0
      %v285 = vadd.f32 %v255, 0.0
      %v286 = vadd.f32 %v256, 0.0
      %v287 = vadd.f32 %v257, 0.0
      %v288 = vadd.f32 %v258, 0.0
      %v289 = vadd.f32 %v259, 0.0
      %v290 = vadd.f32 %v260, 0.0
      %v291 = vadd.f32 %v261, 0.0
      %v292 = vadd.f32 %v262, 0.0
      %v293 = vadd.f32 %v263, 0.0
      %v294 = vadd.f32 %v264, 0.0
      %v295 = vadd.f32 %v265, 0.0
      %v296 = vadd.f32 %v266, 0.0
      %v297 = vadd.f32 %v267, 0.0
      %v298 = vadd.f32 %v268, 0.0
      %v299 = vmul.f32 %v178, 0.11111111
      %v300 = vmul.f32 %v179, 0.11111111
      %v301 = vmul.f32 %v180, 0.11111111
      %v302 = vmul.f32 %v181, 0.11111111
      %v303 = vmul.f32 %v182, 0.11111111
      %v304 = vmul.f32 %v183, 0.11111111
      %v305 = vmul.f32 %v184, 0.11111111
      %v306 = vmul.f32 %v185, 0.11111111
      %v307 = vmul.f32 %v186, 0.11111111
      %v308 = vmul.f32 %v187, 0.11111111
      %v309 = vmul.f32 %v188, 0.11111111
      %v310 = vmul.f32 %v189, 0.11111111
      %v311 = vmul.f32 %v190, 0.11111111
      %v312 = vmul.f32 %v191, 0.11111111
      %v313 = vmul.f32 %v192, 0.11111111
      %v314 = vmul.f32 %v193, 0.11111111
      %v315 = vmul.f32 %v194, 0.11111111
      %v316 = vmul.f32 %v195, 0.11111111
      %v317 = vmul.f32 %v196, 0.11111111
      %v318 = vmul.f32 %v197, 0.11111111
      %v319 = vmul.f32 %v198, 0.11111111
      %v320 = vmul.f32 %v199, 0.11111111
      %v321 = vmul.f32 %v200, 0.11111111
      %v322 = vmul.f32 %v201, 0.11111111
      %v323 = vmul.f32 %v202, 0.11111111
      %v324 = vmul.f32 %v203, 0.11111111
      %v325 = vmul.f32 %v204, 0.11111111
      %v326 = vmul.f32 %v205, 0.11111111
      %v327 = vmul.f32 %v206, 0.11111111
      %v328 = vmul.f32 %v207, 0.11111111
      %v329 = vadd.f32 %v299, 0.0
      %v330 = vadd.f32 %v300, 0.0
      %v331 = vadd.f32 %v301, 0.0
      %v332 = vadd.f32 %v302, 0.0
      %v333 = vadd.f32 %v303, 0.0
      %v334 = vadd.f32 %v304, 0.0
      %v335 = vadd.f32 %v305, 0.0
      %v336 = vadd.f32 %v306, 0.0
      %v337 = vadd.f32 %v307, 0.0
      %v338 = vadd.f32 %v308, 0.0
      %v339 = vadd.f32 %v309, 0.0
      %v340 = vadd.f32 %v310, 0.0
      %v341 = vadd.f32 %v311, 0.0
      %v342 = vadd.f32 %v312, 0.0
      %v343 = vadd.f32 %v313, 0.0
      %v344 = vadd.f32 %v314, 0.0
      %v345 = vadd.f32 %v315, 0.0
      %v346 = vadd.f32 %v316, 0.0
      %v347 = vadd.f32 %v317, 0.0
      %v348 = vadd.f32 %v318, 0.0
      %v349 = vadd.f32 %v319, 0.0
      %v350 = vadd.f32 %v320, 0.0
      %v351 = vadd.f32 %v321, 0.0
      %v352 = vadd.f32 %v322, 0.0
      %v353 = vadd.f32 %v323, 0.0
      %v354 = vadd.f32 %v324, 0.0
      %v355 = vadd.f32 %v325, 0.0
      %v356 = vadd.f32 %v326, 0.0
      %v357 = vadd.f32 %v327, 0.0
      %v358 = vadd.f32 %v328, 0.0
      %v359 = vld [vmem:[%s177 + $0x2] sm:$0xff]
      %v360 = vld [vmem:[%s177 + $0xa] sm:$0x7f]
      %v361 = vld [vmem:[%s177 + $0x1a] sm:$0xff]
      %v362 = vld [vmem:[%s177 + $0x22] sm:$0x7f]
      %v363 = vld [vmem:[%s177 + $0x32] sm:$0xff]
      %v364 = vld [vmem:[%s177 + $0x3a] sm:$0x7f]
      %v365 = vld [vmem:[%s177 + $0x4a] sm:$0xff]
      %v366 = vld [vmem:[%s177 + $0x52] sm:$0x7f]
      %v367 = vld [vmem:[%s177 + $0x62] sm:$0xff]
      %v368 = vld [vmem:[%s177 + $0x6a] sm:$0x7f]
      %v369 = vld [vmem:[%s177 + $0x7a] sm:$0xff]
      %v370 = vld [vmem:[%s177 + $0x82] sm:$0x7f]
      %v371 = vld [vmem:[%s177 + $0x92] sm:$0xff]
      %v372 = vld [vmem:[%s177 + $0x9a] sm:$0x7f]
      %v373 = vld [vmem:[%s177 + $0xaa] sm:$0xff]
      %v374 = vld [vmem:[%s177 + $0xb2] sm:$0x7f]
      %v375 = vld [vmem:[%s177 + $0xc2] sm:$0xff]
      %v376 = vld [vmem:[%s177 + $0xca] sm:$0x7f]
      %v377 = vld [vmem:[%s177 + $0xda] sm:$0xff]
      %v378 = vld [vmem:[%s177 + $0xe2] sm:$0x7f]
      %v379 = vld [vmem:[%s177 + $0xf2] sm:$0xff]
      %v380 = vld [vmem:[%s177 + $0xfa] sm:$0x7f]
      %v381 = vld [vmem:[%s177 + $0x10a] sm:$0xff]
      %v382 = vld [vmem:[%s177 + $0x112] sm:$0x7f]
      %v383 = vld [vmem:[%s177 + $0x122] sm:$0xff]
      %v384 = vld [vmem:[%s177 + $0x12a] sm:$0x7f]
      %v385 = vld [vmem:[%s177 + $0x13a] sm:$0xff]
      %v386 = vld [vmem:[%s177 + $0x142] sm:$0x7f]
      %v387 = vld [vmem:[%s177 + $0x152] sm:$0xff]
      %v388 = vld [vmem:[%s177 + $0x15a] sm:$0x7f]
      %v389 = vmax.f32 %v359, 0.0
      %v390 = vmax.f32 %v360, 0.0
      %v391 = vmax.f32 %v361, 0.0
      %v392 = vmax.f32 %v362, 0.0
      %v393 = vmax.f32 %v363, 0.0
      %v394 = vmax.f32 %v364, 0.0
      %v395 = vmax.f32 %v365, 0.0
      %v396 = vmax.f32 %v366, 0.0
      %v397 = vmax.f32 %v367, 0.0
      %v398 = vmax.f32 %v368, 0.0
      %v399 = vmax.f32 %v369, 0.0
      %v400 = vmax.f32 %v370, 0.0
      %v401 = vmax.f32 %v371, 0.0
      %v402 = vmax.f32 %v372, 0.0
      %v403 = vmax.f32 %v373, 0.0
      %v404 = vmax.f32 %v374, 0.0
      %v405 = vmax.f32 %v375, 0.0
      %v406 = vmax.f32 %v376, 0.0
      %v407 = vmax.f32 %v377, 0.0
      %v408 = vmax.f32 %v378, 0.0
      %v409 = vmax.f32 %v379, 0.0
      %v410 = vmax.f32 %v380, 0.0
      %v411 = vmax.f32 %v381, 0.0
      %v412 = vmax.f32 %v382, 0.0
      %v413 = vmax.f32 %v383, 0.0
      %v414 = vmax.f32 %v384, 0.0
      %v415 = vmax.f32 %v385, 0.0
      %v416 = vmax.f32 %v386, 0.0
      %v417 = vmax.f32 %v387, 0.0
      %v418 = vmax.f32 %v388, 0.0
      %v419 = vperm.slane %v171, 1
      %v420 = vmul.f32 %v389, %v419
      %v421 = vmul.f32 %v390, %v419
      %v422 = vmul.f32 %v391, %v419
      %v423 = vmul.f32 %v392, %v419
      %v424 = vmul.f32 %v393, %v419
      %v425 = vmul.f32 %v394, %v419
      %v426 = vmul.f32 %v395, %v419
      %v427 = vmul.f32 %v396, %v419
      %v428 = vmul.f32 %v397, %v419
      %v429 = vmul.f32 %v398, %v419
      %v430 = vmul.f32 %v399, %v419
      %v431 = vmul.f32 %v400, %v419
      %v432 = vmul.f32 %v401, %v419
      %v433 = vmul.f32 %v402, %v419
      %v434 = vmul.f32 %v403, %v419
      %v435 = vmul.f32 %v404, %v419
      %v436 = vmul.f32 %v405, %v419
      %v437 = vmul.f32 %v406, %v419
      %v438 = vmul.f32 %v407, %v419
      %v439 = vmul.f32 %v408, %v419
      %v440 = vmul.f32 %v409, %v419
      %v441 = vmul.f32 %v410, %v419
      %v442 = vmul.f32 %v411, %v419
      %v443 = vmul.f32 %v412, %v419
      %v444 = vmul.f32 %v413, %v419
      %v445 = vmul.f32 %v414, %v419
      %v446 = vmul.f32 %v415, %v419
      %v447 = vmul.f32 %v416, %v419
      %v448 = vmul.f32 %v417, %v419
      %v449 = vmul.f32 %v418, %v419
      %v450 = vadd.f32 %v269, %v420
      %v451 = vadd.f32 %v270, %v421
      %v452 = vadd.f32 %v271, %v422
      %v453 = vadd.f32 %v272, %v423
      %v454 = vadd.f32 %v273, %v424
      %v455 = vadd.f32 %v274, %v425
      %v456 = vadd.f32 %v275, %v426
      %v457 = vadd.f32 %v276, %v427
      %v458 = vadd.f32 %v277, %v428
      %v459 = vadd.f32 %v278, %v429
      %v460 = vadd.f32 %v279, %v430
      %v461 = vadd.f32 %v280, %v431
      %v462 = vadd.f32 %v281, %v432
      %v463 = vadd.f32 %v282, %v433
      %v464 = vadd.f32 %v283, %v434
      %v465 = vadd.f32 %v284, %v435
      %v466 = vadd.f32 %v285, %v436
      %v467 = vadd.f32 %v286, %v437
      %v468 = vadd.f32 %v287, %v438
      %v469 = vadd.f32 %v288, %v439
      %v470 = vadd.f32 %v289, %v440
      %v471 = vadd.f32 %v290, %v441
      %v472 = vadd.f32 %v291, %v442
      %v473 = vadd.f32 %v292, %v443
      %v474 = vadd.f32 %v293, %v444
      %v475 = vadd.f32 %v294, %v445
      %v476 = vadd.f32 %v295, %v446
      %v477 = vadd.f32 %v296, %v447
      %v478 = vadd.f32 %v297, %v448
      %v479 = vadd.f32 %v298, %v449
      %v480 = vmul.f32 %v359, 0.11111111
      %v481 = vmul.f32 %v360, 0.11111111
      %v482 = vmul.f32 %v361, 0.11111111
      %v483 = vmul.f32 %v362, 0.11111111
      %v484 = vmul.f32 %v363, 0.11111111
      %v485 = vmul.f32 %v364, 0.11111111
      %v486 = vmul.f32 %v365, 0.11111111
      %v487 = vmul.f32 %v366, 0.11111111
      %v488 = vmul.f32 %v367, 0.11111111
      %v489 = vmul.f32 %v368, 0.11111111
      %v490 = vmul.f32 %v369, 0.11111111
      %v491 = vmul.f32 %v370, 0.11111111
      %v492 = vmul.f32 %v371, 0.11111111
      %v493 = vmul.f32 %v372, 0.11111111
      %v494 = vmul.f32 %v373, 0.11111111
      %v495 = vmul.f32 %v374, 0.11111111
      %v496 = vmul.f32 %v375, 0.11111111
      %v497 = vmul.f32 %v376, 0.11111111
      %v498 = vmul.f32 %v377, 0.11111111
      %v499 = vmul.f32 %v378, 0.11111111
      %v500 = vmul.f32 %v379, 0.11111111
      %v501 = vmul.f32 %v380, 0.11111111
      %v502 = vmul.f32 %v381, 0.11111111
      %v503 = vmul.f32 %v382, 0.11111111
      %v504 = vmul.f32 %v383, 0.11111111
      %v505 = vmul.f32 %v384, 0.11111111
      %v506 = vmul.f32 %v385, 0.11111111
      %v507 = vmul.f32 %v386, 0.11111111
      %v508 = vmul.f32 %v387, 0.11111111
      %v509 = vmul.f32 %v388, 0.11111111
      %v510 = vadd.f32 %v329, %v480
      %v511 = vadd.f32 %v330, %v481
      %v512 = vadd.f32 %v331, %v482
      %v513 = vadd.f32 %v332, %v483
      %v514 = vadd.f32 %v333, %v484
      %v515 = vadd.f32 %v334, %v485
      %v516 = vadd.f32 %v335, %v486
      %v517 = vadd.f32 %v336, %v487
      %v518 = vadd.f32 %v337, %v488
      %v519 = vadd.f32 %v338, %v489
      %v520 = vadd.f32 %v339, %v490
      %v521 = vadd.f32 %v340, %v491
      %v522 = vadd.f32 %v341, %v492
      %v523 = vadd.f32 %v342, %v493
      %v524 = vadd.f32 %v343, %v494
      %v525 = vadd.f32 %v344, %v495
      %v526 = vadd.f32 %v345, %v496
      %v527 = vadd.f32 %v346, %v497
      %v528 = vadd.f32 %v347, %v498
      %v529 = vadd.f32 %v348, %v499
      %v530 = vadd.f32 %v349, %v500
      %v531 = vadd.f32 %v350, %v501
      %v532 = vadd.f32 %v351, %v502
      %v533 = vadd.f32 %v352, %v503
      %v534 = vadd.f32 %v353, %v504
      %v535 = vadd.f32 %v354, %v505
      %v536 = vadd.f32 %v355, %v506
      %v537 = vadd.f32 %v356, %v507
      %v538 = vadd.f32 %v357, %v508
      %v539 = vadd.f32 %v358, %v509
      %v540 = vld [vmem:[%s177 + $0x3] sm:$0xff]
      %v541 = vld [vmem:[%s177 + $0xb] sm:$0x7f]
      %v542 = vld [vmem:[%s177 + $0x1b] sm:$0xff]
      %v543 = vld [vmem:[%s177 + $0x23] sm:$0x7f]
      %v544 = vld [vmem:[%s177 + $0x33] sm:$0xff]
      %v545 = vld [vmem:[%s177 + $0x3b] sm:$0x7f]
      %v546 = vld [vmem:[%s177 + $0x4b] sm:$0xff]
      %v547 = vld [vmem:[%s177 + $0x53] sm:$0x7f]
      %v548 = vld [vmem:[%s177 + $0x63] sm:$0xff]
      %v549 = vld [vmem:[%s177 + $0x6b] sm:$0x7f]
      %v550 = vld [vmem:[%s177 + $0x7b] sm:$0xff]
      %v551 = vld [vmem:[%s177 + $0x83] sm:$0x7f]
      %v552 = vld [vmem:[%s177 + $0x93] sm:$0xff]
      %v553 = vld [vmem:[%s177 + $0x9b] sm:$0x7f]
      %v554 = vld [vmem:[%s177 + $0xab] sm:$0xff]
      %v555 = vld [vmem:[%s177 + $0xb3] sm:$0x7f]
      %v556 = vld [vmem:[%s177 + $0xc3] sm:$0xff]
      %v557 = vld [vmem:[%s177 + $0xcb] sm:$0x7f]
      %v558 = vld [vmem:[%s177 + $0xdb] sm:$0xff]
      %v559 = vld [vmem:[%s177 + $0xe3] sm:$0x7f]
      %v560 = vld [vmem:[%s177 + $0xf3] sm:$0xff]
      %v561 = vld [vmem:[%s177 + $0xfb] sm:$0x7f]
      %v562 = vld [vmem:[%s177 + $0x10b] sm:$0xff]
      %v563 = vld [vmem:[%s177 + $0x113] sm:$0x7f]
      %v564 = vld [vmem:[%s177 + $0x123] sm:$0xff]
      %v565 = vld [vmem:[%s177 + $0x12b] sm:$0x7f]
      %v566 = vld [vmem:[%s177 + $0x13b] sm:$0xff]
      %v567 = vld [vmem:[%s177 + $0x143] sm:$0x7f]
      %v568 = vld [vmem:[%s177 + $0x153] sm:$0xff]
      %v569 = vld [vmem:[%s177 + $0x15b] sm:$0x7f]
      %v570 = vmax.f32 %v540, 0.0
      %v571 = vmax.f32 %v541, 0.0
      %v572 = vmax.f32 %v542, 0.0
      %v573 = vmax.f32 %v543, 0.0
      %v574 = vmax.f32 %v544, 0.0
      %v575 = vmax.f32 %v545, 0.0
      %v576 = vmax.f32 %v546, 0.0
      %v577 = vmax.f32 %v547, 0.0
      %v578 = vmax.f32 %v548, 0.0
      %v579 = vmax.f32 %v549, 0.0
      %v580 = vmax.f32 %v550, 0.0
      %v581 = vmax.f32 %v551, 0.0
      %v582 = vmax.f32 %v552, 0.0
      %v583 = vmax.f32 %v553, 0.0
      %v584 = vmax.f32 %v554, 0.0
      %v585 = vmax.f32 %v555, 0.0
      %v586 = vmax.f32 %v556, 0.0
      %v587 = vmax.f32 %v557, 0.0
      %v588 = vmax.f32 %v558, 0.0
      %v589 = vmax.f32 %v559, 0.0
      %v590 = vmax.f32 %v560, 0.0
      %v591 = vmax.f32 %v561, 0.0
      %v592 = vmax.f32 %v562, 0.0
      %v593 = vmax.f32 %v563, 0.0
      %v594 = vmax.f32 %v564, 0.0
      %v595 = vmax.f32 %v565, 0.0
      %v596 = vmax.f32 %v566, 0.0
      %v597 = vmax.f32 %v567, 0.0
      %v598 = vmax.f32 %v568, 0.0
      %v599 = vmax.f32 %v569, 0.0
      %v600 = vperm.slane %v171, 2
      %v601 = vmul.f32 %v570, %v600
      %v602 = vmul.f32 %v571, %v600
      %v603 = vmul.f32 %v572, %v600
      %v604 = vmul.f32 %v573, %v600
      %v605 = vmul.f32 %v574, %v600
      %v606 = vmul.f32 %v575, %v600
      %v607 = vmul.f32 %v576, %v600
      %v608 = vmul.f32 %v577, %v600
      %v609 = vmul.f32 %v578, %v600
      %v610 = vmul.f32 %v579, %v600
      %v611 = vmul.f32 %v580, %v600
      %v612 = vmul.f32 %v581, %v600
      %v613 = vmul.f32 %v582, %v600
      %v614 = vmul.f32 %v583, %v600
      %v615 = vmul.f32 %v584, %v600
      %v616 = vmul.f32 %v585, %v600
      %v617 = vmul.f32 %v586, %v600
      %v618 = vmul.f32 %v587, %v600
      %v619 = vmul.f32 %v588, %v600
      %v620 = vmul.f32 %v589, %v600
      %v621 = vmul.f32 %v590, %v600
      %v622 = vmul.f32 %v591, %v600
      %v623 = vmul.f32 %v592, %v600
      %v624 = vmul.f32 %v593, %v600
      %v625 = vmul.f32 %v594, %v600
      %v626 = vmul.f32 %v595, %v600
      %v627 = vmul.f32 %v596, %v600
      %v628 = vmul.f32 %v597, %v600
      %v629 = vmul.f32 %v598, %v600
      %v630 = vmul.f32 %v599, %v600
      %v631 = vadd.f32 %v450, %v601
      %v632 = vadd.f32 %v451, %v602
      %v633 = vadd.f32 %v452, %v603
      %v634 = vadd.f32 %v453, %v604
      %v635 = vadd.f32 %v454, %v605
      %v636 = vadd.f32 %v455, %v606
      %v637 = vadd.f32 %v456, %v607
      %v638 = vadd.f32 %v457, %v608
      %v639 = vadd.f32 %v458, %v609
      %v640 = vadd.f32 %v459, %v610
      %v641 = vadd.f32 %v460, %v611
      %v642 = vadd.f32 %v461, %v612
      %v643 = vadd.f32 %v462, %v613
      %v644 = vadd.f32 %v463, %v614
      %v645 = vadd.f32 %v464, %v615
      %v646 = vadd.f32 %v465, %v616
      %v647 = vadd.f32 %v466, %v617
      %v648 = vadd.f32 %v467, %v618
      %v649 = vadd.f32 %v468, %v619
      %v650 = vadd.f32 %v469, %v620
      %v651 = vadd.f32 %v470, %v621
      %v652 = vadd.f32 %v471, %v622
      %v653 = vadd.f32 %v472, %v623
      %v654 = vadd.f32 %v473, %v624
      %v655 = vadd.f32 %v474, %v625
      %v656 = vadd.f32 %v475, %v626
      %v657 = vadd.f32 %v476, %v627
      %v658 = vadd.f32 %v477, %v628
      %v659 = vadd.f32 %v478, %v629
      %v660 = vadd.f32 %v479, %v630
      %v661 = vmul.f32 %v540, 0.11111111
      %v662 = vmul.f32 %v541, 0.11111111
      %v663 = vmul.f32 %v542, 0.11111111
      %v664 = vmul.f32 %v543, 0.11111111
      %v665 = vmul.f32 %v544, 0.11111111
      %v666 = vmul.f32 %v545, 0.11111111
      %v667 = vmul.f32 %v546, 0.11111111
      %v668 = vmul.f32 %v547, 0.11111111
      %v669 = vmul.f32 %v548, 0.11111111
      %v670 = vmul.f32 %v549, 0.11111111
      %v671 = vmul.f32 %v550, 0.11111111
      %v672 = vmul.f32 %v551, 0.11111111
      %v673 = vmul.f32 %v552, 0.11111111
      %v674 = vmul.f32 %v553, 0.11111111
      %v675 = vmul.f32 %v554, 0.11111111
      %v676 = vmul.f32 %v555, 0.11111111
      %v677 = vmul.f32 %v556, 0.11111111
      %v678 = vmul.f32 %v557, 0.11111111
      %v679 = vmul.f32 %v558, 0.11111111
      %v680 = vmul.f32 %v559, 0.11111111
      %v681 = vmul.f32 %v560, 0.11111111
      %v682 = vmul.f32 %v561, 0.11111111
      %v683 = vmul.f32 %v562, 0.11111111
      %v684 = vmul.f32 %v563, 0.11111111
      %v685 = vmul.f32 %v564, 0.11111111
      %v686 = vmul.f32 %v565, 0.11111111
      %v687 = vmul.f32 %v566, 0.11111111
      %v688 = vmul.f32 %v567, 0.11111111
      %v689 = vmul.f32 %v568, 0.11111111
      %v690 = vmul.f32 %v569, 0.11111111
      %v691 = vadd.f32 %v510, %v661
      %v692 = vadd.f32 %v511, %v662
      %v693 = vadd.f32 %v512, %v663
      %v694 = vadd.f32 %v513, %v664
      %v695 = vadd.f32 %v514, %v665
      %v696 = vadd.f32 %v515, %v666
      %v697 = vadd.f32 %v516, %v667
      %v698 = vadd.f32 %v517, %v668
      %v699 = vadd.f32 %v518, %v669
      %v700 = vadd.f32 %v519, %v670
      %v701 = vadd.f32 %v520, %v671
      %v702 = vadd.f32 %v521, %v672
      %v703 = vadd.f32 %v522, %v673
      %v704 = vadd.f32 %v523, %v674
      %v705 = vadd.f32 %v524, %v675
      %v706 = vadd.f32 %v525, %v676
      %v707 = vadd.f32 %v526, %v677
      %v708 = vadd.f32 %v527, %v678
      %v709 = vadd.f32 %v528, %v679
      %v710 = vadd.f32 %v529, %v680
      %v711 = vadd.f32 %v530, %v681
      %v712 = vadd.f32 %v531, %v682
      %v713 = vadd.f32 %v532, %v683
      %v714 = vadd.f32 %v533, %v684
      %v715 = vadd.f32 %v534, %v685
      %v716 = vadd.f32 %v535, %v686
      %v717 = vadd.f32 %v536, %v687
      %v718 = vadd.f32 %v537, %v688
      %v719 = vadd.f32 %v538, %v689
      %v720 = vadd.f32 %v539, %v690
      %s721 = scalar_lea.vmem %s165, 48
      %v722 = vld [vmem:[%s721 + $0x1] sm:$0xff]
      %v723 = vld [vmem:[%s721 + $0x9] sm:$0x7f]
      %v724 = vld [vmem:[%s721 + $0x19] sm:$0xff]
      %v725 = vld [vmem:[%s721 + $0x21] sm:$0x7f]
      %v726 = vld [vmem:[%s721 + $0x31] sm:$0xff]
      %v727 = vld [vmem:[%s721 + $0x39] sm:$0x7f]
      %v728 = vld [vmem:[%s721 + $0x49] sm:$0xff]
      %v729 = vld [vmem:[%s721 + $0x51] sm:$0x7f]
      %v730 = vld [vmem:[%s721 + $0x61] sm:$0xff]
      %v731 = vld [vmem:[%s721 + $0x69] sm:$0x7f]
      %v732 = vld [vmem:[%s721 + $0x79] sm:$0xff]
      %v733 = vld [vmem:[%s721 + $0x81] sm:$0x7f]
      %v734 = vld [vmem:[%s721 + $0x91] sm:$0xff]
      %v735 = vld [vmem:[%s721 + $0x99] sm:$0x7f]
      %v736 = vld [vmem:[%s721 + $0xa9] sm:$0xff]
      %v737 = vld [vmem:[%s721 + $0xb1] sm:$0x7f]
      %v738 = vld [vmem:[%s721 + $0xc1] sm:$0xff]
      %v739 = vld [vmem:[%s721 + $0xc9] sm:$0x7f]
      %v740 = vld [vmem:[%s721 + $0xd9] sm:$0xff]
      %v741 = vld [vmem:[%s721 + $0xe1] sm:$0x7f]
      %v742 = vld [vmem:[%s721 + $0xf1] sm:$0xff]
      %v743 = vld [vmem:[%s721 + $0xf9] sm:$0x7f]
      %v744 = vld [vmem:[%s721 + $0x109] sm:$0xff]
      %v745 = vld [vmem:[%s721 + $0x111] sm:$0x7f]
      %v746 = vld [vmem:[%s721 + $0x121] sm:$0xff]
      %v747 = vld [vmem:[%s721 + $0x129] sm:$0x7f]
      %v748 = vld [vmem:[%s721 + $0x139] sm:$0xff]
      %v749 = vld [vmem:[%s721 + $0x141] sm:$0x7f]
      %v750 = vld [vmem:[%s721 + $0x151] sm:$0xff]
      %v751 = vld [vmem:[%s721 + $0x159] sm:$0x7f]
      %v752 = vmax.f32 %v722, 0.0
      %v753 = vmax.f32 %v723, 0.0
      %v754 = vmax.f32 %v724, 0.0
      %v755 = vmax.f32 %v725, 0.0
      %v756 = vmax.f32 %v726, 0.0
      %v757 = vmax.f32 %v727, 0.0
      %v758 = vmax.f32 %v728, 0.0
      %v759 = vmax.f32 %v729, 0.0
      %v760 = vmax.f32 %v730, 0.0
      %v761 = vmax.f32 %v731, 0.0
      %v762 = vmax.f32 %v732, 0.0
      %v763 = vmax.f32 %v733, 0.0
      %v764 = vmax.f32 %v734, 0.0
      %v765 = vmax.f32 %v735, 0.0
      %v766 = vmax.f32 %v736, 0.0
      %v767 = vmax.f32 %v737, 0.0
      %v768 = vmax.f32 %v738, 0.0
      %v769 = vmax.f32 %v739, 0.0
      %v770 = vmax.f32 %v740, 0.0
      %v771 = vmax.f32 %v741, 0.0
      %v772 = vmax.f32 %v742, 0.0
      %v773 = vmax.f32 %v743, 0.0
      %v774 = vmax.f32 %v744, 0.0
      %v775 = vmax.f32 %v745, 0.0
      %v776 = vmax.f32 %v746, 0.0
      %v777 = vmax.f32 %v747, 0.0
      %v778 = vmax.f32 %v748, 0.0
      %v779 = vmax.f32 %v749, 0.0
      %v780 = vmax.f32 %v750, 0.0
      %v781 = vmax.f32 %v751, 0.0
      %v782 = vperm.slane %v171, 3
      %v783 = vmul.f32 %v752, %v782
      %v784 = vmul.f32 %v753, %v782
      %v785 = vmul.f32 %v754, %v782
      %v786 = vmul.f32 %v755, %v782
      %v787 = vmul.f32 %v756, %v782
      %v788 = vmul.f32 %v757, %v782
      %v789 = vmul.f32 %v758, %v782
      %v790 = vmul.f32 %v759, %v782
      %v791 = vmul.f32 %v760, %v782
      %v792 = vmul.f32 %v761, %v782
      %v793 = vmul.f32 %v762, %v782
      %v794 = vmul.f32 %v763, %v782
      %v795 = vmul.f32 %v764, %v782
      %v796 = vmul.f32 %v765, %v782
      %v797 = vmul.f32 %v766, %v782
      %v798 = vmul.f32 %v767, %v782
      %v799 = vmul.f32 %v768, %v782
      %v800 = vmul.f32 %v769, %v782
      %v801 = vmul.f32 %v770, %v782
      %v802 = vmul.f32 %v771, %v782
      %v803 = vmul.f32 %v772, %v782
      %v804 = vmul.f32 %v773, %v782
      %v805 = vmul.f32 %v774, %v782
      %v806 = vmul.f32 %v775, %v782
      %v807 = vmul.f32 %v776, %v782
      %v808 = vmul.f32 %v777, %v782
      %v809 = vmul.f32 %v778, %v782
      %v810 = vmul.f32 %v779, %v782
      %v811 = vmul.f32 %v780, %v782
      %v812 = vmul.f32 %v781, %v782
      %v813 = vadd.f32 %v631, %v783
      %v814 = vadd.f32 %v632, %v784
      %v815 = vadd.f32 %v633, %v785
      %v816 = vadd.f32 %v634, %v786
      %v817 = vadd.f32 %v635, %v787
      %v818 = vadd.f32 %v636, %v788
      %v819 = vadd.f32 %v637, %v789
      %v820 = vadd.f32 %v638, %v790
      %v821 = vadd.f32 %v639, %v791
      %v822 = vadd.f32 %v640, %v792
      %v823 = vadd.f32 %v641, %v793
      %v824 = vadd.f32 %v642, %v794
      %v825 = vadd.f32 %v643, %v795
      %v826 = vadd.f32 %v644, %v796
      %v827 = vadd.f32 %v645, %v797
      %v828 = vadd.f32 %v646, %v798
      %v829 = vadd.f32 %v647, %v799
      %v830 = vadd.f32 %v648, %v800
      %v831 = vadd.f32 %v649, %v801
      %v832 = vadd.f32 %v650, %v802
      %v833 = vadd.f32 %v651, %v803
      %v834 = vadd.f32 %v652, %v804
      %v835 = vadd.f32 %v653, %v805
      %v836 = vadd.f32 %v654, %v806
      %v837 = vadd.f32 %v655, %v807
      %v838 = vadd.f32 %v656, %v808
      %v839 = vadd.f32 %v657, %v809
      %v840 = vadd.f32 %v658, %v810
      %v841 = vadd.f32 %v659, %v811
      %v842 = vadd.f32 %v660, %v812
      %v843 = vmul.f32 %v722, 0.11111111
      %v844 = vmul.f32 %v723, 0.11111111
      %v845 = vmul.f32 %v724, 0.11111111
      %v846 = vmul.f32 %v725, 0.11111111
      %v847 = vmul.f32 %v726, 0.11111111
      %v848 = vmul.f32 %v727, 0.11111111
      %v849 = vmul.f32 %v728, 0.11111111
      %v850 = vmul.f32 %v729, 0.11111111
      %v851 = vmul.f32 %v730, 0.11111111
      %v852 = vmul.f32 %v731, 0.11111111
      %v853 = vmul.f32 %v732, 0.11111111
      %v854 = vmul.f32 %v733, 0.11111111
      %v855 = vmul.f32 %v734, 0.11111111
      %v856 = vmul.f32 %v735, 0.11111111
      %v857 = vmul.f32 %v736, 0.11111111
      %v858 = vmul.f32 %v737, 0.11111111
      %v859 = vmul.f32 %v738, 0.11111111
      %v860 = vmul.f32 %v739, 0.11111111
      %v861 = vmul.f32 %v740, 0.11111111
      %v862 = vmul.f32 %v741, 0.11111111
      %v863 = vmul.f32 %v742, 0.11111111
      %v864 = vmul.f32 %v743, 0.11111111
      %v865 = vmul.f32 %v744, 0.11111111
      %v866 = vmul.f32 %v745, 0.11111111
      %v867 = vmul.f32 %v746, 0.11111111
      %v868 = vmul.f32 %v747, 0.11111111
      %v869 = vmul.f32 %v748, 0.11111111
      %v870 = vmul.f32 %v749, 0.11111111
      %v871 = vmul.f32 %v750, 0.11111111
      %v872 = vmul.f32 %v751, 0.11111111
      %v873 = vadd.f32 %v691, %v843
      %v874 = vadd.f32 %v692, %v844
      %v875 = vadd.f32 %v693, %v845
      %v876 = vadd.f32 %v694, %v846
      %v877 = vadd.f32 %v695, %v847
      %v878 = vadd.f32 %v696, %v848
      %v879 = vadd.f32 %v697, %v849
      %v880 = vadd.f32 %v698, %v850
      %v881 = vadd.f32 %v699, %v851
      %v882 = vadd.f32 %v700, %v852
      %v883 = vadd.f32 %v701, %v853
      %v884 = vadd.f32 %v702, %v854
      %v885 = vadd.f32 %v703, %v855
      %v886 = vadd.f32 %v704, %v856
      %v887 = vadd.f32 %v705, %v857
      %v888 = vadd.f32 %v706, %v858
      %v889 = vadd.f32 %v707, %v859
      %v890 = vadd.f32 %v708, %v860
      %v891 = vadd.f32 %v709, %v861
      %v892 = vadd.f32 %v710, %v862
      %v893 = vadd.f32 %v711, %v863
      %v894 = vadd.f32 %v712, %v864
      %v895 = vadd.f32 %v713, %v865
      %v896 = vadd.f32 %v714, %v866
      %v897 = vadd.f32 %v715, %v867
      %v898 = vadd.f32 %v716, %v868
      %v899 = vadd.f32 %v717, %v869
      %v900 = vadd.f32 %v718, %v870
      %v901 = vadd.f32 %v719, %v871
      %v902 = vadd.f32 %v720, %v872
      %v903 = vld [vmem:[%s721 + $0x2] sm:$0xff]
      %v904 = vld [vmem:[%s721 + $0xa] sm:$0x7f]
      %v905 = vld [vmem:[%s721 + $0x1a] sm:$0xff]
      %v906 = vld [vmem:[%s721 + $0x22] sm:$0x7f]
      %v907 = vld [vmem:[%s721 + $0x32] sm:$0xff]
      %v908 = vld [vmem:[%s721 + $0x3a] sm:$0x7f]
      %v909 = vld [vmem:[%s721 + $0x4a] sm:$0xff]
      %v910 = vld [vmem:[%s721 + $0x52] sm:$0x7f]
      %v911 = vld [vmem:[%s721 + $0x62] sm:$0xff]
      %v912 = vld [vmem:[%s721 + $0x6a] sm:$0x7f]
      %v913 = vld [vmem:[%s721 + $0x7a] sm:$0xff]
      %v914 = vld [vmem:[%s721 + $0x82] sm:$0x7f]
      %v915 = vld [vmem:[%s721 + $0x92] sm:$0xff]
      %v916 = vld [vmem:[%s721 + $0x9a] sm:$0x7f]
      %v917 = vld [vmem:[%s721 + $0xaa] sm:$0xff]
      %v918 = vld [vmem:[%s721 + $0xb2] sm:$0x7f]
      %v919 = vld [vmem:[%s721 + $0xc2] sm:$0xff]
      %v920 = vld [vmem:[%s721 + $0xca] sm:$0x7f]
      %v921 = vld [vmem:[%s721 + $0xda] sm:$0xff]
      %v922 = vld [vmem:[%s721 + $0xe2] sm:$0x7f]
      %v923 = vld [vmem:[%s721 + $0xf2] sm:$0xff]
      %v924 = vld [vmem:[%s721 + $0xfa] sm:$0x7f]
      %v925 = vld [vmem:[%s721 + $0x10a] sm:$0xff]
      %v926 = vld [vmem:[%s721 + $0x112] sm:$0x7f]
      %v927 = vld [vmem:[%s721 + $0x122] sm:$0xff]
      %v928 = vld [vmem:[%s721 + $0x12a] sm:$0x7f]
      %v929 = vld [vmem:[%s721 + $0x13a] sm:$0xff]
      %v930 = vld [vmem:[%s721 + $0x142] sm:$0x7f]
      %v931 = vld [vmem:[%s721 + $0x152] sm:$0xff]
      %v932 = vld [vmem:[%s721 + $0x15a] sm:$0x7f]
      %v933 = vmax.f32 %v903, 0.0
      %v934 = vmax.f32 %v904, 0.0
      %v935 = vmax.f32 %v905, 0.0
      %v936 = vmax.f32 %v906, 0.0
      %v937 = vmax.f32 %v907, 0.0
      %v938 = vmax.f32 %v908, 0.0
      %v939 = vmax.f32 %v909, 0.0
      %v940 = vmax.f32 %v910, 0.0
      %v941 = vmax.f32 %v911, 0.0
      %v942 = vmax.f32 %v912, 0.0
      %v943 = vmax.f32 %v913, 0.0
      %v944 = vmax.f32 %v914, 0.0
      %v945 = vmax.f32 %v915, 0.0
      %v946 = vmax.f32 %v916, 0.0
      %v947 = vmax.f32 %v917, 0.0
      %v948 = vmax.f32 %v918, 0.0
      %v949 = vmax.f32 %v919, 0.0
      %v950 = vmax.f32 %v920, 0.0
      %v951 = vmax.f32 %v921, 0.0
      %v952 = vmax.f32 %v922, 0.0
      %v953 = vmax.f32 %v923, 0.0
      %v954 = vmax.f32 %v924, 0.0
      %v955 = vmax.f32 %v925, 0.0
      %v956 = vmax.f32 %v926, 0.0
      %v957 = vmax.f32 %v927, 0.0
      %v958 = vmax.f32 %v928, 0.0
      %v959 = vmax.f32 %v929, 0.0
      %v960 = vmax.f32 %v930, 0.0
      %v961 = vmax.f32 %v931, 0.0
      %v962 = vmax.f32 %v932, 0.0
      %v963 = vperm.slane %v171, 4
      %v964 = vmul.f32 %v933, %v963
      %v965 = vmul.f32 %v934, %v963
      %v966 = vmul.f32 %v935, %v963
      %v967 = vmul.f32 %v936, %v963
      %v968 = vmul.f32 %v937, %v963
      %v969 = vmul.f32 %v938, %v963
      %v970 = vmul.f32 %v939, %v963
      %v971 = vmul.f32 %v940, %v963
      %v972 = vmul.f32 %v941, %v963
      %v973 = vmul.f32 %v942, %v963
      %v974 = vmul.f32 %v943, %v963
      %v975 = vmul.f32 %v944, %v963
      %v976 = vmul.f32 %v945, %v963
      %v977 = vmul.f32 %v946, %v963
      %v978 = vmul.f32 %v947, %v963
      %v979 = vmul.f32 %v948, %v963
      %v980 = vmul.f32 %v949, %v963
      %v981 = vmul.f32 %v950, %v963
      %v982 = vmul.f32 %v951, %v963
      %v983 = vmul.f32 %v952, %v963
      %v984 = vmul.f32 %v953, %v963
      %v985 = vmul.f32 %v954, %v963
      %v986 = vmul.f32 %v955, %v963
      %v987 = vmul.f32 %v956, %v963
      %v988 = vmul.f32 %v957, %v963
      %v989 = vmul.f32 %v958, %v963
      %v990 = vmul.f32 %v959, %v963
      %v991 = vmul.f32 %v960, %v963
      %v992 = vmul.f32 %v961, %v963
      %v993 = vmul.f32 %v962, %v963
      %v994 = vadd.f32 %v813, %v964
      %v995 = vadd.f32 %v814, %v965
      %v996 = vadd.f32 %v815, %v966
      %v997 = vadd.f32 %v816, %v967
      %v998 = vadd.f32 %v817, %v968
      %v999 = vadd.f32 %v818, %v969
      %v1000 = vadd.f32 %v819, %v970
      %v1001 = vadd.f32 %v820, %v971
      %v1002 = vadd.f32 %v821, %v972
      %v1003 = vadd.f32 %v822, %v973
      %v1004 = vadd.f32 %v823, %v974
      %v1005 = vadd.f32 %v824, %v975
      %v1006 = vadd.f32 %v825, %v976
      %v1007 = vadd.f32 %v826, %v977
      %v1008 = vadd.f32 %v827, %v978
      %v1009 = vadd.f32 %v828, %v979
      %v1010 = vadd.f32 %v829, %v980
      %v1011 = vadd.f32 %v830, %v981
      %v1012 = vadd.f32 %v831, %v982
      %v1013 = vadd.f32 %v832, %v983
      %v1014 = vadd.f32 %v833, %v984
      %v1015 = vadd.f32 %v834, %v985
      %v1016 = vadd.f32 %v835, %v986
      %v1017 = vadd.f32 %v836, %v987
      %v1018 = vadd.f32 %v837, %v988
      %v1019 = vadd.f32 %v838, %v989
      %v1020 = vadd.f32 %v839, %v990
      %v1021 = vadd.f32 %v840, %v991
      %v1022 = vadd.f32 %v841, %v992
      %v1023 = vadd.f32 %v842, %v993
      %v1024 = vmul.f32 %v903, 0.11111111
      %v1025 = vmul.f32 %v904, 0.11111111
      %v1026 = vmul.f32 %v905, 0.11111111
      %v1027 = vmul.f32 %v906, 0.11111111
      %v1028 = vmul.f32 %v907, 0.11111111
      %v1029 = vmul.f32 %v908, 0.11111111
      %v1030 = vmul.f32 %v909, 0.11111111
      %v1031 = vmul.f32 %v910, 0.11111111
      %v1032 = vmul.f32 %v911, 0.11111111
      %v1033 = vmul.f32 %v912, 0.11111111
      %v1034 = vmul.f32 %v913, 0.11111111
      %v1035 = vmul.f32 %v914, 0.11111111
      %v1036 = vmul.f32 %v915, 0.11111111
      %v1037 = vmul.f32 %v916, 0.11111111
      %v1038 = vmul.f32 %v917, 0.11111111
      %v1039 = vmul.f32 %v918, 0.11111111
      %v1040 = vmul.f32 %v919, 0.11111111
      %v1041 = vmul.f32 %v920, 0.11111111
      %v1042 = vmul.f32 %v921, 0.11111111
      %v1043 = vmul.f32 %v922, 0.11111111
      %v1044 = vmul.f32 %v923, 0.11111111
      %v1045 = vmul.f32 %v924, 0.11111111
      %v1046 = vmul.f32 %v925, 0.11111111
      %v1047 = vmul.f32 %v926, 0.11111111
      %v1048 = vmul.f32 %v927, 0.11111111
      %v1049 = vmul.f32 %v928, 0.11111111
      %v1050 = vmul.f32 %v929, 0.11111111
      %v1051 = vmul.f32 %v930, 0.11111111
      %v1052 = vmul.f32 %v931, 0.11111111
      %v1053 = vmul.f32 %v932, 0.11111111
      %v1054 = vadd.f32 %v873, %v1024
      %v1055 = vadd.f32 %v874, %v1025
      %v1056 = vadd.f32 %v875, %v1026
      %v1057 = vadd.f32 %v876, %v1027
      %v1058 = vadd.f32 %v877, %v1028
      %v1059 = vadd.f32 %v878, %v1029
      %v1060 = vadd.f32 %v879, %v1030
      %v1061 = vadd.f32 %v880, %v1031
      %v1062 = vadd.f32 %v881, %v1032
      %v1063 = vadd.f32 %v882, %v1033
      %v1064 = vadd.f32 %v883, %v1034
      %v1065 = vadd.f32 %v884, %v1035
      %v1066 = vadd.f32 %v885, %v1036
      %v1067 = vadd.f32 %v886, %v1037
      %v1068 = vadd.f32 %v887, %v1038
      %v1069 = vadd.f32 %v888, %v1039
      %v1070 = vadd.f32 %v889, %v1040
      %v1071 = vadd.f32 %v890, %v1041
      %v1072 = vadd.f32 %v891, %v1042
      %v1073 = vadd.f32 %v892, %v1043
      %v1074 = vadd.f32 %v893, %v1044
      %v1075 = vadd.f32 %v894, %v1045
      %v1076 = vadd.f32 %v895, %v1046
      %v1077 = vadd.f32 %v896, %v1047
      %v1078 = vadd.f32 %v897, %v1048
      %v1079 = vadd.f32 %v898, %v1049
      %v1080 = vadd.f32 %v899, %v1050
      %v1081 = vadd.f32 %v900, %v1051
      %v1082 = vadd.f32 %v901, %v1052
      %v1083 = vadd.f32 %v902, %v1053
      %v1084 = vld [vmem:[%s721 + $0x3] sm:$0xff]
      %v1085 = vld [vmem:[%s721 + $0xb] sm:$0x7f]
      %v1086 = vld [vmem:[%s721 + $0x1b] sm:$0xff]
      %v1087 = vld [vmem:[%s721 + $0x23] sm:$0x7f]
      %v1088 = vld [vmem:[%s721 + $0x33] sm:$0xff]
      %v1089 = vld [vmem:[%s721 + $0x3b] sm:$0x7f]
      %v1090 = vld [vmem:[%s721 + $0x4b] sm:$0xff]
      %v1091 = vld [vmem:[%s721 + $0x53] sm:$0x7f]
      %v1092 = vld [vmem:[%s721 + $0x63] sm:$0xff]
      %v1093 = vld [vmem:[%s721 + $0x6b] sm:$0x7f]
      %v1094 = vld [vmem:[%s721 + $0x7b] sm:$0xff]
      %v1095 = vld [vmem:[%s721 + $0x83] sm:$0x7f]
      %v1096 = vld [vmem:[%s721 + $0x93] sm:$0xff]
      %v1097 = vld [vmem:[%s721 + $0x9b] sm:$0x7f]
      %v1098 = vld [vmem:[%s721 + $0xab] sm:$0xff]
      %v1099 = vld [vmem:[%s721 + $0xb3] sm:$0x7f]
      %v1100 = vld [vmem:[%s721 + $0xc3] sm:$0xff]
      %v1101 = vld [vmem:[%s721 + $0xcb] sm:$0x7f]
      %v1102 = vld [vmem:[%s721 + $0xdb] sm:$0xff]
      %v1103 = vld [vmem:[%s721 + $0xe3] sm:$0x7f]
      %v1104 = vld [vmem:[%s721 + $0xf3] sm:$0xff]
      %v1105 = vld [vmem:[%s721 + $0xfb] sm:$0x7f]
      %v1106 = vld [vmem:[%s721 + $0x10b] sm:$0xff]
      %v1107 = vld [vmem:[%s721 + $0x113] sm:$0x7f]
      %v1108 = vld [vmem:[%s721 + $0x123] sm:$0xff]
      %v1109 = vld [vmem:[%s721 + $0x12b] sm:$0x7f]
      %v1110 = vld [vmem:[%s721 + $0x13b] sm:$0xff]
      %v1111 = vld [vmem:[%s721 + $0x143] sm:$0x7f]
      %v1112 = vld [vmem:[%s721 + $0x153] sm:$0xff]
      %v1113 = vld [vmem:[%s721 + $0x15b] sm:$0x7f]
      %v1114 = vmax.f32 %v1084, 0.0
      %v1115 = vmax.f32 %v1085, 0.0
      %v1116 = vmax.f32 %v1086, 0.0
      %v1117 = vmax.f32 %v1087, 0.0
      %v1118 = vmax.f32 %v1088, 0.0
      %v1119 = vmax.f32 %v1089, 0.0
      %v1120 = vmax.f32 %v1090, 0.0
      %v1121 = vmax.f32 %v1091, 0.0
      %v1122 = vmax.f32 %v1092, 0.0
      %v1123 = vmax.f32 %v1093, 0.0
      %v1124 = vmax.f32 %v1094, 0.0
      %v1125 = vmax.f32 %v1095, 0.0
      %v1126 = vmax.f32 %v1096, 0.0
      %v1127 = vmax.f32 %v1097, 0.0
      %v1128 = vmax.f32 %v1098, 0.0
      %v1129 = vmax.f32 %v1099, 0.0
      %v1130 = vmax.f32 %v1100, 0.0
      %v1131 = vmax.f32 %v1101, 0.0
      %v1132 = vmax.f32 %v1102, 0.0
      %v1133 = vmax.f32 %v1103, 0.0
      %v1134 = vmax.f32 %v1104, 0.0
      %v1135 = vmax.f32 %v1105, 0.0
      %v1136 = vmax.f32 %v1106, 0.0
      %v1137 = vmax.f32 %v1107, 0.0
      %v1138 = vmax.f32 %v1108, 0.0
      %v1139 = vmax.f32 %v1109, 0.0
      %v1140 = vmax.f32 %v1110, 0.0
      %v1141 = vmax.f32 %v1111, 0.0
      %v1142 = vmax.f32 %v1112, 0.0
      %v1143 = vmax.f32 %v1113, 0.0
      %v1144 = vperm.slane %v171, 5
      %v1145 = vmul.f32 %v1114, %v1144
      %v1146 = vmul.f32 %v1115, %v1144
      %v1147 = vmul.f32 %v1116, %v1144
      %v1148 = vmul.f32 %v1117, %v1144
      %v1149 = vmul.f32 %v1118, %v1144
      %v1150 = vmul.f32 %v1119, %v1144
      %v1151 = vmul.f32 %v1120, %v1144
      %v1152 = vmul.f32 %v1121, %v1144
      %v1153 = vmul.f32 %v1122, %v1144
      %v1154 = vmul.f32 %v1123, %v1144
      %v1155 = vmul.f32 %v1124, %v1144
      %v1156 = vmul.f32 %v1125, %v1144
      %v1157 = vmul.f32 %v1126, %v1144
      %v1158 = vmul.f32 %v1127, %v1144
      %v1159 = vmul.f32 %v1128, %v1144
      %v1160 = vmul.f32 %v1129, %v1144
      %v1161 = vmul.f32 %v1130, %v1144
      %v1162 = vmul.f32 %v1131, %v1144
      %v1163 = vmul.f32 %v1132, %v1144
      %v1164 = vmul.f32 %v1133, %v1144
      %v1165 = vmul.f32 %v1134, %v1144
      %v1166 = vmul.f32 %v1135, %v1144
      %v1167 = vmul.f32 %v1136, %v1144
      %v1168 = vmul.f32 %v1137, %v1144
      %v1169 = vmul.f32 %v1138, %v1144
      %v1170 = vmul.f32 %v1139, %v1144
      %v1171 = vmul.f32 %v1140, %v1144
      %v1172 = vmul.f32 %v1141, %v1144
      %v1173 = vmul.f32 %v1142, %v1144
      %v1174 = vmul.f32 %v1143, %v1144
      %v1175 = vadd.f32 %v994, %v1145
      %v1176 = vadd.f32 %v995, %v1146
      %v1177 = vadd.f32 %v996, %v1147
      %v1178 = vadd.f32 %v997, %v1148
      %v1179 = vadd.f32 %v998, %v1149
      %v1180 = vadd.f32 %v999, %v1150
      %v1181 = vadd.f32 %v1000, %v1151
      %v1182 = vadd.f32 %v1001, %v1152
      %v1183 = vadd.f32 %v1002, %v1153
      %v1184 = vadd.f32 %v1003, %v1154
      %v1185 = vadd.f32 %v1004, %v1155
      %v1186 = vadd.f32 %v1005, %v1156
      %v1187 = vadd.f32 %v1006, %v1157
      %v1188 = vadd.f32 %v1007, %v1158
      %v1189 = vadd.f32 %v1008, %v1159
      %v1190 = vadd.f32 %v1009, %v1160
      %v1191 = vadd.f32 %v1010, %v1161
      %v1192 = vadd.f32 %v1011, %v1162
      %v1193 = vadd.f32 %v1012, %v1163
      %v1194 = vadd.f32 %v1013, %v1164
      %v1195 = vadd.f32 %v1014, %v1165
      %v1196 = vadd.f32 %v1015, %v1166
      %v1197 = vadd.f32 %v1016, %v1167
      %v1198 = vadd.f32 %v1017, %v1168
      %v1199 = vadd.f32 %v1018, %v1169
      %v1200 = vadd.f32 %v1019, %v1170
      %v1201 = vadd.f32 %v1020, %v1171
      %v1202 = vadd.f32 %v1021, %v1172
      %v1203 = vadd.f32 %v1022, %v1173
      %v1204 = vadd.f32 %v1023, %v1174
      %v1205 = vmul.f32 %v1084, 0.11111111
      %v1206 = vmul.f32 %v1085, 0.11111111
      %v1207 = vmul.f32 %v1086, 0.11111111
      %v1208 = vmul.f32 %v1087, 0.11111111
      %v1209 = vmul.f32 %v1088, 0.11111111
      %v1210 = vmul.f32 %v1089, 0.11111111
      %v1211 = vmul.f32 %v1090, 0.11111111
      %v1212 = vmul.f32 %v1091, 0.11111111
      %v1213 = vmul.f32 %v1092, 0.11111111
      %v1214 = vmul.f32 %v1093, 0.11111111
      %v1215 = vmul.f32 %v1094, 0.11111111
      %v1216 = vmul.f32 %v1095, 0.11111111
      %v1217 = vmul.f32 %v1096, 0.11111111
      %v1218 = vmul.f32 %v1097, 0.11111111
      %v1219 = vmul.f32 %v1098, 0.11111111
      %v1220 = vmul.f32 %v1099, 0.11111111
      %v1221 = vmul.f32 %v1100, 0.11111111
      %v1222 = vmul.f32 %v1101, 0.11111111
      %v1223 = vmul.f32 %v1102, 0.11111111
      %v1224 = vmul.f32 %v1103, 0.11111111
      %v1225 = vmul.f32 %v1104, 0.11111111
      %v1226 = vmul.f32 %v1105, 0.11111111
      %v1227 = vmul.f32 %v1106, 0.11111111
      %v1228 = vmul.f32 %v1107, 0.11111111
      %v1229 = vmul.f32 %v1108, 0.11111111
      %v1230 = vmul.f32 %v1109, 0.11111111
      %v1231 = vmul.f32 %v1110, 0.11111111
      %v1232 = vmul.f32 %v1111, 0.11111111
      %v1233 = vmul.f32 %v1112, 0.11111111
      %v1234 = vmul.f32 %v1113, 0.11111111
      %v1235 = vadd.f32 %v1054, %v1205
      %v1236 = vadd.f32 %v1055, %v1206
      %v1237 = vadd.f32 %v1056, %v1207
      %v1238 = vadd.f32 %v1057, %v1208
      %v1239 = vadd.f32 %v1058, %v1209
      %v1240 = vadd.f32 %v1059, %v1210
      %v1241 = vadd.f32 %v1060, %v1211
      %v1242 = vadd.f32 %v1061, %v1212
      %v1243 = vadd.f32 %v1062, %v1213
      %v1244 = vadd.f32 %v1063, %v1214
      %v1245 = vadd.f32 %v1064, %v1215
      %v1246 = vadd.f32 %v1065, %v1216
      %v1247 = vadd.f32 %v1066, %v1217
      %v1248 = vadd.f32 %v1067, %v1218
      %v1249 = vadd.f32 %v1068, %v1219
      %v1250 = vadd.f32 %v1069, %v1220
      %v1251 = vadd.f32 %v1070, %v1221
      %v1252 = vadd.f32 %v1071, %v1222
      %v1253 = vadd.f32 %v1072, %v1223
      %v1254 = vadd.f32 %v1073, %v1224
      %v1255 = vadd.f32 %v1074, %v1225
      %v1256 = vadd.f32 %v1075, %v1226
      %v1257 = vadd.f32 %v1076, %v1227
      %v1258 = vadd.f32 %v1077, %v1228
      %v1259 = vadd.f32 %v1078, %v1229
      %v1260 = vadd.f32 %v1079, %v1230
      %v1261 = vadd.f32 %v1080, %v1231
      %v1262 = vadd.f32 %v1081, %v1232
      %v1263 = vadd.f32 %v1082, %v1233
      %v1264 = vadd.f32 %v1083, %v1234
      %s1265 = scalar_lea.vmem %s165, 72
      %v1266 = vld [vmem:[%s1265 + $0x1] sm:$0xff]
      %v1267 = vld [vmem:[%s1265 + $0x9] sm:$0x7f]
      %v1268 = vld [vmem:[%s1265 + $0x19] sm:$0xff]
      %v1269 = vld [vmem:[%s1265 + $0x21] sm:$0x7f]
      %v1270 = vld [vmem:[%s1265 + $0x31] sm:$0xff]
      %v1271 = vld [vmem:[%s1265 + $0x39] sm:$0x7f]
      %v1272 = vld [vmem:[%s1265 + $0x49] sm:$0xff]
      %v1273 = vld [vmem:[%s1265 + $0x51] sm:$0x7f]
      %v1274 = vld [vmem:[%s1265 + $0x61] sm:$0xff]
      %v1275 = vld [vmem:[%s1265 + $0x69] sm:$0x7f]
      %v1276 = vld [vmem:[%s1265 + $0x79] sm:$0xff]
      %v1277 = vld [vmem:[%s1265 + $0x81] sm:$0x7f]
      %v1278 = vld [vmem:[%s1265 + $0x91] sm:$0xff]
      %v1279 = vld [vmem:[%s1265 + $0x99] sm:$0x7f]
      %v1280 = vld [vmem:[%s1265 + $0xa9] sm:$0xff]
      %v1281 = vld [vmem:[%s1265 + $0xb1] sm:$0x7f]
      %v1282 = vld [vmem:[%s1265 + $0xc1] sm:$0xff]
      %v1283 = vld [vmem:[%s1265 + $0xc9] sm:$0x7f]
      %v1284 = vld [vmem:[%s1265 + $0xd9] sm:$0xff]
      %v1285 = vld [vmem:[%s1265 + $0xe1] sm:$0x7f]
      %v1286 = vld [vmem:[%s1265 + $0xf1] sm:$0xff]
      %v1287 = vld [vmem:[%s1265 + $0xf9] sm:$0x7f]
      %v1288 = vld [vmem:[%s1265 + $0x109] sm:$0xff]
      %v1289 = vld [vmem:[%s1265 + $0x111] sm:$0x7f]
      %v1290 = vld [vmem:[%s1265 + $0x121] sm:$0xff]
      %v1291 = vld [vmem:[%s1265 + $0x129] sm:$0x7f]
      %v1292 = vld [vmem:[%s1265 + $0x139] sm:$0xff]
      %v1293 = vld [vmem:[%s1265 + $0x141] sm:$0x7f]
      %v1294 = vld [vmem:[%s1265 + $0x151] sm:$0xff]
      %v1295 = vld [vmem:[%s1265 + $0x159] sm:$0x7f]
      %v1296 = vmax.f32 %v1266, 0.0
      %v1297 = vmax.f32 %v1267, 0.0
      %v1298 = vmax.f32 %v1268, 0.0
      %v1299 = vmax.f32 %v1269, 0.0
      %v1300 = vmax.f32 %v1270, 0.0
      %v1301 = vmax.f32 %v1271, 0.0
      %v1302 = vmax.f32 %v1272, 0.0
      %v1303 = vmax.f32 %v1273, 0.0
      %v1304 = vmax.f32 %v1274, 0.0
      %v1305 = vmax.f32 %v1275, 0.0
      %v1306 = vmax.f32 %v1276, 0.0
      %v1307 = vmax.f32 %v1277, 0.0
      %v1308 = vmax.f32 %v1278, 0.0
      %v1309 = vmax.f32 %v1279, 0.0
      %v1310 = vmax.f32 %v1280, 0.0
      %v1311 = vmax.f32 %v1281, 0.0
      %v1312 = vmax.f32 %v1282, 0.0
      %v1313 = vmax.f32 %v1283, 0.0
      %v1314 = vmax.f32 %v1284, 0.0
      %v1315 = vmax.f32 %v1285, 0.0
      %v1316 = vmax.f32 %v1286, 0.0
      %v1317 = vmax.f32 %v1287, 0.0
      %v1318 = vmax.f32 %v1288, 0.0
      %v1319 = vmax.f32 %v1289, 0.0
      %v1320 = vmax.f32 %v1290, 0.0
      %v1321 = vmax.f32 %v1291, 0.0
      %v1322 = vmax.f32 %v1292, 0.0
      %v1323 = vmax.f32 %v1293, 0.0
      %v1324 = vmax.f32 %v1294, 0.0
      %v1325 = vmax.f32 %v1295, 0.0
      %v1326 = vperm.slane %v171, 6
      %v1327 = vmul.f32 %v1296, %v1326
      %v1328 = vmul.f32 %v1297, %v1326
      %v1329 = vmul.f32 %v1298, %v1326
      %v1330 = vmul.f32 %v1299, %v1326
      %v1331 = vmul.f32 %v1300, %v1326
      %v1332 = vmul.f32 %v1301, %v1326
      %v1333 = vmul.f32 %v1302, %v1326
      %v1334 = vmul.f32 %v1303, %v1326
      %v1335 = vmul.f32 %v1304, %v1326
      %v1336 = vmul.f32 %v1305, %v1326
      %v1337 = vmul.f32 %v1306, %v1326
      %v1338 = vmul.f32 %v1307, %v1326
      %v1339 = vmul.f32 %v1308, %v1326
      %v1340 = vmul.f32 %v1309, %v1326
      %v1341 = vmul.f32 %v1310, %v1326
      %v1342 = vmul.f32 %v1311, %v1326
      %v1343 = vmul.f32 %v1312, %v1326
      %v1344 = vmul.f32 %v1313, %v1326
      %v1345 = vmul.f32 %v1314, %v1326
      %v1346 = vmul.f32 %v1315, %v1326
      %v1347 = vmul.f32 %v1316, %v1326
      %v1348 = vmul.f32 %v1317, %v1326
      %v1349 = vmul.f32 %v1318, %v1326
      %v1350 = vmul.f32 %v1319, %v1326
      %v1351 = vmul.f32 %v1320, %v1326
      %v1352 = vmul.f32 %v1321, %v1326
      %v1353 = vmul.f32 %v1322, %v1326
      %v1354 = vmul.f32 %v1323, %v1326
      %v1355 = vmul.f32 %v1324, %v1326
      %v1356 = vmul.f32 %v1325, %v1326
      %v1357 = vadd.f32 %v1175, %v1327
      %v1358 = vadd.f32 %v1176, %v1328
      %v1359 = vadd.f32 %v1177, %v1329
      %v1360 = vadd.f32 %v1178, %v1330
      %v1361 = vadd.f32 %v1179, %v1331
      %v1362 = vadd.f32 %v1180, %v1332
      %v1363 = vadd.f32 %v1181, %v1333
      %v1364 = vadd.f32 %v1182, %v1334
      %v1365 = vadd.f32 %v1183, %v1335
      %v1366 = vadd.f32 %v1184, %v1336
      %v1367 = vadd.f32 %v1185, %v1337
      %v1368 = vadd.f32 %v1186, %v1338
      %v1369 = vadd.f32 %v1187, %v1339
      %v1370 = vadd.f32 %v1188, %v1340
      %v1371 = vadd.f32 %v1189, %v1341
      %v1372 = vadd.f32 %v1190, %v1342
      %v1373 = vadd.f32 %v1191, %v1343
      %v1374 = vadd.f32 %v1192, %v1344
      %v1375 = vadd.f32 %v1193, %v1345
      %v1376 = vadd.f32 %v1194, %v1346
      %v1377 = vadd.f32 %v1195, %v1347
      %v1378 = vadd.f32 %v1196, %v1348
      %v1379 = vadd.f32 %v1197, %v1349
      %v1380 = vadd.f32 %v1198, %v1350
      %v1381 = vadd.f32 %v1199, %v1351
      %v1382 = vadd.f32 %v1200, %v1352
      %v1383 = vadd.f32 %v1201, %v1353
      %v1384 = vadd.f32 %v1202, %v1354
      %v1385 = vadd.f32 %v1203, %v1355
      %v1386 = vadd.f32 %v1204, %v1356
      %v1387 = vmul.f32 %v1266, 0.11111111
      %v1388 = vmul.f32 %v1267, 0.11111111
      %v1389 = vmul.f32 %v1268, 0.11111111
      %v1390 = vmul.f32 %v1269, 0.11111111
      %v1391 = vmul.f32 %v1270, 0.11111111
      %v1392 = vmul.f32 %v1271, 0.11111111
      %v1393 = vmul.f32 %v1272, 0.11111111
      %v1394 = vmul.f32 %v1273, 0.11111111
      %v1395 = vmul.f32 %v1274, 0.11111111
      %v1396 = vmul.f32 %v1275, 0.11111111
      %v1397 = vmul.f32 %v1276, 0.11111111
      %v1398 = vmul.f32 %v1277, 0.11111111
      %v1399 = vmul.f32 %v1278, 0.11111111
      %v1400 = vmul.f32 %v1279, 0.11111111
      %v1401 = vmul.f32 %v1280, 0.11111111
      %v1402 = vmul.f32 %v1281, 0.11111111
      %v1403 = vmul.f32 %v1282, 0.11111111
      %v1404 = vmul.f32 %v1283, 0.11111111
      %v1405 = vmul.f32 %v1284, 0.11111111
      %v1406 = vmul.f32 %v1285, 0.11111111
      %v1407 = vmul.f32 %v1286, 0.11111111
      %v1408 = vmul.f32 %v1287, 0.11111111
      %v1409 = vmul.f32 %v1288, 0.11111111
      %v1410 = vmul.f32 %v1289, 0.11111111
      %v1411 = vmul.f32 %v1290, 0.11111111
      %v1412 = vmul.f32 %v1291, 0.11111111
      %v1413 = vmul.f32 %v1292, 0.11111111
      %v1414 = vmul.f32 %v1293, 0.11111111
      %v1415 = vmul.f32 %v1294, 0.11111111
      %v1416 = vmul.f32 %v1295, 0.11111111
      %v1417 = vadd.f32 %v1235, %v1387
      %v1418 = vadd.f32 %v1236, %v1388
      %v1419 = vadd.f32 %v1237, %v1389
      %v1420 = vadd.f32 %v1238, %v1390
      %v1421 = vadd.f32 %v1239, %v1391
      %v1422 = vadd.f32 %v1240, %v1392
      %v1423 = vadd.f32 %v1241, %v1393
      %v1424 = vadd.f32 %v1242, %v1394
      %v1425 = vadd.f32 %v1243, %v1395
      %v1426 = vadd.f32 %v1244, %v1396
      %v1427 = vadd.f32 %v1245, %v1397
      %v1428 = vadd.f32 %v1246, %v1398
      %v1429 = vadd.f32 %v1247, %v1399
      %v1430 = vadd.f32 %v1248, %v1400
      %v1431 = vadd.f32 %v1249, %v1401
      %v1432 = vadd.f32 %v1250, %v1402
      %v1433 = vadd.f32 %v1251, %v1403
      %v1434 = vadd.f32 %v1252, %v1404
      %v1435 = vadd.f32 %v1253, %v1405
      %v1436 = vadd.f32 %v1254, %v1406
      %v1437 = vadd.f32 %v1255, %v1407
      %v1438 = vadd.f32 %v1256, %v1408
      %v1439 = vadd.f32 %v1257, %v1409
      %v1440 = vadd.f32 %v1258, %v1410
      %v1441 = vadd.f32 %v1259, %v1411
      %v1442 = vadd.f32 %v1260, %v1412
      %v1443 = vadd.f32 %v1261, %v1413
      %v1444 = vadd.f32 %v1262, %v1414
      %v1445 = vadd.f32 %v1263, %v1415
      %v1446 = vadd.f32 %v1264, %v1416
      %v1447 = vld [vmem:[%s1265 + $0x2] sm:$0xff]
      %v1448 = vld [vmem:[%s1265 + $0xa] sm:$0x7f]
      %v1449 = vld [vmem:[%s1265 + $0x1a] sm:$0xff]
      %v1450 = vld [vmem:[%s1265 + $0x22] sm:$0x7f]
      %v1451 = vld [vmem:[%s1265 + $0x32] sm:$0xff]
      %v1452 = vld [vmem:[%s1265 + $0x3a] sm:$0x7f]
      %v1453 = vld [vmem:[%s1265 + $0x4a] sm:$0xff]
      %v1454 = vld [vmem:[%s1265 + $0x52] sm:$0x7f]
      %v1455 = vld [vmem:[%s1265 + $0x62] sm:$0xff]
      %v1456 = vld [vmem:[%s1265 + $0x6a] sm:$0x7f]
      %v1457 = vld [vmem:[%s1265 + $0x7a] sm:$0xff]
      %v1458 = vld [vmem:[%s1265 + $0x82] sm:$0x7f]
      %v1459 = vld [vmem:[%s1265 + $0x92] sm:$0xff]
      %v1460 = vld [vmem:[%s1265 + $0x9a] sm:$0x7f]
      %v1461 = vld [vmem:[%s1265 + $0xaa] sm:$0xff]
      %v1462 = vld [vmem:[%s1265 + $0xb2] sm:$0x7f]
      %v1463 = vld [vmem:[%s1265 + $0xc2] sm:$0xff]
      %v1464 = vld [vmem:[%s1265 + $0xca] sm:$0x7f]
      %v1465 = vld [vmem:[%s1265 + $0xda] sm:$0xff]
      %v1466 = vld [vmem:[%s1265 + $0xe2] sm:$0x7f]
      %v1467 = vld [vmem:[%s1265 + $0xf2] sm:$0xff]
      %v1468 = vld [vmem:[%s1265 + $0xfa] sm:$0x7f]
      %v1469 = vld [vmem:[%s1265 + $0x10a] sm:$0xff]
      %v1470 = vld [vmem:[%s1265 + $0x112] sm:$0x7f]
      %v1471 = vld [vmem:[%s1265 + $0x122] sm:$0xff]
      %v1472 = vld [vmem:[%s1265 + $0x12a] sm:$0x7f]
      %v1473 = vld [vmem:[%s1265 + $0x13a] sm:$0xff]
      %v1474 = vld [vmem:[%s1265 + $0x142] sm:$0x7f]
      %v1475 = vld [vmem:[%s1265 + $0x152] sm:$0xff]
      %v1476 = vld [vmem:[%s1265 + $0x15a] sm:$0x7f]
      %v1477 = vmax.f32 %v1447, 0.0
      %v1478 = vmax.f32 %v1448, 0.0
      %v1479 = vmax.f32 %v1449, 0.0
      %v1480 = vmax.f32 %v1450, 0.0
      %v1481 = vmax.f32 %v1451, 0.0
      %v1482 = vmax.f32 %v1452, 0.0
      %v1483 = vmax.f32 %v1453, 0.0
      %v1484 = vmax.f32 %v1454, 0.0
      %v1485 = vmax.f32 %v1455, 0.0
      %v1486 = vmax.f32 %v1456, 0.0
      %v1487 = vmax.f32 %v1457, 0.0
      %v1488 = vmax.f32 %v1458, 0.0
      %v1489 = vmax.f32 %v1459, 0.0
      %v1490 = vmax.f32 %v1460, 0.0
      %v1491 = vmax.f32 %v1461, 0.0
      %v1492 = vmax.f32 %v1462, 0.0
      %v1493 = vmax.f32 %v1463, 0.0
      %v1494 = vmax.f32 %v1464, 0.0
      %v1495 = vmax.f32 %v1465, 0.0
      %v1496 = vmax.f32 %v1466, 0.0
      %v1497 = vmax.f32 %v1467, 0.0
      %v1498 = vmax.f32 %v1468, 0.0
      %v1499 = vmax.f32 %v1469, 0.0
      %v1500 = vmax.f32 %v1470, 0.0
      %v1501 = vmax.f32 %v1471, 0.0
      %v1502 = vmax.f32 %v1472, 0.0
      %v1503 = vmax.f32 %v1473, 0.0
      %v1504 = vmax.f32 %v1474, 0.0
      %v1505 = vmax.f32 %v1475, 0.0
      %v1506 = vmax.f32 %v1476, 0.0
      %v1507 = vperm.slane %v171, 7
      %v1508 = vmul.f32 %v1477, %v1507
      %v1509 = vmul.f32 %v1478, %v1507
      %v1510 = vmul.f32 %v1479, %v1507
      %v1511 = vmul.f32 %v1480, %v1507
      %v1512 = vmul.f32 %v1481, %v1507
      %v1513 = vmul.f32 %v1482, %v1507
      %v1514 = vmul.f32 %v1483, %v1507
      %v1515 = vmul.f32 %v1484, %v1507
      %v1516 = vmul.f32 %v1485, %v1507
      %v1517 = vmul.f32 %v1486, %v1507
      %v1518 = vmul.f32 %v1487, %v1507
      %v1519 = vmul.f32 %v1488, %v1507
      %v1520 = vmul.f32 %v1489, %v1507
      %v1521 = vmul.f32 %v1490, %v1507
      %v1522 = vmul.f32 %v1491, %v1507
      %v1523 = vmul.f32 %v1492, %v1507
      %v1524 = vmul.f32 %v1493, %v1507
      %v1525 = vmul.f32 %v1494, %v1507
      %v1526 = vmul.f32 %v1495, %v1507
      %v1527 = vmul.f32 %v1496, %v1507
      %v1528 = vmul.f32 %v1497, %v1507
      %v1529 = vmul.f32 %v1498, %v1507
      %v1530 = vmul.f32 %v1499, %v1507
      %v1531 = vmul.f32 %v1500, %v1507
      %v1532 = vmul.f32 %v1501, %v1507
      %v1533 = vmul.f32 %v1502, %v1507
      %v1534 = vmul.f32 %v1503, %v1507
      %v1535 = vmul.f32 %v1504, %v1507
      %v1536 = vmul.f32 %v1505, %v1507
      %v1537 = vmul.f32 %v1506, %v1507
      %v1538 = vadd.f32 %v1357, %v1508
      %v1539 = vadd.f32 %v1358, %v1509
      %v1540 = vadd.f32 %v1359, %v1510
      %v1541 = vadd.f32 %v1360, %v1511
      %v1542 = vadd.f32 %v1361, %v1512
      %v1543 = vadd.f32 %v1362, %v1513
      %v1544 = vadd.f32 %v1363, %v1514
      %v1545 = vadd.f32 %v1364, %v1515
      %v1546 = vadd.f32 %v1365, %v1516
      %v1547 = vadd.f32 %v1366, %v1517
      %v1548 = vadd.f32 %v1367, %v1518
      %v1549 = vadd.f32 %v1368, %v1519
      %v1550 = vadd.f32 %v1369, %v1520
      %v1551 = vadd.f32 %v1370, %v1521
      %v1552 = vadd.f32 %v1371, %v1522
      %v1553 = vadd.f32 %v1372, %v1523
      %v1554 = vadd.f32 %v1373, %v1524
      %v1555 = vadd.f32 %v1374, %v1525
      %v1556 = vadd.f32 %v1375, %v1526
      %v1557 = vadd.f32 %v1376, %v1527
      %v1558 = vadd.f32 %v1377, %v1528
      %v1559 = vadd.f32 %v1378, %v1529
      %v1560 = vadd.f32 %v1379, %v1530
      %v1561 = vadd.f32 %v1380, %v1531
      %v1562 = vadd.f32 %v1381, %v1532
      %v1563 = vadd.f32 %v1382, %v1533
      %v1564 = vadd.f32 %v1383, %v1534
      %v1565 = vadd.f32 %v1384, %v1535
      %v1566 = vadd.f32 %v1385, %v1536
      %v1567 = vadd.f32 %v1386, %v1537
      %v1568 = vmul.f32 %v1447, 0.11111111
      %v1569 = vmul.f32 %v1448, 0.11111111
      %v1570 = vmul.f32 %v1449, 0.11111111
      %v1571 = vmul.f32 %v1450, 0.11111111
      %v1572 = vmul.f32 %v1451, 0.11111111
      %v1573 = vmul.f32 %v1452, 0.11111111
      %v1574 = vmul.f32 %v1453, 0.11111111
      %v1575 = vmul.f32 %v1454, 0.11111111
      %v1576 = vmul.f32 %v1455, 0.11111111
      %v1577 = vmul.f32 %v1456, 0.11111111
      %v1578 = vmul.f32 %v1457, 0.11111111
      %v1579 = vmul.f32 %v1458, 0.11111111
      %v1580 = vmul.f32 %v1459, 0.11111111
      %v1581 = vmul.f32 %v1460, 0.11111111
      %v1582 = vmul.f32 %v1461, 0.11111111
      %v1583 = vmul.f32 %v1462, 0.11111111
      %v1584 = vmul.f32 %v1463, 0.11111111
      %v1585 = vmul.f32 %v1464, 0.11111111
      %v1586 = vmul.f32 %v1465, 0.11111111
      %v1587 = vmul.f32 %v1466, 0.11111111
      %v1588 = vmul.f32 %v1467, 0.11111111
      %v1589 = vmul.f32 %v1468, 0.11111111
      %v1590 = vmul.f32 %v1469, 0.11111111
      %v1591 = vmul.f32 %v1470, 0.11111111
      %v1592 = vmul.f32 %v1471, 0.11111111
      %v1593 = vmul.f32 %v1472, 0.11111111
      %v1594 = vmul.f32 %v1473, 0.11111111
      %v1595 = vmul.f32 %v1474, 0.11111111
      %v1596 = vmul.f32 %v1475, 0.11111111
      %v1597 = vmul.f32 %v1476, 0.11111111
      %v1598 = vadd.f32 %v1417, %v1568
      %v1599 = vadd.f32 %v1418, %v1569
      %v1600 = vadd.f32 %v1419, %v1570
      %v1601 = vadd.f32 %v1420, %v1571
      %v1602 = vadd.f32 %v1421, %v1572
      %v1603 = vadd.f32 %v1422, %v1573
      %v1604 = vadd.f32 %v1423, %v1574
      %v1605 = vadd.f32 %v1424, %v1575
      %v1606 = vadd.f32 %v1425, %v1576
      %v1607 = vadd.f32 %v1426, %v1577
      %v1608 = vadd.f32 %v1427, %v1578
      %v1609 = vadd.f32 %v1428, %v1579
      %v1610 = vadd.f32 %v1429, %v1580
      %v1611 = vadd.f32 %v1430, %v1581
      %v1612 = vadd.f32 %v1431, %v1582
      %v1613 = vadd.f32 %v1432, %v1583
      %v1614 = vadd.f32 %v1433, %v1584
      %v1615 = vadd.f32 %v1434, %v1585
      %v1616 = vadd.f32 %v1435, %v1586
      %v1617 = vadd.f32 %v1436, %v1587
      %v1618 = vadd.f32 %v1437, %v1588
      %v1619 = vadd.f32 %v1438, %v1589
      %v1620 = vadd.f32 %v1439, %v1590
      %v1621 = vadd.f32 %v1440, %v1591
      %v1622 = vadd.f32 %v1441, %v1592
      %v1623 = vadd.f32 %v1442, %v1593
      %v1624 = vadd.f32 %v1443, %v1594
      %v1625 = vadd.f32 %v1444, %v1595
      %v1626 = vadd.f32 %v1445, %v1596
      %v1627 = vadd.f32 %v1446, %v1597
      %v1628 = vld [vmem:[%s1265 + $0x3] sm:$0xff]
      %v1629 = vld [vmem:[%s1265 + $0xb] sm:$0x7f]
      %v1630 = vld [vmem:[%s1265 + $0x1b] sm:$0xff]
      %v1631 = vld [vmem:[%s1265 + $0x23] sm:$0x7f]
      %v1632 = vld [vmem:[%s1265 + $0x33] sm:$0xff]
      %v1633 = vld [vmem:[%s1265 + $0x3b] sm:$0x7f]
      %v1634 = vld [vmem:[%s1265 + $0x4b] sm:$0xff]
      %v1635 = vld [vmem:[%s1265 + $0x53] sm:$0x7f]
      %v1636 = vld [vmem:[%s1265 + $0x63] sm:$0xff]
      %v1637 = vld [vmem:[%s1265 + $0x6b] sm:$0x7f]
      %v1638 = vld [vmem:[%s1265 + $0x7b] sm:$0xff]
      %v1639 = vld [vmem:[%s1265 + $0x83] sm:$0x7f]
      %v1640 = vld [vmem:[%s1265 + $0x93] sm:$0xff]
      %v1641 = vld [vmem:[%s1265 + $0x9b] sm:$0x7f]
      %v1642 = vld [vmem:[%s1265 + $0xab] sm:$0xff]
      %v1643 = vld [vmem:[%s1265 + $0xb3] sm:$0x7f]
      %v1644 = vld [vmem:[%s1265 + $0xc3] sm:$0xff]
      %v1645 = vld [vmem:[%s1265 + $0xcb] sm:$0x7f]
      %v1646 = vld [vmem:[%s1265 + $0xdb] sm:$0xff]
      %v1647 = vld [vmem:[%s1265 + $0xe3] sm:$0x7f]
      %v1648 = vld [vmem:[%s1265 + $0xf3] sm:$0xff]
      %v1649 = vld [vmem:[%s1265 + $0xfb] sm:$0x7f]
      %v1650 = vld [vmem:[%s1265 + $0x10b] sm:$0xff]
      %v1651 = vld [vmem:[%s1265 + $0x113] sm:$0x7f]
      %v1652 = vld [vmem:[%s1265 + $0x123] sm:$0xff]
      %v1653 = vld [vmem:[%s1265 + $0x12b] sm:$0x7f]
      %v1654 = vld [vmem:[%s1265 + $0x13b] sm:$0xff]
      %v1655 = vld [vmem:[%s1265 + $0x143] sm:$0x7f]
      %v1656 = vld [vmem:[%s1265 + $0x153] sm:$0xff]
      %v1657 = vld [vmem:[%s1265 + $0x15b] sm:$0x7f]
      %v1658 = vmax.f32 %v1628, 0.0
      %v1659 = vmax.f32 %v1629, 0.0
      %v1660 = vmax.f32 %v1630, 0.0
      %v1661 = vmax.f32 %v1631, 0.0
      %v1662 = vmax.f32 %v1632, 0.0
      %v1663 = vmax.f32 %v1633, 0.0
      %v1664 = vmax.f32 %v1634, 0.0
      %v1665 = vmax.f32 %v1635, 0.0
      %v1666 = vmax.f32 %v1636, 0.0
      %v1667 = vmax.f32 %v1637, 0.0
      %v1668 = vmax.f32 %v1638, 0.0
      %v1669 = vmax.f32 %v1639, 0.0
      %v1670 = vmax.f32 %v1640, 0.0
      %v1671 = vmax.f32 %v1641, 0.0
      %v1672 = vmax.f32 %v1642, 0.0
      %v1673 = vmax.f32 %v1643, 0.0
      %v1674 = vmax.f32 %v1644, 0.0
      %v1675 = vmax.f32 %v1645, 0.0
      %v1676 = vmax.f32 %v1646, 0.0
      %v1677 = vmax.f32 %v1647, 0.0
      %v1678 = vmax.f32 %v1648, 0.0
      %v1679 = vmax.f32 %v1649, 0.0
      %v1680 = vmax.f32 %v1650, 0.0
      %v1681 = vmax.f32 %v1651, 0.0
      %v1682 = vmax.f32 %v1652, 0.0
      %v1683 = vmax.f32 %v1653, 0.0
      %v1684 = vmax.f32 %v1654, 0.0
      %v1685 = vmax.f32 %v1655, 0.0
      %v1686 = vmax.f32 %v1656, 0.0
      %v1687 = vmax.f32 %v1657, 0.0
      %v1688 = vperm.slane %v172, 0
      %v1689 = vmul.f32 %v1658, %v1688
      %v1690 = vmul.f32 %v1659, %v1688
      %v1691 = vmul.f32 %v1660, %v1688
      %v1692 = vmul.f32 %v1661, %v1688
      %v1693 = vmul.f32 %v1662, %v1688
      %v1694 = vmul.f32 %v1663, %v1688
      %v1695 = vmul.f32 %v1664, %v1688
      %v1696 = vmul.f32 %v1665, %v1688
      %v1697 = vmul.f32 %v1666, %v1688
      %v1698 = vmul.f32 %v1667, %v1688
      %v1699 = vmul.f32 %v1668, %v1688
      %v1700 = vmul.f32 %v1669, %v1688
      %v1701 = vmul.f32 %v1670, %v1688
      %v1702 = vmul.f32 %v1671, %v1688
      %v1703 = vmul.f32 %v1672, %v1688
      %v1704 = vmul.f32 %v1673, %v1688
      %v1705 = vmul.f32 %v1674, %v1688
      %v1706 = vmul.f32 %v1675, %v1688
      %v1707 = vmul.f32 %v1676, %v1688
      %v1708 = vmul.f32 %v1677, %v1688
      %v1709 = vmul.f32 %v1678, %v1688
      %v1710 = vmul.f32 %v1679, %v1688
      %v1711 = vmul.f32 %v1680, %v1688
      %v1712 = vmul.f32 %v1681, %v1688
      %v1713 = vmul.f32 %v1682, %v1688
      %v1714 = vmul.f32 %v1683, %v1688
      %v1715 = vmul.f32 %v1684, %v1688
      %v1716 = vmul.f32 %v1685, %v1688
      %v1717 = vmul.f32 %v1686, %v1688
      %v1718 = vmul.f32 %v1687, %v1688
      %v1719 = vadd.f32 %v1538, %v1689
      %v1720 = vadd.f32 %v1539, %v1690
      %v1721 = vadd.f32 %v1540, %v1691
      %v1722 = vadd.f32 %v1541, %v1692
      %v1723 = vadd.f32 %v1542, %v1693
      %v1724 = vadd.f32 %v1543, %v1694
      %v1725 = vadd.f32 %v1544, %v1695
      %v1726 = vadd.f32 %v1545, %v1696
      %v1727 = vadd.f32 %v1546, %v1697
      %v1728 = vadd.f32 %v1547, %v1698
      %v1729 = vadd.f32 %v1548, %v1699
      %v1730 = vadd.f32 %v1549, %v1700
      %v1731 = vadd.f32 %v1550, %v1701
      %v1732 = vadd.f32 %v1551, %v1702
      %v1733 = vadd.f32 %v1552, %v1703
      %v1734 = vadd.f32 %v1553, %v1704
      %v1735 = vadd.f32 %v1554, %v1705
      %v1736 = vadd.f32 %v1555, %v1706
      %v1737 = vadd.f32 %v1556, %v1707
      %v1738 = vadd.f32 %v1557, %v1708
      %v1739 = vadd.f32 %v1558, %v1709
      %v1740 = vadd.f32 %v1559, %v1710
      %v1741 = vadd.f32 %v1560, %v1711
      %v1742 = vadd.f32 %v1561, %v1712
      %v1743 = vadd.f32 %v1562, %v1713
      %v1744 = vadd.f32 %v1563, %v1714
      %v1745 = vadd.f32 %v1564, %v1715
      %v1746 = vadd.f32 %v1565, %v1716
      %v1747 = vadd.f32 %v1566, %v1717
      %v1748 = vadd.f32 %v1567, %v1718
      %v1749 = vmul.f32 %v1628, 0.11111111
      %v1750 = vmul.f32 %v1629, 0.11111111
      %v1751 = vmul.f32 %v1630, 0.11111111
      %v1752 = vmul.f32 %v1631, 0.11111111
      %v1753 = vmul.f32 %v1632, 0.11111111
      %v1754 = vmul.f32 %v1633, 0.11111111
      %v1755 = vmul.f32 %v1634, 0.11111111
      %v1756 = vmul.f32 %v1635, 0.11111111
      %v1757 = vmul.f32 %v1636, 0.11111111
      %v1758 = vmul.f32 %v1637, 0.11111111
      %v1759 = vmul.f32 %v1638, 0.11111111
      %v1760 = vmul.f32 %v1639, 0.11111111
      %v1761 = vmul.f32 %v1640, 0.11111111
      %v1762 = vmul.f32 %v1641, 0.11111111
      %v1763 = vmul.f32 %v1642, 0.11111111
      %v1764 = vmul.f32 %v1643, 0.11111111
      %v1765 = vmul.f32 %v1644, 0.11111111
      %v1766 = vmul.f32 %v1645, 0.11111111
      %v1767 = vmul.f32 %v1646, 0.11111111
      %v1768 = vmul.f32 %v1647, 0.11111111
      %v1769 = vmul.f32 %v1648, 0.11111111
      %v1770 = vmul.f32 %v1649, 0.11111111
      %v1771 = vmul.f32 %v1650, 0.11111111
      %v1772 = vmul.f32 %v1651, 0.11111111
      %v1773 = vmul.f32 %v1652, 0.11111111
      %v1774 = vmul.f32 %v1653, 0.11111111
      %v1775 = vmul.f32 %v1654, 0.11111111
      %v1776 = vmul.f32 %v1655, 0.11111111
      %v1777 = vmul.f32 %v1656, 0.11111111
      %v1778 = vmul.f32 %v1657, 0.11111111
      %v1779 = vadd.f32 %v1598, %v1749
      %v1780 = vadd.f32 %v1599, %v1750
      %v1781 = vadd.f32 %v1600, %v1751
      %v1782 = vadd.f32 %v1601, %v1752
      %v1783 = vadd.f32 %v1602, %v1753
      %v1784 = vadd.f32 %v1603, %v1754
      %v1785 = vadd.f32 %v1604, %v1755
      %v1786 = vadd.f32 %v1605, %v1756
      %v1787 = vadd.f32 %v1606, %v1757
      %v1788 = vadd.f32 %v1607, %v1758
      %v1789 = vadd.f32 %v1608, %v1759
      %v1790 = vadd.f32 %v1609, %v1760
      %v1791 = vadd.f32 %v1610, %v1761
      %v1792 = vadd.f32 %v1611, %v1762
      %v1793 = vadd.f32 %v1612, %v1763
      %v1794 = vadd.f32 %v1613, %v1764
      %v1795 = vadd.f32 %v1614, %v1765
      %v1796 = vadd.f32 %v1615, %v1766
      %v1797 = vadd.f32 %v1616, %v1767
      %v1798 = vadd.f32 %v1617, %v1768
      %v1799 = vadd.f32 %v1618, %v1769
      %v1800 = vadd.f32 %v1619, %v1770
      %v1801 = vadd.f32 %v1620, %v1771
      %v1802 = vadd.f32 %v1621, %v1772
      %v1803 = vadd.f32 %v1622, %v1773
      %v1804 = vadd.f32 %v1623, %v1774
      %v1805 = vadd.f32 %v1624, %v1775
      %v1806 = vadd.f32 %v1625, %v1776
      %v1807 = vadd.f32 %v1626, %v1777
      %v1808 = vadd.f32 %v1627, %v1778
      %v1809 = vpack.c.bf16 %v1719, %v1719
      %v1810 = vpack.c.bf16 %v1720, %v1720
      %v1811 = vpack.c.bf16 %v1721, %v1721
      %v1812 = vpack.c.bf16 %v1722, %v1722
      %v1813 = vpack.c.bf16 %v1723, %v1723
      %v1814 = vpack.c.bf16 %v1724, %v1724
      %v1815 = vpack.c.bf16 %v1725, %v1725
      %v1816 = vpack.c.bf16 %v1726, %v1726
      %v1817 = vpack.c.bf16 %v1727, %v1727
      %v1818 = vpack.c.bf16 %v1728, %v1728
      %v1819 = vpack.c.bf16 %v1729, %v1729
      %v1820 = vpack.c.bf16 %v1730, %v1730
      %v1821 = vpack.c.bf16 %v1731, %v1731
      %v1822 = vpack.c.bf16 %v1732, %v1732
      %v1823 = vpack.c.bf16 %v1733, %v1733
      %v1824 = vpack.c.bf16 %v1734, %v1734
      %v1825 = vpack.c.bf16 %v1735, %v1735
      %v1826 = vpack.c.bf16 %v1736, %v1736
      %v1827 = vpack.c.bf16 %v1737, %v1737
      %v1828 = vpack.c.bf16 %v1738, %v1738
      %v1829 = vpack.c.bf16 %v1739, %v1739
      %v1830 = vpack.c.bf16 %v1740, %v1740
      %v1831 = vpack.c.bf16 %v1741, %v1741
      %v1832 = vpack.c.bf16 %v1742, %v1742
      %v1833 = vpack.c.bf16 %v1743, %v1743
      %v1834 = vpack.c.bf16 %v1744, %v1744
      %v1835 = vpack.c.bf16 %v1745, %v1745
      %v1836 = vpack.c.bf16 %v1746, %v1746
      %v1837 = vpack.c.bf16 %v1747, %v1747
      %v1838 = vpack.c.bf16 %v1748, %v1748
      %1839 = vst [vmem:[%s170] sm:$0xf] %v1809
      %vm1840 = vcmask 1043456
      %vm1841 = vsmask.f32 3328
      %vm1842 = vmand %vm1840, %vm1841
      %v1843 = vld [vmem:[%s170 + $0xc] sm:$0xf]
      %v1844 = vsel %vm1842, %v1810, %v1843
      %1845 = vst [vmem:[%s170 + $0xc] sm:$0xf] %v1844
      %1846 = vst [vmem:[%s170 + $0x18] sm:$0xf] %v1811
      %v1847 = vld [vmem:[%s170 + $0x24] sm:$0xf]
      %v1848 = vsel %vm1842, %v1812, %v1847
      %1849 = vst [vmem:[%s170 + $0x24] sm:$0xf] %v1848
      %1850 = vst [vmem:[%s170 + $0x30] sm:$0xf] %v1813
      %v1851 = vld [vmem:[%s170 + $0x3c] sm:$0xf]
      %v1852 = vsel %vm1842, %v1814, %v1851
      %1853 = vst [vmem:[%s170 + $0x3c] sm:$0xf] %v1852
      %1854 = vst [vmem:[%s170 + $0x48] sm:$0xf] %v1815
      %v1855 = vld [vmem:[%s170 + $0x54] sm:$0xf]
      %v1856 = vsel %vm1842, %v1816, %v1855
      %1857 = vst [vmem:[%s170 + $0x54] sm:$0xf] %v1856
      %1858 = vst [vmem:[%s170 + $0x60] sm:$0xf] %v1817
      %v1859 = vld [vmem:[%s170 + $0x6c] sm:$0xf]
      %v1860 = vsel %vm1842, %v1818, %v1859
      %1861 = vst [vmem:[%s170 + $0x6c] sm:$0xf] %v1860
      %1862 = vst [vmem:[%s170 + $0x78] sm:$0xf] %v1819
      %v1863 = vld [vmem:[%s170 + $0x84] sm:$0xf]
      %v1864 = vsel %vm1842, %v1820, %v1863
      %1865 = vst [vmem:[%s170 + $0x84] sm:$0xf] %v1864
      %1866 = vst [vmem:[%s170 + $0x90] sm:$0xf] %v1821
      %v1867 = vld [vmem:[%s170 + $0x9c] sm:$0xf]
      %v1868 = vsel %vm1842, %v1822, %v1867
      %1869 = vst [vmem:[%s170 + $0x9c] sm:$0xf] %v1868
      %1870 = vst [vmem:[%s170 + $0xa8] sm:$0xf] %v1823
      %v1871 = vld [vmem:[%s170 + $0xb4] sm:$0xf]
      %v1872 = vsel %vm1842, %v1824, %v1871
      %1873 = vst [vmem:[%s170 + $0xb4] sm:$0xf] %v1872
      %1874 = vst [vmem:[%s170 + $0xc0] sm:$0xf] %v1825
      %v1875 = vld [vmem:[%s170 + $0xcc] sm:$0xf]
      %v1876 = vsel %vm1842, %v1826, %v1875
      %1877 = vst [vmem:[%s170 + $0xcc] sm:$0xf] %v1876
      %1878 = vst [vmem:[%s170 + $0xd8] sm:$0xf] %v1827
      %v1879 = vld [vmem:[%s170 + $0xe4] sm:$0xf]
      %v1880 = vsel %vm1842, %v1828, %v1879
      %1881 = vst [vmem:[%s170 + $0xe4] sm:$0xf] %v1880
      %1882 = vst [vmem:[%s170 + $0xf0] sm:$0xf] %v1829
      %v1883 = vld [vmem:[%s170 + $0xfc] sm:$0xf]
      %v1884 = vsel %vm1842, %v1830, %v1883
      %1885 = vst [vmem:[%s170 + $0xfc] sm:$0xf] %v1884
      %1886 = vst [vmem:[%s170 + $0x108] sm:$0xf] %v1831
      %v1887 = vld [vmem:[%s170 + $0x114] sm:$0xf]
      %v1888 = vsel %vm1842, %v1832, %v1887
      %1889 = vst [vmem:[%s170 + $0x114] sm:$0xf] %v1888
      %1890 = vst [vmem:[%s170 + $0x120] sm:$0xf] %v1833
      %v1891 = vld [vmem:[%s170 + $0x12c] sm:$0xf]
      %v1892 = vsel %vm1842, %v1834, %v1891
      %1893 = vst [vmem:[%s170 + $0x12c] sm:$0xf] %v1892
      %1894 = vst [vmem:[%s170 + $0x138] sm:$0xf] %v1835
      %v1895 = vld [vmem:[%s170 + $0x144] sm:$0xf]
      %v1896 = vsel %vm1842, %v1836, %v1895
      %1897 = vst [vmem:[%s170 + $0x144] sm:$0xf] %v1896
      %1898 = vst [vmem:[%s170 + $0x150] sm:$0xf] %v1837
      %v1899 = vld [vmem:[%s170 + $0x15c] sm:$0xf]
      %v1900 = vsel %vm1842, %v1838, %v1899
      %1901 = vst [vmem:[%s170 + $0x15c] sm:$0xf] %v1900
      %v1902 = vpack.c.bf16 %v1779, %v1779
      %v1903 = vpack.c.bf16 %v1780, %v1780
      %v1904 = vpack.c.bf16 %v1781, %v1781
      %v1905 = vpack.c.bf16 %v1782, %v1782
      %v1906 = vpack.c.bf16 %v1783, %v1783
      %v1907 = vpack.c.bf16 %v1784, %v1784
      %v1908 = vpack.c.bf16 %v1785, %v1785
      %v1909 = vpack.c.bf16 %v1786, %v1786
      %v1910 = vpack.c.bf16 %v1787, %v1787
      %v1911 = vpack.c.bf16 %v1788, %v1788
      %v1912 = vpack.c.bf16 %v1789, %v1789
      %v1913 = vpack.c.bf16 %v1790, %v1790
      %v1914 = vpack.c.bf16 %v1791, %v1791
      %v1915 = vpack.c.bf16 %v1792, %v1792
      %v1916 = vpack.c.bf16 %v1793, %v1793
      %v1917 = vpack.c.bf16 %v1794, %v1794
      %v1918 = vpack.c.bf16 %v1795, %v1795
      %v1919 = vpack.c.bf16 %v1796, %v1796
      %v1920 = vpack.c.bf16 %v1797, %v1797
      %v1921 = vpack.c.bf16 %v1798, %v1798
      %v1922 = vpack.c.bf16 %v1799, %v1799
      %v1923 = vpack.c.bf16 %v1800, %v1800
      %v1924 = vpack.c.bf16 %v1801, %v1801
      %v1925 = vpack.c.bf16 %v1802, %v1802
      %v1926 = vpack.c.bf16 %v1803, %v1803
      %v1927 = vpack.c.bf16 %v1804, %v1804
      %v1928 = vpack.c.bf16 %v1805, %v1805
      %v1929 = vpack.c.bf16 %v1806, %v1806
      %v1930 = vpack.c.bf16 %v1807, %v1807
      %v1931 = vpack.c.bf16 %v1808, %v1808
      %1932 = vst [vmem:[%s170 + $0x8] sm:$0xf] %v1902
      %v1933 = vld [vmem:[%s170 + $0x14] sm:$0xf]
      %v1934 = vsel %vm1842, %v1903, %v1933
      %1935 = vst [vmem:[%s170 + $0x14] sm:$0xf] %v1934
      %1936 = vst [vmem:[%s170 + $0x20] sm:$0xf] %v1904
      %v1937 = vld [vmem:[%s170 + $0x2c] sm:$0xf]
      %v1938 = vsel %vm1842, %v1905, %v1937
      %1939 = vst [vmem:[%s170 + $0x2c] sm:$0xf] %v1938
      %1940 = vst [vmem:[%s170 + $0x38] sm:$0xf] %v1906
      %v1941 = vld [vmem:[%s170 + $0x44] sm:$0xf]
      %v1942 = vsel %vm1842, %v1907, %v1941
      %1943 = vst [vmem:[%s170 + $0x44] sm:$0xf] %v1942
      %1944 = vst [vmem:[%s170 + $0x50] sm:$0xf] %v1908
      %v1945 = vld [vmem:[%s170 + $0x5c] sm:$0xf]
      %v1946 = vsel %vm1842, %v1909, %v1945
      %1947 = vst [vmem:[%s170 + $0x5c] sm:$0xf] %v1946
      %1948 = vst [vmem:[%s170 + $0x68] sm:$0xf] %v1910
      %v1949 = vld [vmem:[%s170 + $0x74] sm:$0xf]
      %v1950 = vsel %vm1842, %v1911, %v1949
      %1951 = vst [vmem:[%s170 + $0x74] sm:$0xf] %v1950
      %1952 = vst [vmem:[%s170 + $0x80] sm:$0xf] %v1912
      %v1953 = vld [vmem:[%s170 + $0x8c] sm:$0xf]
      %v1954 = vsel %vm1842, %v1913, %v1953
      %1955 = vst [vmem:[%s170 + $0x8c] sm:$0xf] %v1954
      %1956 = vst [vmem:[%s170 + $0x98] sm:$0xf] %v1914
      %v1957 = vld [vmem:[%s170 + $0xa4] sm:$0xf]
      %v1958 = vsel %vm1842, %v1915, %v1957
      %1959 = vst [vmem:[%s170 + $0xa4] sm:$0xf] %v1958
      %1960 = vst [vmem:[%s170 + $0xb0] sm:$0xf] %v1916
      %v1961 = vld [vmem:[%s170 + $0xbc] sm:$0xf]
      %v1962 = vsel %vm1842, %v1917, %v1961
      %1963 = vst [vmem:[%s170 + $0xbc] sm:$0xf] %v1962
      %1964 = vst [vmem:[%s170 + $0xc8] sm:$0xf] %v1918
      %v1965 = vld [vmem:[%s170 + $0xd4] sm:$0xf]
      %v1966 = vsel %vm1842, %v1919, %v1965
      %1967 = vst [vmem:[%s170 + $0xd4] sm:$0xf] %v1966
      %1968 = vst [vmem:[%s170 + $0xe0] sm:$0xf] %v1920
      %v1969 = vld [vmem:[%s170 + $0xec] sm:$0xf]
      %v1970 = vsel %vm1842, %v1921, %v1969
      %1971 = vst [vmem:[%s170 + $0xec] sm:$0xf] %v1970
      %1972 = vst [vmem:[%s170 + $0xf8] sm:$0xf] %v1922
      %v1973 = vld [vmem:[%s170 + $0x104] sm:$0xf]
      %v1974 = vsel %vm1842, %v1923, %v1973
      %1975 = vst [vmem:[%s170 + $0x104] sm:$0xf] %v1974
      %1976 = vst [vmem:[%s170 + $0x110] sm:$0xf] %v1924
      %v1977 = vld [vmem:[%s170 + $0x11c] sm:$0xf]
      %v1978 = vsel %vm1842, %v1925, %v1977
      %1979 = vst [vmem:[%s170 + $0x11c] sm:$0xf] %v1978
      %1980 = vst [vmem:[%s170 + $0x128] sm:$0xf] %v1926
      %v1981 = vld [vmem:[%s170 + $0x134] sm:$0xf]
      %v1982 = vsel %vm1842, %v1927, %v1981
      %1983 = vst [vmem:[%s170 + $0x134] sm:$0xf] %v1982
      %1984 = vst [vmem:[%s170 + $0x140] sm:$0xf] %v1928
      %v1985 = vld [vmem:[%s170 + $0x14c] sm:$0xf]
      %v1986 = vsel %vm1842, %v1929, %v1985
      %1987 = vst [vmem:[%s170 + $0x14c] sm:$0xf] %v1986
      %1988 = vst [vmem:[%s170 + $0x158] sm:$0xf] %v1930
      %v1989 = vld [vmem:[%s170 + $0x164] sm:$0xf]
      %v1990 = vsel %vm1842, %v1931, %v1989
      %1991 = vst [vmem:[%s170 + $0x164] sm:$0xf] %v1990
      %v1992 = vld [vmem:[%s165] sm:$0xff]
      %v1993 = vld [vmem:[%s165 + $0x8] sm:$0x7f]
      %v1994 = vld [vmem:[%s165 + $0x18] sm:$0xff]
      %v1995 = vld [vmem:[%s165 + $0x20] sm:$0x7f]
      %v1996 = vld [vmem:[%s165 + $0x30] sm:$0xff]
      %v1997 = vld [vmem:[%s165 + $0x38] sm:$0x7f]
      %v1998 = vld [vmem:[%s165 + $0x48] sm:$0xff]
      %v1999 = vld [vmem:[%s165 + $0x50] sm:$0x7f]
      %v2000 = vld [vmem:[%s165 + $0x60] sm:$0xff]
      %v2001 = vld [vmem:[%s165 + $0x68] sm:$0x7f]
      %v2002 = vld [vmem:[%s165 + $0x78] sm:$0xff]
      %v2003 = vld [vmem:[%s165 + $0x80] sm:$0x7f]
      %v2004 = vld [vmem:[%s165 + $0x90] sm:$0xff]
      %v2005 = vld [vmem:[%s165 + $0x98] sm:$0x7f]
      %v2006 = vld [vmem:[%s165 + $0xa8] sm:$0xff]
      %v2007 = vld [vmem:[%s165 + $0xb0] sm:$0x7f]
      %v2008 = vld [vmem:[%s165 + $0xc0] sm:$0xff]
      %v2009 = vld [vmem:[%s165 + $0xc8] sm:$0x7f]
      %v2010 = vld [vmem:[%s165 + $0xd8] sm:$0xff]
      %v2011 = vld [vmem:[%s165 + $0xe0] sm:$0x7f]
      %v2012 = vld [vmem:[%s165 + $0xf0] sm:$0xff]
      %v2013 = vld [vmem:[%s165 + $0xf8] sm:$0x7f]
      %v2014 = vld [vmem:[%s165 + $0x108] sm:$0xff]
      %v2015 = vld [vmem:[%s165 + $0x110] sm:$0x7f]
      %v2016 = vld [vmem:[%s165 + $0x120] sm:$0xff]
      %v2017 = vld [vmem:[%s165 + $0x128] sm:$0x7f]
      %v2018 = vld [vmem:[%s165 + $0x138] sm:$0xff]
      %v2019 = vld [vmem:[%s165 + $0x140] sm:$0x7f]
      %v2020 = vld [vmem:[%s165 + $0x150] sm:$0xff]
      %v2021 = vld [vmem:[%s165 + $0x158] sm:$0x7f]
      %v2022 = vmax.f32 %v1992, 0.0
      %v2023 = vmax.f32 %v1993, 0.0
      %v2024 = vmax.f32 %v1994, 0.0
      %v2025 = vmax.f32 %v1995, 0.0
      %v2026 = vmax.f32 %v1996, 0.0
      %v2027 = vmax.f32 %v1997, 0.0
      %v2028 = vmax.f32 %v1998, 0.0
      %v2029 = vmax.f32 %v1999, 0.0
      %v2030 = vmax.f32 %v2000, 0.0
      %v2031 = vmax.f32 %v2001, 0.0
      %v2032 = vmax.f32 %v2002, 0.0
      %v2033 = vmax.f32 %v2003, 0.0
      %v2034 = vmax.f32 %v2004, 0.0
      %v2035 = vmax.f32 %v2005, 0.0
      %v2036 = vmax.f32 %v2006, 0.0
      %v2037 = vmax.f32 %v2007, 0.0
      %v2038 = vmax.f32 %v2008, 0.0
      %v2039 = vmax.f32 %v2009, 0.0
      %v2040 = vmax.f32 %v2010, 0.0
      %v2041 = vmax.f32 %v2011, 0.0
      %v2042 = vmax.f32 %v2012, 0.0
      %v2043 = vmax.f32 %v2013, 0.0
      %v2044 = vmax.f32 %v2014, 0.0
      %v2045 = vmax.f32 %v2015, 0.0
      %v2046 = vmax.f32 %v2016, 0.0
      %v2047 = vmax.f32 %v2017, 0.0
      %v2048 = vmax.f32 %v2018, 0.0
      %v2049 = vmax.f32 %v2019, 0.0
      %v2050 = vmax.f32 %v2020, 0.0
      %v2051 = vmax.f32 %v2021, 0.0
      %v2052 = vperm.slane %v173, 0
      %v2053 = vmul.f32 %v2022, %v2052
      %v2054 = vmul.f32 %v2023, %v2052
      %v2055 = vmul.f32 %v2024, %v2052
      %v2056 = vmul.f32 %v2025, %v2052
      %v2057 = vmul.f32 %v2026, %v2052
      %v2058 = vmul.f32 %v2027, %v2052
      %v2059 = vmul.f32 %v2028, %v2052
      %v2060 = vmul.f32 %v2029, %v2052
      %v2061 = vmul.f32 %v2030, %v2052
      %v2062 = vmul.f32 %v2031, %v2052
      %v2063 = vmul.f32 %v2032, %v2052
      %v2064 = vmul.f32 %v2033, %v2052
      %v2065 = vmul.f32 %v2034, %v2052
      %v2066 = vmul.f32 %v2035, %v2052
      %v2067 = vmul.f32 %v2036, %v2052
      %v2068 = vmul.f32 %v2037, %v2052
      %v2069 = vmul.f32 %v2038, %v2052
      %v2070 = vmul.f32 %v2039, %v2052
      %v2071 = vmul.f32 %v2040, %v2052
      %v2072 = vmul.f32 %v2041, %v2052
      %v2073 = vmul.f32 %v2042, %v2052
      %v2074 = vmul.f32 %v2043, %v2052
      %v2075 = vmul.f32 %v2044, %v2052
      %v2076 = vmul.f32 %v2045, %v2052
      %v2077 = vmul.f32 %v2046, %v2052
      %v2078 = vmul.f32 %v2047, %v2052
      %v2079 = vmul.f32 %v2048, %v2052
      %v2080 = vmul.f32 %v2049, %v2052
      %v2081 = vmul.f32 %v2050, %v2052
      %v2082 = vmul.f32 %v2051, %v2052
      %v2083 = vadd.f32 %v2053, 0.0
      %v2084 = vadd.f32 %v2054, 0.0
      %v2085 = vadd.f32 %v2055, 0.0
      %v2086 = vadd.f32 %v2056, 0.0
      %v2087 = vadd.f32 %v2057, 0.0
      %v2088 = vadd.f32 %v2058, 0.0
      %v2089 = vadd.f32 %v2059, 0.0
      %v2090 = vadd.f32 %v2060, 0.0
      %v2091 = vadd.f32 %v2061, 0.0
      %v2092 = vadd.f32 %v2062, 0.0
      %v2093 = vadd.f32 %v2063, 0.0
      %v2094 = vadd.f32 %v2064, 0.0
      %v2095 = vadd.f32 %v2065, 0.0
      %v2096 = vadd.f32 %v2066, 0.0
      %v2097 = vadd.f32 %v2067, 0.0
      %v2098 = vadd.f32 %v2068, 0.0
      %v2099 = vadd.f32 %v2069, 0.0
      %v2100 = vadd.f32 %v2070, 0.0
      %v2101 = vadd.f32 %v2071, 0.0
      %v2102 = vadd.f32 %v2072, 0.0
      %v2103 = vadd.f32 %v2073, 0.0
      %v2104 = vadd.f32 %v2074, 0.0
      %v2105 = vadd.f32 %v2075, 0.0
      %v2106 = vadd.f32 %v2076, 0.0
      %v2107 = vadd.f32 %v2077, 0.0
      %v2108 = vadd.f32 %v2078, 0.0
      %v2109 = vadd.f32 %v2079, 0.0
      %v2110 = vadd.f32 %v2080, 0.0
      %v2111 = vadd.f32 %v2081, 0.0
      %v2112 = vadd.f32 %v2082, 0.0
      %v2113 = vld [vmem:[%s165 + $0x1] sm:$0xff]
      %v2114 = vld [vmem:[%s165 + $0x9] sm:$0x7f]
      %v2115 = vld [vmem:[%s165 + $0x19] sm:$0xff]
      %v2116 = vld [vmem:[%s165 + $0x21] sm:$0x7f]
      %v2117 = vld [vmem:[%s165 + $0x31] sm:$0xff]
      %v2118 = vld [vmem:[%s165 + $0x39] sm:$0x7f]
      %v2119 = vld [vmem:[%s165 + $0x49] sm:$0xff]
      %v2120 = vld [vmem:[%s165 + $0x51] sm:$0x7f]
      %v2121 = vld [vmem:[%s165 + $0x61] sm:$0xff]
      %v2122 = vld [vmem:[%s165 + $0x69] sm:$0x7f]
      %v2123 = vld [vmem:[%s165 + $0x79] sm:$0xff]
      %v2124 = vld [vmem:[%s165 + $0x81] sm:$0x7f]
      %v2125 = vld [vmem:[%s165 + $0x91] sm:$0xff]
      %v2126 = vld [vmem:[%s165 + $0x99] sm:$0x7f]
      %v2127 = vld [vmem:[%s165 + $0xa9] sm:$0xff]
      %v2128 = vld [vmem:[%s165 + $0xb1] sm:$0x7f]
      %v2129 = vld [vmem:[%s165 + $0xc1] sm:$0xff]
      %v2130 = vld [vmem:[%s165 + $0xc9] sm:$0x7f]
      %v2131 = vld [vmem:[%s165 + $0xd9] sm:$0xff]
      %v2132 = vld [vmem:[%s165 + $0xe1] sm:$0x7f]
      %v2133 = vld [vmem:[%s165 + $0xf1] sm:$0xff]
      %v2134 = vld [vmem:[%s165 + $0xf9] sm:$0x7f]
      %v2135 = vld [vmem:[%s165 + $0x109] sm:$0xff]
      %v2136 = vld [vmem:[%s165 + $0x111] sm:$0x7f]
      %v2137 = vld [vmem:[%s165 + $0x121] sm:$0xff]
      %v2138 = vld [vmem:[%s165 + $0x129] sm:$0x7f]
      %v2139 = vld [vmem:[%s165 + $0x139] sm:$0xff]
      %v2140 = vld [vmem:[%s165 + $0x141] sm:$0x7f]
      %v2141 = vld [vmem:[%s165 + $0x151] sm:$0xff]
      %v2142 = vld [vmem:[%s165 + $0x159] sm:$0x7f]
      %v2143 = vmax.f32 %v2113, 0.0
      %v2144 = vmax.f32 %v2114, 0.0
      %v2145 = vmax.f32 %v2115, 0.0
      %v2146 = vmax.f32 %v2116, 0.0
      %v2147 = vmax.f32 %v2117, 0.0
      %v2148 = vmax.f32 %v2118, 0.0
      %v2149 = vmax.f32 %v2119, 0.0
      %v2150 = vmax.f32 %v2120, 0.0
      %v2151 = vmax.f32 %v2121, 0.0
      %v2152 = vmax.f32 %v2122, 0.0
      %v2153 = vmax.f32 %v2123, 0.0
      %v2154 = vmax.f32 %v2124, 0.0
      %v2155 = vmax.f32 %v2125, 0.0
      %v2156 = vmax.f32 %v2126, 0.0
      %v2157 = vmax.f32 %v2127, 0.0
      %v2158 = vmax.f32 %v2128, 0.0
      %v2159 = vmax.f32 %v2129, 0.0
      %v2160 = vmax.f32 %v2130, 0.0
      %v2161 = vmax.f32 %v2131, 0.0
      %v2162 = vmax.f32 %v2132, 0.0
      %v2163 = vmax.f32 %v2133, 0.0
      %v2164 = vmax.f32 %v2134, 0.0
      %v2165 = vmax.f32 %v2135, 0.0
      %v2166 = vmax.f32 %v2136, 0.0
      %v2167 = vmax.f32 %v2137, 0.0
      %v2168 = vmax.f32 %v2138, 0.0
      %v2169 = vmax.f32 %v2139, 0.0
      %v2170 = vmax.f32 %v2140, 0.0
      %v2171 = vmax.f32 %v2141, 0.0
      %v2172 = vmax.f32 %v2142, 0.0
      %v2173 = vperm.slane %v173, 1
      %v2174 = vmul.f32 %v2143, %v2173
      %v2175 = vmul.f32 %v2144, %v2173
      %v2176 = vmul.f32 %v2145, %v2173
      %v2177 = vmul.f32 %v2146, %v2173
      %v2178 = vmul.f32 %v2147, %v2173
      %v2179 = vmul.f32 %v2148, %v2173
      %v2180 = vmul.f32 %v2149, %v2173
      %v2181 = vmul.f32 %v2150, %v2173
      %v2182 = vmul.f32 %v2151, %v2173
      %v2183 = vmul.f32 %v2152, %v2173
      %v2184 = vmul.f32 %v2153, %v2173
      %v2185 = vmul.f32 %v2154, %v2173
      %v2186 = vmul.f32 %v2155, %v2173
      %v2187 = vmul.f32 %v2156, %v2173
      %v2188 = vmul.f32 %v2157, %v2173
      %v2189 = vmul.f32 %v2158, %v2173
      %v2190 = vmul.f32 %v2159, %v2173
      %v2191 = vmul.f32 %v2160, %v2173
      %v2192 = vmul.f32 %v2161, %v2173
      %v2193 = vmul.f32 %v2162, %v2173
      %v2194 = vmul.f32 %v2163, %v2173
      %v2195 = vmul.f32 %v2164, %v2173
      %v2196 = vmul.f32 %v2165, %v2173
      %v2197 = vmul.f32 %v2166, %v2173
      %v2198 = vmul.f32 %v2167, %v2173
      %v2199 = vmul.f32 %v2168, %v2173
      %v2200 = vmul.f32 %v2169, %v2173
      %v2201 = vmul.f32 %v2170, %v2173
      %v2202 = vmul.f32 %v2171, %v2173
      %v2203 = vmul.f32 %v2172, %v2173
      %v2204 = vadd.f32 %v2083, %v2174
      %v2205 = vadd.f32 %v2084, %v2175
      %v2206 = vadd.f32 %v2085, %v2176
      %v2207 = vadd.f32 %v2086, %v2177
      %v2208 = vadd.f32 %v2087, %v2178
      %v2209 = vadd.f32 %v2088, %v2179
      %v2210 = vadd.f32 %v2089, %v2180
      %v2211 = vadd.f32 %v2090, %v2181
      %v2212 = vadd.f32 %v2091, %v2182
      %v2213 = vadd.f32 %v2092, %v2183
      %v2214 = vadd.f32 %v2093, %v2184
      %v2215 = vadd.f32 %v2094, %v2185
      %v2216 = vadd.f32 %v2095, %v2186
      %v2217 = vadd.f32 %v2096, %v2187
      %v2218 = vadd.f32 %v2097, %v2188
      %v2219 = vadd.f32 %v2098, %v2189
      %v2220 = vadd.f32 %v2099, %v2190
      %v2221 = vadd.f32 %v2100, %v2191
      %v2222 = vadd.f32 %v2101, %v2192
      %v2223 = vadd.f32 %v2102, %v2193
      %v2224 = vadd.f32 %v2103, %v2194
      %v2225 = vadd.f32 %v2104, %v2195
      %v2226 = vadd.f32 %v2105, %v2196
      %v2227 = vadd.f32 %v2106, %v2197
      %v2228 = vadd.f32 %v2107, %v2198
      %v2229 = vadd.f32 %v2108, %v2199
      %v2230 = vadd.f32 %v2109, %v2200
      %v2231 = vadd.f32 %v2110, %v2201
      %v2232 = vadd.f32 %v2111, %v2202
      %v2233 = vadd.f32 %v2112, %v2203
      %v2234 = vld [vmem:[%s165 + $0x2] sm:$0xff]
      %v2235 = vld [vmem:[%s165 + $0xa] sm:$0x7f]
      %v2236 = vld [vmem:[%s165 + $0x1a] sm:$0xff]
      %v2237 = vld [vmem:[%s165 + $0x22] sm:$0x7f]
      %v2238 = vld [vmem:[%s165 + $0x32] sm:$0xff]
      %v2239 = vld [vmem:[%s165 + $0x3a] sm:$0x7f]
      %v2240 = vld [vmem:[%s165 + $0x4a] sm:$0xff]
      %v2241 = vld [vmem:[%s165 + $0x52] sm:$0x7f]
      %v2242 = vld [vmem:[%s165 + $0x62] sm:$0xff]
      %v2243 = vld [vmem:[%s165 + $0x6a] sm:$0x7f]
      %v2244 = vld [vmem:[%s165 + $0x7a] sm:$0xff]
      %v2245 = vld [vmem:[%s165 + $0x82] sm:$0x7f]
      %v2246 = vld [vmem:[%s165 + $0x92] sm:$0xff]
      %v2247 = vld [vmem:[%s165 + $0x9a] sm:$0x7f]
      %v2248 = vld [vmem:[%s165 + $0xaa] sm:$0xff]
      %v2249 = vld [vmem:[%s165 + $0xb2] sm:$0x7f]
      %v2250 = vld [vmem:[%s165 + $0xc2] sm:$0xff]
      %v2251 = vld [vmem:[%s165 + $0xca] sm:$0x7f]
      %v2252 = vld [vmem:[%s165 + $0xda] sm:$0xff]
      %v2253 = vld [vmem:[%s165 + $0xe2] sm:$0x7f]
      %v2254 = vld [vmem:[%s165 + $0xf2] sm:$0xff]
      %v2255 = vld [vmem:[%s165 + $0xfa] sm:$0x7f]
      %v2256 = vld [vmem:[%s165 + $0x10a] sm:$0xff]
      %v2257 = vld [vmem:[%s165 + $0x112] sm:$0x7f]
      %v2258 = vld [vmem:[%s165 + $0x122] sm:$0xff]
      %v2259 = vld [vmem:[%s165 + $0x12a] sm:$0x7f]
      %v2260 = vld [vmem:[%s165 + $0x13a] sm:$0xff]
      %v2261 = vld [vmem:[%s165 + $0x142] sm:$0x7f]
      %v2262 = vld [vmem:[%s165 + $0x152] sm:$0xff]
      %v2263 = vld [vmem:[%s165 + $0x15a] sm:$0x7f]
      %v2264 = vmax.f32 %v2234, 0.0
      %v2265 = vmax.f32 %v2235, 0.0
      %v2266 = vmax.f32 %v2236, 0.0
      %v2267 = vmax.f32 %v2237, 0.0
      %v2268 = vmax.f32 %v2238, 0.0
      %v2269 = vmax.f32 %v2239, 0.0
      %v2270 = vmax.f32 %v2240, 0.0
      %v2271 = vmax.f32 %v2241, 0.0
      %v2272 = vmax.f32 %v2242, 0.0
      %v2273 = vmax.f32 %v2243, 0.0
      %v2274 = vmax.f32 %v2244, 0.0
      %v2275 = vmax.f32 %v2245, 0.0
      %v2276 = vmax.f32 %v2246, 0.0
      %v2277 = vmax.f32 %v2247, 0.0
      %v2278 = vmax.f32 %v2248, 0.0
      %v2279 = vmax.f32 %v2249, 0.0
      %v2280 = vmax.f32 %v2250, 0.0
      %v2281 = vmax.f32 %v2251, 0.0
      %v2282 = vmax.f32 %v2252, 0.0
      %v2283 = vmax.f32 %v2253, 0.0
      %v2284 = vmax.f32 %v2254, 0.0
      %v2285 = vmax.f32 %v2255, 0.0
      %v2286 = vmax.f32 %v2256, 0.0
      %v2287 = vmax.f32 %v2257, 0.0
      %v2288 = vmax.f32 %v2258, 0.0
      %v2289 = vmax.f32 %v2259, 0.0
      %v2290 = vmax.f32 %v2260, 0.0
      %v2291 = vmax.f32 %v2261, 0.0
      %v2292 = vmax.f32 %v2262, 0.0
      %v2293 = vmax.f32 %v2263, 0.0
      %v2294 = vperm.slane %v173, 2
      %v2295 = vmul.f32 %v2264, %v2294
      %v2296 = vmul.f32 %v2265, %v2294
      %v2297 = vmul.f32 %v2266, %v2294
      %v2298 = vmul.f32 %v2267, %v2294
      %v2299 = vmul.f32 %v2268, %v2294
      %v2300 = vmul.f32 %v2269, %v2294
      %v2301 = vmul.f32 %v2270, %v2294
      %v2302 = vmul.f32 %v2271, %v2294
      %v2303 = vmul.f32 %v2272, %v2294
      %v2304 = vmul.f32 %v2273, %v2294
      %v2305 = vmul.f32 %v2274, %v2294
      %v2306 = vmul.f32 %v2275, %v2294
      %v2307 = vmul.f32 %v2276, %v2294
      %v2308 = vmul.f32 %v2277, %v2294
      %v2309 = vmul.f32 %v2278, %v2294
      %v2310 = vmul.f32 %v2279, %v2294
      %v2311 = vmul.f32 %v2280, %v2294
      %v2312 = vmul.f32 %v2281, %v2294
      %v2313 = vmul.f32 %v2282, %v2294
      %v2314 = vmul.f32 %v2283, %v2294
      %v2315 = vmul.f32 %v2284, %v2294
      %v2316 = vmul.f32 %v2285, %v2294
      %v2317 = vmul.f32 %v2286, %v2294
      %v2318 = vmul.f32 %v2287, %v2294
      %v2319 = vmul.f32 %v2288, %v2294
      %v2320 = vmul.f32 %v2289, %v2294
      %v2321 = vmul.f32 %v2290, %v2294
      %v2322 = vmul.f32 %v2291, %v2294
      %v2323 = vmul.f32 %v2292, %v2294
      %v2324 = vmul.f32 %v2293, %v2294
      %v2325 = vadd.f32 %v2204, %v2295
      %v2326 = vadd.f32 %v2205, %v2296
      %v2327 = vadd.f32 %v2206, %v2297
      %v2328 = vadd.f32 %v2207, %v2298
      %v2329 = vadd.f32 %v2208, %v2299
      %v2330 = vadd.f32 %v2209, %v2300
      %v2331 = vadd.f32 %v2210, %v2301
      %v2332 = vadd.f32 %v2211, %v2302
      %v2333 = vadd.f32 %v2212, %v2303
      %v2334 = vadd.f32 %v2213, %v2304
      %v2335 = vadd.f32 %v2214, %v2305
      %v2336 = vadd.f32 %v2215, %v2306
      %v2337 = vadd.f32 %v2216, %v2307
      %v2338 = vadd.f32 %v2217, %v2308
      %v2339 = vadd.f32 %v2218, %v2309
      %v2340 = vadd.f32 %v2219, %v2310
      %v2341 = vadd.f32 %v2220, %v2311
      %v2342 = vadd.f32 %v2221, %v2312
      %v2343 = vadd.f32 %v2222, %v2313
      %v2344 = vadd.f32 %v2223, %v2314
      %v2345 = vadd.f32 %v2224, %v2315
      %v2346 = vadd.f32 %v2225, %v2316
      %v2347 = vadd.f32 %v2226, %v2317
      %v2348 = vadd.f32 %v2227, %v2318
      %v2349 = vadd.f32 %v2228, %v2319
      %v2350 = vadd.f32 %v2229, %v2320
      %v2351 = vadd.f32 %v2230, %v2321
      %v2352 = vadd.f32 %v2231, %v2322
      %v2353 = vadd.f32 %v2232, %v2323
      %v2354 = vadd.f32 %v2233, %v2324
      %v2355 = vld [vmem:[%s165 + $0x3] sm:$0xff]
      %v2356 = vld [vmem:[%s165 + $0xb] sm:$0x7f]
      %v2357 = vld [vmem:[%s165 + $0x1b] sm:$0xff]
      %v2358 = vld [vmem:[%s165 + $0x23] sm:$0x7f]
      %v2359 = vld [vmem:[%s165 + $0x33] sm:$0xff]
      %v2360 = vld [vmem:[%s165 + $0x3b] sm:$0x7f]
      %v2361 = vld [vmem:[%s165 + $0x4b] sm:$0xff]
      %v2362 = vld [vmem:[%s165 + $0x53] sm:$0x7f]
      %v2363 = vld [vmem:[%s165 + $0x63] sm:$0xff]
      %v2364 = vld [vmem:[%s165 + $0x6b] sm:$0x7f]
      %v2365 = vld [vmem:[%s165 + $0x7b] sm:$0xff]
      %v2366 = vld [vmem:[%s165 + $0x83] sm:$0x7f]
      %v2367 = vld [vmem:[%s165 + $0x93] sm:$0xff]
      %v2368 = vld [vmem:[%s165 + $0x9b] sm:$0x7f]
      %v2369 = vld [vmem:[%s165 + $0xab] sm:$0xff]
      %v2370 = vld [vmem:[%s165 + $0xb3] sm:$0x7f]
      %v2371 = vld [vmem:[%s165 + $0xc3] sm:$0xff]
      %v2372 = vld [vmem:[%s165 + $0xcb] sm:$0x7f]
      %v2373 = vld [vmem:[%s165 + $0xdb] sm:$0xff]
      %v2374 = vld [vmem:[%s165 + $0xe3] sm:$0x7f]
      %v2375 = vld [vmem:[%s165 + $0xf3] sm:$0xff]
      %v2376 = vld [vmem:[%s165 + $0xfb] sm:$0x7f]
      %v2377 = vld [vmem:[%s165 + $0x10b] sm:$0xff]
      %v2378 = vld [vmem:[%s165 + $0x113] sm:$0x7f]
      %v2379 = vld [vmem:[%s165 + $0x123] sm:$0xff]
      %v2380 = vld [vmem:[%s165 + $0x12b] sm:$0x7f]
      %v2381 = vld [vmem:[%s165 + $0x13b] sm:$0xff]
      %v2382 = vld [vmem:[%s165 + $0x143] sm:$0x7f]
      %v2383 = vld [vmem:[%s165 + $0x153] sm:$0xff]
      %v2384 = vld [vmem:[%s165 + $0x15b] sm:$0x7f]
      %v2385 = vmax.f32 %v2355, 0.0
      %v2386 = vmax.f32 %v2356, 0.0
      %v2387 = vmax.f32 %v2357, 0.0
      %v2388 = vmax.f32 %v2358, 0.0
      %v2389 = vmax.f32 %v2359, 0.0
      %v2390 = vmax.f32 %v2360, 0.0
      %v2391 = vmax.f32 %v2361, 0.0
      %v2392 = vmax.f32 %v2362, 0.0
      %v2393 = vmax.f32 %v2363, 0.0
      %v2394 = vmax.f32 %v2364, 0.0
      %v2395 = vmax.f32 %v2365, 0.0
      %v2396 = vmax.f32 %v2366, 0.0
      %v2397 = vmax.f32 %v2367, 0.0
      %v2398 = vmax.f32 %v2368, 0.0
      %v2399 = vmax.f32 %v2369, 0.0
      %v2400 = vmax.f32 %v2370, 0.0
      %v2401 = vmax.f32 %v2371, 0.0
      %v2402 = vmax.f32 %v2372, 0.0
      %v2403 = vmax.f32 %v2373, 0.0
      %v2404 = vmax.f32 %v2374, 0.0
      %v2405 = vmax.f32 %v2375, 0.0
      %v2406 = vmax.f32 %v2376, 0.0
      %v2407 = vmax.f32 %v2377, 0.0
      %v2408 = vmax.f32 %v2378, 0.0
      %v2409 = vmax.f32 %v2379, 0.0
      %v2410 = vmax.f32 %v2380, 0.0
      %v2411 = vmax.f32 %v2381, 0.0
      %v2412 = vmax.f32 %v2382, 0.0
      %v2413 = vmax.f32 %v2383, 0.0
      %v2414 = vmax.f32 %v2384, 0.0
      %v2415 = vperm.slane %v173, 3
      %v2416 = vmul.f32 %v2385, %v2415
      %v2417 = vmul.f32 %v2386, %v2415
      %v2418 = vmul.f32 %v2387, %v2415
      %v2419 = vmul.f32 %v2388, %v2415
      %v2420 = vmul.f32 %v2389, %v2415
      %v2421 = vmul.f32 %v2390, %v2415
      %v2422 = vmul.f32 %v2391, %v2415
      %v2423 = vmul.f32 %v2392, %v2415
      %v2424 = vmul.f32 %v2393, %v2415
      %v2425 = vmul.f32 %v2394, %v2415
      %v2426 = vmul.f32 %v2395, %v2415
      %v2427 = vmul.f32 %v2396, %v2415
      %v2428 = vmul.f32 %v2397, %v2415
      %v2429 = vmul.f32 %v2398, %v2415
      %v2430 = vmul.f32 %v2399, %v2415
      %v2431 = vmul.f32 %v2400, %v2415
      %v2432 = vmul.f32 %v2401, %v2415
      %v2433 = vmul.f32 %v2402, %v2415
      %v2434 = vmul.f32 %v2403, %v2415
      %v2435 = vmul.f32 %v2404, %v2415
      %v2436 = vmul.f32 %v2405, %v2415
      %v2437 = vmul.f32 %v2406, %v2415
      %v2438 = vmul.f32 %v2407, %v2415
      %v2439 = vmul.f32 %v2408, %v2415
      %v2440 = vmul.f32 %v2409, %v2415
      %v2441 = vmul.f32 %v2410, %v2415
      %v2442 = vmul.f32 %v2411, %v2415
      %v2443 = vmul.f32 %v2412, %v2415
      %v2444 = vmul.f32 %v2413, %v2415
      %v2445 = vmul.f32 %v2414, %v2415
      %v2446 = vadd.f32 %v2325, %v2416
      %v2447 = vadd.f32 %v2326, %v2417
      %v2448 = vadd.f32 %v2327, %v2418
      %v2449 = vadd.f32 %v2328, %v2419
      %v2450 = vadd.f32 %v2329, %v2420
      %v2451 = vadd.f32 %v2330, %v2421
      %v2452 = vadd.f32 %v2331, %v2422
      %v2453 = vadd.f32 %v2332, %v2423
      %v2454 = vadd.f32 %v2333, %v2424
      %v2455 = vadd.f32 %v2334, %v2425
      %v2456 = vadd.f32 %v2335, %v2426
      %v2457 = vadd.f32 %v2336, %v2427
      %v2458 = vadd.f32 %v2337, %v2428
      %v2459 = vadd.f32 %v2338, %v2429
      %v2460 = vadd.f32 %v2339, %v2430
      %v2461 = vadd.f32 %v2340, %v2431
      %v2462 = vadd.f32 %v2341, %v2432
      %v2463 = vadd.f32 %v2342, %v2433
      %v2464 = vadd.f32 %v2343, %v2434
      %v2465 = vadd.f32 %v2344, %v2435
      %v2466 = vadd.f32 %v2345, %v2436
      %v2467 = vadd.f32 %v2346, %v2437
      %v2468 = vadd.f32 %v2347, %v2438
      %v2469 = vadd.f32 %v2348, %v2439
      %v2470 = vadd.f32 %v2349, %v2440
      %v2471 = vadd.f32 %v2350, %v2441
      %v2472 = vadd.f32 %v2351, %v2442
      %v2473 = vadd.f32 %v2352, %v2443
      %v2474 = vadd.f32 %v2353, %v2444
      %v2475 = vadd.f32 %v2354, %v2445
      %v2476 = vld [vmem:[%s165 + $0x4] sm:$0xff]
      %v2477 = vld [vmem:[%s165 + $0xc] sm:$0x7f]
      %v2478 = vld [vmem:[%s165 + $0x1c] sm:$0xff]
      %v2479 = vld [vmem:[%s165 + $0x24] sm:$0x7f]
      %v2480 = vld [vmem:[%s165 + $0x34] sm:$0xff]
      %v2481 = vld [vmem:[%s165 + $0x3c] sm:$0x7f]
      %v2482 = vld [vmem:[%s165 + $0x4c] sm:$0xff]
      %v2483 = vld [vmem:[%s165 + $0x54] sm:$0x7f]
      %v2484 = vld [vmem:[%s165 + $0x64] sm:$0xff]
      %v2485 = vld [vmem:[%s165 + $0x6c] sm:$0x7f]
      %v2486 = vld [vmem:[%s165 + $0x7c] sm:$0xff]
      %v2487 = vld [vmem:[%s165 + $0x84] sm:$0x7f]
      %v2488 = vld [vmem:[%s165 + $0x94] sm:$0xff]
      %v2489 = vld [vmem:[%s165 + $0x9c] sm:$0x7f]
      %v2490 = vld [vmem:[%s165 + $0xac] sm:$0xff]
      %v2491 = vld [vmem:[%s165 + $0xb4] sm:$0x7f]
      %v2492 = vld [vmem:[%s165 + $0xc4] sm:$0xff]
      %v2493 = vld [vmem:[%s165 + $0xcc] sm:$0x7f]
      %v2494 = vld [vmem:[%s165 + $0xdc] sm:$0xff]
      %v2495 = vld [vmem:[%s165 + $0xe4] sm:$0x7f]
      %v2496 = vld [vmem:[%s165 + $0xf4] sm:$0xff]
      %v2497 = vld [vmem:[%s165 + $0xfc] sm:$0x7f]
      %v2498 = vld [vmem:[%s165 + $0x10c] sm:$0xff]
      %v2499 = vld [vmem:[%s165 + $0x114] sm:$0x7f]
      %v2500 = vld [vmem:[%s165 + $0x124] sm:$0xff]
      %v2501 = vld [vmem:[%s165 + $0x12c] sm:$0x7f]
      %v2502 = vld [vmem:[%s165 + $0x13c] sm:$0xff]
      %v2503 = vld [vmem:[%s165 + $0x144] sm:$0x7f]
      %v2504 = vld [vmem:[%s165 + $0x154] sm:$0xff]
      %v2505 = vld [vmem:[%s165 + $0x15c] sm:$0x7f]
      %v2506 = vmax.f32 %v2476, 0.0
      %v2507 = vmax.f32 %v2477, 0.0
      %v2508 = vmax.f32 %v2478, 0.0
      %v2509 = vmax.f32 %v2479, 0.0
      %v2510 = vmax.f32 %v2480, 0.0
      %v2511 = vmax.f32 %v2481, 0.0
      %v2512 = vmax.f32 %v2482, 0.0
      %v2513 = vmax.f32 %v2483, 0.0
      %v2514 = vmax.f32 %v2484, 0.0
      %v2515 = vmax.f32 %v2485, 0.0
      %v2516 = vmax.f32 %v2486, 0.0
      %v2517 = vmax.f32 %v2487, 0.0
      %v2518 = vmax.f32 %v2488, 0.0
      %v2519 = vmax.f32 %v2489, 0.0
      %v2520 = vmax.f32 %v2490, 0.0
      %v2521 = vmax.f32 %v2491, 0.0
      %v2522 = vmax.f32 %v2492, 0.0
      %v2523 = vmax.f32 %v2493, 0.0
      %v2524 = vmax.f32 %v2494, 0.0
      %v2525 = vmax.f32 %v2495, 0.0
      %v2526 = vmax.f32 %v2496, 0.0
      %v2527 = vmax.f32 %v2497, 0.0
      %v2528 = vmax.f32 %v2498, 0.0
      %v2529 = vmax.f32 %v2499, 0.0
      %v2530 = vmax.f32 %v2500, 0.0
      %v2531 = vmax.f32 %v2501, 0.0
      %v2532 = vmax.f32 %v2502, 0.0
      %v2533 = vmax.f32 %v2503, 0.0
      %v2534 = vmax.f32 %v2504, 0.0
      %v2535 = vmax.f32 %v2505, 0.0
      %v2536 = vperm.slane %v173, 4
      %v2537 = vmul.f32 %v2506, %v2536
      %v2538 = vmul.f32 %v2507, %v2536
      %v2539 = vmul.f32 %v2508, %v2536
      %v2540 = vmul.f32 %v2509, %v2536
      %v2541 = vmul.f32 %v2510, %v2536
      %v2542 = vmul.f32 %v2511, %v2536
      %v2543 = vmul.f32 %v2512, %v2536
      %v2544 = vmul.f32 %v2513, %v2536
      %v2545 = vmul.f32 %v2514, %v2536
      %v2546 = vmul.f32 %v2515, %v2536
      %v2547 = vmul.f32 %v2516, %v2536
      %v2548 = vmul.f32 %v2517, %v2536
      %v2549 = vmul.f32 %v2518, %v2536
      %v2550 = vmul.f32 %v2519, %v2536
      %v2551 = vmul.f32 %v2520, %v2536
      %v2552 = vmul.f32 %v2521, %v2536
      %v2553 = vmul.f32 %v2522, %v2536
      %v2554 = vmul.f32 %v2523, %v2536
      %v2555 = vmul.f32 %v2524, %v2536
      %v2556 = vmul.f32 %v2525, %v2536
      %v2557 = vmul.f32 %v2526, %v2536
      %v2558 = vmul.f32 %v2527, %v2536
      %v2559 = vmul.f32 %v2528, %v2536
      %v2560 = vmul.f32 %v2529, %v2536
      %v2561 = vmul.f32 %v2530, %v2536
      %v2562 = vmul.f32 %v2531, %v2536
      %v2563 = vmul.f32 %v2532, %v2536
      %v2564 = vmul.f32 %v2533, %v2536
      %v2565 = vmul.f32 %v2534, %v2536
      %v2566 = vmul.f32 %v2535, %v2536
      %v2567 = vadd.f32 %v2446, %v2537
      %v2568 = vadd.f32 %v2447, %v2538
      %v2569 = vadd.f32 %v2448, %v2539
      %v2570 = vadd.f32 %v2449, %v2540
      %v2571 = vadd.f32 %v2450, %v2541
      %v2572 = vadd.f32 %v2451, %v2542
      %v2573 = vadd.f32 %v2452, %v2543
      %v2574 = vadd.f32 %v2453, %v2544
      %v2575 = vadd.f32 %v2454, %v2545
      %v2576 = vadd.f32 %v2455, %v2546
      %v2577 = vadd.f32 %v2456, %v2547
      %v2578 = vadd.f32 %v2457, %v2548
      %v2579 = vadd.f32 %v2458, %v2549
      %v2580 = vadd.f32 %v2459, %v2550
      %v2581 = vadd.f32 %v2460, %v2551
      %v2582 = vadd.f32 %v2461, %v2552
      %v2583 = vadd.f32 %v2462, %v2553
      %v2584 = vadd.f32 %v2463, %v2554
      %v2585 = vadd.f32 %v2464, %v2555
      %v2586 = vadd.f32 %v2465, %v2556
      %v2587 = vadd.f32 %v2466, %v2557
      %v2588 = vadd.f32 %v2467, %v2558
      %v2589 = vadd.f32 %v2468, %v2559
      %v2590 = vadd.f32 %v2469, %v2560
      %v2591 = vadd.f32 %v2470, %v2561
      %v2592 = vadd.f32 %v2471, %v2562
      %v2593 = vadd.f32 %v2472, %v2563
      %v2594 = vadd.f32 %v2473, %v2564
      %v2595 = vadd.f32 %v2474, %v2565
      %v2596 = vadd.f32 %v2475, %v2566
      %v2597 = vld [vmem:[%s177] sm:$0xff]
      %v2598 = vld [vmem:[%s177 + $0x8] sm:$0x7f]
      %v2599 = vld [vmem:[%s177 + $0x18] sm:$0xff]
      %v2600 = vld [vmem:[%s177 + $0x20] sm:$0x7f]
      %v2601 = vld [vmem:[%s177 + $0x30] sm:$0xff]
      %v2602 = vld [vmem:[%s177 + $0x38] sm:$0x7f]
      %v2603 = vld [vmem:[%s177 + $0x48] sm:$0xff]
      %v2604 = vld [vmem:[%s177 + $0x50] sm:$0x7f]
      %v2605 = vld [vmem:[%s177 + $0x60] sm:$0xff]
      %v2606 = vld [vmem:[%s177 + $0x68] sm:$0x7f]
      %v2607 = vld [vmem:[%s177 + $0x78] sm:$0xff]
      %v2608 = vld [vmem:[%s177 + $0x80] sm:$0x7f]
      %v2609 = vld [vmem:[%s177 + $0x90] sm:$0xff]
      %v2610 = vld [vmem:[%s177 + $0x98] sm:$0x7f]
      %v2611 = vld [vmem:[%s177 + $0xa8] sm:$0xff]
      %v2612 = vld [vmem:[%s177 + $0xb0] sm:$0x7f]
      %v2613 = vld [vmem:[%s177 + $0xc0] sm:$0xff]
      %v2614 = vld [vmem:[%s177 + $0xc8] sm:$0x7f]
      %v2615 = vld [vmem:[%s177 + $0xd8] sm:$0xff]
      %v2616 = vld [vmem:[%s177 + $0xe0] sm:$0x7f]
      %v2617 = vld [vmem:[%s177 + $0xf0] sm:$0xff]
      %v2618 = vld [vmem:[%s177 + $0xf8] sm:$0x7f]
      %v2619 = vld [vmem:[%s177 + $0x108] sm:$0xff]
      %v2620 = vld [vmem:[%s177 + $0x110] sm:$0x7f]
      %v2621 = vld [vmem:[%s177 + $0x120] sm:$0xff]
      %v2622 = vld [vmem:[%s177 + $0x128] sm:$0x7f]
      %v2623 = vld [vmem:[%s177 + $0x138] sm:$0xff]
      %v2624 = vld [vmem:[%s177 + $0x140] sm:$0x7f]
      %v2625 = vld [vmem:[%s177 + $0x150] sm:$0xff]
      %v2626 = vld [vmem:[%s177 + $0x158] sm:$0x7f]
      %v2627 = vmax.f32 %v2597, 0.0
      %v2628 = vmax.f32 %v2598, 0.0
      %v2629 = vmax.f32 %v2599, 0.0
      %v2630 = vmax.f32 %v2600, 0.0
      %v2631 = vmax.f32 %v2601, 0.0
      %v2632 = vmax.f32 %v2602, 0.0
      %v2633 = vmax.f32 %v2603, 0.0
      %v2634 = vmax.f32 %v2604, 0.0
      %v2635 = vmax.f32 %v2605, 0.0
      %v2636 = vmax.f32 %v2606, 0.0
      %v2637 = vmax.f32 %v2607, 0.0
      %v2638 = vmax.f32 %v2608, 0.0
      %v2639 = vmax.f32 %v2609, 0.0
      %v2640 = vmax.f32 %v2610, 0.0
      %v2641 = vmax.f32 %v2611, 0.0
      %v2642 = vmax.f32 %v2612, 0.0
      %v2643 = vmax.f32 %v2613, 0.0
      %v2644 = vmax.f32 %v2614, 0.0
      %v2645 = vmax.f32 %v2615, 0.0
      %v2646 = vmax.f32 %v2616, 0.0
      %v2647 = vmax.f32 %v2617, 0.0
      %v2648 = vmax.f32 %v2618, 0.0
      %v2649 = vmax.f32 %v2619, 0.0
      %v2650 = vmax.f32 %v2620, 0.0
      %v2651 = vmax.f32 %v2621, 0.0
      %v2652 = vmax.f32 %v2622, 0.0
      %v2653 = vmax.f32 %v2623, 0.0
      %v2654 = vmax.f32 %v2624, 0.0
      %v2655 = vmax.f32 %v2625, 0.0
      %v2656 = vmax.f32 %v2626, 0.0
      %v2657 = vperm.slane %v173, 5
      %v2658 = vmul.f32 %v2627, %v2657
      %v2659 = vmul.f32 %v2628, %v2657
      %v2660 = vmul.f32 %v2629, %v2657
      %v2661 = vmul.f32 %v2630, %v2657
      %v2662 = vmul.f32 %v2631, %v2657
      %v2663 = vmul.f32 %v2632, %v2657
      %v2664 = vmul.f32 %v2633, %v2657
      %v2665 = vmul.f32 %v2634, %v2657
      %v2666 = vmul.f32 %v2635, %v2657
      %v2667 = vmul.f32 %v2636, %v2657
      %v2668 = vmul.f32 %v2637, %v2657
      %v2669 = vmul.f32 %v2638, %v2657
      %v2670 = vmul.f32 %v2639, %v2657
      %v2671 = vmul.f32 %v2640, %v2657
      %v2672 = vmul.f32 %v2641, %v2657
      %v2673 = vmul.f32 %v2642, %v2657
      %v2674 = vmul.f32 %v2643, %v2657
      %v2675 = vmul.f32 %v2644, %v2657
      %v2676 = vmul.f32 %v2645, %v2657
      %v2677 = vmul.f32 %v2646, %v2657
      %v2678 = vmul.f32 %v2647, %v2657
      %v2679 = vmul.f32 %v2648, %v2657
      %v2680 = vmul.f32 %v2649, %v2657
      %v2681 = vmul.f32 %v2650, %v2657
      %v2682 = vmul.f32 %v2651, %v2657
      %v2683 = vmul.f32 %v2652, %v2657
      %v2684 = vmul.f32 %v2653, %v2657
      %v2685 = vmul.f32 %v2654, %v2657
      %v2686 = vmul.f32 %v2655, %v2657
      %v2687 = vmul.f32 %v2656, %v2657
      %v2688 = vadd.f32 %v2567, %v2658
      %v2689 = vadd.f32 %v2568, %v2659
      %v2690 = vadd.f32 %v2569, %v2660
      %v2691 = vadd.f32 %v2570, %v2661
      %v2692 = vadd.f32 %v2571, %v2662
      %v2693 = vadd.f32 %v2572, %v2663
      %v2694 = vadd.f32 %v2573, %v2664
      %v2695 = vadd.f32 %v2574, %v2665
      %v2696 = vadd.f32 %v2575, %v2666
      %v2697 = vadd.f32 %v2576, %v2667
      %v2698 = vadd.f32 %v2577, %v2668
      %v2699 = vadd.f32 %v2578, %v2669
      %v2700 = vadd.f32 %v2579, %v2670
      %v2701 = vadd.f32 %v2580, %v2671
      %v2702 = vadd.f32 %v2581, %v2672
      %v2703 = vadd.f32 %v2582, %v2673
      %v2704 = vadd.f32 %v2583, %v2674
      %v2705 = vadd.f32 %v2584, %v2675
      %v2706 = vadd.f32 %v2585, %v2676
      %v2707 = vadd.f32 %v2586, %v2677
      %v2708 = vadd.f32 %v2587, %v2678
      %v2709 = vadd.f32 %v2588, %v2679
      %v2710 = vadd.f32 %v2589, %v2680
      %v2711 = vadd.f32 %v2590, %v2681
      %v2712 = vadd.f32 %v2591, %v2682
      %v2713 = vadd.f32 %v2592, %v2683
      %v2714 = vadd.f32 %v2593, %v2684
      %v2715 = vadd.f32 %v2594, %v2685
      %v2716 = vadd.f32 %v2595, %v2686
      %v2717 = vadd.f32 %v2596, %v2687
      %v2718 = vld [vmem:[%s177 + $0x1] sm:$0xff]
      %v2719 = vld [vmem:[%s177 + $0x9] sm:$0x7f]
      %v2720 = vld [vmem:[%s177 + $0x19] sm:$0xff]
      %v2721 = vld [vmem:[%s177 + $0x21] sm:$0x7f]
      %v2722 = vld [vmem:[%s177 + $0x31] sm:$0xff]
      %v2723 = vld [vmem:[%s177 + $0x39] sm:$0x7f]
      %v2724 = vld [vmem:[%s177 + $0x49] sm:$0xff]
      %v2725 = vld [vmem:[%s177 + $0x51] sm:$0x7f]
      %v2726 = vld [vmem:[%s177 + $0x61] sm:$0xff]
      %v2727 = vld [vmem:[%s177 + $0x69] sm:$0x7f]
      %v2728 = vld [vmem:[%s177 + $0x79] sm:$0xff]
      %v2729 = vld [vmem:[%s177 + $0x81] sm:$0x7f]
      %v2730 = vld [vmem:[%s177 + $0x91] sm:$0xff]
      %v2731 = vld [vmem:[%s177 + $0x99] sm:$0x7f]
      %v2732 = vld [vmem:[%s177 + $0xa9] sm:$0xff]
      %v2733 = vld [vmem:[%s177 + $0xb1] sm:$0x7f]
      %v2734 = vld [vmem:[%s177 + $0xc1] sm:$0xff]
      %v2735 = vld [vmem:[%s177 + $0xc9] sm:$0x7f]
      %v2736 = vld [vmem:[%s177 + $0xd9] sm:$0xff]
      %v2737 = vld [vmem:[%s177 + $0xe1] sm:$0x7f]
      %v2738 = vld [vmem:[%s177 + $0xf1] sm:$0xff]
      %v2739 = vld [vmem:[%s177 + $0xf9] sm:$0x7f]
      %v2740 = vld [vmem:[%s177 + $0x109] sm:$0xff]
      %v2741 = vld [vmem:[%s177 + $0x111] sm:$0x7f]
      %v2742 = vld [vmem:[%s177 + $0x121] sm:$0xff]
      %v2743 = vld [vmem:[%s177 + $0x129] sm:$0x7f]
      %v2744 = vld [vmem:[%s177 + $0x139] sm:$0xff]
      %v2745 = vld [vmem:[%s177 + $0x141] sm:$0x7f]
      %v2746 = vld [vmem:[%s177 + $0x151] sm:$0xff]
      %v2747 = vld [vmem:[%s177 + $0x159] sm:$0x7f]
      %v2748 = vmax.f32 %v2718, 0.0
      %v2749 = vmax.f32 %v2719, 0.0
      %v2750 = vmax.f32 %v2720, 0.0
      %v2751 = vmax.f32 %v2721, 0.0
      %v2752 = vmax.f32 %v2722, 0.0
      %v2753 = vmax.f32 %v2723, 0.0
      %v2754 = vmax.f32 %v2724, 0.0
      %v2755 = vmax.f32 %v2725, 0.0
      %v2756 = vmax.f32 %v2726, 0.0
      %v2757 = vmax.f32 %v2727, 0.0
      %v2758 = vmax.f32 %v2728, 0.0
      %v2759 = vmax.f32 %v2729, 0.0
      %v2760 = vmax.f32 %v2730, 0.0
      %v2761 = vmax.f32 %v2731, 0.0
      %v2762 = vmax.f32 %v2732, 0.0
      %v2763 = vmax.f32 %v2733, 0.0
      %v2764 = vmax.f32 %v2734, 0.0
      %v2765 = vmax.f32 %v2735, 0.0
      %v2766 = vmax.f32 %v2736, 0.0
      %v2767 = vmax.f32 %v2737, 0.0
      %v2768 = vmax.f32 %v2738, 0.0
      %v2769 = vmax.f32 %v2739, 0.0
      %v2770 = vmax.f32 %v2740, 0.0
      %v2771 = vmax.f32 %v2741, 0.0
      %v2772 = vmax.f32 %v2742, 0.0
      %v2773 = vmax.f32 %v2743, 0.0
      %v2774 = vmax.f32 %v2744, 0.0
      %v2775 = vmax.f32 %v2745, 0.0
      %v2776 = vmax.f32 %v2746, 0.0
      %v2777 = vmax.f32 %v2747, 0.0
      %v2778 = vperm.slane %v173, 6
      %v2779 = vmul.f32 %v2748, %v2778
      %v2780 = vmul.f32 %v2749, %v2778
      %v2781 = vmul.f32 %v2750, %v2778
      %v2782 = vmul.f32 %v2751, %v2778
      %v2783 = vmul.f32 %v2752, %v2778
      %v2784 = vmul.f32 %v2753, %v2778
      %v2785 = vmul.f32 %v2754, %v2778
      %v2786 = vmul.f32 %v2755, %v2778
      %v2787 = vmul.f32 %v2756, %v2778
      %v2788 = vmul.f32 %v2757, %v2778
      %v2789 = vmul.f32 %v2758, %v2778
      %v2790 = vmul.f32 %v2759, %v2778
      %v2791 = vmul.f32 %v2760, %v2778
      %v2792 = vmul.f32 %v2761, %v2778
      %v2793 = vmul.f32 %v2762, %v2778
      %v2794 = vmul.f32 %v2763, %v2778
      %v2795 = vmul.f32 %v2764, %v2778
      %v2796 = vmul.f32 %v2765, %v2778
      %v2797 = vmul.f32 %v2766, %v2778
      %v2798 = vmul.f32 %v2767, %v2778
      %v2799 = vmul.f32 %v2768, %v2778
      %v2800 = vmul.f32 %v2769, %v2778
      %v2801 = vmul.f32 %v2770, %v2778
      %v2802 = vmul.f32 %v2771, %v2778
      %v2803 = vmul.f32 %v2772, %v2778
      %v2804 = vmul.f32 %v2773, %v2778
      %v2805 = vmul.f32 %v2774, %v2778
      %v2806 = vmul.f32 %v2775, %v2778
      %v2807 = vmul.f32 %v2776, %v2778
      %v2808 = vmul.f32 %v2777, %v2778
      %v2809 = vadd.f32 %v2688, %v2779
      %v2810 = vadd.f32 %v2689, %v2780
      %v2811 = vadd.f32 %v2690, %v2781
      %v2812 = vadd.f32 %v2691, %v2782
      %v2813 = vadd.f32 %v2692, %v2783
      %v2814 = vadd.f32 %v2693, %v2784
      %v2815 = vadd.f32 %v2694, %v2785
      %v2816 = vadd.f32 %v2695, %v2786
      %v2817 = vadd.f32 %v2696, %v2787
      %v2818 = vadd.f32 %v2697, %v2788
      %v2819 = vadd.f32 %v2698, %v2789
      %v2820 = vadd.f32 %v2699, %v2790
      %v2821 = vadd.f32 %v2700, %v2791
      %v2822 = vadd.f32 %v2701, %v2792
      %v2823 = vadd.f32 %v2702, %v2793
      %v2824 = vadd.f32 %v2703, %v2794
      %v2825 = vadd.f32 %v2704, %v2795
      %v2826 = vadd.f32 %v2705, %v2796
      %v2827 = vadd.f32 %v2706, %v2797
      %v2828 = vadd.f32 %v2707, %v2798
      %v2829 = vadd.f32 %v2708, %v2799
      %v2830 = vadd.f32 %v2709, %v2800
      %v2831 = vadd.f32 %v2710, %v2801
      %v2832 = vadd.f32 %v2711, %v2802
      %v2833 = vadd.f32 %v2712, %v2803
      %v2834 = vadd.f32 %v2713, %v2804
      %v2835 = vadd.f32 %v2714, %v2805
      %v2836 = vadd.f32 %v2715, %v2806
      %v2837 = vadd.f32 %v2716, %v2807
      %v2838 = vadd.f32 %v2717, %v2808
      %v2839 = vld [vmem:[%s177 + $0x2] sm:$0xff]
      %v2840 = vld [vmem:[%s177 + $0xa] sm:$0x7f]
      %v2841 = vld [vmem:[%s177 + $0x1a] sm:$0xff]
      %v2842 = vld [vmem:[%s177 + $0x22] sm:$0x7f]
      %v2843 = vld [vmem:[%s177 + $0x32] sm:$0xff]
      %v2844 = vld [vmem:[%s177 + $0x3a] sm:$0x7f]
      %v2845 = vld [vmem:[%s177 + $0x4a] sm:$0xff]
      %v2846 = vld [vmem:[%s177 + $0x52] sm:$0x7f]
      %v2847 = vld [vmem:[%s177 + $0x62] sm:$0xff]
      %v2848 = vld [vmem:[%s177 + $0x6a] sm:$0x7f]
      %v2849 = vld [vmem:[%s177 + $0x7a] sm:$0xff]
      %v2850 = vld [vmem:[%s177 + $0x82] sm:$0x7f]
      %v2851 = vld [vmem:[%s177 + $0x92] sm:$0xff]
      %v2852 = vld [vmem:[%s177 + $0x9a] sm:$0x7f]
      %v2853 = vld [vmem:[%s177 + $0xaa] sm:$0xff]
      %v2854 = vld [vmem:[%s177 + $0xb2] sm:$0x7f]
      %v2855 = vld [vmem:[%s177 + $0xc2] sm:$0xff]
      %v2856 = vld [vmem:[%s177 + $0xca] sm:$0x7f]
      %v2857 = vld [vmem:[%s177 + $0xda] sm:$0xff]
      %v2858 = vld [vmem:[%s177 + $0xe2] sm:$0x7f]
      %v2859 = vld [vmem:[%s177 + $0xf2] sm:$0xff]
      %v2860 = vld [vmem:[%s177 + $0xfa] sm:$0x7f]
      %v2861 = vld [vmem:[%s177 + $0x10a] sm:$0xff]
      %v2862 = vld [vmem:[%s177 + $0x112] sm:$0x7f]
      %v2863 = vld [vmem:[%s177 + $0x122] sm:$0xff]
      %v2864 = vld [vmem:[%s177 + $0x12a] sm:$0x7f]
      %v2865 = vld [vmem:[%s177 + $0x13a] sm:$0xff]
      %v2866 = vld [vmem:[%s177 + $0x142] sm:$0x7f]
      %v2867 = vld [vmem:[%s177 + $0x152] sm:$0xff]
      %v2868 = vld [vmem:[%s177 + $0x15a] sm:$0x7f]
      %v2869 = vmax.f32 %v2839, 0.0
      %v2870 = vmax.f32 %v2840, 0.0
      %v2871 = vmax.f32 %v2841, 0.0
      %v2872 = vmax.f32 %v2842, 0.0
      %v2873 = vmax.f32 %v2843, 0.0
      %v2874 = vmax.f32 %v2844, 0.0
      %v2875 = vmax.f32 %v2845, 0.0
      %v2876 = vmax.f32 %v2846, 0.0
      %v2877 = vmax.f32 %v2847, 0.0
      %v2878 = vmax.f32 %v2848, 0.0
      %v2879 = vmax.f32 %v2849, 0.0
      %v2880 = vmax.f32 %v2850, 0.0
      %v2881 = vmax.f32 %v2851, 0.0
      %v2882 = vmax.f32 %v2852, 0.0
      %v2883 = vmax.f32 %v2853, 0.0
      %v2884 = vmax.f32 %v2854, 0.0
      %v2885 = vmax.f32 %v2855, 0.0
      %v2886 = vmax.f32 %v2856, 0.0
      %v2887 = vmax.f32 %v2857, 0.0
      %v2888 = vmax.f32 %v2858, 0.0
      %v2889 = vmax.f32 %v2859, 0.0
      %v2890 = vmax.f32 %v2860, 0.0
      %v2891 = vmax.f32 %v2861, 0.0
      %v2892 = vmax.f32 %v2862, 0.0
      %v2893 = vmax.f32 %v2863, 0.0
      %v2894 = vmax.f32 %v2864, 0.0
      %v2895 = vmax.f32 %v2865, 0.0
      %v2896 = vmax.f32 %v2866, 0.0
      %v2897 = vmax.f32 %v2867, 0.0
      %v2898 = vmax.f32 %v2868, 0.0
      %v2899 = vperm.slane %v173, 7
      %v2900 = vmul.f32 %v2869, %v2899
      %v2901 = vmul.f32 %v2870, %v2899
      %v2902 = vmul.f32 %v2871, %v2899
      %v2903 = vmul.f32 %v2872, %v2899
      %v2904 = vmul.f32 %v2873, %v2899
      %v2905 = vmul.f32 %v2874, %v2899
      %v2906 = vmul.f32 %v2875, %v2899
      %v2907 = vmul.f32 %v2876, %v2899
      %v2908 = vmul.f32 %v2877, %v2899
      %v2909 = vmul.f32 %v2878, %v2899
      %v2910 = vmul.f32 %v2879, %v2899
      %v2911 = vmul.f32 %v2880, %v2899
      %v2912 = vmul.f32 %v2881, %v2899
      %v2913 = vmul.f32 %v2882, %v2899
      %v2914 = vmul.f32 %v2883, %v2899
      %v2915 = vmul.f32 %v2884, %v2899
      %v2916 = vmul.f32 %v2885, %v2899
      %v2917 = vmul.f32 %v2886, %v2899
      %v2918 = vmul.f32 %v2887, %v2899
      %v2919 = vmul.f32 %v2888, %v2899
      %v2920 = vmul.f32 %v2889, %v2899
      %v2921 = vmul.f32 %v2890, %v2899
      %v2922 = vmul.f32 %v2891, %v2899
      %v2923 = vmul.f32 %v2892, %v2899
      %v2924 = vmul.f32 %v2893, %v2899
      %v2925 = vmul.f32 %v2894, %v2899
      %v2926 = vmul.f32 %v2895, %v2899
      %v2927 = vmul.f32 %v2896, %v2899
      %v2928 = vmul.f32 %v2897, %v2899
      %v2929 = vmul.f32 %v2898, %v2899
      %v2930 = vadd.f32 %v2809, %v2900
      %v2931 = vadd.f32 %v2810, %v2901
      %v2932 = vadd.f32 %v2811, %v2902
      %v2933 = vadd.f32 %v2812, %v2903
      %v2934 = vadd.f32 %v2813, %v2904
      %v2935 = vadd.f32 %v2814, %v2905
      %v2936 = vadd.f32 %v2815, %v2906
      %v2937 = vadd.f32 %v2816, %v2907
      %v2938 = vadd.f32 %v2817, %v2908
      %v2939 = vadd.f32 %v2818, %v2909
      %v2940 = vadd.f32 %v2819, %v2910
      %v2941 = vadd.f32 %v2820, %v2911
      %v2942 = vadd.f32 %v2821, %v2912
      %v2943 = vadd.f32 %v2822, %v2913
      %v2944 = vadd.f32 %v2823, %v2914
      %v2945 = vadd.f32 %v2824, %v2915
      %v2946 = vadd.f32 %v2825, %v2916
      %v2947 = vadd.f32 %v2826, %v2917
      %v2948 = vadd.f32 %v2827, %v2918
      %v2949 = vadd.f32 %v2828, %v2919
      %v2950 = vadd.f32 %v2829, %v2920
      %v2951 = vadd.f32 %v2830, %v2921
      %v2952 = vadd.f32 %v2831, %v2922
      %v2953 = vadd.f32 %v2832, %v2923
      %v2954 = vadd.f32 %v2833, %v2924
      %v2955 = vadd.f32 %v2834, %v2925
      %v2956 = vadd.f32 %v2835, %v2926
      %v2957 = vadd.f32 %v2836, %v2927
      %v2958 = vadd.f32 %v2837, %v2928
      %v2959 = vadd.f32 %v2838, %v2929
      %v2960 = vld [vmem:[%s177 + $0x3] sm:$0xff]
      %v2961 = vld [vmem:[%s177 + $0xb] sm:$0x7f]
      %v2962 = vld [vmem:[%s177 + $0x1b] sm:$0xff]
      %v2963 = vld [vmem:[%s177 + $0x23] sm:$0x7f]
      %v2964 = vld [vmem:[%s177 + $0x33] sm:$0xff]
      %v2965 = vld [vmem:[%s177 + $0x3b] sm:$0x7f]
      %v2966 = vld [vmem:[%s177 + $0x4b] sm:$0xff]
      %v2967 = vld [vmem:[%s177 + $0x53] sm:$0x7f]
      %v2968 = vld [vmem:[%s177 + $0x63] sm:$0xff]
      %v2969 = vld [vmem:[%s177 + $0x6b] sm:$0x7f]
      %v2970 = vld [vmem:[%s177 + $0x7b] sm:$0xff]
      %v2971 = vld [vmem:[%s177 + $0x83] sm:$0x7f]
      %v2972 = vld [vmem:[%s177 + $0x93] sm:$0xff]
      %v2973 = vld [vmem:[%s177 + $0x9b] sm:$0x7f]
      %v2974 = vld [vmem:[%s177 + $0xab] sm:$0xff]
      %v2975 = vld [vmem:[%s177 + $0xb3] sm:$0x7f]
      %v2976 = vld [vmem:[%s177 + $0xc3] sm:$0xff]
      %v2977 = vld [vmem:[%s177 + $0xcb] sm:$0x7f]
      %v2978 = vld [vmem:[%s177 + $0xdb] sm:$0xff]
      %v2979 = vld [vmem:[%s177 + $0xe3] sm:$0x7f]
      %v2980 = vld [vmem:[%s177 + $0xf3] sm:$0xff]
      %v2981 = vld [vmem:[%s177 + $0xfb] sm:$0x7f]
      %v2982 = vld [vmem:[%s177 + $0x10b] sm:$0xff]
      %v2983 = vld [vmem:[%s177 + $0x113] sm:$0x7f]
      %v2984 = vld [vmem:[%s177 + $0x123] sm:$0xff]
      %v2985 = vld [vmem:[%s177 + $0x12b] sm:$0x7f]
      %v2986 = vld [vmem:[%s177 + $0x13b] sm:$0xff]
      %v2987 = vld [vmem:[%s177 + $0x143] sm:$0x7f]
      %v2988 = vld [vmem:[%s177 + $0x153] sm:$0xff]
      %v2989 = vld [vmem:[%s177 + $0x15b] sm:$0x7f]
      %v2990 = vmax.f32 %v2960, 0.0
      %v2991 = vmax.f32 %v2961, 0.0
      %v2992 = vmax.f32 %v2962, 0.0
      %v2993 = vmax.f32 %v2963, 0.0
      %v2994 = vmax.f32 %v2964, 0.0
      %v2995 = vmax.f32 %v2965, 0.0
      %v2996 = vmax.f32 %v2966, 0.0
      %v2997 = vmax.f32 %v2967, 0.0
      %v2998 = vmax.f32 %v2968, 0.0
      %v2999 = vmax.f32 %v2969, 0.0
      %v3000 = vmax.f32 %v2970, 0.0
      %v3001 = vmax.f32 %v2971, 0.0
      %v3002 = vmax.f32 %v2972, 0.0
      %v3003 = vmax.f32 %v2973, 0.0
      %v3004 = vmax.f32 %v2974, 0.0
      %v3005 = vmax.f32 %v2975, 0.0
      %v3006 = vmax.f32 %v2976, 0.0
      %v3007 = vmax.f32 %v2977, 0.0
      %v3008 = vmax.f32 %v2978, 0.0
      %v3009 = vmax.f32 %v2979, 0.0
      %v3010 = vmax.f32 %v2980, 0.0
      %v3011 = vmax.f32 %v2981, 0.0
      %v3012 = vmax.f32 %v2982, 0.0
      %v3013 = vmax.f32 %v2983, 0.0
      %v3014 = vmax.f32 %v2984, 0.0
      %v3015 = vmax.f32 %v2985, 0.0
      %v3016 = vmax.f32 %v2986, 0.0
      %v3017 = vmax.f32 %v2987, 0.0
      %v3018 = vmax.f32 %v2988, 0.0
      %v3019 = vmax.f32 %v2989, 0.0
      %v3020 = vperm.slane %v174, 0
      %v3021 = vmul.f32 %v2990, %v3020
      %v3022 = vmul.f32 %v2991, %v3020
      %v3023 = vmul.f32 %v2992, %v3020
      %v3024 = vmul.f32 %v2993, %v3020
      %v3025 = vmul.f32 %v2994, %v3020
      %v3026 = vmul.f32 %v2995, %v3020
      %v3027 = vmul.f32 %v2996, %v3020
      %v3028 = vmul.f32 %v2997, %v3020
      %v3029 = vmul.f32 %v2998, %v3020
      %v3030 = vmul.f32 %v2999, %v3020
      %v3031 = vmul.f32 %v3000, %v3020
      %v3032 = vmul.f32 %v3001, %v3020
      %v3033 = vmul.f32 %v3002, %v3020
      %v3034 = vmul.f32 %v3003, %v3020
      %v3035 = vmul.f32 %v3004, %v3020
      %v3036 = vmul.f32 %v3005, %v3020
      %v3037 = vmul.f32 %v3006, %v3020
      %v3038 = vmul.f32 %v3007, %v3020
      %v3039 = vmul.f32 %v3008, %v3020
      %v3040 = vmul.f32 %v3009, %v3020
      %v3041 = vmul.f32 %v3010, %v3020
      %v3042 = vmul.f32 %v3011, %v3020
      %v3043 = vmul.f32 %v3012, %v3020
      %v3044 = vmul.f32 %v3013, %v3020
      %v3045 = vmul.f32 %v3014, %v3020
      %v3046 = vmul.f32 %v3015, %v3020
      %v3047 = vmul.f32 %v3016, %v3020
      %v3048 = vmul.f32 %v3017, %v3020
      %v3049 = vmul.f32 %v3018, %v3020
      %v3050 = vmul.f32 %v3019, %v3020
      %v3051 = vadd.f32 %v2930, %v3021
      %v3052 = vadd.f32 %v2931, %v3022
      %v3053 = vadd.f32 %v2932, %v3023
      %v3054 = vadd.f32 %v2933, %v3024
      %v3055 = vadd.f32 %v2934, %v3025
      %v3056 = vadd.f32 %v2935, %v3026
      %v3057 = vadd.f32 %v2936, %v3027
      %v3058 = vadd.f32 %v2937, %v3028
      %v3059 = vadd.f32 %v2938, %v3029
      %v3060 = vadd.f32 %v2939, %v3030
      %v3061 = vadd.f32 %v2940, %v3031
      %v3062 = vadd.f32 %v2941, %v3032
      %v3063 = vadd.f32 %v2942, %v3033
      %v3064 = vadd.f32 %v2943, %v3034
      %v3065 = vadd.f32 %v2944, %v3035
      %v3066 = vadd.f32 %v2945, %v3036
      %v3067 = vadd.f32 %v2946, %v3037
      %v3068 = vadd.f32 %v2947, %v3038
      %v3069 = vadd.f32 %v2948, %v3039
      %v3070 = vadd.f32 %v2949, %v3040
      %v3071 = vadd.f32 %v2950, %v3041
      %v3072 = vadd.f32 %v2951, %v3042
      %v3073 = vadd.f32 %v2952, %v3043
      %v3074 = vadd.f32 %v2953, %v3044
      %v3075 = vadd.f32 %v2954, %v3045
      %v3076 = vadd.f32 %v2955, %v3046
      %v3077 = vadd.f32 %v2956, %v3047
      %v3078 = vadd.f32 %v2957, %v3048
      %v3079 = vadd.f32 %v2958, %v3049
      %v3080 = vadd.f32 %v2959, %v3050
      %v3081 = vld [vmem:[%s177 + $0x4] sm:$0xff]
      %v3082 = vld [vmem:[%s177 + $0xc] sm:$0x7f]
      %v3083 = vld [vmem:[%s177 + $0x1c] sm:$0xff]
      %v3084 = vld [vmem:[%s177 + $0x24] sm:$0x7f]
      %v3085 = vld [vmem:[%s177 + $0x34] sm:$0xff]
      %v3086 = vld [vmem:[%s177 + $0x3c] sm:$0x7f]
      %v3087 = vld [vmem:[%s177 + $0x4c] sm:$0xff]
      %v3088 = vld [vmem:[%s177 + $0x54] sm:$0x7f]
      %v3089 = vld [vmem:[%s177 + $0x64] sm:$0xff]
      %v3090 = vld [vmem:[%s177 + $0x6c] sm:$0x7f]
      %v3091 = vld [vmem:[%s177 + $0x7c] sm:$0xff]
      %v3092 = vld [vmem:[%s177 + $0x84] sm:$0x7f]
      %v3093 = vld [vmem:[%s177 + $0x94] sm:$0xff]
      %v3094 = vld [vmem:[%s177 + $0x9c] sm:$0x7f]
      %v3095 = vld [vmem:[%s177 + $0xac] sm:$0xff]
      %v3096 = vld [vmem:[%s177 + $0xb4] sm:$0x7f]
      %v3097 = vld [vmem:[%s177 + $0xc4] sm:$0xff]
      %v3098 = vld [vmem:[%s177 + $0xcc] sm:$0x7f]
      %v3099 = vld [vmem:[%s177 + $0xdc] sm:$0xff]
      %v3100 = vld [vmem:[%s177 + $0xe4] sm:$0x7f]
      %v3101 = vld [vmem:[%s177 + $0xf4] sm:$0xff]
      %v3102 = vld [vmem:[%s177 + $0xfc] sm:$0x7f]
      %v3103 = vld [vmem:[%s177 + $0x10c] sm:$0xff]
      %v3104 = vld [vmem:[%s177 + $0x114] sm:$0x7f]
      %v3105 = vld [vmem:[%s177 + $0x124] sm:$0xff]
      %v3106 = vld [vmem:[%s177 + $0x12c] sm:$0x7f]
      %v3107 = vld [vmem:[%s177 + $0x13c] sm:$0xff]
      %v3108 = vld [vmem:[%s177 + $0x144] sm:$0x7f]
      %v3109 = vld [vmem:[%s177 + $0x154] sm:$0xff]
      %v3110 = vld [vmem:[%s177 + $0x15c] sm:$0x7f]
      %v3111 = vmax.f32 %v3081, 0.0
      %v3112 = vmax.f32 %v3082, 0.0
      %v3113 = vmax.f32 %v3083, 0.0
      %v3114 = vmax.f32 %v3084, 0.0
      %v3115 = vmax.f32 %v3085, 0.0
      %v3116 = vmax.f32 %v3086, 0.0
      %v3117 = vmax.f32 %v3087, 0.0
      %v3118 = vmax.f32 %v3088, 0.0
      %v3119 = vmax.f32 %v3089, 0.0
      %v3120 = vmax.f32 %v3090, 0.0
      %v3121 = vmax.f32 %v3091, 0.0
      %v3122 = vmax.f32 %v3092, 0.0
      %v3123 = vmax.f32 %v3093, 0.0
      %v3124 = vmax.f32 %v3094, 0.0
      %v3125 = vmax.f32 %v3095, 0.0
      %v3126 = vmax.f32 %v3096, 0.0
      %v3127 = vmax.f32 %v3097, 0.0
      %v3128 = vmax.f32 %v3098, 0.0
      %v3129 = vmax.f32 %v3099, 0.0
      %v3130 = vmax.f32 %v3100, 0.0
      %v3131 = vmax.f32 %v3101, 0.0
      %v3132 = vmax.f32 %v3102, 0.0
      %v3133 = vmax.f32 %v3103, 0.0
      %v3134 = vmax.f32 %v3104, 0.0
      %v3135 = vmax.f32 %v3105, 0.0
      %v3136 = vmax.f32 %v3106, 0.0
      %v3137 = vmax.f32 %v3107, 0.0
      %v3138 = vmax.f32 %v3108, 0.0
      %v3139 = vmax.f32 %v3109, 0.0
      %v3140 = vmax.f32 %v3110, 0.0
      %v3141 = vperm.slane %v174, 1
      %v3142 = vmul.f32 %v3111, %v3141
      %v3143 = vmul.f32 %v3112, %v3141
      %v3144 = vmul.f32 %v3113, %v3141
      %v3145 = vmul.f32 %v3114, %v3141
      %v3146 = vmul.f32 %v3115, %v3141
      %v3147 = vmul.f32 %v3116, %v3141
      %v3148 = vmul.f32 %v3117, %v3141
      %v3149 = vmul.f32 %v3118, %v3141
      %v3150 = vmul.f32 %v3119, %v3141
      %v3151 = vmul.f32 %v3120, %v3141
      %v3152 = vmul.f32 %v3121, %v3141
      %v3153 = vmul.f32 %v3122, %v3141
      %v3154 = vmul.f32 %v3123, %v3141
      %v3155 = vmul.f32 %v3124, %v3141
      %v3156 = vmul.f32 %v3125, %v3141
      %v3157 = vmul.f32 %v3126, %v3141
      %v3158 = vmul.f32 %v3127, %v3141
      %v3159 = vmul.f32 %v3128, %v3141
      %v3160 = vmul.f32 %v3129, %v3141
      %v3161 = vmul.f32 %v3130, %v3141
      %v3162 = vmul.f32 %v3131, %v3141
      %v3163 = vmul.f32 %v3132, %v3141
      %v3164 = vmul.f32 %v3133, %v3141
      %v3165 = vmul.f32 %v3134, %v3141
      %v3166 = vmul.f32 %v3135, %v3141
      %v3167 = vmul.f32 %v3136, %v3141
      %v3168 = vmul.f32 %v3137, %v3141
      %v3169 = vmul.f32 %v3138, %v3141
      %v3170 = vmul.f32 %v3139, %v3141
      %v3171 = vmul.f32 %v3140, %v3141
      %v3172 = vadd.f32 %v3051, %v3142
      %v3173 = vadd.f32 %v3052, %v3143
      %v3174 = vadd.f32 %v3053, %v3144
      %v3175 = vadd.f32 %v3054, %v3145
      %v3176 = vadd.f32 %v3055, %v3146
      %v3177 = vadd.f32 %v3056, %v3147
      %v3178 = vadd.f32 %v3057, %v3148
      %v3179 = vadd.f32 %v3058, %v3149
      %v3180 = vadd.f32 %v3059, %v3150
      %v3181 = vadd.f32 %v3060, %v3151
      %v3182 = vadd.f32 %v3061, %v3152
      %v3183 = vadd.f32 %v3062, %v3153
      %v3184 = vadd.f32 %v3063, %v3154
      %v3185 = vadd.f32 %v3064, %v3155
      %v3186 = vadd.f32 %v3065, %v3156
      %v3187 = vadd.f32 %v3066, %v3157
      %v3188 = vadd.f32 %v3067, %v3158
      %v3189 = vadd.f32 %v3068, %v3159
      %v3190 = vadd.f32 %v3069, %v3160
      %v3191 = vadd.f32 %v3070, %v3161
      %v3192 = vadd.f32 %v3071, %v3162
      %v3193 = vadd.f32 %v3072, %v3163
      %v3194 = vadd.f32 %v3073, %v3164
      %v3195 = vadd.f32 %v3074, %v3165
      %v3196 = vadd.f32 %v3075, %v3166
      %v3197 = vadd.f32 %v3076, %v3167
      %v3198 = vadd.f32 %v3077, %v3168
      %v3199 = vadd.f32 %v3078, %v3169
      %v3200 = vadd.f32 %v3079, %v3170
      %v3201 = vadd.f32 %v3080, %v3171
      %v3202 = vld [vmem:[%s721] sm:$0xff]
      %v3203 = vld [vmem:[%s721 + $0x8] sm:$0x7f]
      %v3204 = vld [vmem:[%s721 + $0x18] sm:$0xff]
      %v3205 = vld [vmem:[%s721 + $0x20] sm:$0x7f]
      %v3206 = vld [vmem:[%s721 + $0x30] sm:$0xff]
      %v3207 = vld [vmem:[%s721 + $0x38] sm:$0x7f]
      %v3208 = vld [vmem:[%s721 + $0x48] sm:$0xff]
      %v3209 = vld [vmem:[%s721 + $0x50] sm:$0x7f]
      %v3210 = vld [vmem:[%s721 + $0x60] sm:$0xff]
      %v3211 = vld [vmem:[%s721 + $0x68] sm:$0x7f]
      %v3212 = vld [vmem:[%s721 + $0x78] sm:$0xff]
      %v3213 = vld [vmem:[%s721 + $0x80] sm:$0x7f]
      %v3214 = vld [vmem:[%s721 + $0x90] sm:$0xff]
      %v3215 = vld [vmem:[%s721 + $0x98] sm:$0x7f]
      %v3216 = vld [vmem:[%s721 + $0xa8] sm:$0xff]
      %v3217 = vld [vmem:[%s721 + $0xb0] sm:$0x7f]
      %v3218 = vld [vmem:[%s721 + $0xc0] sm:$0xff]
      %v3219 = vld [vmem:[%s721 + $0xc8] sm:$0x7f]
      %v3220 = vld [vmem:[%s721 + $0xd8] sm:$0xff]
      %v3221 = vld [vmem:[%s721 + $0xe0] sm:$0x7f]
      %v3222 = vld [vmem:[%s721 + $0xf0] sm:$0xff]
      %v3223 = vld [vmem:[%s721 + $0xf8] sm:$0x7f]
      %v3224 = vld [vmem:[%s721 + $0x108] sm:$0xff]
      %v3225 = vld [vmem:[%s721 + $0x110] sm:$0x7f]
      %v3226 = vld [vmem:[%s721 + $0x120] sm:$0xff]
      %v3227 = vld [vmem:[%s721 + $0x128] sm:$0x7f]
      %v3228 = vld [vmem:[%s721 + $0x138] sm:$0xff]
      %v3229 = vld [vmem:[%s721 + $0x140] sm:$0x7f]
      %v3230 = vld [vmem:[%s721 + $0x150] sm:$0xff]
      %v3231 = vld [vmem:[%s721 + $0x158] sm:$0x7f]
      %v3232 = vmax.f32 %v3202, 0.0
      %v3233 = vmax.f32 %v3203, 0.0
      %v3234 = vmax.f32 %v3204, 0.0
      %v3235 = vmax.f32 %v3205, 0.0
      %v3236 = vmax.f32 %v3206, 0.0
      %v3237 = vmax.f32 %v3207, 0.0
      %v3238 = vmax.f32 %v3208, 0.0
      %v3239 = vmax.f32 %v3209, 0.0
      %v3240 = vmax.f32 %v3210, 0.0
      %v3241 = vmax.f32 %v3211, 0.0
      %v3242 = vmax.f32 %v3212, 0.0
      %v3243 = vmax.f32 %v3213, 0.0
      %v3244 = vmax.f32 %v3214, 0.0
      %v3245 = vmax.f32 %v3215, 0.0
      %v3246 = vmax.f32 %v3216, 0.0
      %v3247 = vmax.f32 %v3217, 0.0
      %v3248 = vmax.f32 %v3218, 0.0
      %v3249 = vmax.f32 %v3219, 0.0
      %v3250 = vmax.f32 %v3220, 0.0
      %v3251 = vmax.f32 %v3221, 0.0
      %v3252 = vmax.f32 %v3222, 0.0
      %v3253 = vmax.f32 %v3223, 0.0
      %v3254 = vmax.f32 %v3224, 0.0
      %v3255 = vmax.f32 %v3225, 0.0
      %v3256 = vmax.f32 %v3226, 0.0
      %v3257 = vmax.f32 %v3227, 0.0
      %v3258 = vmax.f32 %v3228, 0.0
      %v3259 = vmax.f32 %v3229, 0.0
      %v3260 = vmax.f32 %v3230, 0.0
      %v3261 = vmax.f32 %v3231, 0.0
      %v3262 = vperm.slane %v174, 2
      %v3263 = vmul.f32 %v3232, %v3262
      %v3264 = vmul.f32 %v3233, %v3262
      %v3265 = vmul.f32 %v3234, %v3262
      %v3266 = vmul.f32 %v3235, %v3262
      %v3267 = vmul.f32 %v3236, %v3262
      %v3268 = vmul.f32 %v3237, %v3262
      %v3269 = vmul.f32 %v3238, %v3262
      %v3270 = vmul.f32 %v3239, %v3262
      %v3271 = vmul.f32 %v3240, %v3262
      %v3272 = vmul.f32 %v3241, %v3262
      %v3273 = vmul.f32 %v3242, %v3262
      %v3274 = vmul.f32 %v3243, %v3262
      %v3275 = vmul.f32 %v3244, %v3262
      %v3276 = vmul.f32 %v3245, %v3262
      %v3277 = vmul.f32 %v3246, %v3262
      %v3278 = vmul.f32 %v3247, %v3262
      %v3279 = vmul.f32 %v3248, %v3262
      %v3280 = vmul.f32 %v3249, %v3262
      %v3281 = vmul.f32 %v3250, %v3262
      %v3282 = vmul.f32 %v3251, %v3262
      %v3283 = vmul.f32 %v3252, %v3262
      %v3284 = vmul.f32 %v3253, %v3262
      %v3285 = vmul.f32 %v3254, %v3262
      %v3286 = vmul.f32 %v3255, %v3262
      %v3287 = vmul.f32 %v3256, %v3262
      %v3288 = vmul.f32 %v3257, %v3262
      %v3289 = vmul.f32 %v3258, %v3262
      %v3290 = vmul.f32 %v3259, %v3262
      %v3291 = vmul.f32 %v3260, %v3262
      %v3292 = vmul.f32 %v3261, %v3262
      %v3293 = vadd.f32 %v3172, %v3263
      %v3294 = vadd.f32 %v3173, %v3264
      %v3295 = vadd.f32 %v3174, %v3265
      %v3296 = vadd.f32 %v3175, %v3266
      %v3297 = vadd.f32 %v3176, %v3267
      %v3298 = vadd.f32 %v3177, %v3268
      %v3299 = vadd.f32 %v3178, %v3269
      %v3300 = vadd.f32 %v3179, %v3270
      %v3301 = vadd.f32 %v3180, %v3271
      %v3302 = vadd.f32 %v3181, %v3272
      %v3303 = vadd.f32 %v3182, %v3273
      %v3304 = vadd.f32 %v3183, %v3274
      %v3305 = vadd.f32 %v3184, %v3275
      %v3306 = vadd.f32 %v3185, %v3276
      %v3307 = vadd.f32 %v3186, %v3277
      %v3308 = vadd.f32 %v3187, %v3278
      %v3309 = vadd.f32 %v3188, %v3279
      %v3310 = vadd.f32 %v3189, %v3280
      %v3311 = vadd.f32 %v3190, %v3281
      %v3312 = vadd.f32 %v3191, %v3282
      %v3313 = vadd.f32 %v3192, %v3283
      %v3314 = vadd.f32 %v3193, %v3284
      %v3315 = vadd.f32 %v3194, %v3285
      %v3316 = vadd.f32 %v3195, %v3286
      %v3317 = vadd.f32 %v3196, %v3287
      %v3318 = vadd.f32 %v3197, %v3288
      %v3319 = vadd.f32 %v3198, %v3289
      %v3320 = vadd.f32 %v3199, %v3290
      %v3321 = vadd.f32 %v3200, %v3291
      %v3322 = vadd.f32 %v3201, %v3292
      %v3323 = vld [vmem:[%s721 + $0x1] sm:$0xff]
      %v3324 = vld [vmem:[%s721 + $0x9] sm:$0x7f]
      %v3325 = vld [vmem:[%s721 + $0x19] sm:$0xff]
      %v3326 = vld [vmem:[%s721 + $0x21] sm:$0x7f]
      %v3327 = vld [vmem:[%s721 + $0x31] sm:$0xff]
      %v3328 = vld [vmem:[%s721 + $0x39] sm:$0x7f]
      %v3329 = vld [vmem:[%s721 + $0x49] sm:$0xff]
      %v3330 = vld [vmem:[%s721 + $0x51] sm:$0x7f]
      %v3331 = vld [vmem:[%s721 + $0x61] sm:$0xff]
      %v3332 = vld [vmem:[%s721 + $0x69] sm:$0x7f]
      %v3333 = vld [vmem:[%s721 + $0x79] sm:$0xff]
      %v3334 = vld [vmem:[%s721 + $0x81] sm:$0x7f]
      %v3335 = vld [vmem:[%s721 + $0x91] sm:$0xff]
      %v3336 = vld [vmem:[%s721 + $0x99] sm:$0x7f]
      %v3337 = vld [vmem:[%s721 + $0xa9] sm:$0xff]
      %v3338 = vld [vmem:[%s721 + $0xb1] sm:$0x7f]
      %v3339 = vld [vmem:[%s721 + $0xc1] sm:$0xff]
      %v3340 = vld [vmem:[%s721 + $0xc9] sm:$0x7f]
      %v3341 = vld [vmem:[%s721 + $0xd9] sm:$0xff]
      %v3342 = vld [vmem:[%s721 + $0xe1] sm:$0x7f]
      %v3343 = vld [vmem:[%s721 + $0xf1] sm:$0xff]
      %v3344 = vld [vmem:[%s721 + $0xf9] sm:$0x7f]
      %v3345 = vld [vmem:[%s721 + $0x109] sm:$0xff]
      %v3346 = vld [vmem:[%s721 + $0x111] sm:$0x7f]
      %v3347 = vld [vmem:[%s721 + $0x121] sm:$0xff]
      %v3348 = vld [vmem:[%s721 + $0x129] sm:$0x7f]
      %v3349 = vld [vmem:[%s721 + $0x139] sm:$0xff]
      %v3350 = vld [vmem:[%s721 + $0x141] sm:$0x7f]
      %v3351 = vld [vmem:[%s721 + $0x151] sm:$0xff]
      %v3352 = vld [vmem:[%s721 + $0x159] sm:$0x7f]
      %v3353 = vmax.f32 %v3323, 0.0
      %v3354 = vmax.f32 %v3324, 0.0
      %v3355 = vmax.f32 %v3325, 0.0
      %v3356 = vmax.f32 %v3326, 0.0
      %v3357 = vmax.f32 %v3327, 0.0
      %v3358 = vmax.f32 %v3328, 0.0
      %v3359 = vmax.f32 %v3329, 0.0
      %v3360 = vmax.f32 %v3330, 0.0
      %v3361 = vmax.f32 %v3331, 0.0
      %v3362 = vmax.f32 %v3332, 0.0
      %v3363 = vmax.f32 %v3333, 0.0
      %v3364 = vmax.f32 %v3334, 0.0
      %v3365 = vmax.f32 %v3335, 0.0
      %v3366 = vmax.f32 %v3336, 0.0
      %v3367 = vmax.f32 %v3337, 0.0
      %v3368 = vmax.f32 %v3338, 0.0
      %v3369 = vmax.f32 %v3339, 0.0
      %v3370 = vmax.f32 %v3340, 0.0
      %v3371 = vmax.f32 %v3341, 0.0
      %v3372 = vmax.f32 %v3342, 0.0
      %v3373 = vmax.f32 %v3343, 0.0
      %v3374 = vmax.f32 %v3344, 0.0
      %v3375 = vmax.f32 %v3345, 0.0
      %v3376 = vmax.f32 %v3346, 0.0
      %v3377 = vmax.f32 %v3347, 0.0
      %v3378 = vmax.f32 %v3348, 0.0
      %v3379 = vmax.f32 %v3349, 0.0
      %v3380 = vmax.f32 %v3350, 0.0
      %v3381 = vmax.f32 %v3351, 0.0
      %v3382 = vmax.f32 %v3352, 0.0
      %v3383 = vperm.slane %v174, 3
      %v3384 = vmul.f32 %v3353, %v3383
      %v3385 = vmul.f32 %v3354, %v3383
      %v3386 = vmul.f32 %v3355, %v3383
      %v3387 = vmul.f32 %v3356, %v3383
      %v3388 = vmul.f32 %v3357, %v3383
      %v3389 = vmul.f32 %v3358, %v3383
      %v3390 = vmul.f32 %v3359, %v3383
      %v3391 = vmul.f32 %v3360, %v3383
      %v3392 = vmul.f32 %v3361, %v3383
      %v3393 = vmul.f32 %v3362, %v3383
      %v3394 = vmul.f32 %v3363, %v3383
      %v3395 = vmul.f32 %v3364, %v3383
      %v3396 = vmul.f32 %v3365, %v3383
      %v3397 = vmul.f32 %v3366, %v3383
      %v3398 = vmul.f32 %v3367, %v3383
      %v3399 = vmul.f32 %v3368, %v3383
      %v3400 = vmul.f32 %v3369, %v3383
      %v3401 = vmul.f32 %v3370, %v3383
      %v3402 = vmul.f32 %v3371, %v3383
      %v3403 = vmul.f32 %v3372, %v3383
      %v3404 = vmul.f32 %v3373, %v3383
      %v3405 = vmul.f32 %v3374, %v3383
      %v3406 = vmul.f32 %v3375, %v3383
      %v3407 = vmul.f32 %v3376, %v3383
      %v3408 = vmul.f32 %v3377, %v3383
      %v3409 = vmul.f32 %v3378, %v3383
      %v3410 = vmul.f32 %v3379, %v3383
      %v3411 = vmul.f32 %v3380, %v3383
      %v3412 = vmul.f32 %v3381, %v3383
      %v3413 = vmul.f32 %v3382, %v3383
      %v3414 = vadd.f32 %v3293, %v3384
      %v3415 = vadd.f32 %v3294, %v3385
      %v3416 = vadd.f32 %v3295, %v3386
      %v3417 = vadd.f32 %v3296, %v3387
      %v3418 = vadd.f32 %v3297, %v3388
      %v3419 = vadd.f32 %v3298, %v3389
      %v3420 = vadd.f32 %v3299, %v3390
      %v3421 = vadd.f32 %v3300, %v3391
      %v3422 = vadd.f32 %v3301, %v3392
      %v3423 = vadd.f32 %v3302, %v3393
      %v3424 = vadd.f32 %v3303, %v3394
      %v3425 = vadd.f32 %v3304, %v3395
      %v3426 = vadd.f32 %v3305, %v3396
      %v3427 = vadd.f32 %v3306, %v3397
      %v3428 = vadd.f32 %v3307, %v3398
      %v3429 = vadd.f32 %v3308, %v3399
      %v3430 = vadd.f32 %v3309, %v3400
      %v3431 = vadd.f32 %v3310, %v3401
      %v3432 = vadd.f32 %v3311, %v3402
      %v3433 = vadd.f32 %v3312, %v3403
      %v3434 = vadd.f32 %v3313, %v3404
      %v3435 = vadd.f32 %v3314, %v3405
      %v3436 = vadd.f32 %v3315, %v3406
      %v3437 = vadd.f32 %v3316, %v3407
      %v3438 = vadd.f32 %v3317, %v3408
      %v3439 = vadd.f32 %v3318, %v3409
      %v3440 = vadd.f32 %v3319, %v3410
      %v3441 = vadd.f32 %v3320, %v3411
      %v3442 = vadd.f32 %v3321, %v3412
      %v3443 = vadd.f32 %v3322, %v3413
      %v3444 = vld [vmem:[%s721 + $0x2] sm:$0xff]
      %v3445 = vld [vmem:[%s721 + $0xa] sm:$0x7f]
      %v3446 = vld [vmem:[%s721 + $0x1a] sm:$0xff]
      %v3447 = vld [vmem:[%s721 + $0x22] sm:$0x7f]
      %v3448 = vld [vmem:[%s721 + $0x32] sm:$0xff]
      %v3449 = vld [vmem:[%s721 + $0x3a] sm:$0x7f]
      %v3450 = vld [vmem:[%s721 + $0x4a] sm:$0xff]
      %v3451 = vld [vmem:[%s721 + $0x52] sm:$0x7f]
      %v3452 = vld [vmem:[%s721 + $0x62] sm:$0xff]
      %v3453 = vld [vmem:[%s721 + $0x6a] sm:$0x7f]
      %v3454 = vld [vmem:[%s721 + $0x7a] sm:$0xff]
      %v3455 = vld [vmem:[%s721 + $0x82] sm:$0x7f]
      %v3456 = vld [vmem:[%s721 + $0x92] sm:$0xff]
      %v3457 = vld [vmem:[%s721 + $0x9a] sm:$0x7f]
      %v3458 = vld [vmem:[%s721 + $0xaa] sm:$0xff]
      %v3459 = vld [vmem:[%s721 + $0xb2] sm:$0x7f]
      %v3460 = vld [vmem:[%s721 + $0xc2] sm:$0xff]
      %v3461 = vld [vmem:[%s721 + $0xca] sm:$0x7f]
      %v3462 = vld [vmem:[%s721 + $0xda] sm:$0xff]
      %v3463 = vld [vmem:[%s721 + $0xe2] sm:$0x7f]
      %v3464 = vld [vmem:[%s721 + $0xf2] sm:$0xff]
      %v3465 = vld [vmem:[%s721 + $0xfa] sm:$0x7f]
      %v3466 = vld [vmem:[%s721 + $0x10a] sm:$0xff]
      %v3467 = vld [vmem:[%s721 + $0x112] sm:$0x7f]
      %v3468 = vld [vmem:[%s721 + $0x122] sm:$0xff]
      %v3469 = vld [vmem:[%s721 + $0x12a] sm:$0x7f]
      %v3470 = vld [vmem:[%s721 + $0x13a] sm:$0xff]
      %v3471 = vld [vmem:[%s721 + $0x142] sm:$0x7f]
      %v3472 = vld [vmem:[%s721 + $0x152] sm:$0xff]
      %v3473 = vld [vmem:[%s721 + $0x15a] sm:$0x7f]
      %v3474 = vmax.f32 %v3444, 0.0
      %v3475 = vmax.f32 %v3445, 0.0
      %v3476 = vmax.f32 %v3446, 0.0
      %v3477 = vmax.f32 %v3447, 0.0
      %v3478 = vmax.f32 %v3448, 0.0
      %v3479 = vmax.f32 %v3449, 0.0
      %v3480 = vmax.f32 %v3450, 0.0
      %v3481 = vmax.f32 %v3451, 0.0
      %v3482 = vmax.f32 %v3452, 0.0
      %v3483 = vmax.f32 %v3453, 0.0
      %v3484 = vmax.f32 %v3454, 0.0
      %v3485 = vmax.f32 %v3455, 0.0
      %v3486 = vmax.f32 %v3456, 0.0
      %v3487 = vmax.f32 %v3457, 0.0
      %v3488 = vmax.f32 %v3458, 0.0
      %v3489 = vmax.f32 %v3459, 0.0
      %v3490 = vmax.f32 %v3460, 0.0
      %v3491 = vmax.f32 %v3461, 0.0
      %v3492 = vmax.f32 %v3462, 0.0
      %v3493 = vmax.f32 %v3463, 0.0
      %v3494 = vmax.f32 %v3464, 0.0
      %v3495 = vmax.f32 %v3465, 0.0
      %v3496 = vmax.f32 %v3466, 0.0
      %v3497 = vmax.f32 %v3467, 0.0
      %v3498 = vmax.f32 %v3468, 0.0
      %v3499 = vmax.f32 %v3469, 0.0
      %v3500 = vmax.f32 %v3470, 0.0
      %v3501 = vmax.f32 %v3471, 0.0
      %v3502 = vmax.f32 %v3472, 0.0
      %v3503 = vmax.f32 %v3473, 0.0
      %v3504 = vperm.slane %v174, 4
      %v3505 = vmul.f32 %v3474, %v3504
      %v3506 = vmul.f32 %v3475, %v3504
      %v3507 = vmul.f32 %v3476, %v3504
      %v3508 = vmul.f32 %v3477, %v3504
      %v3509 = vmul.f32 %v3478, %v3504
      %v3510 = vmul.f32 %v3479, %v3504
      %v3511 = vmul.f32 %v3480, %v3504
      %v3512 = vmul.f32 %v3481, %v3504
      %v3513 = vmul.f32 %v3482, %v3504
      %v3514 = vmul.f32 %v3483, %v3504
      %v3515 = vmul.f32 %v3484, %v3504
      %v3516 = vmul.f32 %v3485, %v3504
      %v3517 = vmul.f32 %v3486, %v3504
      %v3518 = vmul.f32 %v3487, %v3504
      %v3519 = vmul.f32 %v3488, %v3504
      %v3520 = vmul.f32 %v3489, %v3504
      %v3521 = vmul.f32 %v3490, %v3504
      %v3522 = vmul.f32 %v3491, %v3504
      %v3523 = vmul.f32 %v3492, %v3504
      %v3524 = vmul.f32 %v3493, %v3504
      %v3525 = vmul.f32 %v3494, %v3504
      %v3526 = vmul.f32 %v3495, %v3504
      %v3527 = vmul.f32 %v3496, %v3504
      %v3528 = vmul.f32 %v3497, %v3504
      %v3529 = vmul.f32 %v3498, %v3504
      %v3530 = vmul.f32 %v3499, %v3504
      %v3531 = vmul.f32 %v3500, %v3504
      %v3532 = vmul.f32 %v3501, %v3504
      %v3533 = vmul.f32 %v3502, %v3504
      %v3534 = vmul.f32 %v3503, %v3504
      %v3535 = vadd.f32 %v3414, %v3505
      %v3536 = vadd.f32 %v3415, %v3506
      %v3537 = vadd.f32 %v3416, %v3507
      %v3538 = vadd.f32 %v3417, %v3508
      %v3539 = vadd.f32 %v3418, %v3509
      %v3540 = vadd.f32 %v3419, %v3510
      %v3541 = vadd.f32 %v3420, %v3511
      %v3542 = vadd.f32 %v3421, %v3512
      %v3543 = vadd.f32 %v3422, %v3513
      %v3544 = vadd.f32 %v3423, %v3514
      %v3545 = vadd.f32 %v3424, %v3515
      %v3546 = vadd.f32 %v3425, %v3516
      %v3547 = vadd.f32 %v3426, %v3517
      %v3548 = vadd.f32 %v3427, %v3518
      %v3549 = vadd.f32 %v3428, %v3519
      %v3550 = vadd.f32 %v3429, %v3520
      %v3551 = vadd.f32 %v3430, %v3521
      %v3552 = vadd.f32 %v3431, %v3522
      %v3553 = vadd.f32 %v3432, %v3523
      %v3554 = vadd.f32 %v3433, %v3524
      %v3555 = vadd.f32 %v3434, %v3525
      %v3556 = vadd.f32 %v3435, %v3526
      %v3557 = vadd.f32 %v3436, %v3527
      %v3558 = vadd.f32 %v3437, %v3528
      %v3559 = vadd.f32 %v3438, %v3529
      %v3560 = vadd.f32 %v3439, %v3530
      %v3561 = vadd.f32 %v3440, %v3531
      %v3562 = vadd.f32 %v3441, %v3532
      %v3563 = vadd.f32 %v3442, %v3533
      %v3564 = vadd.f32 %v3443, %v3534
      %v3565 = vld [vmem:[%s721 + $0x3] sm:$0xff]
      %v3566 = vld [vmem:[%s721 + $0xb] sm:$0x7f]
      %v3567 = vld [vmem:[%s721 + $0x1b] sm:$0xff]
      %v3568 = vld [vmem:[%s721 + $0x23] sm:$0x7f]
      %v3569 = vld [vmem:[%s721 + $0x33] sm:$0xff]
      %v3570 = vld [vmem:[%s721 + $0x3b] sm:$0x7f]
      %v3571 = vld [vmem:[%s721 + $0x4b] sm:$0xff]
      %v3572 = vld [vmem:[%s721 + $0x53] sm:$0x7f]
      %v3573 = vld [vmem:[%s721 + $0x63] sm:$0xff]
      %v3574 = vld [vmem:[%s721 + $0x6b] sm:$0x7f]
      %v3575 = vld [vmem:[%s721 + $0x7b] sm:$0xff]
      %v3576 = vld [vmem:[%s721 + $0x83] sm:$0x7f]
      %v3577 = vld [vmem:[%s721 + $0x93] sm:$0xff]
      %v3578 = vld [vmem:[%s721 + $0x9b] sm:$0x7f]
      %v3579 = vld [vmem:[%s721 + $0xab] sm:$0xff]
      %v3580 = vld [vmem:[%s721 + $0xb3] sm:$0x7f]
      %v3581 = vld [vmem:[%s721 + $0xc3] sm:$0xff]
      %v3582 = vld [vmem:[%s721 + $0xcb] sm:$0x7f]
      %v3583 = vld [vmem:[%s721 + $0xdb] sm:$0xff]
      %v3584 = vld [vmem:[%s721 + $0xe3] sm:$0x7f]
      %v3585 = vld [vmem:[%s721 + $0xf3] sm:$0xff]
      %v3586 = vld [vmem:[%s721 + $0xfb] sm:$0x7f]
      %v3587 = vld [vmem:[%s721 + $0x10b] sm:$0xff]
      %v3588 = vld [vmem:[%s721 + $0x113] sm:$0x7f]
      %v3589 = vld [vmem:[%s721 + $0x123] sm:$0xff]
      %v3590 = vld [vmem:[%s721 + $0x12b] sm:$0x7f]
      %v3591 = vld [vmem:[%s721 + $0x13b] sm:$0xff]
      %v3592 = vld [vmem:[%s721 + $0x143] sm:$0x7f]
      %v3593 = vld [vmem:[%s721 + $0x153] sm:$0xff]
      %v3594 = vld [vmem:[%s721 + $0x15b] sm:$0x7f]
      %v3595 = vmax.f32 %v3565, 0.0
      %v3596 = vmax.f32 %v3566, 0.0
      %v3597 = vmax.f32 %v3567, 0.0
      %v3598 = vmax.f32 %v3568, 0.0
      %v3599 = vmax.f32 %v3569, 0.0
      %v3600 = vmax.f32 %v3570, 0.0
      %v3601 = vmax.f32 %v3571, 0.0
      %v3602 = vmax.f32 %v3572, 0.0
      %v3603 = vmax.f32 %v3573, 0.0
      %v3604 = vmax.f32 %v3574, 0.0
      %v3605 = vmax.f32 %v3575, 0.0
      %v3606 = vmax.f32 %v3576, 0.0
      %v3607 = vmax.f32 %v3577, 0.0
      %v3608 = vmax.f32 %v3578, 0.0
      %v3609 = vmax.f32 %v3579, 0.0
      %v3610 = vmax.f32 %v3580, 0.0
      %v3611 = vmax.f32 %v3581, 0.0
      %v3612 = vmax.f32 %v3582, 0.0
      %v3613 = vmax.f32 %v3583, 0.0
      %v3614 = vmax.f32 %v3584, 0.0
      %v3615 = vmax.f32 %v3585, 0.0
      %v3616 = vmax.f32 %v3586, 0.0
      %v3617 = vmax.f32 %v3587, 0.0
      %v3618 = vmax.f32 %v3588, 0.0
      %v3619 = vmax.f32 %v3589, 0.0
      %v3620 = vmax.f32 %v3590, 0.0
      %v3621 = vmax.f32 %v3591, 0.0
      %v3622 = vmax.f32 %v3592, 0.0
      %v3623 = vmax.f32 %v3593, 0.0
      %v3624 = vmax.f32 %v3594, 0.0
      %v3625 = vperm.slane %v174, 5
      %v3626 = vmul.f32 %v3595, %v3625
      %v3627 = vmul.f32 %v3596, %v3625
      %v3628 = vmul.f32 %v3597, %v3625
      %v3629 = vmul.f32 %v3598, %v3625
      %v3630 = vmul.f32 %v3599, %v3625
      %v3631 = vmul.f32 %v3600, %v3625
      %v3632 = vmul.f32 %v3601, %v3625
      %v3633 = vmul.f32 %v3602, %v3625
      %v3634 = vmul.f32 %v3603, %v3625
      %v3635 = vmul.f32 %v3604, %v3625
      %v3636 = vmul.f32 %v3605, %v3625
      %v3637 = vmul.f32 %v3606, %v3625
      %v3638 = vmul.f32 %v3607, %v3625
      %v3639 = vmul.f32 %v3608, %v3625
      %v3640 = vmul.f32 %v3609, %v3625
      %v3641 = vmul.f32 %v3610, %v3625
      %v3642 = vmul.f32 %v3611, %v3625
      %v3643 = vmul.f32 %v3612, %v3625
      %v3644 = vmul.f32 %v3613, %v3625
      %v3645 = vmul.f32 %v3614, %v3625
      %v3646 = vmul.f32 %v3615, %v3625
      %v3647 = vmul.f32 %v3616, %v3625
      %v3648 = vmul.f32 %v3617, %v3625
      %v3649 = vmul.f32 %v3618, %v3625
      %v3650 = vmul.f32 %v3619, %v3625
      %v3651 = vmul.f32 %v3620, %v3625
      %v3652 = vmul.f32 %v3621, %v3625
      %v3653 = vmul.f32 %v3622, %v3625
      %v3654 = vmul.f32 %v3623, %v3625
      %v3655 = vmul.f32 %v3624, %v3625
      %v3656 = vadd.f32 %v3535, %v3626
      %v3657 = vadd.f32 %v3536, %v3627
      %v3658 = vadd.f32 %v3537, %v3628
      %v3659 = vadd.f32 %v3538, %v3629
      %v3660 = vadd.f32 %v3539, %v3630
      %v3661 = vadd.f32 %v3540, %v3631
      %v3662 = vadd.f32 %v3541, %v3632
      %v3663 = vadd.f32 %v3542, %v3633
      %v3664 = vadd.f32 %v3543, %v3634
      %v3665 = vadd.f32 %v3544, %v3635
      %v3666 = vadd.f32 %v3545, %v3636
      %v3667 = vadd.f32 %v3546, %v3637
      %v3668 = vadd.f32 %v3547, %v3638
      %v3669 = vadd.f32 %v3548, %v3639
      %v3670 = vadd.f32 %v3549, %v3640
      %v3671 = vadd.f32 %v3550, %v3641
      %v3672 = vadd.f32 %v3551, %v3642
      %v3673 = vadd.f32 %v3552, %v3643
      %v3674 = vadd.f32 %v3553, %v3644
      %v3675 = vadd.f32 %v3554, %v3645
      %v3676 = vadd.f32 %v3555, %v3646
      %v3677 = vadd.f32 %v3556, %v3647
      %v3678 = vadd.f32 %v3557, %v3648
      %v3679 = vadd.f32 %v3558, %v3649
      %v3680 = vadd.f32 %v3559, %v3650
      %v3681 = vadd.f32 %v3560, %v3651
      %v3682 = vadd.f32 %v3561, %v3652
      %v3683 = vadd.f32 %v3562, %v3653
      %v3684 = vadd.f32 %v3563, %v3654
      %v3685 = vadd.f32 %v3564, %v3655
      %v3686 = vld [vmem:[%s721 + $0x4] sm:$0xff]
      %v3687 = vld [vmem:[%s721 + $0xc] sm:$0x7f]
      %v3688 = vld [vmem:[%s721 + $0x1c] sm:$0xff]
      %v3689 = vld [vmem:[%s721 + $0x24] sm:$0x7f]
      %v3690 = vld [vmem:[%s721 + $0x34] sm:$0xff]
      %v3691 = vld [vmem:[%s721 + $0x3c] sm:$0x7f]
      %v3692 = vld [vmem:[%s721 + $0x4c] sm:$0xff]
      %v3693 = vld [vmem:[%s721 + $0x54] sm:$0x7f]
      %v3694 = vld [vmem:[%s721 + $0x64] sm:$0xff]
      %v3695 = vld [vmem:[%s721 + $0x6c] sm:$0x7f]
      %v3696 = vld [vmem:[%s721 + $0x7c] sm:$0xff]
      %v3697 = vld [vmem:[%s721 + $0x84] sm:$0x7f]
      %v3698 = vld [vmem:[%s721 + $0x94] sm:$0xff]
      %v3699 = vld [vmem:[%s721 + $0x9c] sm:$0x7f]
      %v3700 = vld [vmem:[%s721 + $0xac] sm:$0xff]
      %v3701 = vld [vmem:[%s721 + $0xb4] sm:$0x7f]
      %v3702 = vld [vmem:[%s721 + $0xc4] sm:$0xff]
      %v3703 = vld [vmem:[%s721 + $0xcc] sm:$0x7f]
      %v3704 = vld [vmem:[%s721 + $0xdc] sm:$0xff]
      %v3705 = vld [vmem:[%s721 + $0xe4] sm:$0x7f]
      %v3706 = vld [vmem:[%s721 + $0xf4] sm:$0xff]
      %v3707 = vld [vmem:[%s721 + $0xfc] sm:$0x7f]
      %v3708 = vld [vmem:[%s721 + $0x10c] sm:$0xff]
      %v3709 = vld [vmem:[%s721 + $0x114] sm:$0x7f]
      %v3710 = vld [vmem:[%s721 + $0x124] sm:$0xff]
      %v3711 = vld [vmem:[%s721 + $0x12c] sm:$0x7f]
      %v3712 = vld [vmem:[%s721 + $0x13c] sm:$0xff]
      %v3713 = vld [vmem:[%s721 + $0x144] sm:$0x7f]
      %v3714 = vld [vmem:[%s721 + $0x154] sm:$0xff]
      %v3715 = vld [vmem:[%s721 + $0x15c] sm:$0x7f]
      %v3716 = vmax.f32 %v3686, 0.0
      %v3717 = vmax.f32 %v3687, 0.0
      %v3718 = vmax.f32 %v3688, 0.0
      %v3719 = vmax.f32 %v3689, 0.0
      %v3720 = vmax.f32 %v3690, 0.0
      %v3721 = vmax.f32 %v3691, 0.0
      %v3722 = vmax.f32 %v3692, 0.0
      %v3723 = vmax.f32 %v3693, 0.0
      %v3724 = vmax.f32 %v3694, 0.0
      %v3725 = vmax.f32 %v3695, 0.0
      %v3726 = vmax.f32 %v3696, 0.0
      %v3727 = vmax.f32 %v3697, 0.0
      %v3728 = vmax.f32 %v3698, 0.0
      %v3729 = vmax.f32 %v3699, 0.0
      %v3730 = vmax.f32 %v3700, 0.0
      %v3731 = vmax.f32 %v3701, 0.0
      %v3732 = vmax.f32 %v3702, 0.0
      %v3733 = vmax.f32 %v3703, 0.0
      %v3734 = vmax.f32 %v3704, 0.0
      %v3735 = vmax.f32 %v3705, 0.0
      %v3736 = vmax.f32 %v3706, 0.0
      %v3737 = vmax.f32 %v3707, 0.0
      %v3738 = vmax.f32 %v3708, 0.0
      %v3739 = vmax.f32 %v3709, 0.0
      %v3740 = vmax.f32 %v3710, 0.0
      %v3741 = vmax.f32 %v3711, 0.0
      %v3742 = vmax.f32 %v3712, 0.0
      %v3743 = vmax.f32 %v3713, 0.0
      %v3744 = vmax.f32 %v3714, 0.0
      %v3745 = vmax.f32 %v3715, 0.0
      %v3746 = vperm.slane %v174, 6
      %v3747 = vmul.f32 %v3716, %v3746
      %v3748 = vmul.f32 %v3717, %v3746
      %v3749 = vmul.f32 %v3718, %v3746
      %v3750 = vmul.f32 %v3719, %v3746
      %v3751 = vmul.f32 %v3720, %v3746
      %v3752 = vmul.f32 %v3721, %v3746
      %v3753 = vmul.f32 %v3722, %v3746
      %v3754 = vmul.f32 %v3723, %v3746
      %v3755 = vmul.f32 %v3724, %v3746
      %v3756 = vmul.f32 %v3725, %v3746
      %v3757 = vmul.f32 %v3726, %v3746
      %v3758 = vmul.f32 %v3727, %v3746
      %v3759 = vmul.f32 %v3728, %v3746
      %v3760 = vmul.f32 %v3729, %v3746
      %v3761 = vmul.f32 %v3730, %v3746
      %v3762 = vmul.f32 %v3731, %v3746
      %v3763 = vmul.f32 %v3732, %v3746
      %v3764 = vmul.f32 %v3733, %v3746
      %v3765 = vmul.f32 %v3734, %v3746
      %v3766 = vmul.f32 %v3735, %v3746
      %v3767 = vmul.f32 %v3736, %v3746
      %v3768 = vmul.f32 %v3737, %v3746
      %v3769 = vmul.f32 %v3738, %v3746
      %v3770 = vmul.f32 %v3739, %v3746
      %v3771 = vmul.f32 %v3740, %v3746
      %v3772 = vmul.f32 %v3741, %v3746
      %v3773 = vmul.f32 %v3742, %v3746
      %v3774 = vmul.f32 %v3743, %v3746
      %v3775 = vmul.f32 %v3744, %v3746
      %v3776 = vmul.f32 %v3745, %v3746
      %v3777 = vadd.f32 %v3656, %v3747
      %v3778 = vadd.f32 %v3657, %v3748
      %v3779 = vadd.f32 %v3658, %v3749
      %v3780 = vadd.f32 %v3659, %v3750
      %v3781 = vadd.f32 %v3660, %v3751
      %v3782 = vadd.f32 %v3661, %v3752
      %v3783 = vadd.f32 %v3662, %v3753
      %v3784 = vadd.f32 %v3663, %v3754
      %v3785 = vadd.f32 %v3664, %v3755
      %v3786 = vadd.f32 %v3665, %v3756
      %v3787 = vadd.f32 %v3666, %v3757
      %v3788 = vadd.f32 %v3667, %v3758
      %v3789 = vadd.f32 %v3668, %v3759
      %v3790 = vadd.f32 %v3669, %v3760
      %v3791 = vadd.f32 %v3670, %v3761
      %v3792 = vadd.f32 %v3671, %v3762
      %v3793 = vadd.f32 %v3672, %v3763
      %v3794 = vadd.f32 %v3673, %v3764
      %v3795 = vadd.f32 %v3674, %v3765
      %v3796 = vadd.f32 %v3675, %v3766
      %v3797 = vadd.f32 %v3676, %v3767
      %v3798 = vadd.f32 %v3677, %v3768
      %v3799 = vadd.f32 %v3678, %v3769
      %v3800 = vadd.f32 %v3679, %v3770
      %v3801 = vadd.f32 %v3680, %v3771
      %v3802 = vadd.f32 %v3681, %v3772
      %v3803 = vadd.f32 %v3682, %v3773
      %v3804 = vadd.f32 %v3683, %v3774
      %v3805 = vadd.f32 %v3684, %v3775
      %v3806 = vadd.f32 %v3685, %v3776
      %v3807 = vld [vmem:[%s1265] sm:$0xff]
      %v3808 = vld [vmem:[%s1265 + $0x8] sm:$0x7f]
      %v3809 = vld [vmem:[%s1265 + $0x18] sm:$0xff]
      %v3810 = vld [vmem:[%s1265 + $0x20] sm:$0x7f]
      %v3811 = vld [vmem:[%s1265 + $0x30] sm:$0xff]
      %v3812 = vld [vmem:[%s1265 + $0x38] sm:$0x7f]
      %v3813 = vld [vmem:[%s1265 + $0x48] sm:$0xff]
      %v3814 = vld [vmem:[%s1265 + $0x50] sm:$0x7f]
      %v3815 = vld [vmem:[%s1265 + $0x60] sm:$0xff]
      %v3816 = vld [vmem:[%s1265 + $0x68] sm:$0x7f]
      %v3817 = vld [vmem:[%s1265 + $0x78] sm:$0xff]
      %v3818 = vld [vmem:[%s1265 + $0x80] sm:$0x7f]
      %v3819 = vld [vmem:[%s1265 + $0x90] sm:$0xff]
      %v3820 = vld [vmem:[%s1265 + $0x98] sm:$0x7f]
      %v3821 = vld [vmem:[%s1265 + $0xa8] sm:$0xff]
      %v3822 = vld [vmem:[%s1265 + $0xb0] sm:$0x7f]
      %v3823 = vld [vmem:[%s1265 + $0xc0] sm:$0xff]
      %v3824 = vld [vmem:[%s1265 + $0xc8] sm:$0x7f]
      %v3825 = vld [vmem:[%s1265 + $0xd8] sm:$0xff]
      %v3826 = vld [vmem:[%s1265 + $0xe0] sm:$0x7f]
      %v3827 = vld [vmem:[%s1265 + $0xf0] sm:$0xff]
      %v3828 = vld [vmem:[%s1265 + $0xf8] sm:$0x7f]
      %v3829 = vld [vmem:[%s1265 + $0x108] sm:$0xff]
      %v3830 = vld [vmem:[%s1265 + $0x110] sm:$0x7f]
      %v3831 = vld [vmem:[%s1265 + $0x120] sm:$0xff]
      %v3832 = vld [vmem:[%s1265 + $0x128] sm:$0x7f]
      %v3833 = vld [vmem:[%s1265 + $0x138] sm:$0xff]
      %v3834 = vld [vmem:[%s1265 + $0x140] sm:$0x7f]
      %v3835 = vld [vmem:[%s1265 + $0x150] sm:$0xff]
      %v3836 = vld [vmem:[%s1265 + $0x158] sm:$0x7f]
      %v3837 = vmax.f32 %v3807, 0.0
      %v3838 = vmax.f32 %v3808, 0.0
      %v3839 = vmax.f32 %v3809, 0.0
      %v3840 = vmax.f32 %v3810, 0.0
      %v3841 = vmax.f32 %v3811, 0.0
      %v3842 = vmax.f32 %v3812, 0.0
      %v3843 = vmax.f32 %v3813, 0.0
      %v3844 = vmax.f32 %v3814, 0.0
      %v3845 = vmax.f32 %v3815, 0.0
      %v3846 = vmax.f32 %v3816, 0.0
      %v3847 = vmax.f32 %v3817, 0.0
      %v3848 = vmax.f32 %v3818, 0.0
      %v3849 = vmax.f32 %v3819, 0.0
      %v3850 = vmax.f32 %v3820, 0.0
      %v3851 = vmax.f32 %v3821, 0.0
      %v3852 = vmax.f32 %v3822, 0.0
      %v3853 = vmax.f32 %v3823, 0.0
      %v3854 = vmax.f32 %v3824, 0.0
      %v3855 = vmax.f32 %v3825, 0.0
      %v3856 = vmax.f32 %v3826, 0.0
      %v3857 = vmax.f32 %v3827, 0.0
      %v3858 = vmax.f32 %v3828, 0.0
      %v3859 = vmax.f32 %v3829, 0.0
      %v3860 = vmax.f32 %v3830, 0.0
      %v3861 = vmax.f32 %v3831, 0.0
      %v3862 = vmax.f32 %v3832, 0.0
      %v3863 = vmax.f32 %v3833, 0.0
      %v3864 = vmax.f32 %v3834, 0.0
      %v3865 = vmax.f32 %v3835, 0.0
      %v3866 = vmax.f32 %v3836, 0.0
      %v3867 = vperm.slane %v174, 7
      %v3868 = vmul.f32 %v3837, %v3867
      %v3869 = vmul.f32 %v3838, %v3867
      %v3870 = vmul.f32 %v3839, %v3867
      %v3871 = vmul.f32 %v3840, %v3867
      %v3872 = vmul.f32 %v3841, %v3867
      %v3873 = vmul.f32 %v3842, %v3867
      %v3874 = vmul.f32 %v3843, %v3867
      %v3875 = vmul.f32 %v3844, %v3867
      %v3876 = vmul.f32 %v3845, %v3867
      %v3877 = vmul.f32 %v3846, %v3867
      %v3878 = vmul.f32 %v3847, %v3867
      %v3879 = vmul.f32 %v3848, %v3867
      %v3880 = vmul.f32 %v3849, %v3867
      %v3881 = vmul.f32 %v3850, %v3867
      %v3882 = vmul.f32 %v3851, %v3867
      %v3883 = vmul.f32 %v3852, %v3867
      %v3884 = vmul.f32 %v3853, %v3867
      %v3885 = vmul.f32 %v3854, %v3867
      %v3886 = vmul.f32 %v3855, %v3867
      %v3887 = vmul.f32 %v3856, %v3867
      %v3888 = vmul.f32 %v3857, %v3867
      %v3889 = vmul.f32 %v3858, %v3867
      %v3890 = vmul.f32 %v3859, %v3867
      %v3891 = vmul.f32 %v3860, %v3867
      %v3892 = vmul.f32 %v3861, %v3867
      %v3893 = vmul.f32 %v3862, %v3867
      %v3894 = vmul.f32 %v3863, %v3867
      %v3895 = vmul.f32 %v3864, %v3867
      %v3896 = vmul.f32 %v3865, %v3867
      %v3897 = vmul.f32 %v3866, %v3867
      %v3898 = vadd.f32 %v3777, %v3868
      %v3899 = vadd.f32 %v3778, %v3869
      %v3900 = vadd.f32 %v3779, %v3870
      %v3901 = vadd.f32 %v3780, %v3871
      %v3902 = vadd.f32 %v3781, %v3872
      %v3903 = vadd.f32 %v3782, %v3873
      %v3904 = vadd.f32 %v3783, %v3874
      %v3905 = vadd.f32 %v3784, %v3875
      %v3906 = vadd.f32 %v3785, %v3876
      %v3907 = vadd.f32 %v3786, %v3877
      %v3908 = vadd.f32 %v3787, %v3878
      %v3909 = vadd.f32 %v3788, %v3879
      %v3910 = vadd.f32 %v3789, %v3880
      %v3911 = vadd.f32 %v3790, %v3881
      %v3912 = vadd.f32 %v3791, %v3882
      %v3913 = vadd.f32 %v3792, %v3883
      %v3914 = vadd.f32 %v3793, %v3884
      %v3915 = vadd.f32 %v3794, %v3885
      %v3916 = vadd.f32 %v3795, %v3886
      %v3917 = vadd.f32 %v3796, %v3887
      %v3918 = vadd.f32 %v3797, %v3888
      %v3919 = vadd.f32 %v3798, %v3889
      %v3920 = vadd.f32 %v3799, %v3890
      %v3921 = vadd.f32 %v3800, %v3891
      %v3922 = vadd.f32 %v3801, %v3892
      %v3923 = vadd.f32 %v3802, %v3893
      %v3924 = vadd.f32 %v3803, %v3894
      %v3925 = vadd.f32 %v3804, %v3895
      %v3926 = vadd.f32 %v3805, %v3896
      %v3927 = vadd.f32 %v3806, %v3897
      %v3928 = vld [vmem:[%s1265 + $0x1] sm:$0xff]
      %v3929 = vld [vmem:[%s1265 + $0x9] sm:$0x7f]
      %v3930 = vld [vmem:[%s1265 + $0x19] sm:$0xff]
      %v3931 = vld [vmem:[%s1265 + $0x21] sm:$0x7f]
      %v3932 = vld [vmem:[%s1265 + $0x31] sm:$0xff]
      %v3933 = vld [vmem:[%s1265 + $0x39] sm:$0x7f]
      %v3934 = vld [vmem:[%s1265 + $0x49] sm:$0xff]
      %v3935 = vld [vmem:[%s1265 + $0x51] sm:$0x7f]
      %v3936 = vld [vmem:[%s1265 + $0x61] sm:$0xff]
      %v3937 = vld [vmem:[%s1265 + $0x69] sm:$0x7f]
      %v3938 = vld [vmem:[%s1265 + $0x79] sm:$0xff]
      %v3939 = vld [vmem:[%s1265 + $0x81] sm:$0x7f]
      %v3940 = vld [vmem:[%s1265 + $0x91] sm:$0xff]
      %v3941 = vld [vmem:[%s1265 + $0x99] sm:$0x7f]
      %v3942 = vld [vmem:[%s1265 + $0xa9] sm:$0xff]
      %v3943 = vld [vmem:[%s1265 + $0xb1] sm:$0x7f]
      %v3944 = vld [vmem:[%s1265 + $0xc1] sm:$0xff]
      %v3945 = vld [vmem:[%s1265 + $0xc9] sm:$0x7f]
      %v3946 = vld [vmem:[%s1265 + $0xd9] sm:$0xff]
      %v3947 = vld [vmem:[%s1265 + $0xe1] sm:$0x7f]
      %v3948 = vld [vmem:[%s1265 + $0xf1] sm:$0xff]
      %v3949 = vld [vmem:[%s1265 + $0xf9] sm:$0x7f]
      %v3950 = vld [vmem:[%s1265 + $0x109] sm:$0xff]
      %v3951 = vld [vmem:[%s1265 + $0x111] sm:$0x7f]
      %v3952 = vld [vmem:[%s1265 + $0x121] sm:$0xff]
      %v3953 = vld [vmem:[%s1265 + $0x129] sm:$0x7f]
      %v3954 = vld [vmem:[%s1265 + $0x139] sm:$0xff]
      %v3955 = vld [vmem:[%s1265 + $0x141] sm:$0x7f]
      %v3956 = vld [vmem:[%s1265 + $0x151] sm:$0xff]
      %v3957 = vld [vmem:[%s1265 + $0x159] sm:$0x7f]
      %v3958 = vmax.f32 %v3928, 0.0
      %v3959 = vmax.f32 %v3929, 0.0
      %v3960 = vmax.f32 %v3930, 0.0
      %v3961 = vmax.f32 %v3931, 0.0
      %v3962 = vmax.f32 %v3932, 0.0
      %v3963 = vmax.f32 %v3933, 0.0
      %v3964 = vmax.f32 %v3934, 0.0
      %v3965 = vmax.f32 %v3935, 0.0
      %v3966 = vmax.f32 %v3936, 0.0
      %v3967 = vmax.f32 %v3937, 0.0
      %v3968 = vmax.f32 %v3938, 0.0
      %v3969 = vmax.f32 %v3939, 0.0
      %v3970 = vmax.f32 %v3940, 0.0
      %v3971 = vmax.f32 %v3941, 0.0
      %v3972 = vmax.f32 %v3942, 0.0
      %v3973 = vmax.f32 %v3943, 0.0
      %v3974 = vmax.f32 %v3944, 0.0
      %v3975 = vmax.f32 %v3945, 0.0
      %v3976 = vmax.f32 %v3946, 0.0
      %v3977 = vmax.f32 %v3947, 0.0
      %v3978 = vmax.f32 %v3948, 0.0
      %v3979 = vmax.f32 %v3949, 0.0
      %v3980 = vmax.f32 %v3950, 0.0
      %v3981 = vmax.f32 %v3951, 0.0
      %v3982 = vmax.f32 %v3952, 0.0
      %v3983 = vmax.f32 %v3953, 0.0
      %v3984 = vmax.f32 %v3954, 0.0
      %v3985 = vmax.f32 %v3955, 0.0
      %v3986 = vmax.f32 %v3956, 0.0
      %v3987 = vmax.f32 %v3957, 0.0
      %v3988 = vperm.slane %v175, 0
      %v3989 = vmul.f32 %v3958, %v3988
      %v3990 = vmul.f32 %v3959, %v3988
      %v3991 = vmul.f32 %v3960, %v3988
      %v3992 = vmul.f32 %v3961, %v3988
      %v3993 = vmul.f32 %v3962, %v3988
      %v3994 = vmul.f32 %v3963, %v3988
      %v3995 = vmul.f32 %v3964, %v3988
      %v3996 = vmul.f32 %v3965, %v3988
      %v3997 = vmul.f32 %v3966, %v3988
      %v3998 = vmul.f32 %v3967, %v3988
      %v3999 = vmul.f32 %v3968, %v3988
      %v4000 = vmul.f32 %v3969, %v3988
      %v4001 = vmul.f32 %v3970, %v3988
      %v4002 = vmul.f32 %v3971, %v3988
      %v4003 = vmul.f32 %v3972, %v3988
      %v4004 = vmul.f32 %v3973, %v3988
      %v4005 = vmul.f32 %v3974, %v3988
      %v4006 = vmul.f32 %v3975, %v3988
      %v4007 = vmul.f32 %v3976, %v3988
      %v4008 = vmul.f32 %v3977, %v3988
      %v4009 = vmul.f32 %v3978, %v3988
      %v4010 = vmul.f32 %v3979, %v3988
      %v4011 = vmul.f32 %v3980, %v3988
      %v4012 = vmul.f32 %v3981, %v3988
      %v4013 = vmul.f32 %v3982, %v3988
      %v4014 = vmul.f32 %v3983, %v3988
      %v4015 = vmul.f32 %v3984, %v3988
      %v4016 = vmul.f32 %v3985, %v3988
      %v4017 = vmul.f32 %v3986, %v3988
      %v4018 = vmul.f32 %v3987, %v3988
      %v4019 = vadd.f32 %v3898, %v3989
      %v4020 = vadd.f32 %v3899, %v3990
      %v4021 = vadd.f32 %v3900, %v3991
      %v4022 = vadd.f32 %v3901, %v3992
      %v4023 = vadd.f32 %v3902, %v3993
      %v4024 = vadd.f32 %v3903, %v3994
      %v4025 = vadd.f32 %v3904, %v3995
      %v4026 = vadd.f32 %v3905, %v3996
      %v4027 = vadd.f32 %v3906, %v3997
      %v4028 = vadd.f32 %v3907, %v3998
      %v4029 = vadd.f32 %v3908, %v3999
      %v4030 = vadd.f32 %v3909, %v4000
      %v4031 = vadd.f32 %v3910, %v4001
      %v4032 = vadd.f32 %v3911, %v4002
      %v4033 = vadd.f32 %v3912, %v4003
      %v4034 = vadd.f32 %v3913, %v4004
      %v4035 = vadd.f32 %v3914, %v4005
      %v4036 = vadd.f32 %v3915, %v4006
      %v4037 = vadd.f32 %v3916, %v4007
      %v4038 = vadd.f32 %v3917, %v4008
      %v4039 = vadd.f32 %v3918, %v4009
      %v4040 = vadd.f32 %v3919, %v4010
      %v4041 = vadd.f32 %v3920, %v4011
      %v4042 = vadd.f32 %v3921, %v4012
      %v4043 = vadd.f32 %v3922, %v4013
      %v4044 = vadd.f32 %v3923, %v4014
      %v4045 = vadd.f32 %v3924, %v4015
      %v4046 = vadd.f32 %v3925, %v4016
      %v4047 = vadd.f32 %v3926, %v4017
      %v4048 = vadd.f32 %v3927, %v4018
      %v4049 = vld [vmem:[%s1265 + $0x2] sm:$0xff]
      %v4050 = vld [vmem:[%s1265 + $0xa] sm:$0x7f]
      %v4051 = vld [vmem:[%s1265 + $0x1a] sm:$0xff]
      %v4052 = vld [vmem:[%s1265 + $0x22] sm:$0x7f]
      %v4053 = vld [vmem:[%s1265 + $0x32] sm:$0xff]
      %v4054 = vld [vmem:[%s1265 + $0x3a] sm:$0x7f]
      %v4055 = vld [vmem:[%s1265 + $0x4a] sm:$0xff]
      %v4056 = vld [vmem:[%s1265 + $0x52] sm:$0x7f]
      %v4057 = vld [vmem:[%s1265 + $0x62] sm:$0xff]
      %v4058 = vld [vmem:[%s1265 + $0x6a] sm:$0x7f]
      %v4059 = vld [vmem:[%s1265 + $0x7a] sm:$0xff]
      %v4060 = vld [vmem:[%s1265 + $0x82] sm:$0x7f]
      %v4061 = vld [vmem:[%s1265 + $0x92] sm:$0xff]
      %v4062 = vld [vmem:[%s1265 + $0x9a] sm:$0x7f]
      %v4063 = vld [vmem:[%s1265 + $0xaa] sm:$0xff]
      %v4064 = vld [vmem:[%s1265 + $0xb2] sm:$0x7f]
      %v4065 = vld [vmem:[%s1265 + $0xc2] sm:$0xff]
      %v4066 = vld [vmem:[%s1265 + $0xca] sm:$0x7f]
      %v4067 = vld [vmem:[%s1265 + $0xda] sm:$0xff]
      %v4068 = vld [vmem:[%s1265 + $0xe2] sm:$0x7f]
      %v4069 = vld [vmem:[%s1265 + $0xf2] sm:$0xff]
      %v4070 = vld [vmem:[%s1265 + $0xfa] sm:$0x7f]
      %v4071 = vld [vmem:[%s1265 + $0x10a] sm:$0xff]
      %v4072 = vld [vmem:[%s1265 + $0x112] sm:$0x7f]
      %v4073 = vld [vmem:[%s1265 + $0x122] sm:$0xff]
      %v4074 = vld [vmem:[%s1265 + $0x12a] sm:$0x7f]
      %v4075 = vld [vmem:[%s1265 + $0x13a] sm:$0xff]
      %v4076 = vld [vmem:[%s1265 + $0x142] sm:$0x7f]
      %v4077 = vld [vmem:[%s1265 + $0x152] sm:$0xff]
      %v4078 = vld [vmem:[%s1265 + $0x15a] sm:$0x7f]
      %v4079 = vmax.f32 %v4049, 0.0
      %v4080 = vmax.f32 %v4050, 0.0
      %v4081 = vmax.f32 %v4051, 0.0
      %v4082 = vmax.f32 %v4052, 0.0
      %v4083 = vmax.f32 %v4053, 0.0
      %v4084 = vmax.f32 %v4054, 0.0
      %v4085 = vmax.f32 %v4055, 0.0
      %v4086 = vmax.f32 %v4056, 0.0
      %v4087 = vmax.f32 %v4057, 0.0
      %v4088 = vmax.f32 %v4058, 0.0
      %v4089 = vmax.f32 %v4059, 0.0
      %v4090 = vmax.f32 %v4060, 0.0
      %v4091 = vmax.f32 %v4061, 0.0
      %v4092 = vmax.f32 %v4062, 0.0
      %v4093 = vmax.f32 %v4063, 0.0
      %v4094 = vmax.f32 %v4064, 0.0
      %v4095 = vmax.f32 %v4065, 0.0
      %v4096 = vmax.f32 %v4066, 0.0
      %v4097 = vmax.f32 %v4067, 0.0
      %v4098 = vmax.f32 %v4068, 0.0
      %v4099 = vmax.f32 %v4069, 0.0
      %v4100 = vmax.f32 %v4070, 0.0
      %v4101 = vmax.f32 %v4071, 0.0
      %v4102 = vmax.f32 %v4072, 0.0
      %v4103 = vmax.f32 %v4073, 0.0
      %v4104 = vmax.f32 %v4074, 0.0
      %v4105 = vmax.f32 %v4075, 0.0
      %v4106 = vmax.f32 %v4076, 0.0
      %v4107 = vmax.f32 %v4077, 0.0
      %v4108 = vmax.f32 %v4078, 0.0
      %v4109 = vperm.slane %v175, 1
      %v4110 = vmul.f32 %v4079, %v4109
      %v4111 = vmul.f32 %v4080, %v4109
      %v4112 = vmul.f32 %v4081, %v4109
      %v4113 = vmul.f32 %v4082, %v4109
      %v4114 = vmul.f32 %v4083, %v4109
      %v4115 = vmul.f32 %v4084, %v4109
      %v4116 = vmul.f32 %v4085, %v4109
      %v4117 = vmul.f32 %v4086, %v4109
      %v4118 = vmul.f32 %v4087, %v4109
      %v4119 = vmul.f32 %v4088, %v4109
      %v4120 = vmul.f32 %v4089, %v4109
      %v4121 = vmul.f32 %v4090, %v4109
      %v4122 = vmul.f32 %v4091, %v4109
      %v4123 = vmul.f32 %v4092, %v4109
      %v4124 = vmul.f32 %v4093, %v4109
      %v4125 = vmul.f32 %v4094, %v4109
      %v4126 = vmul.f32 %v4095, %v4109
      %v4127 = vmul.f32 %v4096, %v4109
      %v4128 = vmul.f32 %v4097, %v4109
      %v4129 = vmul.f32 %v4098, %v4109
      %v4130 = vmul.f32 %v4099, %v4109
      %v4131 = vmul.f32 %v4100, %v4109
      %v4132 = vmul.f32 %v4101, %v4109
      %v4133 = vmul.f32 %v4102, %v4109
      %v4134 = vmul.f32 %v4103, %v4109
      %v4135 = vmul.f32 %v4104, %v4109
      %v4136 = vmul.f32 %v4105, %v4109
      %v4137 = vmul.f32 %v4106, %v4109
      %v4138 = vmul.f32 %v4107, %v4109
      %v4139 = vmul.f32 %v4108, %v4109
      %v4140 = vadd.f32 %v4019, %v4110
      %v4141 = vadd.f32 %v4020, %v4111
      %v4142 = vadd.f32 %v4021, %v4112
      %v4143 = vadd.f32 %v4022, %v4113
      %v4144 = vadd.f32 %v4023, %v4114
      %v4145 = vadd.f32 %v4024, %v4115
      %v4146 = vadd.f32 %v4025, %v4116
      %v4147 = vadd.f32 %v4026, %v4117
      %v4148 = vadd.f32 %v4027, %v4118
      %v4149 = vadd.f32 %v4028, %v4119
      %v4150 = vadd.f32 %v4029, %v4120
      %v4151 = vadd.f32 %v4030, %v4121
      %v4152 = vadd.f32 %v4031, %v4122
      %v4153 = vadd.f32 %v4032, %v4123
      %v4154 = vadd.f32 %v4033, %v4124
      %v4155 = vadd.f32 %v4034, %v4125
      %v4156 = vadd.f32 %v4035, %v4126
      %v4157 = vadd.f32 %v4036, %v4127
      %v4158 = vadd.f32 %v4037, %v4128
      %v4159 = vadd.f32 %v4038, %v4129
      %v4160 = vadd.f32 %v4039, %v4130
      %v4161 = vadd.f32 %v4040, %v4131
      %v4162 = vadd.f32 %v4041, %v4132
      %v4163 = vadd.f32 %v4042, %v4133
      %v4164 = vadd.f32 %v4043, %v4134
      %v4165 = vadd.f32 %v4044, %v4135
      %v4166 = vadd.f32 %v4045, %v4136
      %v4167 = vadd.f32 %v4046, %v4137
      %v4168 = vadd.f32 %v4047, %v4138
      %v4169 = vadd.f32 %v4048, %v4139
      %v4170 = vld [vmem:[%s1265 + $0x3] sm:$0xff]
      %v4171 = vld [vmem:[%s1265 + $0xb] sm:$0x7f]
      %v4172 = vld [vmem:[%s1265 + $0x1b] sm:$0xff]
      %v4173 = vld [vmem:[%s1265 + $0x23] sm:$0x7f]
      %v4174 = vld [vmem:[%s1265 + $0x33] sm:$0xff]
      %v4175 = vld [vmem:[%s1265 + $0x3b] sm:$0x7f]
      %v4176 = vld [vmem:[%s1265 + $0x4b] sm:$0xff]
      %v4177 = vld [vmem:[%s1265 + $0x53] sm:$0x7f]
      %v4178 = vld [vmem:[%s1265 + $0x63] sm:$0xff]
      %v4179 = vld [vmem:[%s1265 + $0x6b] sm:$0x7f]
      %v4180 = vld [vmem:[%s1265 + $0x7b] sm:$0xff]
      %v4181 = vld [vmem:[%s1265 + $0x83] sm:$0x7f]
      %v4182 = vld [vmem:[%s1265 + $0x93] sm:$0xff]
      %v4183 = vld [vmem:[%s1265 + $0x9b] sm:$0x7f]
      %v4184 = vld [vmem:[%s1265 + $0xab] sm:$0xff]
      %v4185 = vld [vmem:[%s1265 + $0xb3] sm:$0x7f]
      %v4186 = vld [vmem:[%s1265 + $0xc3] sm:$0xff]
      %v4187 = vld [vmem:[%s1265 + $0xcb] sm:$0x7f]
      %v4188 = vld [vmem:[%s1265 + $0xdb] sm:$0xff]
      %v4189 = vld [vmem:[%s1265 + $0xe3] sm:$0x7f]
      %v4190 = vld [vmem:[%s1265 + $0xf3] sm:$0xff]
      %v4191 = vld [vmem:[%s1265 + $0xfb] sm:$0x7f]
      %v4192 = vld [vmem:[%s1265 + $0x10b] sm:$0xff]
      %v4193 = vld [vmem:[%s1265 + $0x113] sm:$0x7f]
      %v4194 = vld [vmem:[%s1265 + $0x123] sm:$0xff]
      %v4195 = vld [vmem:[%s1265 + $0x12b] sm:$0x7f]
      %v4196 = vld [vmem:[%s1265 + $0x13b] sm:$0xff]
      %v4197 = vld [vmem:[%s1265 + $0x143] sm:$0x7f]
      %v4198 = vld [vmem:[%s1265 + $0x153] sm:$0xff]
      %v4199 = vld [vmem:[%s1265 + $0x15b] sm:$0x7f]
      %v4200 = vmax.f32 %v4170, 0.0
      %v4201 = vmax.f32 %v4171, 0.0
      %v4202 = vmax.f32 %v4172, 0.0
      %v4203 = vmax.f32 %v4173, 0.0
      %v4204 = vmax.f32 %v4174, 0.0
      %v4205 = vmax.f32 %v4175, 0.0
      %v4206 = vmax.f32 %v4176, 0.0
      %v4207 = vmax.f32 %v4177, 0.0
      %v4208 = vmax.f32 %v4178, 0.0
      %v4209 = vmax.f32 %v4179, 0.0
      %v4210 = vmax.f32 %v4180, 0.0
      %v4211 = vmax.f32 %v4181, 0.0
      %v4212 = vmax.f32 %v4182, 0.0
      %v4213 = vmax.f32 %v4183, 0.0
      %v4214 = vmax.f32 %v4184, 0.0
      %v4215 = vmax.f32 %v4185, 0.0
      %v4216 = vmax.f32 %v4186, 0.0
      %v4217 = vmax.f32 %v4187, 0.0
      %v4218 = vmax.f32 %v4188, 0.0
      %v4219 = vmax.f32 %v4189, 0.0
      %v4220 = vmax.f32 %v4190, 0.0
      %v4221 = vmax.f32 %v4191, 0.0
      %v4222 = vmax.f32 %v4192, 0.0
      %v4223 = vmax.f32 %v4193, 0.0
      %v4224 = vmax.f32 %v4194, 0.0
      %v4225 = vmax.f32 %v4195, 0.0
      %v4226 = vmax.f32 %v4196, 0.0
      %v4227 = vmax.f32 %v4197, 0.0
      %v4228 = vmax.f32 %v4198, 0.0
      %v4229 = vmax.f32 %v4199, 0.0
      %v4230 = vperm.slane %v175, 2
      %v4231 = vmul.f32 %v4200, %v4230
      %v4232 = vmul.f32 %v4201, %v4230
      %v4233 = vmul.f32 %v4202, %v4230
      %v4234 = vmul.f32 %v4203, %v4230
      %v4235 = vmul.f32 %v4204, %v4230
      %v4236 = vmul.f32 %v4205, %v4230
      %v4237 = vmul.f32 %v4206, %v4230
      %v4238 = vmul.f32 %v4207, %v4230
      %v4239 = vmul.f32 %v4208, %v4230
      %v4240 = vmul.f32 %v4209, %v4230
      %v4241 = vmul.f32 %v4210, %v4230
      %v4242 = vmul.f32 %v4211, %v4230
      %v4243 = vmul.f32 %v4212, %v4230
      %v4244 = vmul.f32 %v4213, %v4230
      %v4245 = vmul.f32 %v4214, %v4230
      %v4246 = vmul.f32 %v4215, %v4230
      %v4247 = vmul.f32 %v4216, %v4230
      %v4248 = vmul.f32 %v4217, %v4230
      %v4249 = vmul.f32 %v4218, %v4230
      %v4250 = vmul.f32 %v4219, %v4230
      %v4251 = vmul.f32 %v4220, %v4230
      %v4252 = vmul.f32 %v4221, %v4230
      %v4253 = vmul.f32 %v4222, %v4230
      %v4254 = vmul.f32 %v4223, %v4230
      %v4255 = vmul.f32 %v4224, %v4230
      %v4256 = vmul.f32 %v4225, %v4230
      %v4257 = vmul.f32 %v4226, %v4230
      %v4258 = vmul.f32 %v4227, %v4230
      %v4259 = vmul.f32 %v4228, %v4230
      %v4260 = vmul.f32 %v4229, %v4230
      %v4261 = vadd.f32 %v4140, %v4231
      %v4262 = vadd.f32 %v4141, %v4232
      %v4263 = vadd.f32 %v4142, %v4233
      %v4264 = vadd.f32 %v4143, %v4234
      %v4265 = vadd.f32 %v4144, %v4235
      %v4266 = vadd.f32 %v4145, %v4236
      %v4267 = vadd.f32 %v4146, %v4237
      %v4268 = vadd.f32 %v4147, %v4238
      %v4269 = vadd.f32 %v4148, %v4239
      %v4270 = vadd.f32 %v4149, %v4240
      %v4271 = vadd.f32 %v4150, %v4241
      %v4272 = vadd.f32 %v4151, %v4242
      %v4273 = vadd.f32 %v4152, %v4243
      %v4274 = vadd.f32 %v4153, %v4244
      %v4275 = vadd.f32 %v4154, %v4245
      %v4276 = vadd.f32 %v4155, %v4246
      %v4277 = vadd.f32 %v4156, %v4247
      %v4278 = vadd.f32 %v4157, %v4248
      %v4279 = vadd.f32 %v4158, %v4249
      %v4280 = vadd.f32 %v4159, %v4250
      %v4281 = vadd.f32 %v4160, %v4251
      %v4282 = vadd.f32 %v4161, %v4252
      %v4283 = vadd.f32 %v4162, %v4253
      %v4284 = vadd.f32 %v4163, %v4254
      %v4285 = vadd.f32 %v4164, %v4255
      %v4286 = vadd.f32 %v4165, %v4256
      %v4287 = vadd.f32 %v4166, %v4257
      %v4288 = vadd.f32 %v4167, %v4258
      %v4289 = vadd.f32 %v4168, %v4259
      %v4290 = vadd.f32 %v4169, %v4260
      %v4291 = vld [vmem:[%s1265 + $0x4] sm:$0xff]
      %v4292 = vld [vmem:[%s1265 + $0xc] sm:$0x7f]
      %v4293 = vld [vmem:[%s1265 + $0x1c] sm:$0xff]
      %v4294 = vld [vmem:[%s1265 + $0x24] sm:$0x7f]
      %v4295 = vld [vmem:[%s1265 + $0x34] sm:$0xff]
      %v4296 = vld [vmem:[%s1265 + $0x3c] sm:$0x7f]
      %v4297 = vld [vmem:[%s1265 + $0x4c] sm:$0xff]
      %v4298 = vld [vmem:[%s1265 + $0x54] sm:$0x7f]
      %v4299 = vld [vmem:[%s1265 + $0x64] sm:$0xff]
      %v4300 = vld [vmem:[%s1265 + $0x6c] sm:$0x7f]
      %v4301 = vld [vmem:[%s1265 + $0x7c] sm:$0xff]
      %v4302 = vld [vmem:[%s1265 + $0x84] sm:$0x7f]
      %v4303 = vld [vmem:[%s1265 + $0x94] sm:$0xff]
      %v4304 = vld [vmem:[%s1265 + $0x9c] sm:$0x7f]
      %v4305 = vld [vmem:[%s1265 + $0xac] sm:$0xff]
      %v4306 = vld [vmem:[%s1265 + $0xb4] sm:$0x7f]
      %v4307 = vld [vmem:[%s1265 + $0xc4] sm:$0xff]
      %v4308 = vld [vmem:[%s1265 + $0xcc] sm:$0x7f]
      %v4309 = vld [vmem:[%s1265 + $0xdc] sm:$0xff]
      %v4310 = vld [vmem:[%s1265 + $0xe4] sm:$0x7f]
      %v4311 = vld [vmem:[%s1265 + $0xf4] sm:$0xff]
      %v4312 = vld [vmem:[%s1265 + $0xfc] sm:$0x7f]
      %v4313 = vld [vmem:[%s1265 + $0x10c] sm:$0xff]
      %v4314 = vld [vmem:[%s1265 + $0x114] sm:$0x7f]
      %v4315 = vld [vmem:[%s1265 + $0x124] sm:$0xff]
      %v4316 = vld [vmem:[%s1265 + $0x12c] sm:$0x7f]
      %v4317 = vld [vmem:[%s1265 + $0x13c] sm:$0xff]
      %v4318 = vld [vmem:[%s1265 + $0x144] sm:$0x7f]
      %v4319 = vld [vmem:[%s1265 + $0x154] sm:$0xff]
      %v4320 = vld [vmem:[%s1265 + $0x15c] sm:$0x7f]
      %v4321 = vmax.f32 %v4291, 0.0
      %v4322 = vmax.f32 %v4292, 0.0
      %v4323 = vmax.f32 %v4293, 0.0
      %v4324 = vmax.f32 %v4294, 0.0
      %v4325 = vmax.f32 %v4295, 0.0
      %v4326 = vmax.f32 %v4296, 0.0
      %v4327 = vmax.f32 %v4297, 0.0
      %v4328 = vmax.f32 %v4298, 0.0
      %v4329 = vmax.f32 %v4299, 0.0
      %v4330 = vmax.f32 %v4300, 0.0
      %v4331 = vmax.f32 %v4301, 0.0
      %v4332 = vmax.f32 %v4302, 0.0
      %v4333 = vmax.f32 %v4303, 0.0
      %v4334 = vmax.f32 %v4304, 0.0
      %v4335 = vmax.f32 %v4305, 0.0
      %v4336 = vmax.f32 %v4306, 0.0
      %v4337 = vmax.f32 %v4307, 0.0
      %v4338 = vmax.f32 %v4308, 0.0
      %v4339 = vmax.f32 %v4309, 0.0
      %v4340 = vmax.f32 %v4310, 0.0
      %v4341 = vmax.f32 %v4311, 0.0
      %v4342 = vmax.f32 %v4312, 0.0
      %v4343 = vmax.f32 %v4313, 0.0
      %v4344 = vmax.f32 %v4314, 0.0
      %v4345 = vmax.f32 %v4315, 0.0
      %v4346 = vmax.f32 %v4316, 0.0
      %v4347 = vmax.f32 %v4317, 0.0
      %v4348 = vmax.f32 %v4318, 0.0
      %v4349 = vmax.f32 %v4319, 0.0
      %v4350 = vmax.f32 %v4320, 0.0
      %v4351 = vperm.slane %v175, 3
      %v4352 = vmul.f32 %v4321, %v4351
      %v4353 = vmul.f32 %v4322, %v4351
      %v4354 = vmul.f32 %v4323, %v4351
      %v4355 = vmul.f32 %v4324, %v4351
      %v4356 = vmul.f32 %v4325, %v4351
      %v4357 = vmul.f32 %v4326, %v4351
      %v4358 = vmul.f32 %v4327, %v4351
      %v4359 = vmul.f32 %v4328, %v4351
      %v4360 = vmul.f32 %v4329, %v4351
      %v4361 = vmul.f32 %v4330, %v4351
      %v4362 = vmul.f32 %v4331, %v4351
      %v4363 = vmul.f32 %v4332, %v4351
      %v4364 = vmul.f32 %v4333, %v4351
      %v4365 = vmul.f32 %v4334, %v4351
      %v4366 = vmul.f32 %v4335, %v4351
      %v4367 = vmul.f32 %v4336, %v4351
      %v4368 = vmul.f32 %v4337, %v4351
      %v4369 = vmul.f32 %v4338, %v4351
      %v4370 = vmul.f32 %v4339, %v4351
      %v4371 = vmul.f32 %v4340, %v4351
      %v4372 = vmul.f32 %v4341, %v4351
      %v4373 = vmul.f32 %v4342, %v4351
      %v4374 = vmul.f32 %v4343, %v4351
      %v4375 = vmul.f32 %v4344, %v4351
      %v4376 = vmul.f32 %v4345, %v4351
      %v4377 = vmul.f32 %v4346, %v4351
      %v4378 = vmul.f32 %v4347, %v4351
      %v4379 = vmul.f32 %v4348, %v4351
      %v4380 = vmul.f32 %v4349, %v4351
      %v4381 = vmul.f32 %v4350, %v4351
      %v4382 = vadd.f32 %v4261, %v4352
      %v4383 = vadd.f32 %v4262, %v4353
      %v4384 = vadd.f32 %v4263, %v4354
      %v4385 = vadd.f32 %v4264, %v4355
      %v4386 = vadd.f32 %v4265, %v4356
      %v4387 = vadd.f32 %v4266, %v4357
      %v4388 = vadd.f32 %v4267, %v4358
      %v4389 = vadd.f32 %v4268, %v4359
      %v4390 = vadd.f32 %v4269, %v4360
      %v4391 = vadd.f32 %v4270, %v4361
      %v4392 = vadd.f32 %v4271, %v4362
      %v4393 = vadd.f32 %v4272, %v4363
      %v4394 = vadd.f32 %v4273, %v4364
      %v4395 = vadd.f32 %v4274, %v4365
      %v4396 = vadd.f32 %v4275, %v4366
      %v4397 = vadd.f32 %v4276, %v4367
      %v4398 = vadd.f32 %v4277, %v4368
      %v4399 = vadd.f32 %v4278, %v4369
      %v4400 = vadd.f32 %v4279, %v4370
      %v4401 = vadd.f32 %v4280, %v4371
      %v4402 = vadd.f32 %v4281, %v4372
      %v4403 = vadd.f32 %v4282, %v4373
      %v4404 = vadd.f32 %v4283, %v4374
      %v4405 = vadd.f32 %v4284, %v4375
      %v4406 = vadd.f32 %v4285, %v4376
      %v4407 = vadd.f32 %v4286, %v4377
      %v4408 = vadd.f32 %v4287, %v4378
      %v4409 = vadd.f32 %v4288, %v4379
      %v4410 = vadd.f32 %v4289, %v4380
      %v4411 = vadd.f32 %v4290, %v4381
      %s4412 = scalar_lea.vmem %s165, 96
      %v4413 = vld [vmem:[%s4412] sm:$0xff]
      %v4414 = vld [vmem:[%s4412 + $0x8] sm:$0x7f]
      %v4415 = vld [vmem:[%s4412 + $0x18] sm:$0xff]
      %v4416 = vld [vmem:[%s4412 + $0x20] sm:$0x7f]
      %v4417 = vld [vmem:[%s4412 + $0x30] sm:$0xff]
      %v4418 = vld [vmem:[%s4412 + $0x38] sm:$0x7f]
      %v4419 = vld [vmem:[%s4412 + $0x48] sm:$0xff]
      %v4420 = vld [vmem:[%s4412 + $0x50] sm:$0x7f]
      %v4421 = vld [vmem:[%s4412 + $0x60] sm:$0xff]
      %v4422 = vld [vmem:[%s4412 + $0x68] sm:$0x7f]
      %v4423 = vld [vmem:[%s4412 + $0x78] sm:$0xff]
      %v4424 = vld [vmem:[%s4412 + $0x80] sm:$0x7f]
      %v4425 = vld [vmem:[%s4412 + $0x90] sm:$0xff]
      %v4426 = vld [vmem:[%s4412 + $0x98] sm:$0x7f]
      %v4427 = vld [vmem:[%s4412 + $0xa8] sm:$0xff]
      %v4428 = vld [vmem:[%s4412 + $0xb0] sm:$0x7f]
      %v4429 = vld [vmem:[%s4412 + $0xc0] sm:$0xff]
      %v4430 = vld [vmem:[%s4412 + $0xc8] sm:$0x7f]
      %v4431 = vld [vmem:[%s4412 + $0xd8] sm:$0xff]
      %v4432 = vld [vmem:[%s4412 + $0xe0] sm:$0x7f]
      %v4433 = vld [vmem:[%s4412 + $0xf0] sm:$0xff]
      %v4434 = vld [vmem:[%s4412 + $0xf8] sm:$0x7f]
      %v4435 = vld [vmem:[%s4412 + $0x108] sm:$0xff]
      %v4436 = vld [vmem:[%s4412 + $0x110] sm:$0x7f]
      %v4437 = vld [vmem:[%s4412 + $0x120] sm:$0xff]
      %v4438 = vld [vmem:[%s4412 + $0x128] sm:$0x7f]
      %v4439 = vld [vmem:[%s4412 + $0x138] sm:$0xff]
      %v4440 = vld [vmem:[%s4412 + $0x140] sm:$0x7f]
      %v4441 = vld [vmem:[%s4412 + $0x150] sm:$0xff]
      %v4442 = vld [vmem:[%s4412 + $0x158] sm:$0x7f]
      %v4443 = vmax.f32 %v4413, 0.0
      %v4444 = vmax.f32 %v4414, 0.0
      %v4445 = vmax.f32 %v4415, 0.0
      %v4446 = vmax.f32 %v4416, 0.0
      %v4447 = vmax.f32 %v4417, 0.0
      %v4448 = vmax.f32 %v4418, 0.0
      %v4449 = vmax.f32 %v4419, 0.0
      %v4450 = vmax.f32 %v4420, 0.0
      %v4451 = vmax.f32 %v4421, 0.0
      %v4452 = vmax.f32 %v4422, 0.0
      %v4453 = vmax.f32 %v4423, 0.0
      %v4454 = vmax.f32 %v4424, 0.0
      %v4455 = vmax.f32 %v4425, 0.0
      %v4456 = vmax.f32 %v4426, 0.0
      %v4457 = vmax.f32 %v4427, 0.0
      %v4458 = vmax.f32 %v4428, 0.0
      %v4459 = vmax.f32 %v4429, 0.0
      %v4460 = vmax.f32 %v4430, 0.0
      %v4461 = vmax.f32 %v4431, 0.0
      %v4462 = vmax.f32 %v4432, 0.0
      %v4463 = vmax.f32 %v4433, 0.0
      %v4464 = vmax.f32 %v4434, 0.0
      %v4465 = vmax.f32 %v4435, 0.0
      %v4466 = vmax.f32 %v4436, 0.0
      %v4467 = vmax.f32 %v4437, 0.0
      %v4468 = vmax.f32 %v4438, 0.0
      %v4469 = vmax.f32 %v4439, 0.0
      %v4470 = vmax.f32 %v4440, 0.0
      %v4471 = vmax.f32 %v4441, 0.0
      %v4472 = vmax.f32 %v4442, 0.0
      %v4473 = vperm.slane %v175, 4
      %v4474 = vmul.f32 %v4443, %v4473
      %v4475 = vmul.f32 %v4444, %v4473
      %v4476 = vmul.f32 %v4445, %v4473
      %v4477 = vmul.f32 %v4446, %v4473
      %v4478 = vmul.f32 %v4447, %v4473
      %v4479 = vmul.f32 %v4448, %v4473
      %v4480 = vmul.f32 %v4449, %v4473
      %v4481 = vmul.f32 %v4450, %v4473
      %v4482 = vmul.f32 %v4451, %v4473
      %v4483 = vmul.f32 %v4452, %v4473
      %v4484 = vmul.f32 %v4453, %v4473
      %v4485 = vmul.f32 %v4454, %v4473
      %v4486 = vmul.f32 %v4455, %v4473
      %v4487 = vmul.f32 %v4456, %v4473
      %v4488 = vmul.f32 %v4457, %v4473
      %v4489 = vmul.f32 %v4458, %v4473
      %v4490 = vmul.f32 %v4459, %v4473
      %v4491 = vmul.f32 %v4460, %v4473
      %v4492 = vmul.f32 %v4461, %v4473
      %v4493 = vmul.f32 %v4462, %v4473
      %v4494 = vmul.f32 %v4463, %v4473
      %v4495 = vmul.f32 %v4464, %v4473
      %v4496 = vmul.f32 %v4465, %v4473
      %v4497 = vmul.f32 %v4466, %v4473
      %v4498 = vmul.f32 %v4467, %v4473
      %v4499 = vmul.f32 %v4468, %v4473
      %v4500 = vmul.f32 %v4469, %v4473
      %v4501 = vmul.f32 %v4470, %v4473
      %v4502 = vmul.f32 %v4471, %v4473
      %v4503 = vmul.f32 %v4472, %v4473
      %v4504 = vadd.f32 %v4382, %v4474
      %v4505 = vadd.f32 %v4383, %v4475
      %v4506 = vadd.f32 %v4384, %v4476
      %v4507 = vadd.f32 %v4385, %v4477
      %v4508 = vadd.f32 %v4386, %v4478
      %v4509 = vadd.f32 %v4387, %v4479
      %v4510 = vadd.f32 %v4388, %v4480
      %v4511 = vadd.f32 %v4389, %v4481
      %v4512 = vadd.f32 %v4390, %v4482
      %v4513 = vadd.f32 %v4391, %v4483
      %v4514 = vadd.f32 %v4392, %v4484
      %v4515 = vadd.f32 %v4393, %v4485
      %v4516 = vadd.f32 %v4394, %v4486
      %v4517 = vadd.f32 %v4395, %v4487
      %v4518 = vadd.f32 %v4396, %v4488
      %v4519 = vadd.f32 %v4397, %v4489
      %v4520 = vadd.f32 %v4398, %v4490
      %v4521 = vadd.f32 %v4399, %v4491
      %v4522 = vadd.f32 %v4400, %v4492
      %v4523 = vadd.f32 %v4401, %v4493
      %v4524 = vadd.f32 %v4402, %v4494
      %v4525 = vadd.f32 %v4403, %v4495
      %v4526 = vadd.f32 %v4404, %v4496
      %v4527 = vadd.f32 %v4405, %v4497
      %v4528 = vadd.f32 %v4406, %v4498
      %v4529 = vadd.f32 %v4407, %v4499
      %v4530 = vadd.f32 %v4408, %v4500
      %v4531 = vadd.f32 %v4409, %v4501
      %v4532 = vadd.f32 %v4410, %v4502
      %v4533 = vadd.f32 %v4411, %v4503
      %v4534 = vld [vmem:[%s4412 + $0x1] sm:$0xff]
      %v4535 = vld [vmem:[%s4412 + $0x9] sm:$0x7f]
      %v4536 = vld [vmem:[%s4412 + $0x19] sm:$0xff]
      %v4537 = vld [vmem:[%s4412 + $0x21] sm:$0x7f]
      %v4538 = vld [vmem:[%s4412 + $0x31] sm:$0xff]
      %v4539 = vld [vmem:[%s4412 + $0x39] sm:$0x7f]
      %v4540 = vld [vmem:[%s4412 + $0x49] sm:$0xff]
      %v4541 = vld [vmem:[%s4412 + $0x51] sm:$0x7f]
      %v4542 = vld [vmem:[%s4412 + $0x61] sm:$0xff]
      %v4543 = vld [vmem:[%s4412 + $0x69] sm:$0x7f]
      %v4544 = vld [vmem:[%s4412 + $0x79] sm:$0xff]
      %v4545 = vld [vmem:[%s4412 + $0x81] sm:$0x7f]
      %v4546 = vld [vmem:[%s4412 + $0x91] sm:$0xff]
      %v4547 = vld [vmem:[%s4412 + $0x99] sm:$0x7f]
      %v4548 = vld [vmem:[%s4412 + $0xa9] sm:$0xff]
      %v4549 = vld [vmem:[%s4412 + $0xb1] sm:$0x7f]
      %v4550 = vld [vmem:[%s4412 + $0xc1] sm:$0xff]
      %v4551 = vld [vmem:[%s4412 + $0xc9] sm:$0x7f]
      %v4552 = vld [vmem:[%s4412 + $0xd9] sm:$0xff]
      %v4553 = vld [vmem:[%s4412 + $0xe1] sm:$0x7f]
      %v4554 = vld [vmem:[%s4412 + $0xf1] sm:$0xff]
      %v4555 = vld [vmem:[%s4412 + $0xf9] sm:$0x7f]
      %v4556 = vld [vmem:[%s4412 + $0x109] sm:$0xff]
      %v4557 = vld [vmem:[%s4412 + $0x111] sm:$0x7f]
      %v4558 = vld [vmem:[%s4412 + $0x121] sm:$0xff]
      %v4559 = vld [vmem:[%s4412 + $0x129] sm:$0x7f]
      %v4560 = vld [vmem:[%s4412 + $0x139] sm:$0xff]
      %v4561 = vld [vmem:[%s4412 + $0x141] sm:$0x7f]
      %v4562 = vld [vmem:[%s4412 + $0x151] sm:$0xff]
      %v4563 = vld [vmem:[%s4412 + $0x159] sm:$0x7f]
      %v4564 = vmax.f32 %v4534, 0.0
      %v4565 = vmax.f32 %v4535, 0.0
      %v4566 = vmax.f32 %v4536, 0.0
      %v4567 = vmax.f32 %v4537, 0.0
      %v4568 = vmax.f32 %v4538, 0.0
      %v4569 = vmax.f32 %v4539, 0.0
      %v4570 = vmax.f32 %v4540, 0.0
      %v4571 = vmax.f32 %v4541, 0.0
      %v4572 = vmax.f32 %v4542, 0.0
      %v4573 = vmax.f32 %v4543, 0.0
      %v4574 = vmax.f32 %v4544, 0.0
      %v4575 = vmax.f32 %v4545, 0.0
      %v4576 = vmax.f32 %v4546, 0.0
      %v4577 = vmax.f32 %v4547, 0.0
      %v4578 = vmax.f32 %v4548, 0.0
      %v4579 = vmax.f32 %v4549, 0.0
      %v4580 = vmax.f32 %v4550, 0.0
      %v4581 = vmax.f32 %v4551, 0.0
      %v4582 = vmax.f32 %v4552, 0.0
      %v4583 = vmax.f32 %v4553, 0.0
      %v4584 = vmax.f32 %v4554, 0.0
      %v4585 = vmax.f32 %v4555, 0.0
      %v4586 = vmax.f32 %v4556, 0.0
      %v4587 = vmax.f32 %v4557, 0.0
      %v4588 = vmax.f32 %v4558, 0.0
      %v4589 = vmax.f32 %v4559, 0.0
      %v4590 = vmax.f32 %v4560, 0.0
      %v4591 = vmax.f32 %v4561, 0.0
      %v4592 = vmax.f32 %v4562, 0.0
      %v4593 = vmax.f32 %v4563, 0.0
      %v4594 = vperm.slane %v175, 5
      %v4595 = vmul.f32 %v4564, %v4594
      %v4596 = vmul.f32 %v4565, %v4594
      %v4597 = vmul.f32 %v4566, %v4594
      %v4598 = vmul.f32 %v4567, %v4594
      %v4599 = vmul.f32 %v4568, %v4594
      %v4600 = vmul.f32 %v4569, %v4594
      %v4601 = vmul.f32 %v4570, %v4594
      %v4602 = vmul.f32 %v4571, %v4594
      %v4603 = vmul.f32 %v4572, %v4594
      %v4604 = vmul.f32 %v4573, %v4594
      %v4605 = vmul.f32 %v4574, %v4594
      %v4606 = vmul.f32 %v4575, %v4594
      %v4607 = vmul.f32 %v4576, %v4594
      %v4608 = vmul.f32 %v4577, %v4594
      %v4609 = vmul.f32 %v4578, %v4594
      %v4610 = vmul.f32 %v4579, %v4594
      %v4611 = vmul.f32 %v4580, %v4594
      %v4612 = vmul.f32 %v4581, %v4594
      %v4613 = vmul.f32 %v4582, %v4594
      %v4614 = vmul.f32 %v4583, %v4594
      %v4615 = vmul.f32 %v4584, %v4594
      %v4616 = vmul.f32 %v4585, %v4594
      %v4617 = vmul.f32 %v4586, %v4594
      %v4618 = vmul.f32 %v4587, %v4594
      %v4619 = vmul.f32 %v4588, %v4594
      %v4620 = vmul.f32 %v4589, %v4594
      %v4621 = vmul.f32 %v4590, %v4594
      %v4622 = vmul.f32 %v4591, %v4594
      %v4623 = vmul.f32 %v4592, %v4594
      %v4624 = vmul.f32 %v4593, %v4594
      %v4625 = vadd.f32 %v4504, %v4595
      %v4626 = vadd.f32 %v4505, %v4596
      %v4627 = vadd.f32 %v4506, %v4597
      %v4628 = vadd.f32 %v4507, %v4598
      %v4629 = vadd.f32 %v4508, %v4599
      %v4630 = vadd.f32 %v4509, %v4600
      %v4631 = vadd.f32 %v4510, %v4601
      %v4632 = vadd.f32 %v4511, %v4602
      %v4633 = vadd.f32 %v4512, %v4603
      %v4634 = vadd.f32 %v4513, %v4604
      %v4635 = vadd.f32 %v4514, %v4605
      %v4636 = vadd.f32 %v4515, %v4606
      %v4637 = vadd.f32 %v4516, %v4607
      %v4638 = vadd.f32 %v4517, %v4608
      %v4639 = vadd.f32 %v4518, %v4609
      %v4640 = vadd.f32 %v4519, %v4610
      %v4641 = vadd.f32 %v4520, %v4611
      %v4642 = vadd.f32 %v4521, %v4612
      %v4643 = vadd.f32 %v4522, %v4613
      %v4644 = vadd.f32 %v4523, %v4614
      %v4645 = vadd.f32 %v4524, %v4615
      %v4646 = vadd.f32 %v4525, %v4616
      %v4647 = vadd.f32 %v4526, %v4617
      %v4648 = vadd.f32 %v4527, %v4618
      %v4649 = vadd.f32 %v4528, %v4619
      %v4650 = vadd.f32 %v4529, %v4620
      %v4651 = vadd.f32 %v4530, %v4621
      %v4652 = vadd.f32 %v4531, %v4622
      %v4653 = vadd.f32 %v4532, %v4623
      %v4654 = vadd.f32 %v4533, %v4624
      %v4655 = vld [vmem:[%s4412 + $0x2] sm:$0xff]
      %v4656 = vld [vmem:[%s4412 + $0xa] sm:$0x7f]
      %v4657 = vld [vmem:[%s4412 + $0x1a] sm:$0xff]
      %v4658 = vld [vmem:[%s4412 + $0x22] sm:$0x7f]
      %v4659 = vld [vmem:[%s4412 + $0x32] sm:$0xff]
      %v4660 = vld [vmem:[%s4412 + $0x3a] sm:$0x7f]
      %v4661 = vld [vmem:[%s4412 + $0x4a] sm:$0xff]
      %v4662 = vld [vmem:[%s4412 + $0x52] sm:$0x7f]
      %v4663 = vld [vmem:[%s4412 + $0x62] sm:$0xff]
      %v4664 = vld [vmem:[%s4412 + $0x6a] sm:$0x7f]
      %v4665 = vld [vmem:[%s4412 + $0x7a] sm:$0xff]
      %v4666 = vld [vmem:[%s4412 + $0x82] sm:$0x7f]
      %v4667 = vld [vmem:[%s4412 + $0x92] sm:$0xff]
      %v4668 = vld [vmem:[%s4412 + $0x9a] sm:$0x7f]
      %v4669 = vld [vmem:[%s4412 + $0xaa] sm:$0xff]
      %v4670 = vld [vmem:[%s4412 + $0xb2] sm:$0x7f]
      %v4671 = vld [vmem:[%s4412 + $0xc2] sm:$0xff]
      %v4672 = vld [vmem:[%s4412 + $0xca] sm:$0x7f]
      %v4673 = vld [vmem:[%s4412 + $0xda] sm:$0xff]
      %v4674 = vld [vmem:[%s4412 + $0xe2] sm:$0x7f]
      %v4675 = vld [vmem:[%s4412 + $0xf2] sm:$0xff]
      %v4676 = vld [vmem:[%s4412 + $0xfa] sm:$0x7f]
      %v4677 = vld [vmem:[%s4412 + $0x10a] sm:$0xff]
      %v4678 = vld [vmem:[%s4412 + $0x112] sm:$0x7f]
      %v4679 = vld [vmem:[%s4412 + $0x122] sm:$0xff]
      %v4680 = vld [vmem:[%s4412 + $0x12a] sm:$0x7f]
      %v4681 = vld [vmem:[%s4412 + $0x13a] sm:$0xff]
      %v4682 = vld [vmem:[%s4412 + $0x142] sm:$0x7f]
      %v4683 = vld [vmem:[%s4412 + $0x152] sm:$0xff]
      %v4684 = vld [vmem:[%s4412 + $0x15a] sm:$0x7f]
      %v4685 = vmax.f32 %v4655, 0.0
      %v4686 = vmax.f32 %v4656, 0.0
      %v4687 = vmax.f32 %v4657, 0.0
      %v4688 = vmax.f32 %v4658, 0.0
      %v4689 = vmax.f32 %v4659, 0.0
      %v4690 = vmax.f32 %v4660, 0.0
      %v4691 = vmax.f32 %v4661, 0.0
      %v4692 = vmax.f32 %v4662, 0.0
      %v4693 = vmax.f32 %v4663, 0.0
      %v4694 = vmax.f32 %v4664, 0.0
      %v4695 = vmax.f32 %v4665, 0.0
      %v4696 = vmax.f32 %v4666, 0.0
      %v4697 = vmax.f32 %v4667, 0.0
      %v4698 = vmax.f32 %v4668, 0.0
      %v4699 = vmax.f32 %v4669, 0.0
      %v4700 = vmax.f32 %v4670, 0.0
      %v4701 = vmax.f32 %v4671, 0.0
      %v4702 = vmax.f32 %v4672, 0.0
      %v4703 = vmax.f32 %v4673, 0.0
      %v4704 = vmax.f32 %v4674, 0.0
      %v4705 = vmax.f32 %v4675, 0.0
      %v4706 = vmax.f32 %v4676, 0.0
      %v4707 = vmax.f32 %v4677, 0.0
      %v4708 = vmax.f32 %v4678, 0.0
      %v4709 = vmax.f32 %v4679, 0.0
      %v4710 = vmax.f32 %v4680, 0.0
      %v4711 = vmax.f32 %v4681, 0.0
      %v4712 = vmax.f32 %v4682, 0.0
      %v4713 = vmax.f32 %v4683, 0.0
      %v4714 = vmax.f32 %v4684, 0.0
      %v4715 = vperm.slane %v175, 6
      %v4716 = vmul.f32 %v4685, %v4715
      %v4717 = vmul.f32 %v4686, %v4715
      %v4718 = vmul.f32 %v4687, %v4715
      %v4719 = vmul.f32 %v4688, %v4715
      %v4720 = vmul.f32 %v4689, %v4715
      %v4721 = vmul.f32 %v4690, %v4715
      %v4722 = vmul.f32 %v4691, %v4715
      %v4723 = vmul.f32 %v4692, %v4715
      %v4724 = vmul.f32 %v4693, %v4715
      %v4725 = vmul.f32 %v4694, %v4715
      %v4726 = vmul.f32 %v4695, %v4715
      %v4727 = vmul.f32 %v4696, %v4715
      %v4728 = vmul.f32 %v4697, %v4715
      %v4729 = vmul.f32 %v4698, %v4715
      %v4730 = vmul.f32 %v4699, %v4715
      %v4731 = vmul.f32 %v4700, %v4715
      %v4732 = vmul.f32 %v4701, %v4715
      %v4733 = vmul.f32 %v4702, %v4715
      %v4734 = vmul.f32 %v4703, %v4715
      %v4735 = vmul.f32 %v4704, %v4715
      %v4736 = vmul.f32 %v4705, %v4715
      %v4737 = vmul.f32 %v4706, %v4715
      %v4738 = vmul.f32 %v4707, %v4715
      %v4739 = vmul.f32 %v4708, %v4715
      %v4740 = vmul.f32 %v4709, %v4715
      %v4741 = vmul.f32 %v4710, %v4715
      %v4742 = vmul.f32 %v4711, %v4715
      %v4743 = vmul.f32 %v4712, %v4715
      %v4744 = vmul.f32 %v4713, %v4715
      %v4745 = vmul.f32 %v4714, %v4715
      %v4746 = vadd.f32 %v4625, %v4716
      %v4747 = vadd.f32 %v4626, %v4717
      %v4748 = vadd.f32 %v4627, %v4718
      %v4749 = vadd.f32 %v4628, %v4719
      %v4750 = vadd.f32 %v4629, %v4720
      %v4751 = vadd.f32 %v4630, %v4721
      %v4752 = vadd.f32 %v4631, %v4722
      %v4753 = vadd.f32 %v4632, %v4723
      %v4754 = vadd.f32 %v4633, %v4724
      %v4755 = vadd.f32 %v4634, %v4725
      %v4756 = vadd.f32 %v4635, %v4726
      %v4757 = vadd.f32 %v4636, %v4727
      %v4758 = vadd.f32 %v4637, %v4728
      %v4759 = vadd.f32 %v4638, %v4729
      %v4760 = vadd.f32 %v4639, %v4730
      %v4761 = vadd.f32 %v4640, %v4731
      %v4762 = vadd.f32 %v4641, %v4732
      %v4763 = vadd.f32 %v4642, %v4733
      %v4764 = vadd.f32 %v4643, %v4734
      %v4765 = vadd.f32 %v4644, %v4735
      %v4766 = vadd.f32 %v4645, %v4736
      %v4767 = vadd.f32 %v4646, %v4737
      %v4768 = vadd.f32 %v4647, %v4738
      %v4769 = vadd.f32 %v4648, %v4739
      %v4770 = vadd.f32 %v4649, %v4740
      %v4771 = vadd.f32 %v4650, %v4741
      %v4772 = vadd.f32 %v4651, %v4742
      %v4773 = vadd.f32 %v4652, %v4743
      %v4774 = vadd.f32 %v4653, %v4744
      %v4775 = vadd.f32 %v4654, %v4745
      %v4776 = vld [vmem:[%s4412 + $0x3] sm:$0xff]
      %v4777 = vld [vmem:[%s4412 + $0xb] sm:$0x7f]
      %v4778 = vld [vmem:[%s4412 + $0x1b] sm:$0xff]
      %v4779 = vld [vmem:[%s4412 + $0x23] sm:$0x7f]
      %v4780 = vld [vmem:[%s4412 + $0x33] sm:$0xff]
      %v4781 = vld [vmem:[%s4412 + $0x3b] sm:$0x7f]
      %v4782 = vld [vmem:[%s4412 + $0x4b] sm:$0xff]
      %v4783 = vld [vmem:[%s4412 + $0x53] sm:$0x7f]
      %v4784 = vld [vmem:[%s4412 + $0x63] sm:$0xff]
      %v4785 = vld [vmem:[%s4412 + $0x6b] sm:$0x7f]
      %v4786 = vld [vmem:[%s4412 + $0x7b] sm:$0xff]
      %v4787 = vld [vmem:[%s4412 + $0x83] sm:$0x7f]
      %v4788 = vld [vmem:[%s4412 + $0x93] sm:$0xff]
      %v4789 = vld [vmem:[%s4412 + $0x9b] sm:$0x7f]
      %v4790 = vld [vmem:[%s4412 + $0xab] sm:$0xff]
      %v4791 = vld [vmem:[%s4412 + $0xb3] sm:$0x7f]
      %v4792 = vld [vmem:[%s4412 + $0xc3] sm:$0xff]
      %v4793 = vld [vmem:[%s4412 + $0xcb] sm:$0x7f]
      %v4794 = vld [vmem:[%s4412 + $0xdb] sm:$0xff]
      %v4795 = vld [vmem:[%s4412 + $0xe3] sm:$0x7f]
      %v4796 = vld [vmem:[%s4412 + $0xf3] sm:$0xff]
      %v4797 = vld [vmem:[%s4412 + $0xfb] sm:$0x7f]
      %v4798 = vld [vmem:[%s4412 + $0x10b] sm:$0xff]
      %v4799 = vld [vmem:[%s4412 + $0x113] sm:$0x7f]
      %v4800 = vld [vmem:[%s4412 + $0x123] sm:$0xff]
      %v4801 = vld [vmem:[%s4412 + $0x12b] sm:$0x7f]
      %v4802 = vld [vmem:[%s4412 + $0x13b] sm:$0xff]
      %v4803 = vld [vmem:[%s4412 + $0x143] sm:$0x7f]
      %v4804 = vld [vmem:[%s4412 + $0x153] sm:$0xff]
      %v4805 = vld [vmem:[%s4412 + $0x15b] sm:$0x7f]
      %v4806 = vmax.f32 %v4776, 0.0
      %v4807 = vmax.f32 %v4777, 0.0
      %v4808 = vmax.f32 %v4778, 0.0
      %v4809 = vmax.f32 %v4779, 0.0
      %v4810 = vmax.f32 %v4780, 0.0
      %v4811 = vmax.f32 %v4781, 0.0
      %v4812 = vmax.f32 %v4782, 0.0
      %v4813 = vmax.f32 %v4783, 0.0
      %v4814 = vmax.f32 %v4784, 0.0
      %v4815 = vmax.f32 %v4785, 0.0
      %v4816 = vmax.f32 %v4786, 0.0
      %v4817 = vmax.f32 %v4787, 0.0
      %v4818 = vmax.f32 %v4788, 0.0
      %v4819 = vmax.f32 %v4789, 0.0
      %v4820 = vmax.f32 %v4790, 0.0
      %v4821 = vmax.f32 %v4791, 0.0
      %v4822 = vmax.f32 %v4792, 0.0
      %v4823 = vmax.f32 %v4793, 0.0
      %v4824 = vmax.f32 %v4794, 0.0
      %v4825 = vmax.f32 %v4795, 0.0
      %v4826 = vmax.f32 %v4796, 0.0
      %v4827 = vmax.f32 %v4797, 0.0
      %v4828 = vmax.f32 %v4798, 0.0
      %v4829 = vmax.f32 %v4799, 0.0
      %v4830 = vmax.f32 %v4800, 0.0
      %v4831 = vmax.f32 %v4801, 0.0
      %v4832 = vmax.f32 %v4802, 0.0
      %v4833 = vmax.f32 %v4803, 0.0
      %v4834 = vmax.f32 %v4804, 0.0
      %v4835 = vmax.f32 %v4805, 0.0
      %v4836 = vperm.slane %v175, 7
      %v4837 = vmul.f32 %v4806, %v4836
      %v4838 = vmul.f32 %v4807, %v4836
      %v4839 = vmul.f32 %v4808, %v4836
      %v4840 = vmul.f32 %v4809, %v4836
      %v4841 = vmul.f32 %v4810, %v4836
      %v4842 = vmul.f32 %v4811, %v4836
      %v4843 = vmul.f32 %v4812, %v4836
      %v4844 = vmul.f32 %v4813, %v4836
      %v4845 = vmul.f32 %v4814, %v4836
      %v4846 = vmul.f32 %v4815, %v4836
      %v4847 = vmul.f32 %v4816, %v4836
      %v4848 = vmul.f32 %v4817, %v4836
      %v4849 = vmul.f32 %v4818, %v4836
      %v4850 = vmul.f32 %v4819, %v4836
      %v4851 = vmul.f32 %v4820, %v4836
      %v4852 = vmul.f32 %v4821, %v4836
      %v4853 = vmul.f32 %v4822, %v4836
      %v4854 = vmul.f32 %v4823, %v4836
      %v4855 = vmul.f32 %v4824, %v4836
      %v4856 = vmul.f32 %v4825, %v4836
      %v4857 = vmul.f32 %v4826, %v4836
      %v4858 = vmul.f32 %v4827, %v4836
      %v4859 = vmul.f32 %v4828, %v4836
      %v4860 = vmul.f32 %v4829, %v4836
      %v4861 = vmul.f32 %v4830, %v4836
      %v4862 = vmul.f32 %v4831, %v4836
      %v4863 = vmul.f32 %v4832, %v4836
      %v4864 = vmul.f32 %v4833, %v4836
      %v4865 = vmul.f32 %v4834, %v4836
      %v4866 = vmul.f32 %v4835, %v4836
      %v4867 = vadd.f32 %v4746, %v4837
      %v4868 = vadd.f32 %v4747, %v4838
      %v4869 = vadd.f32 %v4748, %v4839
      %v4870 = vadd.f32 %v4749, %v4840
      %v4871 = vadd.f32 %v4750, %v4841
      %v4872 = vadd.f32 %v4751, %v4842
      %v4873 = vadd.f32 %v4752, %v4843
      %v4874 = vadd.f32 %v4753, %v4844
      %v4875 = vadd.f32 %v4754, %v4845
      %v4876 = vadd.f32 %v4755, %v4846
      %v4877 = vadd.f32 %v4756, %v4847
      %v4878 = vadd.f32 %v4757, %v4848
      %v4879 = vadd.f32 %v4758, %v4849
      %v4880 = vadd.f32 %v4759, %v4850
      %v4881 = vadd.f32 %v4760, %v4851
      %v4882 = vadd.f32 %v4761, %v4852
      %v4883 = vadd.f32 %v4762, %v4853
      %v4884 = vadd.f32 %v4763, %v4854
      %v4885 = vadd.f32 %v4764, %v4855
      %v4886 = vadd.f32 %v4765, %v4856
      %v4887 = vadd.f32 %v4766, %v4857
      %v4888 = vadd.f32 %v4767, %v4858
      %v4889 = vadd.f32 %v4768, %v4859
      %v4890 = vadd.f32 %v4769, %v4860
      %v4891 = vadd.f32 %v4770, %v4861
      %v4892 = vadd.f32 %v4771, %v4862
      %v4893 = vadd.f32 %v4772, %v4863
      %v4894 = vadd.f32 %v4773, %v4864
      %v4895 = vadd.f32 %v4774, %v4865
      %v4896 = vadd.f32 %v4775, %v4866
      %v4897 = vld [vmem:[%s4412 + $0x4] sm:$0xff]
      %v4898 = vld [vmem:[%s4412 + $0xc] sm:$0x7f]
      %v4899 = vld [vmem:[%s4412 + $0x1c] sm:$0xff]
      %v4900 = vld [vmem:[%s4412 + $0x24] sm:$0x7f]
      %v4901 = vld [vmem:[%s4412 + $0x34] sm:$0xff]
      %v4902 = vld [vmem:[%s4412 + $0x3c] sm:$0x7f]
      %v4903 = vld [vmem:[%s4412 + $0x4c] sm:$0xff]
      %v4904 = vld [vmem:[%s4412 + $0x54] sm:$0x7f]
      %v4905 = vld [vmem:[%s4412 + $0x64] sm:$0xff]
      %v4906 = vld [vmem:[%s4412 + $0x6c] sm:$0x7f]
      %v4907 = vld [vmem:[%s4412 + $0x7c] sm:$0xff]
      %v4908 = vld [vmem:[%s4412 + $0x84] sm:$0x7f]
      %v4909 = vld [vmem:[%s4412 + $0x94] sm:$0xff]
      %v4910 = vld [vmem:[%s4412 + $0x9c] sm:$0x7f]
      %v4911 = vld [vmem:[%s4412 + $0xac] sm:$0xff]
      %v4912 = vld [vmem:[%s4412 + $0xb4] sm:$0x7f]
      %v4913 = vld [vmem:[%s4412 + $0xc4] sm:$0xff]
      %v4914 = vld [vmem:[%s4412 + $0xcc] sm:$0x7f]
      %v4915 = vld [vmem:[%s4412 + $0xdc] sm:$0xff]
      %v4916 = vld [vmem:[%s4412 + $0xe4] sm:$0x7f]
      %v4917 = vld [vmem:[%s4412 + $0xf4] sm:$0xff]
      %v4918 = vld [vmem:[%s4412 + $0xfc] sm:$0x7f]
      %v4919 = vld [vmem:[%s4412 + $0x10c] sm:$0xff]
      %v4920 = vld [vmem:[%s4412 + $0x114] sm:$0x7f]
      %v4921 = vld [vmem:[%s4412 + $0x124] sm:$0xff]
      %v4922 = vld [vmem:[%s4412 + $0x12c] sm:$0x7f]
      %v4923 = vld [vmem:[%s4412 + $0x13c] sm:$0xff]
      %v4924 = vld [vmem:[%s4412 + $0x144] sm:$0x7f]
      %v4925 = vld [vmem:[%s4412 + $0x154] sm:$0xff]
      %v4926 = vld [vmem:[%s4412 + $0x15c] sm:$0x7f]
      %v4927 = vmax.f32 %v4897, 0.0
      %v4928 = vmax.f32 %v4898, 0.0
      %v4929 = vmax.f32 %v4899, 0.0
      %v4930 = vmax.f32 %v4900, 0.0
      %v4931 = vmax.f32 %v4901, 0.0
      %v4932 = vmax.f32 %v4902, 0.0
      %v4933 = vmax.f32 %v4903, 0.0
      %v4934 = vmax.f32 %v4904, 0.0
      %v4935 = vmax.f32 %v4905, 0.0
      %v4936 = vmax.f32 %v4906, 0.0
      %v4937 = vmax.f32 %v4907, 0.0
      %v4938 = vmax.f32 %v4908, 0.0
      %v4939 = vmax.f32 %v4909, 0.0
      %v4940 = vmax.f32 %v4910, 0.0
      %v4941 = vmax.f32 %v4911, 0.0
      %v4942 = vmax.f32 %v4912, 0.0
      %v4943 = vmax.f32 %v4913, 0.0
      %v4944 = vmax.f32 %v4914, 0.0
      %v4945 = vmax.f32 %v4915, 0.0
      %v4946 = vmax.f32 %v4916, 0.0
      %v4947 = vmax.f32 %v4917, 0.0
      %v4948 = vmax.f32 %v4918, 0.0
      %v4949 = vmax.f32 %v4919, 0.0
      %v4950 = vmax.f32 %v4920, 0.0
      %v4951 = vmax.f32 %v4921, 0.0
      %v4952 = vmax.f32 %v4922, 0.0
      %v4953 = vmax.f32 %v4923, 0.0
      %v4954 = vmax.f32 %v4924, 0.0
      %v4955 = vmax.f32 %v4925, 0.0
      %v4956 = vmax.f32 %v4926, 0.0
      %v4957 = vperm.slane %v176, 0
      %v4958 = vmul.f32 %v4927, %v4957
      %v4959 = vmul.f32 %v4928, %v4957
      %v4960 = vmul.f32 %v4929, %v4957
      %v4961 = vmul.f32 %v4930, %v4957
      %v4962 = vmul.f32 %v4931, %v4957
      %v4963 = vmul.f32 %v4932, %v4957
      %v4964 = vmul.f32 %v4933, %v4957
      %v4965 = vmul.f32 %v4934, %v4957
      %v4966 = vmul.f32 %v4935, %v4957
      %v4967 = vmul.f32 %v4936, %v4957
      %v4968 = vmul.f32 %v4937, %v4957
      %v4969 = vmul.f32 %v4938, %v4957
      %v4970 = vmul.f32 %v4939, %v4957
      %v4971 = vmul.f32 %v4940, %v4957
      %v4972 = vmul.f32 %v4941, %v4957
      %v4973 = vmul.f32 %v4942, %v4957
      %v4974 = vmul.f32 %v4943, %v4957
      %v4975 = vmul.f32 %v4944, %v4957
      %v4976 = vmul.f32 %v4945, %v4957
      %v4977 = vmul.f32 %v4946, %v4957
      %v4978 = vmul.f32 %v4947, %v4957
      %v4979 = vmul.f32 %v4948, %v4957
      %v4980 = vmul.f32 %v4949, %v4957
      %v4981 = vmul.f32 %v4950, %v4957
      %v4982 = vmul.f32 %v4951, %v4957
      %v4983 = vmul.f32 %v4952, %v4957
      %v4984 = vmul.f32 %v4953, %v4957
      %v4985 = vmul.f32 %v4954, %v4957
      %v4986 = vmul.f32 %v4955, %v4957
      %v4987 = vmul.f32 %v4956, %v4957
      %v4988 = vadd.f32 %v4867, %v4958
      %v4989 = vadd.f32 %v4868, %v4959
      %v4990 = vadd.f32 %v4869, %v4960
      %v4991 = vadd.f32 %v4870, %v4961
      %v4992 = vadd.f32 %v4871, %v4962
      %v4993 = vadd.f32 %v4872, %v4963
      %v4994 = vadd.f32 %v4873, %v4964
      %v4995 = vadd.f32 %v4874, %v4965
      %v4996 = vadd.f32 %v4875, %v4966
      %v4997 = vadd.f32 %v4876, %v4967
      %v4998 = vadd.f32 %v4877, %v4968
      %v4999 = vadd.f32 %v4878, %v4969
      %v5000 = vadd.f32 %v4879, %v4970
      %v5001 = vadd.f32 %v4880, %v4971
      %v5002 = vadd.f32 %v4881, %v4972
      %v5003 = vadd.f32 %v4882, %v4973
      %v5004 = vadd.f32 %v4883, %v4974
      %v5005 = vadd.f32 %v4884, %v4975
      %v5006 = vadd.f32 %v4885, %v4976
      %v5007 = vadd.f32 %v4886, %v4977
      %v5008 = vadd.f32 %v4887, %v4978
      %v5009 = vadd.f32 %v4888, %v4979
      %v5010 = vadd.f32 %v4889, %v4980
      %v5011 = vadd.f32 %v4890, %v4981
      %v5012 = vadd.f32 %v4891, %v4982
      %v5013 = vadd.f32 %v4892, %v4983
      %v5014 = vadd.f32 %v4893, %v4984
      %v5015 = vadd.f32 %v4894, %v4985
      %v5016 = vadd.f32 %v4895, %v4986
      %v5017 = vadd.f32 %v4896, %v4987
      %v5018 = vpack.c.bf16 %v4988, %v4988
      %v5019 = vpack.c.bf16 %v4989, %v4989
      %v5020 = vpack.c.bf16 %v4990, %v4990
      %v5021 = vpack.c.bf16 %v4991, %v4991
      %v5022 = vpack.c.bf16 %v4992, %v4992
      %v5023 = vpack.c.bf16 %v4993, %v4993
      %v5024 = vpack.c.bf16 %v4994, %v4994
      %v5025 = vpack.c.bf16 %v4995, %v4995
      %v5026 = vpack.c.bf16 %v4996, %v4996
      %v5027 = vpack.c.bf16 %v4997, %v4997
      %v5028 = vpack.c.bf16 %v4998, %v4998
      %v5029 = vpack.c.bf16 %v4999, %v4999
      %v5030 = vpack.c.bf16 %v5000, %v5000
      %v5031 = vpack.c.bf16 %v5001, %v5001
      %v5032 = vpack.c.bf16 %v5002, %v5002
      %v5033 = vpack.c.bf16 %v5003, %v5003
      %v5034 = vpack.c.bf16 %v5004, %v5004
      %v5035 = vpack.c.bf16 %v5005, %v5005
      %v5036 = vpack.c.bf16 %v5006, %v5006
      %v5037 = vpack.c.bf16 %v5007, %v5007
      %v5038 = vpack.c.bf16 %v5008, %v5008
      %v5039 = vpack.c.bf16 %v5009, %v5009
      %v5040 = vpack.c.bf16 %v5010, %v5010
      %v5041 = vpack.c.bf16 %v5011, %v5011
      %v5042 = vpack.c.bf16 %v5012, %v5012
      %v5043 = vpack.c.bf16 %v5013, %v5013
      %v5044 = vpack.c.bf16 %v5014, %v5014
      %v5045 = vpack.c.bf16 %v5015, %v5015
      %v5046 = vpack.c.bf16 %v5016, %v5016
      %v5047 = vpack.c.bf16 %v5017, %v5017
      %5048 = vst [vmem:[%s170 + $0x4] sm:$0xf] %v5018
      %v5049 = vld [vmem:[%s170 + $0x10] sm:$0xf]
      %v5050 = vsel %vm1842, %v5019, %v5049
      %5051 = vst [vmem:[%s170 + $0x10] sm:$0xf] %v5050
      %5052 = vst [vmem:[%s170 + $0x1c] sm:$0xf] %v5020
      %v5053 = vld [vmem:[%s170 + $0x28] sm:$0xf]
      %v5054 = vsel %vm1842, %v5021, %v5053
      %5055 = vst [vmem:[%s170 + $0x28] sm:$0xf] %v5054
      %5056 = vst [vmem:[%s170 + $0x34] sm:$0xf] %v5022
      %v5057 = vld [vmem:[%s170 + $0x40] sm:$0xf]
      %v5058 = vsel %vm1842, %v5023, %v5057
      %5059 = vst [vmem:[%s170 + $0x40] sm:$0xf] %v5058
      %5060 = vst [vmem:[%s170 + $0x4c] sm:$0xf] %v5024
      %v5061 = vld [vmem:[%s170 + $0x58] sm:$0xf]
      %v5062 = vsel %vm1842, %v5025, %v5061
      %5063 = vst [vmem:[%s170 + $0x58] sm:$0xf] %v5062
      %5064 = vst [vmem:[%s170 + $0x64] sm:$0xf] %v5026
      %v5065 = vld [vmem:[%s170 + $0x70] sm:$0xf]
      %v5066 = vsel %vm1842, %v5027, %v5065
      %5067 = vst [vmem:[%s170 + $0x70] sm:$0xf] %v5066
      %5068 = vst [vmem:[%s170 + $0x7c] sm:$0xf] %v5028
      %v5069 = vld [vmem:[%s170 + $0x88] sm:$0xf]
      %v5070 = vsel %vm1842, %v5029, %v5069
      %5071 = vst [vmem:[%s170 + $0x88] sm:$0xf] %v5070
      %5072 = vst [vmem:[%s170 + $0x94] sm:$0xf] %v5030
      %v5073 = vld [vmem:[%s170 + $0xa0] sm:$0xf]
      %v5074 = vsel %vm1842, %v5031, %v5073
      %5075 = vst [vmem:[%s170 + $0xa0] sm:$0xf] %v5074
      %5076 = vst [vmem:[%s170 + $0xac] sm:$0xf] %v5032
      %v5077 = vld [vmem:[%s170 + $0xb8] sm:$0xf]
      %v5078 = vsel %vm1842, %v5033, %v5077
      %5079 = vst [vmem:[%s170 + $0xb8] sm:$0xf] %v5078
      %5080 = vst [vmem:[%s170 + $0xc4] sm:$0xf] %v5034
      %v5081 = vld [vmem:[%s170 + $0xd0] sm:$0xf]
      %v5082 = vsel %vm1842, %v5035, %v5081
      %5083 = vst [vmem:[%s170 + $0xd0] sm:$0xf] %v5082
      %5084 = vst [vmem:[%s170 + $0xdc] sm:$0xf] %v5036
      %v5085 = vld [vmem:[%s170 + $0xe8] sm:$0xf]
      %v5086 = vsel %vm1842, %v5037, %v5085
      %5087 = vst [vmem:[%s170 + $0xe8] sm:$0xf] %v5086
      %5088 = vst [vmem:[%s170 + $0xf4] sm:$0xf] %v5038
      %v5089 = vld [vmem:[%s170 + $0x100] sm:$0xf]
      %v5090 = vsel %vm1842, %v5039, %v5089
      %5091 = vst [vmem:[%s170 + $0x100] sm:$0xf] %v5090
      %5092 = vst [vmem:[%s170 + $0x10c] sm:$0xf] %v5040
      %v5093 = vld [vmem:[%s170 + $0x118] sm:$0xf]
      %v5094 = vsel %vm1842, %v5041, %v5093
      %5095 = vst [vmem:[%s170 + $0x118] sm:$0xf] %v5094
      %5096 = vst [vmem:[%s170 + $0x124] sm:$0xf] %v5042
      %v5097 = vld [vmem:[%s170 + $0x130] sm:$0xf]
      %v5098 = vsel %vm1842, %v5043, %v5097
      %5099 = vst [vmem:[%s170 + $0x130] sm:$0xf] %v5098
      %5100 = vst [vmem:[%s170 + $0x13c] sm:$0xf] %v5044
      %v5101 = vld [vmem:[%s170 + $0x148] sm:$0xf]
      %v5102 = vsel %vm1842, %v5045, %v5101
      %5103 = vst [vmem:[%s170 + $0x148] sm:$0xf] %v5102
      %5104 = vst [vmem:[%s170 + $0x154] sm:$0xf] %v5046
      %v5105 = vld [vmem:[%s170 + $0x160] sm:$0xf]
      %v5106 = vsel %vm1842, %v5047, %v5105
      %5107 = vst [vmem:[%s170 + $0x160] sm:$0xf] %v5106
      %p5108 = scmp.lt.s32.totalorder %s14, 1
      %s5109 = scalar_select %p5108, %s14, 1
      %s5110 = smul.addr %s5109, 90
      %s5111 = smul.addr %s5110, 4
      %s5112 = scalar_lea.vmem %s3, %s5111
      // Predicated region
      $region33: #{nasnet_forward.4} parent=31 // pred_check
        %p5113 = pneg %p100
      $region34: #{nasnet_forward.4} parent=31 // pred_check_branch
        %5115 = sbr.rel (%p5113) target = $region36
      $region35: #{nasnet_forward.4} parent=31 // pred_region
        _
      $region36: #{nasnet_forward.4} parent=31 // pred_fallthru
        _
    $region32: #{nasnet_forward.4} parent=5 // pred_fallthru
      _
    %p5116 = scmp.le.s32.totalorder 2, %s9
    // Predicated region
    $region37: #{nasnet_forward.4} parent=5 // pred_check
      %p5117 = pneg %p5116
    $region38: #{nasnet_forward.4} parent=5 // pred_check_branch
      %5119 = sbr.rel (%p5117) target = $region40
    $region39: #{nasnet_forward.4} parent=5 // pred_region
      %s5120 = ssub.s32 %s9, 2
      // Predicated region
      $region41: #{nasnet_forward.4} parent=39 // pred_check
        %p5121 = pneg %p106
      $region42: #{nasnet_forward.4} parent=39 // pred_check_branch
        %5123 = sbr.rel (%p5121) target = $region44
      $region43: #{nasnet_forward.4} parent=39 // pred_region
        %p5124 = scmp.lt.s32.totalorder %s15, 1
        %s5125 = scalar_select %p5124, %s15, 1
        %s5126 = smul.addr %s5125, 90
        %s5127 = smul.addr %s5126, 4
        %s5128 = scalar_lea.vmem %s3, %s5127
      $region44: #{nasnet_forward.4} parent=39 // pred_fallthru
        _
    $region40: #{nasnet_forward.4} parent=5 // pred_fallthru
      _
  $region6: #{nasnet_forward.4} parent=0 // loop_footer
    %s13 = sadd.s32 1, %s9
  $region7: #{nasnet_forward.4} parent=0 // loop_footer_branch
    %8 = sbr.rel target = $region3
  $region8: #{nasnet_forward.4} parent=0 // loop_exit
    _

</llo_original>
